<compile_context>
chip_gen: v5e
topology: v5e:2x2
jax: 0.10.0
libtpu: 0.0.40
codegen_flags: <defaults>
</compile_context>

<pallas_src>
import functools

import jax
import jax.numpy as jnp
from jax.experimental import pallas as pl
from jax.experimental.pallas import tpu as pltpu


# --------------------------------------------------------------------------
# Block-size pickers (largest divisor of N whose modeled footprint fits VMEM).
# --------------------------------------------------------------------------
def _pick_conv_batch_block(n, h, w, cin, cout, budget=20 * 1024 * 1024):
    f32 = 4

    def usage(nb):
        x_in = 2 * nb * h * w * cin * f32            # double-buffered input block
        y_out = 2 * nb * h * w * cout * f32          # double-buffered output block
        pad = nb * (h + 2) * (w + 2) * cin * f32     # halo-padded scratch
        patch = nb * h * w * 9 * cin * f32           # im2col operand (worst case)
        acc = nb * h * w * cout * f32                # f32 accumulator
        wts = 2 * 9 * cin * cout * f32
        return x_in + y_out + pad + patch + acc + wts

    best = 1
    for cand in range(1, n + 1):
        if n % cand == 0 and usage(cand) <= budget:
            best = cand
    return best


def _pick_affine_batch_block(n, h, w, c, budget=24 * 1024 * 1024):
    f32 = 4

    def usage(nb):
        return 4 * nb * h * w * c * f32              # double-buffered in + out

    best = 1
    for cand in range(1, n + 1):
        if n % cand == 0 and usage(cand) <= budget:
            best = cand
    return best


# --------------------------------------------------------------------------
# Kernel 1: fused [optional per-channel affine+ReLU on the input] -> 3x3 "same"
# conv (no bias) -> per-channel sum / sum-of-squares epilogue.
# One batch block per grid step; halo padding is done in a VMEM scratch.
# --------------------------------------------------------------------------
def _conv3x3_kernel(apply_input_act, x_ref, w_ref, *rest):
    if apply_input_act:
        scale_ref, shift_ref, o_ref, s_ref, ss_ref, xpad_ref = rest
    else:
        o_ref, s_ref, ss_ref, xpad_ref = rest
        scale_ref = shift_ref = None

    nb, h, w, cin = x_ref.shape
    cout = o_ref.shape[-1]

    x = x_ref[...].astype(jnp.float32)                       # (nb, h, w, cin)
    if apply_input_act:
        # previous layer's BatchNorm+ReLU fused into this conv's input load
        scale = scale_ref[...].reshape(1, 1, 1, cin)
        shift = shift_ref[...].reshape(1, 1, 1, cin)
        x = jnp.maximum(x * scale + shift, 0.0)

    # Zero only the 1-pixel halo, then write the interior (borders never hold
    # non-zero data, so this is cheaper than zero-filling the whole padded tile).
    zrow = jnp.zeros((nb, 1, w + 2, cin), jnp.float32)
    xpad_ref[:, 0:1, :, :] = zrow
    xpad_ref[:, h + 1:h + 2, :, :] = zrow
    zcol = jnp.zeros((nb, h + 2, 1, cin), jnp.float32)
    xpad_ref[:, :, 0:1, :] = zcol
    xpad_ref[:, :, w + 1:w + 2, :] = zcol
    xpad_ref[:, 1:h + 1, 1:w + 1, :] = x

    # 9 shifted taps of the padded tile, ordered (dh, dw) to match the
    # HWIO -> (9*cin, cout) weight reshape.
    taps = [xpad_ref[:, dh:dh + h, dw:dw + w, :].reshape(nb * h * w, cin)
            for dh in range(3) for dw in range(3)]

    if 9 * cin <= 256:
        # im2col: one MXU pass with contraction depth 9*cin.
        patch = jnp.concatenate(taps, axis=1)                # (nb*h*w, 9*cin)
        acc = jnp.dot(patch, w_ref[...], preferred_element_type=jnp.float32)
    else:
        # general fallback: 9 accumulating matmuls with full-depth contraction.
        acc = jnp.zeros((nb * h * w, cout), jnp.float32)
        for t, tap in enumerate(taps):
            acc = acc + jnp.dot(tap, w_ref[t * cin:(t + 1) * cin, :],
                                preferred_element_type=jnp.float32)

    o_ref[...] = acc.reshape(nb, h, w, cout).astype(o_ref.dtype)
    # BN statistics epilogue (per-block partial sums; reduced over blocks in JAX).
    s_ref[...] = jnp.sum(acc, axis=0, keepdims=True)
    ss_ref[...] = jnp.sum(acc * acc, axis=0, keepdims=True)


def conv3x3_bn_stats(x_nhwc, w_hwio, scale=None, shift=None):
    """3x3 same conv (bias-free) + per-block channel sum / sumsq.

    If scale/shift are given, relu(x*scale + shift) is applied to the input
    inside the kernel (fused previous-layer BatchNorm+ReLU).
    """
    n, h, w, cin = x_nhwc.shape
    cout = w_hwio.shape[-1]
    w_mat = w_hwio.reshape(9 * cin, cout)                    # HWIO -> (9*Cin, Cout)
    apply_act = scale is not None

    nb = _pick_conv_batch_block(n, h, w, cin, cout)
    n_blocks = n // nb

    in_specs = [
        pl.BlockSpec((nb, h, w, cin), lambda i: (i, 0, 0, 0)),
        pl.BlockSpec((9 * cin, cout), lambda i: (0, 0)),
    ]
    args = [x_nhwc, w_mat]
    if apply_act:
        in_specs += [pl.BlockSpec((1, cin), lambda i: (0, 0)),
                     pl.BlockSpec((1, cin), lambda i: (0, 0))]
        args += [scale.reshape(1, cin), shift.reshape(1, cin)]

    out_shapes = (
        jax.ShapeDtypeStruct((n, h, w, cout), jnp.float32),   # pre-BN conv output
        jax.ShapeDtypeStruct((n_blocks, cout), jnp.float32),  # per-block channel sum
        jax.ShapeDtypeStruct((n_blocks, cout), jnp.float32),  # per-block channel sumsq
    )
    out_specs = [
        pl.BlockSpec((nb, h, w, cout), lambda i: (i, 0, 0, 0)),
        pl.BlockSpec((1, cout), lambda i: (i, 0)),
        pl.BlockSpec((1, cout), lambda i: (i, 0)),
    ]

    return pl.pallas_call(
        functools.partial(_conv3x3_kernel, apply_act),
        out_shape=out_shapes,
        grid_spec=pltpu.PrefetchScalarGridSpec(
            num_scalar_prefetch=0,
            grid=(n_blocks,),
            in_specs=in_specs,
            out_specs=out_specs,
            scratch_shapes=[pltpu.VMEM((nb, h + 2, w + 2, cin), jnp.float32)],
        ),
        compiler_params=pltpu.CompilerParams(
            dimension_semantics=("parallel",),
            vmem_limit_bytes=48 * 1024 * 1024,
        ),
    )(*args)


# --------------------------------------------------------------------------
# Kernel 2: final normalize*gamma + beta + ReLU (per-channel affine), applied to
# the last conv's output using stats computed in that conv's epilogue.
# --------------------------------------------------------------------------
def _bn_relu_kernel(y_ref, scale_ref, shift_ref, o_ref):
    c = y_ref.shape[-1]
    y = y_ref[...].astype(jnp.float32)
    out = y * scale_ref[...].reshape(1, 1, 1, c) + shift_ref[...].reshape(1, 1, 1, c)
    o_ref[...] = jnp.maximum(out, 0.0).astype(o_ref.dtype)


def bn_relu_apply(y_nhwc, scale, shift):
    n, h, w, c = y_nhwc.shape
    nb = _pick_affine_batch_block(n, h, w, c)
    n_blocks = n // nb
    return pl.pallas_call(
        _bn_relu_kernel,
        out_shape=jax.ShapeDtypeStruct((n, h, w, c), jnp.float32),
        grid_spec=pltpu.PrefetchScalarGridSpec(
            num_scalar_prefetch=0,
            grid=(n_blocks,),
            in_specs=[
                pl.BlockSpec((nb, h, w, c), lambda i: (i, 0, 0, 0)),
                pl.BlockSpec((1, c), lambda i: (0, 0)),
                pl.BlockSpec((1, c), lambda i: (0, 0)),
            ],
            out_specs=pl.BlockSpec((nb, h, w, c), lambda i: (i, 0, 0, 0)),
        ),
        compiler_params=pltpu.CompilerParams(
            dimension_semantics=("parallel",),
            vmem_limit_bytes=48 * 1024 * 1024,
        ),
    )(y_nhwc, scale.reshape(1, c), shift.reshape(1, c))


# --------------------------------------------------------------------------
# BN affine from accumulated stats (tiny per-channel math, plain JAX).
# --------------------------------------------------------------------------
def _bn_affine(s, ss, m, gamma, beta, eps):
    total = jnp.sum(s, axis=0)                               # (C,)
    total_sq = jnp.sum(ss, axis=0)                           # (C,)
    mean = total / m
    var = jnp.maximum(total_sq / m - mean * mean, 0.0)       # biased (train-mode) var
    scale = gamma * jax.lax.rsqrt(var + eps)
    shift = beta - mean * scale
    return scale, shift


# --------------------------------------------------------------------------
# conv_block forward (NCHW in / NCHW out, like the PyTorch module).
# --------------------------------------------------------------------------
def conv_block_forward(x_nchw, params, eps=1e-5):
    x = jnp.transpose(x_nchw, (0, 2, 3, 1))                  # NCHW -> NHWC
    n, h, w, _ = x.shape
    m = n * h * w

    # conv1 (bias exactly cancelled by the train-mode BN that follows).
    y1, s1, ss1 = conv3x3_bn_stats(x, params["w1"])
    scale1, shift1 = _bn_affine(s1, ss1, m, params["g1"], params["beta1"], eps)

    # conv2 with BN1+ReLU fused into its input load (bias again dropped).
    y2, s2, ss2 = conv3x3_bn_stats(y1, params["w2"], scale1, shift1)
    scale2, shift2 = _bn_affine(s2, ss2, m, params["g2"], params["beta2"], eps)

    out = bn_relu_apply(y2, scale2, shift2)
    return jnp.transpose(out, (0, 3, 1, 2))                  # NHWC -> NCHW


def init_params(key, ch_in, ch_out):
    k1, k2, k3, k4 = jax.random.split(key, 4)
    bound1 = 1.0 / jnp.sqrt(ch_in * 9.0)
    bound2 = 1.0 / jnp.sqrt(ch_out * 9.0)
    w1_oihw = jax.random.uniform(k1, (ch_out, ch_in, 3, 3), jnp.float32,
                                 -bound1, bound1)
    b1 = jax.random.uniform(k2, (ch_out,), jnp.float32, -bound1, bound1)
    w2_oihw = jax.random.uniform(k3, (ch_out, ch_out, 3, 3), jnp.float32,
                                 -bound2, bound2)
    b2 = jax.random.uniform(k4, (ch_out,), jnp.float32, -bound2, bound2)
    return dict(
        w1=jnp.transpose(w1_oihw, (2, 3, 1, 0)),             # OIHW -> HWIO
        b1=b1,                                               # kept for the reference;
        g1=jnp.ones((ch_out,), jnp.float32),                 # kernels drop bias (exact)
        beta1=jnp.zeros((ch_out,), jnp.float32),
        w2=jnp.transpose(w2_oihw, (2, 3, 1, 0)),
        b2=b2,
        g2=jnp.ones((ch_out,), jnp.float32),
        beta2=jnp.zeros((ch_out,), jnp.float32),
    )


def _reference(x_nchw, params, eps=1e-5):
    # PyTorch-exact: conv WITH bias, training-mode BN (biased var), ReLU.
    def conv(x, w_hwio, b):
        w_oihw = jnp.transpose(w_hwio, (3, 2, 0, 1))
        y = jax.lax.conv_general_dilated(
            x, w_oihw, window_strides=(1, 1), padding="SAME",
            dimension_numbers=("NCHW", "OIHW", "NCHW"))
        return y + b[None, :, None, None]

    def bnr(y, g, be):
        mean = jnp.mean(y, axis=(0, 2, 3), keepdims=True)
        var = jnp.mean((y - mean) ** 2, axis=(0, 2, 3), keepdims=True)
        out = (y - mean) * jax.lax.rsqrt(var + eps)
        out = out * g[None, :, None, None] + be[None, :, None, None]
        return jnp.maximum(out, 0.0)

    y = bnr(conv(x_nchw, params["w1"], params["b1"]), params["g1"], params["beta1"])
    y = bnr(conv(y, params["w2"], params["b2"]), params["g2"], params["beta2"])
    return y


if __name__ == "__main__":
    N, CH_IN, CH_OUT, H, W = 2, 4, 8, 16, 16

    key = jax.random.PRNGKey(0)
    kx, kp = jax.random.split(key)
    x = jax.random.normal(kx, (N, CH_IN, H, W), jnp.float32)
    params = init_params(kp, CH_IN, CH_OUT)

    out = jax.jit(conv_block_forward)(x, params)
    out = jax.block_until_ready(out)

    ref = _reference(x, params)
    assert out.shape == (N, CH_OUT, H, W)
    assert jnp.allclose(out, ref, atol=1e-3, rtol=1e-3), "mismatch vs reference"

    print("KERNEL_OK")
</pallas_src>

<mosaic_0001>
module attributes {stable_mosaic.version = 11 : i64} {
  func.func @_bn_relu_kernel(%arg0: i32, %arg1: memref<2x16x16x8xf32, #tpu.memory_space<vmem>>, %arg2: memref<1x8xf32, #tpu.memory_space<vmem>>, %arg3: memref<1x8xf32, #tpu.memory_space<vmem>>, %arg4: memref<2x16x16x8xf32, #tpu.memory_space<vmem>>) attributes {dimension_semantics = [#tpu.dimension_semantics<parallel>], iteration_bounds = array<i64: 1>, scalar_prefetch = 0 : i64, scratch_operands = 0 : i64, tpu.core_type = #tpu.core_type<tc>, window_params = [{transform_indices = @transform_0, window_bounds = array<i64: 2, 16, 16, 8>}, {pipeline_mode = #tpu.pipeline_mode<synchronous>, transform_indices = @transform_1, window_bounds = array<i64: 1, 8>}, {pipeline_mode = #tpu.pipeline_mode<synchronous>, transform_indices = @transform_2, window_bounds = array<i64: 1, 8>}, {transform_indices = @transform_3, window_bounds = array<i64: 2, 16, 16, 8>}]} {
    %c0 = arith.constant 0 : index
    %c0_0 = arith.constant 0 : index
    %c0_1 = arith.constant 0 : index
    %c0_2 = arith.constant 0 : index
    %0 = vector.load %arg1[%c0, %c0_0, %c0_1, %c0_2] : memref<2x16x16x8xf32, #tpu.memory_space<vmem>>, vector<2x16x16x8xf32>
    %c0_3 = arith.constant 0 : index
    %c0_4 = arith.constant 0 : index
    %1 = vector.load %arg2[%c0_3, %c0_4] : memref<1x8xf32, #tpu.memory_space<vmem>>, vector<1x8xf32>
    %2 = vector.shape_cast %1 : vector<1x8xf32> to vector<1x1x1x8xf32>
    %3 = vector.broadcast %2 : vector<1x1x1x8xf32> to vector<2x16x16x8xf32>
    %4 = arith.mulf %0, %3 : vector<2x16x16x8xf32>
    %c0_5 = arith.constant 0 : index
    %c0_6 = arith.constant 0 : index
    %5 = vector.load %arg3[%c0_5, %c0_6] : memref<1x8xf32, #tpu.memory_space<vmem>>, vector<1x8xf32>
    %6 = vector.shape_cast %5 : vector<1x8xf32> to vector<1x1x1x8xf32>
    %7 = vector.broadcast %6 : vector<1x1x1x8xf32> to vector<2x16x16x8xf32>
    %8 = arith.addf %4, %7 : vector<2x16x16x8xf32>
    %cst = arith.constant 0.000000e+00 : f32
    %9 = vector.broadcast %cst : f32 to vector<2x16x16x8xf32>
    %10 = arith.maximumf %8, %9 : vector<2x16x16x8xf32>
    %c0_7 = arith.constant 0 : index
    %c0_8 = arith.constant 0 : index
    %c0_9 = arith.constant 0 : index
    %c0_10 = arith.constant 0 : index
    %11 = vector.load %arg4[%c0_7, %c0_8, %c0_9, %c0_10] : memref<2x16x16x8xf32, #tpu.memory_space<vmem>>, vector<2x16x16x8xf32>
    tpu.vector_store %arg4[%c0_7, %c0_8, %c0_9, %c0_10], %10 {strides = array<i32>} : memref<2x16x16x8xf32, #tpu.memory_space<vmem>>, vector<2x16x16x8xf32>,
    return
  }
  func.func @transform_0(%arg0: i32) -> (i32, i32, i32, i32) {
    %c0_i32 = arith.constant 0 : i32
    %c0_i32_0 = arith.constant 0 : i32
    %c0_i32_1 = arith.constant 0 : i32
    %c0_i32_2 = arith.constant 0 : i32
    return %arg0, %c0_i32, %c0_i32_0, %c0_i32_1 : i32, i32, i32, i32
  }
  func.func @transform_1(%arg0: i32) -> (i32, i32) {
    %c0_i32 = arith.constant 0 : i32
    %c0_i32_0 = arith.constant 0 : i32
    %c0_i32_1 = arith.constant 0 : i32
    return %c0_i32, %c0_i32_0 : i32, i32
  }
  func.func @transform_2(%arg0: i32) -> (i32, i32) {
    %c0_i32 = arith.constant 0 : i32
    %c0_i32_0 = arith.constant 0 : i32
    %c0_i32_1 = arith.constant 0 : i32
    return %c0_i32, %c0_i32_0 : i32, i32
  }
  func.func @transform_3(%arg0: i32) -> (i32, i32, i32, i32) {
    %c0_i32 = arith.constant 0 : i32
    %c0_i32_0 = arith.constant 0 : i32
    %c0_i32_1 = arith.constant 0 : i32
    %c0_i32_2 = arith.constant 0 : i32
    return %arg0, %c0_i32, %c0_i32_0, %c0_i32_1 : i32, i32, i32, i32
  }
}

module attributes {stable_mosaic.version = 11 : i64} {
  func.func @_conv3x3_kernel(%arg0: i32, %arg1: memref<2x16x16x4xf32, #tpu.memory_space<vmem>>, %arg2: memref<36x8xf32, #tpu.memory_space<vmem>>, %arg3: memref<2x16x16x8xf32, #tpu.memory_space<vmem>>, %arg4: memref<1x8xf32, #tpu.memory_space<vmem>>, %arg5: memref<1x8xf32, #tpu.memory_space<vmem>>, %arg6: memref<2x18x18x4xf32, #tpu.memory_space<vmem>>) attributes {dimension_semantics = [#tpu.dimension_semantics<parallel>], iteration_bounds = array<i64: 1>, scalar_prefetch = 0 : i64, scratch_operands = 1 : i64, tpu.core_type = #tpu.core_type<tc>, window_params = [{transform_indices = @transform_0, window_bounds = array<i64: 2, 16, 16, 4>}, {pipeline_mode = #tpu.pipeline_mode<synchronous>, transform_indices = @transform_1, window_bounds = array<i64: 36, 8>}, {transform_indices = @transform_2, window_bounds = array<i64: 2, 16, 16, 8>}, {transform_indices = @transform_3, window_bounds = array<i64: 1, 8>}, {transform_indices = @transform_4, window_bounds = array<i64: 1, 8>}]} {
    %c0 = arith.constant 0 : index
    %c0_0 = arith.constant 0 : index
    %c0_1 = arith.constant 0 : index
    %c0_2 = arith.constant 0 : index
    %0 = vector.load %arg1[%c0, %c0_0, %c0_1, %c0_2] : memref<2x16x16x4xf32, #tpu.memory_space<vmem>>, vector<2x16x16x4xf32>
    %cst = arith.constant 0.000000e+00 : f32
    %1 = vector.broadcast %cst : f32 to vector<2x1x18x4xf32>
    %c0_3 = arith.constant 0 : index
    %c0_4 = arith.constant 0 : index
    %c0_5 = arith.constant 0 : index
    %c0_6 = arith.constant 0 : index
    %2 = vector.load %arg6[%c0_3, %c0_4, %c0_5, %c0_6] : memref<2x18x18x4xf32, #tpu.memory_space<vmem>>, vector<2x1x18x4xf32>
    tpu.vector_store %arg6[%c0_3, %c0_4, %c0_5, %c0_6], %1 {strides = array<i32>} : memref<2x18x18x4xf32, #tpu.memory_space<vmem>>, vector<2x1x18x4xf32>,
    %c0_7 = arith.constant 0 : index
    %c17 = arith.constant 17 : index
    %c0_8 = arith.constant 0 : index
    %c0_9 = arith.constant 0 : index
    %3 = vector.load %arg6[%c0_7, %c17, %c0_8, %c0_9] : memref<2x18x18x4xf32, #tpu.memory_space<vmem>>, vector<2x1x18x4xf32>
    tpu.vector_store %arg6[%c0_7, %c17, %c0_8, %c0_9], %1 {strides = array<i32>} : memref<2x18x18x4xf32, #tpu.memory_space<vmem>>, vector<2x1x18x4xf32>,
    %cst_10 = arith.constant 0.000000e+00 : f32
    %4 = vector.broadcast %cst_10 : f32 to vector<2x18x1x4xf32>
    %c0_11 = arith.constant 0 : index
    %c0_12 = arith.constant 0 : index
    %c0_13 = arith.constant 0 : index
    %c0_14 = arith.constant 0 : index
    %5 = vector.load %arg6[%c0_11, %c0_12, %c0_13, %c0_14] : memref<2x18x18x4xf32, #tpu.memory_space<vmem>>, vector<2x18x1x4xf32>
    tpu.vector_store %arg6[%c0_11, %c0_12, %c0_13, %c0_14], %4 {strides = array<i32>} : memref<2x18x18x4xf32, #tpu.memory_space<vmem>>, vector<2x18x1x4xf32>,
    %c0_15 = arith.constant 0 : index
    %c0_16 = arith.constant 0 : index
    %c17_17 = arith.constant 17 : index
    %c0_18 = arith.constant 0 : index
    %6 = vector.load %arg6[%c0_15, %c0_16, %c17_17, %c0_18] : memref<2x18x18x4xf32, #tpu.memory_space<vmem>>, vector<2x18x1x4xf32>
    tpu.vector_store %arg6[%c0_15, %c0_16, %c17_17, %c0_18], %4 {strides = array<i32>} : memref<2x18x18x4xf32, #tpu.memory_space<vmem>>, vector<2x18x1x4xf32>,
    %c0_19 = arith.constant 0 : index
    %c1 = arith.constant 1 : index
    %c1_20 = arith.constant 1 : index
    %c0_21 = arith.constant 0 : index
    %7 = vector.load %arg6[%c0_19, %c1, %c1_20, %c0_21] : memref<2x18x18x4xf32, #tpu.memory_space<vmem>>, vector<2x16x16x4xf32>
    tpu.vector_store %arg6[%c0_19, %c1, %c1_20, %c0_21], %0 {strides = array<i32>} : memref<2x18x18x4xf32, #tpu.memory_space<vmem>>, vector<2x16x16x4xf32>,
    %c0_22 = arith.constant 0 : index
    %c0_23 = arith.constant 0 : index
    %c0_24 = arith.constant 0 : index
    %c0_25 = arith.constant 0 : index
    %8 = vector.load %arg6[%c0_22, %c0_23, %c0_24, %c0_25] : memref<2x18x18x4xf32, #tpu.memory_space<vmem>>, vector<2x16x16x4xf32>
    %9 = vector.shape_cast %8 : vector<2x16x16x4xf32> to vector<512x4xf32>
    %c0_26 = arith.constant 0 : index
    %c0_27 = arith.constant 0 : index
    %c1_28 = arith.constant 1 : index
    %c0_29 = arith.constant 0 : index
    %10 = vector.load %arg6[%c0_26, %c0_27, %c1_28, %c0_29] : memref<2x18x18x4xf32, #tpu.memory_space<vmem>>, vector<2x16x16x4xf32>
    %11 = vector.shape_cast %10 : vector<2x16x16x4xf32> to vector<512x4xf32>
    %c0_30 = arith.constant 0 : index
    %c0_31 = arith.constant 0 : index
    %c2 = arith.constant 2 : index
    %c0_32 = arith.constant 0 : index
    %12 = vector.load %arg6[%c0_30, %c0_31, %c2, %c0_32] : memref<2x18x18x4xf32, #tpu.memory_space<vmem>>, vector<2x16x16x4xf32>
    %13 = vector.shape_cast %12 : vector<2x16x16x4xf32> to vector<512x4xf32>
    %c0_33 = arith.constant 0 : index
    %c1_34 = arith.constant 1 : index
    %c0_35 = arith.constant 0 : index
    %c0_36 = arith.constant 0 : index
    %14 = vector.load %arg6[%c0_33, %c1_34, %c0_35, %c0_36] : memref<2x18x18x4xf32, #tpu.memory_space<vmem>>, vector<2x16x16x4xf32>
    %15 = vector.shape_cast %14 : vector<2x16x16x4xf32> to vector<512x4xf32>
    %c0_37 = arith.constant 0 : index
    %c1_38 = arith.constant 1 : index
    %c1_39 = arith.constant 1 : index
    %c0_40 = arith.constant 0 : index
    %16 = vector.load %arg6[%c0_37, %c1_38, %c1_39, %c0_40] : memref<2x18x18x4xf32, #tpu.memory_space<vmem>>, vector<2x16x16x4xf32>
    %17 = vector.shape_cast %16 : vector<2x16x16x4xf32> to vector<512x4xf32>
    %c0_41 = arith.constant 0 : index
    %c1_42 = arith.constant 1 : index
    %c2_43 = arith.constant 2 : index
    %c0_44 = arith.constant 0 : index
    %18 = vector.load %arg6[%c0_41, %c1_42, %c2_43, %c0_44] : memref<2x18x18x4xf32, #tpu.memory_space<vmem>>, vector<2x16x16x4xf32>
    %19 = vector.shape_cast %18 : vector<2x16x16x4xf32> to vector<512x4xf32>
    %c0_45 = arith.constant 0 : index
    %c2_46 = arith.constant 2 : index
    %c0_47 = arith.constant 0 : index
    %c0_48 = arith.constant 0 : index
    %20 = vector.load %arg6[%c0_45, %c2_46, %c0_47, %c0_48] : memref<2x18x18x4xf32, #tpu.memory_space<vmem>>, vector<2x16x16x4xf32>
    %21 = vector.shape_cast %20 : vector<2x16x16x4xf32> to vector<512x4xf32>
    %c0_49 = arith.constant 0 : index
    %c2_50 = arith.constant 2 : index
    %c1_51 = arith.constant 1 : index
    %c0_52 = arith.constant 0 : index
    %22 = vector.load %arg6[%c0_49, %c2_50, %c1_51, %c0_52] : memref<2x18x18x4xf32, #tpu.memory_space<vmem>>, vector<2x16x16x4xf32>
    %23 = vector.shape_cast %22 : vector<2x16x16x4xf32> to vector<512x4xf32>
    %c0_53 = arith.constant 0 : index
    %c2_54 = arith.constant 2 : index
    %c2_55 = arith.constant 2 : index
    %c0_56 = arith.constant 0 : index
    %24 = vector.load %arg6[%c0_53, %c2_54, %c2_55, %c0_56] : memref<2x18x18x4xf32, #tpu.memory_space<vmem>>, vector<2x16x16x4xf32>
    %25 = vector.shape_cast %24 : vector<2x16x16x4xf32> to vector<512x4xf32>
    %26 = tpu.concatenate %9, %11, %13, %15, %17, %19, %21, %23, %25 in 1 : vector<512x4xf32>, vector<512x4xf32>, vector<512x4xf32>, vector<512x4xf32>, vector<512x4xf32>, vector<512x4xf32>, vector<512x4xf32>, vector<512x4xf32>, vector<512x4xf32> -> vector<512x36xf32>
    %c0_57 = arith.constant 0 : index
    %c0_58 = arith.constant 0 : index
    %27 = vector.load %arg2[%c0_57, %c0_58] : memref<36x8xf32, #tpu.memory_space<vmem>>, vector<36x8xf32>
    %cst_59 = arith.constant dense<0.000000e+00> : vector<512x8xf32>
    %28 = tpu.matmul %26, %27, %cst_59 {dimension_numbers = #tpu.dot_dimension_numbers<[1], [0], [0], [1], [0, 0, 1, 1], [], []>} : vector<512x36xf32>, vector<36x8xf32>, vector<512x8xf32> -> vector<512x8xf32>
    %29 = vector.shape_cast %28 : vector<512x8xf32> to vector<2x16x16x8xf32>
    %c0_60 = arith.constant 0 : index
    %c0_61 = arith.constant 0 : index
    %c0_62 = arith.constant 0 : index
    %c0_63 = arith.constant 0 : index
    %30 = vector.load %arg3[%c0_60, %c0_61, %c0_62, %c0_63] : memref<2x16x16x8xf32, #tpu.memory_space<vmem>>, vector<2x16x16x8xf32>
    tpu.vector_store %arg3[%c0_60, %c0_61, %c0_62, %c0_63], %29 {strides = array<i32>} : memref<2x16x16x8xf32, #tpu.memory_space<vmem>>, vector<2x16x16x8xf32>,
    %cst_64 = arith.constant dense<0.000000e+00> : vector<8xf32>
    %31 = vector.multi_reduction <add>, %28, %cst_64 [0] : vector<512x8xf32> to vector<8xf32>
    %32 = vector.shape_cast %31 : vector<8xf32> to vector<1x8xf32>
    %c0_65 = arith.constant 0 : index
    %c0_66 = arith.constant 0 : index
    %33 = vector.load %arg4[%c0_65, %c0_66] : memref<1x8xf32, #tpu.memory_space<vmem>>, vector<1x8xf32>
    tpu.vector_store %arg4[%c0_65, %c0_66], %32 {strides = array<i32>} : memref<1x8xf32, #tpu.memory_space<vmem>>, vector<1x8xf32>,
    %34 = arith.mulf %28, %28 : vector<512x8xf32>
    %cst_67 = arith.constant dense<0.000000e+00> : vector<8xf32>
    %35 = vector.multi_reduction <add>, %34, %cst_67 [0] : vector<512x8xf32> to vector<8xf32>
    %36 = vector.shape_cast %35 : vector<8xf32> to vector<1x8xf32>
    %c0_68 = arith.constant 0 : index
    %c0_69 = arith.constant 0 : index
    %37 = vector.load %arg5[%c0_68, %c0_69] : memref<1x8xf32, #tpu.memory_space<vmem>>, vector<1x8xf32>
    tpu.vector_store %arg5[%c0_68, %c0_69], %36 {strides = array<i32>} : memref<1x8xf32, #tpu.memory_space<vmem>>, vector<1x8xf32>,
    return
  }
  func.func @transform_0(%arg0: i32) -> (i32, i32, i32, i32) {
    %c0_i32 = arith.constant 0 : i32
    %c0_i32_0 = arith.constant 0 : i32
    %c0_i32_1 = arith.constant 0 : i32
    %c0_i32_2 = arith.constant 0 : i32
    return %arg0, %c0_i32, %c0_i32_0, %c0_i32_1 : i32, i32, i32, i32
  }
  func.func @transform_1(%arg0: i32) -> (i32, i32) {
    %c0_i32 = arith.constant 0 : i32
    %c0_i32_0 = arith.constant 0 : i32
    %c0_i32_1 = arith.constant 0 : i32
    return %c0_i32, %c0_i32_0 : i32, i32
  }
  func.func @transform_2(%arg0: i32) -> (i32, i32, i32, i32) {
    %c0_i32 = arith.constant 0 : i32
    %c0_i32_0 = arith.constant 0 : i32
    %c0_i32_1 = arith.constant 0 : i32
    %c0_i32_2 = arith.constant 0 : i32
    return %arg0, %c0_i32, %c0_i32_0, %c0_i32_1 : i32, i32, i32, i32
  }
  func.func @transform_3(%arg0: i32) -> (i32, i32) {
    %c0_i32 = arith.constant 0 : i32
    %c0_i32_0 = arith.constant 0 : i32
    return %arg0, %c0_i32 : i32, i32
  }
  func.func @transform_4(%arg0: i32) -> (i32, i32) {
    %c0_i32 = arith.constant 0 : i32
    %c0_i32_0 = arith.constant 0 : i32
    return %arg0, %c0_i32 : i32, i32
  }
}

module attributes {stable_mosaic.version = 11 : i64} {
  func.func @_conv3x3_kernel(%arg0: i32, %arg1: memref<2x16x16x8xf32, #tpu.memory_space<vmem>>, %arg2: memref<72x8xf32, #tpu.memory_space<vmem>>, %arg3: memref<1x8xf32, #tpu.memory_space<vmem>>, %arg4: memref<1x8xf32, #tpu.memory_space<vmem>>, %arg5: memref<2x16x16x8xf32, #tpu.memory_space<vmem>>, %arg6: memref<1x8xf32, #tpu.memory_space<vmem>>, %arg7: memref<1x8xf32, #tpu.memory_space<vmem>>, %arg8: memref<2x18x18x8xf32, #tpu.memory_space<vmem>>) attributes {dimension_semantics = [#tpu.dimension_semantics<parallel>], iteration_bounds = array<i64: 1>, scalar_prefetch = 0 : i64, scratch_operands = 1 : i64, tpu.core_type = #tpu.core_type<tc>, window_params = [{transform_indices = @transform_0, window_bounds = array<i64: 2, 16, 16, 8>}, {pipeline_mode = #tpu.pipeline_mode<synchronous>, transform_indices = @transform_1, window_bounds = array<i64: 72, 8>}, {pipeline_mode = #tpu.pipeline_mode<synchronous>, transform_indices = @transform_2, window_bounds = array<i64: 1, 8>}, {pipeline_mode = #tpu.pipeline_mode<synchronous>, transform_indices = @transform_3, window_bounds = array<i64: 1, 8>}, {transform_indices = @transform_4, window_bounds = array<i64: 2, 16, 16, 8>}, {transform_indices = @transform_5, window_bounds = array<i64: 1, 8>}, {transform_indices = @transform_6, window_bounds = array<i64: 1, 8>}]} {
    %c0 = arith.constant 0 : index
    %c0_0 = arith.constant 0 : index
    %c0_1 = arith.constant 0 : index
    %c0_2 = arith.constant 0 : index
    %0 = vector.load %arg1[%c0, %c0_0, %c0_1, %c0_2] : memref<2x16x16x8xf32, #tpu.memory_space<vmem>>, vector<2x16x16x8xf32>
    %c0_3 = arith.constant 0 : index
    %c0_4 = arith.constant 0 : index
    %1 = vector.load %arg3[%c0_3, %c0_4] : memref<1x8xf32, #tpu.memory_space<vmem>>, vector<1x8xf32>
    %2 = vector.shape_cast %1 : vector<1x8xf32> to vector<1x1x1x8xf32>
    %c0_5 = arith.constant 0 : index
    %c0_6 = arith.constant 0 : index
    %3 = vector.load %arg4[%c0_5, %c0_6] : memref<1x8xf32, #tpu.memory_space<vmem>>, vector<1x8xf32>
    %4 = vector.shape_cast %3 : vector<1x8xf32> to vector<1x1x1x8xf32>
    %5 = vector.broadcast %2 : vector<1x1x1x8xf32> to vector<2x16x16x8xf32>
    %6 = arith.mulf %0, %5 : vector<2x16x16x8xf32>
    %7 = vector.broadcast %4 : vector<1x1x1x8xf32> to vector<2x16x16x8xf32>
    %8 = arith.addf %6, %7 : vector<2x16x16x8xf32>
    %cst = arith.constant 0.000000e+00 : f32
    %9 = vector.broadcast %cst : f32 to vector<2x16x16x8xf32>
    %10 = arith.maximumf %8, %9 : vector<2x16x16x8xf32>
    %cst_7 = arith.constant 0.000000e+00 : f32
    %11 = vector.broadcast %cst_7 : f32 to vector<2x1x18x8xf32>
    %c0_8 = arith.constant 0 : index
    %c0_9 = arith.constant 0 : index
    %c0_10 = arith.constant 0 : index
    %c0_11 = arith.constant 0 : index
    %12 = vector.load %arg8[%c0_8, %c0_9, %c0_10, %c0_11] : memref<2x18x18x8xf32, #tpu.memory_space<vmem>>, vector<2x1x18x8xf32>
    tpu.vector_store %arg8[%c0_8, %c0_9, %c0_10, %c0_11], %11 {strides = array<i32>} : memref<2x18x18x8xf32, #tpu.memory_space<vmem>>, vector<2x1x18x8xf32>,
    %c0_12 = arith.constant 0 : index
    %c17 = arith.constant 17 : index
    %c0_13 = arith.constant 0 : index
    %c0_14 = arith.constant 0 : index
    %13 = vector.load %arg8[%c0_12, %c17, %c0_13, %c0_14] : memref<2x18x18x8xf32, #tpu.memory_space<vmem>>, vector<2x1x18x8xf32>
    tpu.vector_store %arg8[%c0_12, %c17, %c0_13, %c0_14], %11 {strides = array<i32>} : memref<2x18x18x8xf32, #tpu.memory_space<vmem>>, vector<2x1x18x8xf32>,
    %cst_15 = arith.constant 0.000000e+00 : f32
    %14 = vector.broadcast %cst_15 : f32 to vector<2x18x1x8xf32>
    %c0_16 = arith.constant 0 : index
    %c0_17 = arith.constant 0 : index
    %c0_18 = arith.constant 0 : index
    %c0_19 = arith.constant 0 : index
    %15 = vector.load %arg8[%c0_16, %c0_17, %c0_18, %c0_19] : memref<2x18x18x8xf32, #tpu.memory_space<vmem>>, vector<2x18x1x8xf32>
    tpu.vector_store %arg8[%c0_16, %c0_17, %c0_18, %c0_19], %14 {strides = array<i32>} : memref<2x18x18x8xf32, #tpu.memory_space<vmem>>, vector<2x18x1x8xf32>,
    %c0_20 = arith.constant 0 : index
    %c0_21 = arith.constant 0 : index
    %c17_22 = arith.constant 17 : index
    %c0_23 = arith.constant 0 : index
    %16 = vector.load %arg8[%c0_20, %c0_21, %c17_22, %c0_23] : memref<2x18x18x8xf32, #tpu.memory_space<vmem>>, vector<2x18x1x8xf32>
    tpu.vector_store %arg8[%c0_20, %c0_21, %c17_22, %c0_23], %14 {strides = array<i32>} : memref<2x18x18x8xf32, #tpu.memory_space<vmem>>, vector<2x18x1x8xf32>,
    %c0_24 = arith.constant 0 : index
    %c1 = arith.constant 1 : index
    %c1_25 = arith.constant 1 : index
    %c0_26 = arith.constant 0 : index
    %17 = vector.load %arg8[%c0_24, %c1, %c1_25, %c0_26] : memref<2x18x18x8xf32, #tpu.memory_space<vmem>>, vector<2x16x16x8xf32>
    tpu.vector_store %arg8[%c0_24, %c1, %c1_25, %c0_26], %10 {strides = array<i32>} : memref<2x18x18x8xf32, #tpu.memory_space<vmem>>, vector<2x16x16x8xf32>,
    %c0_27 = arith.constant 0 : index
    %c0_28 = arith.constant 0 : index
    %c0_29 = arith.constant 0 : index
    %c0_30 = arith.constant 0 : index
    %18 = vector.load %arg8[%c0_27, %c0_28, %c0_29, %c0_30] : memref<2x18x18x8xf32, #tpu.memory_space<vmem>>, vector<2x16x16x8xf32>
    %19 = vector.shape_cast %18 : vector<2x16x16x8xf32> to vector<512x8xf32>
    %c0_31 = arith.constant 0 : index
    %c0_32 = arith.constant 0 : index
    %c1_33 = arith.constant 1 : index
    %c0_34 = arith.constant 0 : index
    %20 = vector.load %arg8[%c0_31, %c0_32, %c1_33, %c0_34] : memref<2x18x18x8xf32, #tpu.memory_space<vmem>>, vector<2x16x16x8xf32>
    %21 = vector.shape_cast %20 : vector<2x16x16x8xf32> to vector<512x8xf32>
    %c0_35 = arith.constant 0 : index
    %c0_36 = arith.constant 0 : index
    %c2 = arith.constant 2 : index
    %c0_37 = arith.constant 0 : index
    %22 = vector.load %arg8[%c0_35, %c0_36, %c2, %c0_37] : memref<2x18x18x8xf32, #tpu.memory_space<vmem>>, vector<2x16x16x8xf32>
    %23 = vector.shape_cast %22 : vector<2x16x16x8xf32> to vector<512x8xf32>
    %c0_38 = arith.constant 0 : index
    %c1_39 = arith.constant 1 : index
    %c0_40 = arith.constant 0 : index
    %c0_41 = arith.constant 0 : index
    %24 = vector.load %arg8[%c0_38, %c1_39, %c0_40, %c0_41] : memref<2x18x18x8xf32, #tpu.memory_space<vmem>>, vector<2x16x16x8xf32>
    %25 = vector.shape_cast %24 : vector<2x16x16x8xf32> to vector<512x8xf32>
    %c0_42 = arith.constant 0 : index
    %c1_43 = arith.constant 1 : index
    %c1_44 = arith.constant 1 : index
    %c0_45 = arith.constant 0 : index
    %26 = vector.load %arg8[%c0_42, %c1_43, %c1_44, %c0_45] : memref<2x18x18x8xf32, #tpu.memory_space<vmem>>, vector<2x16x16x8xf32>
    %27 = vector.shape_cast %26 : vector<2x16x16x8xf32> to vector<512x8xf32>
    %c0_46 = arith.constant 0 : index
    %c1_47 = arith.constant 1 : index
    %c2_48 = arith.constant 2 : index
    %c0_49 = arith.constant 0 : index
    %28 = vector.load %arg8[%c0_46, %c1_47, %c2_48, %c0_49] : memref<2x18x18x8xf32, #tpu.memory_space<vmem>>, vector<2x16x16x8xf32>
    %29 = vector.shape_cast %28 : vector<2x16x16x8xf32> to vector<512x8xf32>
    %c0_50 = arith.constant 0 : index
    %c2_51 = arith.constant 2 : index
    %c0_52 = arith.constant 0 : index
    %c0_53 = arith.constant 0 : index
    %30 = vector.load %arg8[%c0_50, %c2_51, %c0_52, %c0_53] : memref<2x18x18x8xf32, #tpu.memory_space<vmem>>, vector<2x16x16x8xf32>
    %31 = vector.shape_cast %30 : vector<2x16x16x8xf32> to vector<512x8xf32>
    %c0_54 = arith.constant 0 : index
    %c2_55 = arith.constant 2 : index
    %c1_56 = arith.constant 1 : index
    %c0_57 = arith.constant 0 : index
    %32 = vector.load %arg8[%c0_54, %c2_55, %c1_56, %c0_57] : memref<2x18x18x8xf32, #tpu.memory_space<vmem>>, vector<2x16x16x8xf32>
    %33 = vector.shape_cast %32 : vector<2x16x16x8xf32> to vector<512x8xf32>
    %c0_58 = arith.constant 0 : index
    %c2_59 = arith.constant 2 : index
    %c2_60 = arith.constant 2 : index
    %c0_61 = arith.constant 0 : index
    %34 = vector.load %arg8[%c0_58, %c2_59, %c2_60, %c0_61] : memref<2x18x18x8xf32, #tpu.memory_space<vmem>>, vector<2x16x16x8xf32>
    %35 = vector.shape_cast %34 : vector<2x16x16x8xf32> to vector<512x8xf32>
    %36 = tpu.concatenate %19, %21, %23, %25, %27, %29, %31, %33, %35 in 1 : vector<512x8xf32>, vector<512x8xf32>, vector<512x8xf32>, vector<512x8xf32>, vector<512x8xf32>, vector<512x8xf32>, vector<512x8xf32>, vector<512x8xf32>, vector<512x8xf32> -> vector<512x72xf32>
    %c0_62 = arith.constant 0 : index
    %c0_63 = arith.constant 0 : index
    %37 = vector.load %arg2[%c0_62, %c0_63] : memref<72x8xf32, #tpu.memory_space<vmem>>, vector<72x8xf32>
    %cst_64 = arith.constant dense<0.000000e+00> : vector<512x8xf32>
    %38 = tpu.matmul %36, %37, %cst_64 {dimension_numbers = #tpu.dot_dimension_numbers<[1], [0], [0], [1], [0, 0, 1, 1], [], []>} : vector<512x72xf32>, vector<72x8xf32>, vector<512x8xf32> -> vector<512x8xf32>
    %39 = vector.shape_cast %38 : vector<512x8xf32> to vector<2x16x16x8xf32>
    %c0_65 = arith.constant 0 : index
    %c0_66 = arith.constant 0 : index
    %c0_67 = arith.constant 0 : index
    %c0_68 = arith.constant 0 : index
    %40 = vector.load %arg5[%c0_65, %c0_66, %c0_67, %c0_68] : memref<2x16x16x8xf32, #tpu.memory_space<vmem>>, vector<2x16x16x8xf32>
    tpu.vector_store %arg5[%c0_65, %c0_66, %c0_67, %c0_68], %39 {strides = array<i32>} : memref<2x16x16x8xf32, #tpu.memory_space<vmem>>, vector<2x16x16x8xf32>,
    %cst_69 = arith.constant dense<0.000000e+00> : vector<8xf32>
    %41 = vector.multi_reduction <add>, %38, %cst_69 [0] : vector<512x8xf32> to vector<8xf32>
    %42 = vector.shape_cast %41 : vector<8xf32> to vector<1x8xf32>
    %c0_70 = arith.constant 0 : index
    %c0_71 = arith.constant 0 : index
    %43 = vector.load %arg6[%c0_70, %c0_71] : memref<1x8xf32, #tpu.memory_space<vmem>>, vector<1x8xf32>
    tpu.vector_store %arg6[%c0_70, %c0_71], %42 {strides = array<i32>} : memref<1x8xf32, #tpu.memory_space<vmem>>, vector<1x8xf32>,
    %44 = arith.mulf %38, %38 : vector<512x8xf32>
    %cst_72 = arith.constant dense<0.000000e+00> : vector<8xf32>
    %45 = vector.multi_reduction <add>, %44, %cst_72 [0] : vector<512x8xf32> to vector<8xf32>
    %46 = vector.shape_cast %45 : vector<8xf32> to vector<1x8xf32>
    %c0_73 = arith.constant 0 : index
    %c0_74 = arith.constant 0 : index
    %47 = vector.load %arg7[%c0_73, %c0_74] : memref<1x8xf32, #tpu.memory_space<vmem>>, vector<1x8xf32>
    tpu.vector_store %arg7[%c0_73, %c0_74], %46 {strides = array<i32>} : memref<1x8xf32, #tpu.memory_space<vmem>>, vector<1x8xf32>,
    return
  }
  func.func @transform_0(%arg0: i32) -> (i32, i32, i32, i32) {
    %c0_i32 = arith.constant 0 : i32
    %c0_i32_0 = arith.constant 0 : i32
    %c0_i32_1 = arith.constant 0 : i32
    %c0_i32_2 = arith.constant 0 : i32
    return %arg0, %c0_i32, %c0_i32_0, %c0_i32_1 : i32, i32, i32, i32
  }
  func.func @transform_1(%arg0: i32) -> (i32, i32) {
    %c0_i32 = arith.constant 0 : i32
    %c0_i32_0 = arith.constant 0 : i32
    %c0_i32_1 = arith.constant 0 : i32
    return %c0_i32, %c0_i32_0 : i32, i32
  }
  func.func @transform_2(%arg0: i32) -> (i32, i32) {
    %c0_i32 = arith.constant 0 : i32
    %c0_i32_0 = arith.constant 0 : i32
    %c0_i32_1 = arith.constant 0 : i32
    return %c0_i32, %c0_i32_0 : i32, i32
  }
  func.func @transform_3(%arg0: i32) -> (i32, i32) {
    %c0_i32 = arith.constant 0 : i32
    %c0_i32_0 = arith.constant 0 : i32
    %c0_i32_1 = arith.constant 0 : i32
    return %c0_i32, %c0_i32_0 : i32, i32
  }
  func.func @transform_4(%arg0: i32) -> (i32, i32, i32, i32) {
    %c0_i32 = arith.constant 0 : i32
    %c0_i32_0 = arith.constant 0 : i32
    %c0_i32_1 = arith.constant 0 : i32
    %c0_i32_2 = arith.constant 0 : i32
    return %arg0, %c0_i32, %c0_i32_0, %c0_i32_1 : i32, i32, i32, i32
  }
  func.func @transform_5(%arg0: i32) -> (i32, i32) {
    %c0_i32 = arith.constant 0 : i32
    %c0_i32_0 = arith.constant 0 : i32
    return %arg0, %c0_i32 : i32, i32
  }
  func.func @transform_6(%arg0: i32) -> (i32, i32) {
    %c0_i32 = arith.constant 0 : i32
    %c0_i32_0 = arith.constant 0 : i32
    return %arg0, %c0_i32 : i32, i32
  }
}

</mosaic_0001>

<llo_original>
// kernel: conv_block_forward.5
$region0: #{conv_block_forward.5}
  #allocation0 [shape = 'u32[]', space=smem, size = 0x4, offset = 0x4, fixed_abs, tag = 'smem constant byte address 0x4 - core index']
  #allocation1 [shape = 'u32[72,128]{1,0:T(1,128)}', space=vmem, size = 0x9000, scoped, tag = 'internal scratch']
  %s0 = inlined_call_operand.vmem [shape: f32[2,16,16,8], index: 0, kind: input, shape index: {}]
  %s1 = inlined_call_operand.vmem [shape: f32[1,8], index: 1, kind: input, shape index: {}]
  %s2 = inlined_call_operand.vmem [shape: f32[1,8], index: 2, kind: input, shape index: {}]
  %s3 = inlined_call_operand.vmem [shape: f32[2,16,16,8], index: 3, kind: output, shape index: {}]
  %s4 = sld [smem:[#allocation0]]
  $region22: #{conv_block_forward.5} parent=0
    _
  %s6 = ssub.s32 1, %s4
  %s7 = scalar_select 0, %s6, %s4
  // Predicated region
  $region2: #{conv_block_forward.5} parent=0 // pred_check
    _
  $region3: #{conv_block_forward.5} parent=0 // pred_check_branch
    %9 = sbr.rel (0) target = $region5
  $region4: #{conv_block_forward.5} parent=0 // pred_region
    _
  $region5: #{conv_block_forward.5} parent=0 // pred_fallthru
    _
  // Predicated region
  $region6: #{conv_block_forward.5} parent=0 // pred_check
    _
  $region7: #{conv_block_forward.5} parent=0 // pred_check_branch
    %11 = sbr.rel (0) target = $region9
  $region8: #{conv_block_forward.5} parent=0 // pred_region
    _
  $region9: #{conv_block_forward.5} parent=0 // pred_fallthru
    _
  // Predicated region
  $region10: #{conv_block_forward.5} parent=0 // pred_check
    _
  $region11: #{conv_block_forward.5} parent=0 // pred_check_branch
    %13 = sbr.rel (0) target = $region13
  $region12: #{conv_block_forward.5} parent=0 // pred_region
    _
  $region13: #{conv_block_forward.5} parent=0 // pred_fallthru
    _
  %v14 = vld [vmem:[%s0] sm:$0xff]
  %v15 = vld [vmem:[%s0 + $0x8] sm:$0xff]
  %v16 = vld [vmem:[%s0 + $0x10] sm:$0xff]
  %v17 = vld [vmem:[%s0 + $0x18] sm:$0xff]
  %v18 = vld [vmem:[%s0 + $0x20] sm:$0xff]
  %v19 = vld [vmem:[%s0 + $0x28] sm:$0xff]
  %v20 = vld [vmem:[%s0 + $0x30] sm:$0xff]
  %v21 = vld [vmem:[%s0 + $0x38] sm:$0xff]
  %v22 = vld [vmem:[%s0 + $0x40] sm:$0xff]
  %v23 = vld [vmem:[%s0 + $0x48] sm:$0xff]
  %v24 = vld [vmem:[%s0 + $0x50] sm:$0xff]
  %v25 = vld [vmem:[%s0 + $0x58] sm:$0xff]
  %v26 = vld [vmem:[%s0 + $0x60] sm:$0xff]
  %v27 = vld [vmem:[%s0 + $0x68] sm:$0xff]
  %v28 = vld [vmem:[%s0 + $0x70] sm:$0xff]
  %v29 = vld [vmem:[%s0 + $0x78] sm:$0xff]
  %v30 = vld [vmem:[%s0 + $0x80] sm:$0xff]
  %v31 = vld [vmem:[%s0 + $0x88] sm:$0xff]
  %v32 = vld [vmem:[%s0 + $0x90] sm:$0xff]
  %v33 = vld [vmem:[%s0 + $0x98] sm:$0xff]
  %v34 = vld [vmem:[%s0 + $0xa0] sm:$0xff]
  %v35 = vld [vmem:[%s0 + $0xa8] sm:$0xff]
  %v36 = vld [vmem:[%s0 + $0xb0] sm:$0xff]
  %v37 = vld [vmem:[%s0 + $0xb8] sm:$0xff]
  %v38 = vld [vmem:[%s0 + $0xc0] sm:$0xff]
  %v39 = vld [vmem:[%s0 + $0xc8] sm:$0xff]
  %v40 = vld [vmem:[%s0 + $0xd0] sm:$0xff]
  %v41 = vld [vmem:[%s0 + $0xd8] sm:$0xff]
  %v42 = vld [vmem:[%s0 + $0xe0] sm:$0xff]
  %v43 = vld [vmem:[%s0 + $0xe8] sm:$0xff]
  %v44 = vld [vmem:[%s0 + $0xf0] sm:$0xff]
  %v45 = vld [vmem:[%s0 + $0xf8] sm:$0xff]
  %v46 = vld [vmem:[%s0 + $0x100] sm:$0xff]
  %v47 = vld [vmem:[%s0 + $0x108] sm:$0xff]
  %v48 = vld [vmem:[%s0 + $0x110] sm:$0xff]
  %v49 = vld [vmem:[%s0 + $0x118] sm:$0xff]
  %v50 = vld [vmem:[%s0 + $0x120] sm:$0xff]
  %v51 = vld [vmem:[%s0 + $0x128] sm:$0xff]
  %v52 = vld [vmem:[%s0 + $0x130] sm:$0xff]
  %v53 = vld [vmem:[%s0 + $0x138] sm:$0xff]
  %v54 = vld [vmem:[%s0 + $0x140] sm:$0xff]
  %v55 = vld [vmem:[%s0 + $0x148] sm:$0xff]
  %v56 = vld [vmem:[%s0 + $0x150] sm:$0xff]
  %v57 = vld [vmem:[%s0 + $0x158] sm:$0xff]
  %v58 = vld [vmem:[%s0 + $0x160] sm:$0xff]
  %v59 = vld [vmem:[%s0 + $0x168] sm:$0xff]
  %v60 = vld [vmem:[%s0 + $0x170] sm:$0xff]
  %v61 = vld [vmem:[%s0 + $0x178] sm:$0xff]
  %v62 = vld [vmem:[%s0 + $0x180] sm:$0xff]
  %v63 = vld [vmem:[%s0 + $0x188] sm:$0xff]
  %v64 = vld [vmem:[%s0 + $0x190] sm:$0xff]
  %v65 = vld [vmem:[%s0 + $0x198] sm:$0xff]
  %v66 = vld [vmem:[%s0 + $0x1a0] sm:$0xff]
  %v67 = vld [vmem:[%s0 + $0x1a8] sm:$0xff]
  %v68 = vld [vmem:[%s0 + $0x1b0] sm:$0xff]
  %v69 = vld [vmem:[%s0 + $0x1b8] sm:$0xff]
  %v70 = vld [vmem:[%s0 + $0x1c0] sm:$0xff]
  %v71 = vld [vmem:[%s0 + $0x1c8] sm:$0xff]
  %v72 = vld [vmem:[%s0 + $0x1d0] sm:$0xff]
  %v73 = vld [vmem:[%s0 + $0x1d8] sm:$0xff]
  %v74 = vld [vmem:[%s0 + $0x1e0] sm:$0xff]
  %v75 = vld [vmem:[%s0 + $0x1e8] sm:$0xff]
  %v76 = vld [vmem:[%s0 + $0x1f0] sm:$0xff]
  %v77 = vld [vmem:[%s0 + $0x1f8] sm:$0xff]
  %v78 = vld [vmem:[%s1] sm:$0x1]
  %v80 = vperm.slane %v78, 0
  %v82 = vmul.f32 %v14, %v80
  %v83 = vmul.f32 %v15, %v80
  %v84 = vmul.f32 %v16, %v80
  %v85 = vmul.f32 %v17, %v80
  %v86 = vmul.f32 %v18, %v80
  %v87 = vmul.f32 %v19, %v80
  %v88 = vmul.f32 %v20, %v80
  %v89 = vmul.f32 %v21, %v80
  %v90 = vmul.f32 %v22, %v80
  %v91 = vmul.f32 %v23, %v80
  %v92 = vmul.f32 %v24, %v80
  %v93 = vmul.f32 %v25, %v80
  %v94 = vmul.f32 %v26, %v80
  %v95 = vmul.f32 %v27, %v80
  %v96 = vmul.f32 %v28, %v80
  %v97 = vmul.f32 %v29, %v80
  %v98 = vmul.f32 %v30, %v80
  %v99 = vmul.f32 %v31, %v80
  %v100 = vmul.f32 %v32, %v80
  %v101 = vmul.f32 %v33, %v80
  %v102 = vmul.f32 %v34, %v80
  %v103 = vmul.f32 %v35, %v80
  %v104 = vmul.f32 %v36, %v80
  %v105 = vmul.f32 %v37, %v80
  %v106 = vmul.f32 %v38, %v80
  %v107 = vmul.f32 %v39, %v80
  %v108 = vmul.f32 %v40, %v80
  %v109 = vmul.f32 %v41, %v80
  %v110 = vmul.f32 %v42, %v80
  %v111 = vmul.f32 %v43, %v80
  %v112 = vmul.f32 %v44, %v80
  %v113 = vmul.f32 %v45, %v80
  %v114 = vmul.f32 %v46, %v80
  %v115 = vmul.f32 %v47, %v80
  %v116 = vmul.f32 %v48, %v80
  %v117 = vmul.f32 %v49, %v80
  %v118 = vmul.f32 %v50, %v80
  %v119 = vmul.f32 %v51, %v80
  %v120 = vmul.f32 %v52, %v80
  %v121 = vmul.f32 %v53, %v80
  %v122 = vmul.f32 %v54, %v80
  %v123 = vmul.f32 %v55, %v80
  %v124 = vmul.f32 %v56, %v80
  %v125 = vmul.f32 %v57, %v80
  %v126 = vmul.f32 %v58, %v80
  %v127 = vmul.f32 %v59, %v80
  %v128 = vmul.f32 %v60, %v80
  %v129 = vmul.f32 %v61, %v80
  %v130 = vmul.f32 %v62, %v80
  %v131 = vmul.f32 %v63, %v80
  %v132 = vmul.f32 %v64, %v80
  %v133 = vmul.f32 %v65, %v80
  %v134 = vmul.f32 %v66, %v80
  %v135 = vmul.f32 %v67, %v80
  %v136 = vmul.f32 %v68, %v80
  %v137 = vmul.f32 %v69, %v80
  %v138 = vmul.f32 %v70, %v80
  %v139 = vmul.f32 %v71, %v80
  %v140 = vmul.f32 %v72, %v80
  %v141 = vmul.f32 %v73, %v80
  %v142 = vmul.f32 %v74, %v80
  %v143 = vmul.f32 %v75, %v80
  %v144 = vmul.f32 %v76, %v80
  %v145 = vmul.f32 %v77, %v80
  %v146 = vld [vmem:[%s2] sm:$0x1]
  %v148 = vperm.slane %v146, 0
  %v150 = vadd.f32 %v82, %v148
  %v151 = vadd.f32 %v83, %v148
  %v152 = vadd.f32 %v84, %v148
  %v153 = vadd.f32 %v85, %v148
  %v154 = vadd.f32 %v86, %v148
  %v155 = vadd.f32 %v87, %v148
  %v156 = vadd.f32 %v88, %v148
  %v157 = vadd.f32 %v89, %v148
  %v158 = vadd.f32 %v90, %v148
  %v159 = vadd.f32 %v91, %v148
  %v160 = vadd.f32 %v92, %v148
  %v161 = vadd.f32 %v93, %v148
  %v162 = vadd.f32 %v94, %v148
  %v163 = vadd.f32 %v95, %v148
  %v164 = vadd.f32 %v96, %v148
  %v165 = vadd.f32 %v97, %v148
  %v166 = vadd.f32 %v98, %v148
  %v167 = vadd.f32 %v99, %v148
  %v168 = vadd.f32 %v100, %v148
  %v169 = vadd.f32 %v101, %v148
  %v170 = vadd.f32 %v102, %v148
  %v171 = vadd.f32 %v103, %v148
  %v172 = vadd.f32 %v104, %v148
  %v173 = vadd.f32 %v105, %v148
  %v174 = vadd.f32 %v106, %v148
  %v175 = vadd.f32 %v107, %v148
  %v176 = vadd.f32 %v108, %v148
  %v177 = vadd.f32 %v109, %v148
  %v178 = vadd.f32 %v110, %v148
  %v179 = vadd.f32 %v111, %v148
  %v180 = vadd.f32 %v112, %v148
  %v181 = vadd.f32 %v113, %v148
  %v182 = vadd.f32 %v114, %v148
  %v183 = vadd.f32 %v115, %v148
  %v184 = vadd.f32 %v116, %v148
  %v185 = vadd.f32 %v117, %v148
  %v186 = vadd.f32 %v118, %v148
  %v187 = vadd.f32 %v119, %v148
  %v188 = vadd.f32 %v120, %v148
  %v189 = vadd.f32 %v121, %v148
  %v190 = vadd.f32 %v122, %v148
  %v191 = vadd.f32 %v123, %v148
  %v192 = vadd.f32 %v124, %v148
  %v193 = vadd.f32 %v125, %v148
  %v194 = vadd.f32 %v126, %v148
  %v195 = vadd.f32 %v127, %v148
  %v196 = vadd.f32 %v128, %v148
  %v197 = vadd.f32 %v129, %v148
  %v198 = vadd.f32 %v130, %v148
  %v199 = vadd.f32 %v131, %v148
  %v200 = vadd.f32 %v132, %v148
  %v201 = vadd.f32 %v133, %v148
  %v202 = vadd.f32 %v134, %v148
  %v203 = vadd.f32 %v135, %v148
  %v204 = vadd.f32 %v136, %v148
  %v205 = vadd.f32 %v137, %v148
  %v206 = vadd.f32 %v138, %v148
  %v207 = vadd.f32 %v139, %v148
  %v208 = vadd.f32 %v140, %v148
  %v209 = vadd.f32 %v141, %v148
  %v210 = vadd.f32 %v142, %v148
  %v211 = vadd.f32 %v143, %v148
  %v212 = vadd.f32 %v144, %v148
  %v213 = vadd.f32 %v145, %v148
  %v214 = vmax.f32 %v150, 0.0
  %v215 = vmax.f32 %v151, 0.0
  %v216 = vmax.f32 %v152, 0.0
  %v217 = vmax.f32 %v153, 0.0
  %v218 = vmax.f32 %v154, 0.0
  %v219 = vmax.f32 %v155, 0.0
  %v220 = vmax.f32 %v156, 0.0
  %v221 = vmax.f32 %v157, 0.0
  %v222 = vmax.f32 %v158, 0.0
  %v223 = vmax.f32 %v159, 0.0
  %v224 = vmax.f32 %v160, 0.0
  %v225 = vmax.f32 %v161, 0.0
  %v226 = vmax.f32 %v162, 0.0
  %v227 = vmax.f32 %v163, 0.0
  %v228 = vmax.f32 %v164, 0.0
  %v229 = vmax.f32 %v165, 0.0
  %v230 = vmax.f32 %v166, 0.0
  %v231 = vmax.f32 %v167, 0.0
  %v232 = vmax.f32 %v168, 0.0
  %v233 = vmax.f32 %v169, 0.0
  %v234 = vmax.f32 %v170, 0.0
  %v235 = vmax.f32 %v171, 0.0
  %v236 = vmax.f32 %v172, 0.0
  %v237 = vmax.f32 %v173, 0.0
  %v238 = vmax.f32 %v174, 0.0
  %v239 = vmax.f32 %v175, 0.0
  %v240 = vmax.f32 %v176, 0.0
  %v241 = vmax.f32 %v177, 0.0
  %v242 = vmax.f32 %v178, 0.0
  %v243 = vmax.f32 %v179, 0.0
  %v244 = vmax.f32 %v180, 0.0
  %v245 = vmax.f32 %v181, 0.0
  %v246 = vmax.f32 %v182, 0.0
  %v247 = vmax.f32 %v183, 0.0
  %v248 = vmax.f32 %v184, 0.0
  %v249 = vmax.f32 %v185, 0.0
  %v250 = vmax.f32 %v186, 0.0
  %v251 = vmax.f32 %v187, 0.0
  %v252 = vmax.f32 %v188, 0.0
  %v253 = vmax.f32 %v189, 0.0
  %v254 = vmax.f32 %v190, 0.0
  %v255 = vmax.f32 %v191, 0.0
  %v256 = vmax.f32 %v192, 0.0
  %v257 = vmax.f32 %v193, 0.0
  %v258 = vmax.f32 %v194, 0.0
  %v259 = vmax.f32 %v195, 0.0
  %v260 = vmax.f32 %v196, 0.0
  %v261 = vmax.f32 %v197, 0.0
  %v262 = vmax.f32 %v198, 0.0
  %v263 = vmax.f32 %v199, 0.0
  %v264 = vmax.f32 %v200, 0.0
  %v265 = vmax.f32 %v201, 0.0
  %v266 = vmax.f32 %v202, 0.0
  %v267 = vmax.f32 %v203, 0.0
  %v268 = vmax.f32 %v204, 0.0
  %v269 = vmax.f32 %v205, 0.0
  %v270 = vmax.f32 %v206, 0.0
  %v271 = vmax.f32 %v207, 0.0
  %v272 = vmax.f32 %v208, 0.0
  %v273 = vmax.f32 %v209, 0.0
  %v274 = vmax.f32 %v210, 0.0
  %v275 = vmax.f32 %v211, 0.0
  %v276 = vmax.f32 %v212, 0.0
  %v277 = vmax.f32 %v213, 0.0
  %vm278 = vcmask 64512
  %279 = vst.msk [vmem:[%s3] sm:$0xff] %vm278, %v214
  %280 = vst.msk [vmem:[%s3 + $0x8] sm:$0xff] %vm278, %v215
  %281 = vst.msk [vmem:[%s3 + $0x10] sm:$0xff] %vm278, %v216
  %282 = vst.msk [vmem:[%s3 + $0x18] sm:$0xff] %vm278, %v217
  %283 = vst.msk [vmem:[%s3 + $0x20] sm:$0xff] %vm278, %v218
  %284 = vst.msk [vmem:[%s3 + $0x28] sm:$0xff] %vm278, %v219
  %285 = vst.msk [vmem:[%s3 + $0x30] sm:$0xff] %vm278, %v220
  %286 = vst.msk [vmem:[%s3 + $0x38] sm:$0xff] %vm278, %v221
  %287 = vst.msk [vmem:[%s3 + $0x40] sm:$0xff] %vm278, %v222
  %288 = vst.msk [vmem:[%s3 + $0x48] sm:$0xff] %vm278, %v223
  %289 = vst.msk [vmem:[%s3 + $0x50] sm:$0xff] %vm278, %v224
  %290 = vst.msk [vmem:[%s3 + $0x58] sm:$0xff] %vm278, %v225
  %291 = vst.msk [vmem:[%s3 + $0x60] sm:$0xff] %vm278, %v226
  %292 = vst.msk [vmem:[%s3 + $0x68] sm:$0xff] %vm278, %v227
  %293 = vst.msk [vmem:[%s3 + $0x70] sm:$0xff] %vm278, %v228
  %294 = vst.msk [vmem:[%s3 + $0x78] sm:$0xff] %vm278, %v229
  %295 = vst.msk [vmem:[%s3 + $0x80] sm:$0xff] %vm278, %v230
  %296 = vst.msk [vmem:[%s3 + $0x88] sm:$0xff] %vm278, %v231
  %297 = vst.msk [vmem:[%s3 + $0x90] sm:$0xff] %vm278, %v232
  %298 = vst.msk [vmem:[%s3 + $0x98] sm:$0xff] %vm278, %v233
  %299 = vst.msk [vmem:[%s3 + $0xa0] sm:$0xff] %vm278, %v234
  %300 = vst.msk [vmem:[%s3 + $0xa8] sm:$0xff] %vm278, %v235
  %301 = vst.msk [vmem:[%s3 + $0xb0] sm:$0xff] %vm278, %v236
  %302 = vst.msk [vmem:[%s3 + $0xb8] sm:$0xff] %vm278, %v237
  %303 = vst.msk [vmem:[%s3 + $0xc0] sm:$0xff] %vm278, %v238
  %304 = vst.msk [vmem:[%s3 + $0xc8] sm:$0xff] %vm278, %v239
  %305 = vst.msk [vmem:[%s3 + $0xd0] sm:$0xff] %vm278, %v240
  %306 = vst.msk [vmem:[%s3 + $0xd8] sm:$0xff] %vm278, %v241
  %307 = vst.msk [vmem:[%s3 + $0xe0] sm:$0xff] %vm278, %v242
  %308 = vst.msk [vmem:[%s3 + $0xe8] sm:$0xff] %vm278, %v243
  %309 = vst.msk [vmem:[%s3 + $0xf0] sm:$0xff] %vm278, %v244
  %310 = vst.msk [vmem:[%s3 + $0xf8] sm:$0xff] %vm278, %v245
  %311 = vst.msk [vmem:[%s3 + $0x100] sm:$0xff] %vm278, %v246
  %312 = vst.msk [vmem:[%s3 + $0x108] sm:$0xff] %vm278, %v247
  %313 = vst.msk [vmem:[%s3 + $0x110] sm:$0xff] %vm278, %v248
  %314 = vst.msk [vmem:[%s3 + $0x118] sm:$0xff] %vm278, %v249
  %315 = vst.msk [vmem:[%s3 + $0x120] sm:$0xff] %vm278, %v250
  %316 = vst.msk [vmem:[%s3 + $0x128] sm:$0xff] %vm278, %v251
  %317 = vst.msk [vmem:[%s3 + $0x130] sm:$0xff] %vm278, %v252
  %318 = vst.msk [vmem:[%s3 + $0x138] sm:$0xff] %vm278, %v253
  %319 = vst.msk [vmem:[%s3 + $0x140] sm:$0xff] %vm278, %v254
  %320 = vst.msk [vmem:[%s3 + $0x148] sm:$0xff] %vm278, %v255
  %321 = vst.msk [vmem:[%s3 + $0x150] sm:$0xff] %vm278, %v256
  %322 = vst.msk [vmem:[%s3 + $0x158] sm:$0xff] %vm278, %v257
  %323 = vst.msk [vmem:[%s3 + $0x160] sm:$0xff] %vm278, %v258
  %324 = vst.msk [vmem:[%s3 + $0x168] sm:$0xff] %vm278, %v259
  %325 = vst.msk [vmem:[%s3 + $0x170] sm:$0xff] %vm278, %v260
  %326 = vst.msk [vmem:[%s3 + $0x178] sm:$0xff] %vm278, %v261
  %327 = vst.msk [vmem:[%s3 + $0x180] sm:$0xff] %vm278, %v262
  %328 = vst.msk [vmem:[%s3 + $0x188] sm:$0xff] %vm278, %v263
  %329 = vst.msk [vmem:[%s3 + $0x190] sm:$0xff] %vm278, %v264
  %330 = vst.msk [vmem:[%s3 + $0x198] sm:$0xff] %vm278, %v265
  %331 = vst.msk [vmem:[%s3 + $0x1a0] sm:$0xff] %vm278, %v266
  %332 = vst.msk [vmem:[%s3 + $0x1a8] sm:$0xff] %vm278, %v267
  %333 = vst.msk [vmem:[%s3 + $0x1b0] sm:$0xff] %vm278, %v268
  %334 = vst.msk [vmem:[%s3 + $0x1b8] sm:$0xff] %vm278, %v269
  %335 = vst.msk [vmem:[%s3 + $0x1c0] sm:$0xff] %vm278, %v270
  %336 = vst.msk [vmem:[%s3 + $0x1c8] sm:$0xff] %vm278, %v271
  %337 = vst.msk [vmem:[%s3 + $0x1d0] sm:$0xff] %vm278, %v272
  %338 = vst.msk [vmem:[%s3 + $0x1d8] sm:$0xff] %vm278, %v273
  %339 = vst.msk [vmem:[%s3 + $0x1e0] sm:$0xff] %vm278, %v274
  %340 = vst.msk [vmem:[%s3 + $0x1e8] sm:$0xff] %vm278, %v275
  %341 = vst.msk [vmem:[%s3 + $0x1f0] sm:$0xff] %vm278, %v276
  %342 = vst.msk [vmem:[%s3 + $0x1f8] sm:$0xff] %vm278, %v277
  // Predicated region
  $region14: #{conv_block_forward.5} parent=0 // pred_check
    _
  $region15: #{conv_block_forward.5} parent=0 // pred_check_branch
    %344 = sbr.rel (0) target = $region17
  $region16: #{conv_block_forward.5} parent=0 // pred_region
    _
  $region17: #{conv_block_forward.5} parent=0 // pred_fallthru
    _
  // Predicated region
  $region18: #{conv_block_forward.5} parent=0 // pred_check
    _
  $region19: #{conv_block_forward.5} parent=0 // pred_check_branch
    %346 = sbr.rel (0) target = $region21
  $region20: #{conv_block_forward.5} parent=0 // pred_region
    _
  $region21: #{conv_block_forward.5} parent=0 // pred_fallthru
    _

// kernel: conv_block_forward.4
$region0: #{conv_block_forward.4}
  #allocation0 [shape = 'u32[]', space=smem, size = 0x4, offset = 0x4, fixed_abs, tag = 'smem constant byte address 0x4 - core index']
  #allocation1 [shape = 'u32[72,128]{1,0:T(1,128)}', space=vmem, size = 0x9000, scoped, tag = 'internal scratch']
  #allocation2 [shape = 'f32[2,18,18,8]{3,2,1,0:T(8,128)}', space=vmem, size = 0x6c000, scoped, tag = 'scratch operand']
  %s0 = inlined_call_operand.vmem [shape: f32[2,16,16,8], index: 0, kind: input, shape index: {}]
  %s1 = inlined_call_operand.vmem [shape: f32[72,8], index: 1, kind: input, shape index: {}]
  %s2 = inlined_call_operand.vmem [shape: f32[1,8], index: 2, kind: input, shape index: {}]
  %s3 = inlined_call_operand.vmem [shape: f32[1,8], index: 3, kind: input, shape index: {}]
  %s4 = inlined_call_operand.vmem [shape: f32[2,16,16,8], index: 4, kind: output, shape index: {0}]
  %s5 = inlined_call_operand.vmem [shape: f32[1,8], index: 5, kind: output, shape index: {1}]
  %s6 = inlined_call_operand.vmem [shape: f32[1,8], index: 6, kind: output, shape index: {2}]
  %7 = xla_tuple %s4, %s5, %s6
  %s8 = sld [smem:[#allocation0]]
  $region42: #{conv_block_forward.4} parent=0
    _
  %s10 = ssub.s32 1, %s8
  %s11 = scalar_select 0, %s10, %s8
  // Predicated region
  $region2: #{conv_block_forward.4} parent=0 // pred_check
    _
  $region3: #{conv_block_forward.4} parent=0 // pred_check_branch
    %13 = sbr.rel (0) target = $region5
  $region4: #{conv_block_forward.4} parent=0 // pred_region
    _
  $region5: #{conv_block_forward.4} parent=0 // pred_fallthru
    _
  // Predicated region
  $region6: #{conv_block_forward.4} parent=0 // pred_check
    _
  $region7: #{conv_block_forward.4} parent=0 // pred_check_branch
    %15 = sbr.rel (0) target = $region9
  $region8: #{conv_block_forward.4} parent=0 // pred_region
    _
  $region9: #{conv_block_forward.4} parent=0 // pred_fallthru
    _
  // Predicated region
  $region10: #{conv_block_forward.4} parent=0 // pred_check
    _
  $region11: #{conv_block_forward.4} parent=0 // pred_check_branch
    %17 = sbr.rel (0) target = $region13
  $region12: #{conv_block_forward.4} parent=0 // pred_region
    _
  $region13: #{conv_block_forward.4} parent=0 // pred_fallthru
    _
  // Predicated region
  $region14: #{conv_block_forward.4} parent=0 // pred_check
    _
  $region15: #{conv_block_forward.4} parent=0 // pred_check_branch
    %19 = sbr.rel (0) target = $region17
  $region16: #{conv_block_forward.4} parent=0 // pred_region
    _
  $region17: #{conv_block_forward.4} parent=0 // pred_fallthru
    _
  %v20 = vld [vmem:[%s0] sm:$0xff]
  %v21 = vld [vmem:[%s0 + $0x8] sm:$0xff]
  %v22 = vld [vmem:[%s0 + $0x10] sm:$0xff]
  %v23 = vld [vmem:[%s0 + $0x18] sm:$0xff]
  %v24 = vld [vmem:[%s0 + $0x20] sm:$0xff]
  %v25 = vld [vmem:[%s0 + $0x28] sm:$0xff]
  %v26 = vld [vmem:[%s0 + $0x30] sm:$0xff]
  %v27 = vld [vmem:[%s0 + $0x38] sm:$0xff]
  %v28 = vld [vmem:[%s0 + $0x40] sm:$0xff]
  %v29 = vld [vmem:[%s0 + $0x48] sm:$0xff]
  %v30 = vld [vmem:[%s0 + $0x50] sm:$0xff]
  %v31 = vld [vmem:[%s0 + $0x58] sm:$0xff]
  %v32 = vld [vmem:[%s0 + $0x60] sm:$0xff]
  %v33 = vld [vmem:[%s0 + $0x68] sm:$0xff]
  %v34 = vld [vmem:[%s0 + $0x70] sm:$0xff]
  %v35 = vld [vmem:[%s0 + $0x78] sm:$0xff]
  %v36 = vld [vmem:[%s0 + $0x80] sm:$0xff]
  %v37 = vld [vmem:[%s0 + $0x88] sm:$0xff]
  %v38 = vld [vmem:[%s0 + $0x90] sm:$0xff]
  %v39 = vld [vmem:[%s0 + $0x98] sm:$0xff]
  %v40 = vld [vmem:[%s0 + $0xa0] sm:$0xff]
  %v41 = vld [vmem:[%s0 + $0xa8] sm:$0xff]
  %v42 = vld [vmem:[%s0 + $0xb0] sm:$0xff]
  %v43 = vld [vmem:[%s0 + $0xb8] sm:$0xff]
  %v44 = vld [vmem:[%s0 + $0xc0] sm:$0xff]
  %v45 = vld [vmem:[%s0 + $0xc8] sm:$0xff]
  %v46 = vld [vmem:[%s0 + $0xd0] sm:$0xff]
  %v47 = vld [vmem:[%s0 + $0xd8] sm:$0xff]
  %v48 = vld [vmem:[%s0 + $0xe0] sm:$0xff]
  %v49 = vld [vmem:[%s0 + $0xe8] sm:$0xff]
  %v50 = vld [vmem:[%s0 + $0xf0] sm:$0xff]
  %v51 = vld [vmem:[%s0 + $0xf8] sm:$0xff]
  %v52 = vld [vmem:[%s0 + $0x100] sm:$0xff]
  %v53 = vld [vmem:[%s0 + $0x108] sm:$0xff]
  %v54 = vld [vmem:[%s0 + $0x110] sm:$0xff]
  %v55 = vld [vmem:[%s0 + $0x118] sm:$0xff]
  %v56 = vld [vmem:[%s0 + $0x120] sm:$0xff]
  %v57 = vld [vmem:[%s0 + $0x128] sm:$0xff]
  %v58 = vld [vmem:[%s0 + $0x130] sm:$0xff]
  %v59 = vld [vmem:[%s0 + $0x138] sm:$0xff]
  %v60 = vld [vmem:[%s0 + $0x140] sm:$0xff]
  %v61 = vld [vmem:[%s0 + $0x148] sm:$0xff]
  %v62 = vld [vmem:[%s0 + $0x150] sm:$0xff]
  %v63 = vld [vmem:[%s0 + $0x158] sm:$0xff]
  %v64 = vld [vmem:[%s0 + $0x160] sm:$0xff]
  %v65 = vld [vmem:[%s0 + $0x168] sm:$0xff]
  %v66 = vld [vmem:[%s0 + $0x170] sm:$0xff]
  %v67 = vld [vmem:[%s0 + $0x178] sm:$0xff]
  %v68 = vld [vmem:[%s0 + $0x180] sm:$0xff]
  %v69 = vld [vmem:[%s0 + $0x188] sm:$0xff]
  %v70 = vld [vmem:[%s0 + $0x190] sm:$0xff]
  %v71 = vld [vmem:[%s0 + $0x198] sm:$0xff]
  %v72 = vld [vmem:[%s0 + $0x1a0] sm:$0xff]
  %v73 = vld [vmem:[%s0 + $0x1a8] sm:$0xff]
  %v74 = vld [vmem:[%s0 + $0x1b0] sm:$0xff]
  %v75 = vld [vmem:[%s0 + $0x1b8] sm:$0xff]
  %v76 = vld [vmem:[%s0 + $0x1c0] sm:$0xff]
  %v77 = vld [vmem:[%s0 + $0x1c8] sm:$0xff]
  %v78 = vld [vmem:[%s0 + $0x1d0] sm:$0xff]
  %v79 = vld [vmem:[%s0 + $0x1d8] sm:$0xff]
  %v80 = vld [vmem:[%s0 + $0x1e0] sm:$0xff]
  %v81 = vld [vmem:[%s0 + $0x1e8] sm:$0xff]
  %v82 = vld [vmem:[%s0 + $0x1f0] sm:$0xff]
  %v83 = vld [vmem:[%s0 + $0x1f8] sm:$0xff]
  %v84 = vld [vmem:[%s2] sm:$0x1]
  %v85 = vld [vmem:[%s3] sm:$0x1]
  %v87 = vperm.slane %v84, 0
  %v89 = vmul.f32 %v20, %v87
  %v90 = vmul.f32 %v21, %v87
  %v91 = vmul.f32 %v22, %v87
  %v92 = vmul.f32 %v23, %v87
  %v93 = vmul.f32 %v24, %v87
  %v94 = vmul.f32 %v25, %v87
  %v95 = vmul.f32 %v26, %v87
  %v96 = vmul.f32 %v27, %v87
  %v97 = vmul.f32 %v28, %v87
  %v98 = vmul.f32 %v29, %v87
  %v99 = vmul.f32 %v30, %v87
  %v100 = vmul.f32 %v31, %v87
  %v101 = vmul.f32 %v32, %v87
  %v102 = vmul.f32 %v33, %v87
  %v103 = vmul.f32 %v34, %v87
  %v104 = vmul.f32 %v35, %v87
  %v105 = vmul.f32 %v36, %v87
  %v106 = vmul.f32 %v37, %v87
  %v107 = vmul.f32 %v38, %v87
  %v108 = vmul.f32 %v39, %v87
  %v109 = vmul.f32 %v40, %v87
  %v110 = vmul.f32 %v41, %v87
  %v111 = vmul.f32 %v42, %v87
  %v112 = vmul.f32 %v43, %v87
  %v113 = vmul.f32 %v44, %v87
  %v114 = vmul.f32 %v45, %v87
  %v115 = vmul.f32 %v46, %v87
  %v116 = vmul.f32 %v47, %v87
  %v117 = vmul.f32 %v48, %v87
  %v118 = vmul.f32 %v49, %v87
  %v119 = vmul.f32 %v50, %v87
  %v120 = vmul.f32 %v51, %v87
  %v121 = vmul.f32 %v52, %v87
  %v122 = vmul.f32 %v53, %v87
  %v123 = vmul.f32 %v54, %v87
  %v124 = vmul.f32 %v55, %v87
  %v125 = vmul.f32 %v56, %v87
  %v126 = vmul.f32 %v57, %v87
  %v127 = vmul.f32 %v58, %v87
  %v128 = vmul.f32 %v59, %v87
  %v129 = vmul.f32 %v60, %v87
  %v130 = vmul.f32 %v61, %v87
  %v131 = vmul.f32 %v62, %v87
  %v132 = vmul.f32 %v63, %v87
  %v133 = vmul.f32 %v64, %v87
  %v134 = vmul.f32 %v65, %v87
  %v135 = vmul.f32 %v66, %v87
  %v136 = vmul.f32 %v67, %v87
  %v137 = vmul.f32 %v68, %v87
  %v138 = vmul.f32 %v69, %v87
  %v139 = vmul.f32 %v70, %v87
  %v140 = vmul.f32 %v71, %v87
  %v141 = vmul.f32 %v72, %v87
  %v142 = vmul.f32 %v73, %v87
  %v143 = vmul.f32 %v74, %v87
  %v144 = vmul.f32 %v75, %v87
  %v145 = vmul.f32 %v76, %v87
  %v146 = vmul.f32 %v77, %v87
  %v147 = vmul.f32 %v78, %v87
  %v148 = vmul.f32 %v79, %v87
  %v149 = vmul.f32 %v80, %v87
  %v150 = vmul.f32 %v81, %v87
  %v151 = vmul.f32 %v82, %v87
  %v152 = vmul.f32 %v83, %v87
  %v154 = vperm.slane %v85, 0
  %v156 = vadd.f32 %v89, %v154
  %v157 = vadd.f32 %v90, %v154
  %v158 = vadd.f32 %v91, %v154
  %v159 = vadd.f32 %v92, %v154
  %v160 = vadd.f32 %v93, %v154
  %v161 = vadd.f32 %v94, %v154
  %v162 = vadd.f32 %v95, %v154
  %v163 = vadd.f32 %v96, %v154
  %v164 = vadd.f32 %v97, %v154
  %v165 = vadd.f32 %v98, %v154
  %v166 = vadd.f32 %v99, %v154
  %v167 = vadd.f32 %v100, %v154
  %v168 = vadd.f32 %v101, %v154
  %v169 = vadd.f32 %v102, %v154
  %v170 = vadd.f32 %v103, %v154
  %v171 = vadd.f32 %v104, %v154
  %v172 = vadd.f32 %v105, %v154
  %v173 = vadd.f32 %v106, %v154
  %v174 = vadd.f32 %v107, %v154
  %v175 = vadd.f32 %v108, %v154
  %v176 = vadd.f32 %v109, %v154
  %v177 = vadd.f32 %v110, %v154
  %v178 = vadd.f32 %v111, %v154
  %v179 = vadd.f32 %v112, %v154
  %v180 = vadd.f32 %v113, %v154
  %v181 = vadd.f32 %v114, %v154
  %v182 = vadd.f32 %v115, %v154
  %v183 = vadd.f32 %v116, %v154
  %v184 = vadd.f32 %v117, %v154
  %v185 = vadd.f32 %v118, %v154
  %v186 = vadd.f32 %v119, %v154
  %v187 = vadd.f32 %v120, %v154
  %v188 = vadd.f32 %v121, %v154
  %v189 = vadd.f32 %v122, %v154
  %v190 = vadd.f32 %v123, %v154
  %v191 = vadd.f32 %v124, %v154
  %v192 = vadd.f32 %v125, %v154
  %v193 = vadd.f32 %v126, %v154
  %v194 = vadd.f32 %v127, %v154
  %v195 = vadd.f32 %v128, %v154
  %v196 = vadd.f32 %v129, %v154
  %v197 = vadd.f32 %v130, %v154
  %v198 = vadd.f32 %v131, %v154
  %v199 = vadd.f32 %v132, %v154
  %v200 = vadd.f32 %v133, %v154
  %v201 = vadd.f32 %v134, %v154
  %v202 = vadd.f32 %v135, %v154
  %v203 = vadd.f32 %v136, %v154
  %v204 = vadd.f32 %v137, %v154
  %v205 = vadd.f32 %v138, %v154
  %v206 = vadd.f32 %v139, %v154
  %v207 = vadd.f32 %v140, %v154
  %v208 = vadd.f32 %v141, %v154
  %v209 = vadd.f32 %v142, %v154
  %v210 = vadd.f32 %v143, %v154
  %v211 = vadd.f32 %v144, %v154
  %v212 = vadd.f32 %v145, %v154
  %v213 = vadd.f32 %v146, %v154
  %v214 = vadd.f32 %v147, %v154
  %v215 = vadd.f32 %v148, %v154
  %v216 = vadd.f32 %v149, %v154
  %v217 = vadd.f32 %v150, %v154
  %v218 = vadd.f32 %v151, %v154
  %v219 = vadd.f32 %v152, %v154
  %v220 = vmax.f32 %v156, 0.0
  %v221 = vmax.f32 %v157, 0.0
  %v222 = vmax.f32 %v158, 0.0
  %v223 = vmax.f32 %v159, 0.0
  %v224 = vmax.f32 %v160, 0.0
  %v225 = vmax.f32 %v161, 0.0
  %v226 = vmax.f32 %v162, 0.0
  %v227 = vmax.f32 %v163, 0.0
  %v228 = vmax.f32 %v164, 0.0
  %v229 = vmax.f32 %v165, 0.0
  %v230 = vmax.f32 %v166, 0.0
  %v231 = vmax.f32 %v167, 0.0
  %v232 = vmax.f32 %v168, 0.0
  %v233 = vmax.f32 %v169, 0.0
  %v234 = vmax.f32 %v170, 0.0
  %v235 = vmax.f32 %v171, 0.0
  %v236 = vmax.f32 %v172, 0.0
  %v237 = vmax.f32 %v173, 0.0
  %v238 = vmax.f32 %v174, 0.0
  %v239 = vmax.f32 %v175, 0.0
  %v240 = vmax.f32 %v176, 0.0
  %v241 = vmax.f32 %v177, 0.0
  %v242 = vmax.f32 %v178, 0.0
  %v243 = vmax.f32 %v179, 0.0
  %v244 = vmax.f32 %v180, 0.0
  %v245 = vmax.f32 %v181, 0.0
  %v246 = vmax.f32 %v182, 0.0
  %v247 = vmax.f32 %v183, 0.0
  %v248 = vmax.f32 %v184, 0.0
  %v249 = vmax.f32 %v185, 0.0
  %v250 = vmax.f32 %v186, 0.0
  %v251 = vmax.f32 %v187, 0.0
  %v252 = vmax.f32 %v188, 0.0
  %v253 = vmax.f32 %v189, 0.0
  %v254 = vmax.f32 %v190, 0.0
  %v255 = vmax.f32 %v191, 0.0
  %v256 = vmax.f32 %v192, 0.0
  %v257 = vmax.f32 %v193, 0.0
  %v258 = vmax.f32 %v194, 0.0
  %v259 = vmax.f32 %v195, 0.0
  %v260 = vmax.f32 %v196, 0.0
  %v261 = vmax.f32 %v197, 0.0
  %v262 = vmax.f32 %v198, 0.0
  %v263 = vmax.f32 %v199, 0.0
  %v264 = vmax.f32 %v200, 0.0
  %v265 = vmax.f32 %v201, 0.0
  %v266 = vmax.f32 %v202, 0.0
  %v267 = vmax.f32 %v203, 0.0
  %v268 = vmax.f32 %v204, 0.0
  %v269 = vmax.f32 %v205, 0.0
  %v270 = vmax.f32 %v206, 0.0
  %v271 = vmax.f32 %v207, 0.0
  %v272 = vmax.f32 %v208, 0.0
  %v273 = vmax.f32 %v209, 0.0
  %v274 = vmax.f32 %v210, 0.0
  %v275 = vmax.f32 %v211, 0.0
  %v276 = vmax.f32 %v212, 0.0
  %v277 = vmax.f32 %v213, 0.0
  %v278 = vmax.f32 %v214, 0.0
  %v279 = vmax.f32 %v215, 0.0
  %v280 = vmax.f32 %v216, 0.0
  %v281 = vmax.f32 %v217, 0.0
  %v282 = vmax.f32 %v218, 0.0
  %v283 = vmax.f32 %v219, 0.0
  %vm284 = vcmask 64512
  %285 = vst.msk [vmem:[#allocation2] sm:$0xff] %vm284, 0.0
  %286 = vst.msk [vmem:[#allocation2 + $0x8] sm:$0xff] %vm284, 0.0
  %vm287 = vcmask 58368
  %288 = vst.msk [vmem:[#allocation2 + $0x10] sm:$0x3] %vm287, 0.0
  %289 = vst.msk [vmem:[#allocation2 + $0x1b0] sm:$0xff] %vm284, 0.0
  %290 = vst.msk [vmem:[#allocation2 + $0x1b8] sm:$0xff] %vm284, 0.0
  %291 = vst.msk [vmem:[#allocation2 + $0x1c0] sm:$0x3] %vm287, 0.0
  %s292 = scalar_lea.vmem [#allocation2], 408
  %293 = vst.msk [vmem:[%s292] sm:$0xff] %vm284, 0.0
  %294 = vst.msk [vmem:[%s292 + $0x8] sm:$0xff] %vm284, 0.0
  %295 = vst.msk [vmem:[%s292 + $0x10] sm:$0x3] %vm287, 0.0
  %296 = vst.msk [vmem:[%s292 + $0x1b0] sm:$0xff] %vm284, 0.0
  %297 = vst.msk [vmem:[%s292 + $0x1b8] sm:$0xff] %vm284, 0.0
  %298 = vst.msk [vmem:[%s292 + $0x1c0] sm:$0x3] %vm287, 0.0
  %vm299 = vcmask 57344
  %300 = vst.msk [vmem:[#allocation2] sm:$0x1] %vm299, 0.0
  %301 = vst.msk [vmem:[#allocation2 + $0x18] sm:$0x1] %vm299, 0.0
  %302 = vst.msk [vmem:[#allocation2 + $0x30] sm:$0x1] %vm299, 0.0
  %303 = vst.msk [vmem:[#allocation2 + $0x48] sm:$0x1] %vm299, 0.0
  %304 = vst.msk [vmem:[#allocation2 + $0x60] sm:$0x1] %vm299, 0.0
  %305 = vst.msk [vmem:[#allocation2 + $0x78] sm:$0x1] %vm299, 0.0
  %306 = vst.msk [vmem:[#allocation2 + $0x90] sm:$0x1] %vm299, 0.0
  %307 = vst.msk [vmem:[#allocation2 + $0xa8] sm:$0x1] %vm299, 0.0
  %308 = vst.msk [vmem:[#allocation2 + $0xc0] sm:$0x1] %vm299, 0.0
  %309 = vst.msk [vmem:[#allocation2 + $0xd8] sm:$0x1] %vm299, 0.0
  %310 = vst.msk [vmem:[#allocation2 + $0xf0] sm:$0x1] %vm299, 0.0
  %311 = vst.msk [vmem:[#allocation2 + $0x108] sm:$0x1] %vm299, 0.0
  %312 = vst.msk [vmem:[#allocation2 + $0x120] sm:$0x1] %vm299, 0.0
  %313 = vst.msk [vmem:[#allocation2 + $0x138] sm:$0x1] %vm299, 0.0
  %314 = vst.msk [vmem:[#allocation2 + $0x150] sm:$0x1] %vm299, 0.0
  %315 = vst.msk [vmem:[#allocation2 + $0x168] sm:$0x1] %vm299, 0.0
  %316 = vst.msk [vmem:[#allocation2 + $0x180] sm:$0x1] %vm299, 0.0
  %317 = vst.msk [vmem:[#allocation2 + $0x198] sm:$0x1] %vm299, 0.0
  %318 = vst.msk [vmem:[#allocation2 + $0x1b0] sm:$0x1] %vm299, 0.0
  %319 = vst.msk [vmem:[#allocation2 + $0x1c8] sm:$0x1] %vm299, 0.0
  %320 = vst.msk [vmem:[#allocation2 + $0x1e0] sm:$0x1] %vm299, 0.0
  %321 = vst.msk [vmem:[#allocation2 + $0x1f8] sm:$0x1] %vm299, 0.0
  %322 = vst.msk [vmem:[#allocation2 + $0x210] sm:$0x1] %vm299, 0.0
  %323 = vst.msk [vmem:[#allocation2 + $0x228] sm:$0x1] %vm299, 0.0
  %324 = vst.msk [vmem:[#allocation2 + $0x240] sm:$0x1] %vm299, 0.0
  %325 = vst.msk [vmem:[#allocation2 + $0x258] sm:$0x1] %vm299, 0.0
  %326 = vst.msk [vmem:[#allocation2 + $0x270] sm:$0x1] %vm299, 0.0
  %327 = vst.msk [vmem:[#allocation2 + $0x288] sm:$0x1] %vm299, 0.0
  %328 = vst.msk [vmem:[#allocation2 + $0x2a0] sm:$0x1] %vm299, 0.0
  %329 = vst.msk [vmem:[#allocation2 + $0x2b8] sm:$0x1] %vm299, 0.0
  %330 = vst.msk [vmem:[#allocation2 + $0x2d0] sm:$0x1] %vm299, 0.0
  %331 = vst.msk [vmem:[#allocation2 + $0x2e8] sm:$0x1] %vm299, 0.0
  %332 = vst.msk [vmem:[#allocation2 + $0x300] sm:$0x1] %vm299, 0.0
  %333 = vst.msk [vmem:[#allocation2 + $0x318] sm:$0x1] %vm299, 0.0
  %334 = vst.msk [vmem:[#allocation2 + $0x330] sm:$0x1] %vm299, 0.0
  %335 = vst.msk [vmem:[#allocation2 + $0x348] sm:$0x1] %vm299, 0.0
  %336 = vst.msk [vmem:[#allocation2 + $0x11] sm:$0x1] %vm299, 0.0
  %337 = vst.msk [vmem:[#allocation2 + $0x29] sm:$0x1] %vm299, 0.0
  %338 = vst.msk [vmem:[#allocation2 + $0x41] sm:$0x1] %vm299, 0.0
  %339 = vst.msk [vmem:[#allocation2 + $0x59] sm:$0x1] %vm299, 0.0
  %340 = vst.msk [vmem:[#allocation2 + $0x71] sm:$0x1] %vm299, 0.0
  %341 = vst.msk [vmem:[#allocation2 + $0x89] sm:$0x1] %vm299, 0.0
  %342 = vst.msk [vmem:[#allocation2 + $0xa1] sm:$0x1] %vm299, 0.0
  %343 = vst.msk [vmem:[#allocation2 + $0xb9] sm:$0x1] %vm299, 0.0
  %344 = vst.msk [vmem:[#allocation2 + $0xd1] sm:$0x1] %vm299, 0.0
  %345 = vst.msk [vmem:[#allocation2 + $0xe9] sm:$0x1] %vm299, 0.0
  %346 = vst.msk [vmem:[#allocation2 + $0x101] sm:$0x1] %vm299, 0.0
  %347 = vst.msk [vmem:[#allocation2 + $0x119] sm:$0x1] %vm299, 0.0
  %348 = vst.msk [vmem:[#allocation2 + $0x131] sm:$0x1] %vm299, 0.0
  %349 = vst.msk [vmem:[#allocation2 + $0x149] sm:$0x1] %vm299, 0.0
  %350 = vst.msk [vmem:[#allocation2 + $0x161] sm:$0x1] %vm299, 0.0
  %351 = vst.msk [vmem:[#allocation2 + $0x179] sm:$0x1] %vm299, 0.0
  %352 = vst.msk [vmem:[#allocation2 + $0x191] sm:$0x1] %vm299, 0.0
  %353 = vst.msk [vmem:[#allocation2 + $0x1a9] sm:$0x1] %vm299, 0.0
  %354 = vst.msk [vmem:[#allocation2 + $0x1c1] sm:$0x1] %vm299, 0.0
  %355 = vst.msk [vmem:[#allocation2 + $0x1d9] sm:$0x1] %vm299, 0.0
  %356 = vst.msk [vmem:[#allocation2 + $0x1f1] sm:$0x1] %vm299, 0.0
  %357 = vst.msk [vmem:[#allocation2 + $0x209] sm:$0x1] %vm299, 0.0
  %358 = vst.msk [vmem:[#allocation2 + $0x221] sm:$0x1] %vm299, 0.0
  %359 = vst.msk [vmem:[#allocation2 + $0x239] sm:$0x1] %vm299, 0.0
  %360 = vst.msk [vmem:[#allocation2 + $0x251] sm:$0x1] %vm299, 0.0
  %361 = vst.msk [vmem:[#allocation2 + $0x269] sm:$0x1] %vm299, 0.0
  %362 = vst.msk [vmem:[#allocation2 + $0x281] sm:$0x1] %vm299, 0.0
  %363 = vst.msk [vmem:[#allocation2 + $0x299] sm:$0x1] %vm299, 0.0
  %364 = vst.msk [vmem:[#allocation2 + $0x2b1] sm:$0x1] %vm299, 0.0
  %365 = vst.msk [vmem:[#allocation2 + $0x2c9] sm:$0x1] %vm299, 0.0
  %366 = vst.msk [vmem:[#allocation2 + $0x2e1] sm:$0x1] %vm299, 0.0
  %367 = vst.msk [vmem:[#allocation2 + $0x2f9] sm:$0x1] %vm299, 0.0
  %368 = vst.msk [vmem:[#allocation2 + $0x311] sm:$0x1] %vm299, 0.0
  %369 = vst.msk [vmem:[#allocation2 + $0x329] sm:$0x1] %vm299, 0.0
  %370 = vst.msk [vmem:[#allocation2 + $0x341] sm:$0x1] %vm299, 0.0
  %371 = vst.msk [vmem:[#allocation2 + $0x359] sm:$0x1] %vm299, 0.0
  %s372 = scalar_lea.vmem [#allocation2], 24
  %373 = vst.msk [vmem:[%s372 + $0x1] sm:$0xff] %vm284, %v220
  %374 = vst.msk [vmem:[%s372 + $0x9] sm:$0xff] %vm284, %v221
  %375 = vst.msk [vmem:[%s372 + $0x19] sm:$0xff] %vm284, %v222
  %376 = vst.msk [vmem:[%s372 + $0x21] sm:$0xff] %vm284, %v223
  %377 = vst.msk [vmem:[%s372 + $0x31] sm:$0xff] %vm284, %v224
  %378 = vst.msk [vmem:[%s372 + $0x39] sm:$0xff] %vm284, %v225
  %379 = vst.msk [vmem:[%s372 + $0x49] sm:$0xff] %vm284, %v226
  %380 = vst.msk [vmem:[%s372 + $0x51] sm:$0xff] %vm284, %v227
  %381 = vst.msk [vmem:[%s372 + $0x61] sm:$0xff] %vm284, %v228
  %382 = vst.msk [vmem:[%s372 + $0x69] sm:$0xff] %vm284, %v229
  %383 = vst.msk [vmem:[%s372 + $0x79] sm:$0xff] %vm284, %v230
  %384 = vst.msk [vmem:[%s372 + $0x81] sm:$0xff] %vm284, %v231
  %385 = vst.msk [vmem:[%s372 + $0x91] sm:$0xff] %vm284, %v232
  %386 = vst.msk [vmem:[%s372 + $0x99] sm:$0xff] %vm284, %v233
  %387 = vst.msk [vmem:[%s372 + $0xa9] sm:$0xff] %vm284, %v234
  %388 = vst.msk [vmem:[%s372 + $0xb1] sm:$0xff] %vm284, %v235
  %389 = vst.msk [vmem:[%s372 + $0xc1] sm:$0xff] %vm284, %v236
  %390 = vst.msk [vmem:[%s372 + $0xc9] sm:$0xff] %vm284, %v237
  %391 = vst.msk [vmem:[%s372 + $0xd9] sm:$0xff] %vm284, %v238
  %392 = vst.msk [vmem:[%s372 + $0xe1] sm:$0xff] %vm284, %v239
  %393 = vst.msk [vmem:[%s372 + $0xf1] sm:$0xff] %vm284, %v240
  %394 = vst.msk [vmem:[%s372 + $0xf9] sm:$0xff] %vm284, %v241
  %395 = vst.msk [vmem:[%s372 + $0x109] sm:$0xff] %vm284, %v242
  %396 = vst.msk [vmem:[%s372 + $0x111] sm:$0xff] %vm284, %v243
  %397 = vst.msk [vmem:[%s372 + $0x121] sm:$0xff] %vm284, %v244
  %398 = vst.msk [vmem:[%s372 + $0x129] sm:$0xff] %vm284, %v245
  %399 = vst.msk [vmem:[%s372 + $0x139] sm:$0xff] %vm284, %v246
  %400 = vst.msk [vmem:[%s372 + $0x141] sm:$0xff] %vm284, %v247
  %401 = vst.msk [vmem:[%s372 + $0x151] sm:$0xff] %vm284, %v248
  %402 = vst.msk [vmem:[%s372 + $0x159] sm:$0xff] %vm284, %v249
  %403 = vst.msk [vmem:[%s372 + $0x169] sm:$0xff] %vm284, %v250
  %404 = vst.msk [vmem:[%s372 + $0x171] sm:$0xff] %vm284, %v251
  %405 = vst.msk [vmem:[%s372 + $0x1b1] sm:$0xff] %vm284, %v252
  %406 = vst.msk [vmem:[%s372 + $0x1b9] sm:$0xff] %vm284, %v253
  %407 = vst.msk [vmem:[%s372 + $0x1c9] sm:$0xff] %vm284, %v254
  %408 = vst.msk [vmem:[%s372 + $0x1d1] sm:$0xff] %vm284, %v255
  %409 = vst.msk [vmem:[%s372 + $0x1e1] sm:$0xff] %vm284, %v256
  %410 = vst.msk [vmem:[%s372 + $0x1e9] sm:$0xff] %vm284, %v257
  %411 = vst.msk [vmem:[%s372 + $0x1f9] sm:$0xff] %vm284, %v258
  %412 = vst.msk [vmem:[%s372 + $0x201] sm:$0xff] %vm284, %v259
  %413 = vst.msk [vmem:[%s372 + $0x211] sm:$0xff] %vm284, %v260
  %414 = vst.msk [vmem:[%s372 + $0x219] sm:$0xff] %vm284, %v261
  %415 = vst.msk [vmem:[%s372 + $0x229] sm:$0xff] %vm284, %v262
  %416 = vst.msk [vmem:[%s372 + $0x231] sm:$0xff] %vm284, %v263
  %417 = vst.msk [vmem:[%s372 + $0x241] sm:$0xff] %vm284, %v264
  %418 = vst.msk [vmem:[%s372 + $0x249] sm:$0xff] %vm284, %v265
  %419 = vst.msk [vmem:[%s372 + $0x259] sm:$0xff] %vm284, %v266
  %420 = vst.msk [vmem:[%s372 + $0x261] sm:$0xff] %vm284, %v267
  %421 = vst.msk [vmem:[%s372 + $0x271] sm:$0xff] %vm284, %v268
  %422 = vst.msk [vmem:[%s372 + $0x279] sm:$0xff] %vm284, %v269
  %423 = vst.msk [vmem:[%s372 + $0x289] sm:$0xff] %vm284, %v270
  %424 = vst.msk [vmem:[%s372 + $0x291] sm:$0xff] %vm284, %v271
  %425 = vst.msk [vmem:[%s372 + $0x2a1] sm:$0xff] %vm284, %v272
  %426 = vst.msk [vmem:[%s372 + $0x2a9] sm:$0xff] %vm284, %v273
  %427 = vst.msk [vmem:[%s372 + $0x2b9] sm:$0xff] %vm284, %v274
  %428 = vst.msk [vmem:[%s372 + $0x2c1] sm:$0xff] %vm284, %v275
  %429 = vst.msk [vmem:[%s372 + $0x2d1] sm:$0xff] %vm284, %v276
  %430 = vst.msk [vmem:[%s372 + $0x2d9] sm:$0xff] %vm284, %v277
  %431 = vst.msk [vmem:[%s372 + $0x2e9] sm:$0xff] %vm284, %v278
  %432 = vst.msk [vmem:[%s372 + $0x2f1] sm:$0xff] %vm284, %v279
  %433 = vst.msk [vmem:[%s372 + $0x301] sm:$0xff] %vm284, %v280
  %434 = vst.msk [vmem:[%s372 + $0x309] sm:$0xff] %vm284, %v281
  %435 = vst.msk [vmem:[%s372 + $0x319] sm:$0xff] %vm284, %v282
  %436 = vst.msk [vmem:[%s372 + $0x321] sm:$0xff] %vm284, %v283
  %v437 = vld [vmem:[#allocation2] sm:$0xff]
  %v438 = vld [vmem:[#allocation2 + $0x8] sm:$0xff]
  %v439 = vld [vmem:[#allocation2 + $0x18] sm:$0xff]
  %v440 = vld [vmem:[#allocation2 + $0x20] sm:$0xff]
  %v441 = vld [vmem:[#allocation2 + $0x30] sm:$0xff]
  %v442 = vld [vmem:[#allocation2 + $0x38] sm:$0xff]
  %v443 = vld [vmem:[#allocation2 + $0x48] sm:$0xff]
  %v444 = vld [vmem:[#allocation2 + $0x50] sm:$0xff]
  %v445 = vld [vmem:[#allocation2 + $0x60] sm:$0xff]
  %v446 = vld [vmem:[#allocation2 + $0x68] sm:$0xff]
  %v447 = vld [vmem:[#allocation2 + $0x78] sm:$0xff]
  %v448 = vld [vmem:[#allocation2 + $0x80] sm:$0xff]
  %v449 = vld [vmem:[#allocation2 + $0x90] sm:$0xff]
  %v450 = vld [vmem:[#allocation2 + $0x98] sm:$0xff]
  %v451 = vld [vmem:[#allocation2 + $0xa8] sm:$0xff]
  %v452 = vld [vmem:[#allocation2 + $0xb0] sm:$0xff]
  %v453 = vld [vmem:[#allocation2 + $0xc0] sm:$0xff]
  %v454 = vld [vmem:[#allocation2 + $0xc8] sm:$0xff]
  %v455 = vld [vmem:[#allocation2 + $0xd8] sm:$0xff]
  %v456 = vld [vmem:[#allocation2 + $0xe0] sm:$0xff]
  %v457 = vld [vmem:[#allocation2 + $0xf0] sm:$0xff]
  %v458 = vld [vmem:[#allocation2 + $0xf8] sm:$0xff]
  %v459 = vld [vmem:[#allocation2 + $0x108] sm:$0xff]
  %v460 = vld [vmem:[#allocation2 + $0x110] sm:$0xff]
  %v461 = vld [vmem:[#allocation2 + $0x120] sm:$0xff]
  %v462 = vld [vmem:[#allocation2 + $0x128] sm:$0xff]
  %v463 = vld [vmem:[#allocation2 + $0x138] sm:$0xff]
  %v464 = vld [vmem:[#allocation2 + $0x140] sm:$0xff]
  %v465 = vld [vmem:[#allocation2 + $0x150] sm:$0xff]
  %v466 = vld [vmem:[#allocation2 + $0x158] sm:$0xff]
  %v467 = vld [vmem:[#allocation2 + $0x168] sm:$0xff]
  %v468 = vld [vmem:[#allocation2 + $0x170] sm:$0xff]
  %v469 = vld [vmem:[#allocation2 + $0x1b0] sm:$0xff]
  %v470 = vld [vmem:[#allocation2 + $0x1b8] sm:$0xff]
  %v471 = vld [vmem:[#allocation2 + $0x1c8] sm:$0xff]
  %v472 = vld [vmem:[#allocation2 + $0x1d0] sm:$0xff]
  %v473 = vld [vmem:[#allocation2 + $0x1e0] sm:$0xff]
  %v474 = vld [vmem:[#allocation2 + $0x1e8] sm:$0xff]
  %v475 = vld [vmem:[#allocation2 + $0x1f8] sm:$0xff]
  %v476 = vld [vmem:[#allocation2 + $0x200] sm:$0xff]
  %v477 = vld [vmem:[#allocation2 + $0x210] sm:$0xff]
  %v478 = vld [vmem:[#allocation2 + $0x218] sm:$0xff]
  %v479 = vld [vmem:[#allocation2 + $0x228] sm:$0xff]
  %v480 = vld [vmem:[#allocation2 + $0x230] sm:$0xff]
  %v481 = vld [vmem:[#allocation2 + $0x240] sm:$0xff]
  %v482 = vld [vmem:[#allocation2 + $0x248] sm:$0xff]
  %v483 = vld [vmem:[#allocation2 + $0x258] sm:$0xff]
  %v484 = vld [vmem:[#allocation2 + $0x260] sm:$0xff]
  %v485 = vld [vmem:[#allocation2 + $0x270] sm:$0xff]
  %v486 = vld [vmem:[#allocation2 + $0x278] sm:$0xff]
  %v487 = vld [vmem:[#allocation2 + $0x288] sm:$0xff]
  %v488 = vld [vmem:[#allocation2 + $0x290] sm:$0xff]
  %v489 = vld [vmem:[#allocation2 + $0x2a0] sm:$0xff]
  %v490 = vld [vmem:[#allocation2 + $0x2a8] sm:$0xff]
  %v491 = vld [vmem:[#allocation2 + $0x2b8] sm:$0xff]
  %v492 = vld [vmem:[#allocation2 + $0x2c0] sm:$0xff]
  %v493 = vld [vmem:[#allocation2 + $0x2d0] sm:$0xff]
  %v494 = vld [vmem:[#allocation2 + $0x2d8] sm:$0xff]
  %v495 = vld [vmem:[#allocation2 + $0x2e8] sm:$0xff]
  %v496 = vld [vmem:[#allocation2 + $0x2f0] sm:$0xff]
  %v497 = vld [vmem:[#allocation2 + $0x300] sm:$0xff]
  %v498 = vld [vmem:[#allocation2 + $0x308] sm:$0xff]
  %v499 = vld [vmem:[#allocation2 + $0x318] sm:$0xff]
  %v500 = vld [vmem:[#allocation2 + $0x320] sm:$0xff]
  %v501 = vld [vmem:[#allocation2 + $0x1] sm:$0xff]
  %v502 = vld [vmem:[#allocation2 + $0x9] sm:$0xff]
  %v503 = vld [vmem:[#allocation2 + $0x19] sm:$0xff]
  %v504 = vld [vmem:[#allocation2 + $0x21] sm:$0xff]
  %v505 = vld [vmem:[#allocation2 + $0x31] sm:$0xff]
  %v506 = vld [vmem:[#allocation2 + $0x39] sm:$0xff]
  %v507 = vld [vmem:[#allocation2 + $0x49] sm:$0xff]
  %v508 = vld [vmem:[#allocation2 + $0x51] sm:$0xff]
  %v509 = vld [vmem:[#allocation2 + $0x61] sm:$0xff]
  %v510 = vld [vmem:[#allocation2 + $0x69] sm:$0xff]
  %v511 = vld [vmem:[#allocation2 + $0x79] sm:$0xff]
  %v512 = vld [vmem:[#allocation2 + $0x81] sm:$0xff]
  %v513 = vld [vmem:[#allocation2 + $0x91] sm:$0xff]
  %v514 = vld [vmem:[#allocation2 + $0x99] sm:$0xff]
  %v515 = vld [vmem:[#allocation2 + $0xa9] sm:$0xff]
  %v516 = vld [vmem:[#allocation2 + $0xb1] sm:$0xff]
  %v517 = vld [vmem:[#allocation2 + $0xc1] sm:$0xff]
  %v518 = vld [vmem:[#allocation2 + $0xc9] sm:$0xff]
  %v519 = vld [vmem:[#allocation2 + $0xd9] sm:$0xff]
  %v520 = vld [vmem:[#allocation2 + $0xe1] sm:$0xff]
  %v521 = vld [vmem:[#allocation2 + $0xf1] sm:$0xff]
  %v522 = vld [vmem:[#allocation2 + $0xf9] sm:$0xff]
  %v523 = vld [vmem:[#allocation2 + $0x109] sm:$0xff]
  %v524 = vld [vmem:[#allocation2 + $0x111] sm:$0xff]
  %v525 = vld [vmem:[#allocation2 + $0x121] sm:$0xff]
  %v526 = vld [vmem:[#allocation2 + $0x129] sm:$0xff]
  %v527 = vld [vmem:[#allocation2 + $0x139] sm:$0xff]
  %v528 = vld [vmem:[#allocation2 + $0x141] sm:$0xff]
  %v529 = vld [vmem:[#allocation2 + $0x151] sm:$0xff]
  %v530 = vld [vmem:[#allocation2 + $0x159] sm:$0xff]
  %v531 = vld [vmem:[#allocation2 + $0x169] sm:$0xff]
  %v532 = vld [vmem:[#allocation2 + $0x171] sm:$0xff]
  %v533 = vld [vmem:[#allocation2 + $0x1b1] sm:$0xff]
  %v534 = vld [vmem:[#allocation2 + $0x1b9] sm:$0xff]
  %v535 = vld [vmem:[#allocation2 + $0x1c9] sm:$0xff]
  %v536 = vld [vmem:[#allocation2 + $0x1d1] sm:$0xff]
  %v537 = vld [vmem:[#allocation2 + $0x1e1] sm:$0xff]
  %v538 = vld [vmem:[#allocation2 + $0x1e9] sm:$0xff]
  %v539 = vld [vmem:[#allocation2 + $0x1f9] sm:$0xff]
  %v540 = vld [vmem:[#allocation2 + $0x201] sm:$0xff]
  %v541 = vld [vmem:[#allocation2 + $0x211] sm:$0xff]
  %v542 = vld [vmem:[#allocation2 + $0x219] sm:$0xff]
  %v543 = vld [vmem:[#allocation2 + $0x229] sm:$0xff]
  %v544 = vld [vmem:[#allocation2 + $0x231] sm:$0xff]
  %v545 = vld [vmem:[#allocation2 + $0x241] sm:$0xff]
  %v546 = vld [vmem:[#allocation2 + $0x249] sm:$0xff]
  %v547 = vld [vmem:[#allocation2 + $0x259] sm:$0xff]
  %v548 = vld [vmem:[#allocation2 + $0x261] sm:$0xff]
  %v549 = vld [vmem:[#allocation2 + $0x271] sm:$0xff]
  %v550 = vld [vmem:[#allocation2 + $0x279] sm:$0xff]
  %v551 = vld [vmem:[#allocation2 + $0x289] sm:$0xff]
  %v552 = vld [vmem:[#allocation2 + $0x291] sm:$0xff]
  %v553 = vld [vmem:[#allocation2 + $0x2a1] sm:$0xff]
  %v554 = vld [vmem:[#allocation2 + $0x2a9] sm:$0xff]
  %v555 = vld [vmem:[#allocation2 + $0x2b9] sm:$0xff]
  %v556 = vld [vmem:[#allocation2 + $0x2c1] sm:$0xff]
  %v557 = vld [vmem:[#allocation2 + $0x2d1] sm:$0xff]
  %v558 = vld [vmem:[#allocation2 + $0x2d9] sm:$0xff]
  %v559 = vld [vmem:[#allocation2 + $0x2e9] sm:$0xff]
  %v560 = vld [vmem:[#allocation2 + $0x2f1] sm:$0xff]
  %v561 = vld [vmem:[#allocation2 + $0x301] sm:$0xff]
  %v562 = vld [vmem:[#allocation2 + $0x309] sm:$0xff]
  %v563 = vld [vmem:[#allocation2 + $0x319] sm:$0xff]
  %v564 = vld [vmem:[#allocation2 + $0x321] sm:$0xff]
  %v565 = vld [vmem:[#allocation2 + $0x2] sm:$0xff]
  %v566 = vld [vmem:[#allocation2 + $0xa] sm:$0xff]
  %v567 = vld [vmem:[#allocation2 + $0x1a] sm:$0xff]
  %v568 = vld [vmem:[#allocation2 + $0x22] sm:$0xff]
  %v569 = vld [vmem:[#allocation2 + $0x32] sm:$0xff]
  %v570 = vld [vmem:[#allocation2 + $0x3a] sm:$0xff]
  %v571 = vld [vmem:[#allocation2 + $0x4a] sm:$0xff]
  %v572 = vld [vmem:[#allocation2 + $0x52] sm:$0xff]
  %v573 = vld [vmem:[#allocation2 + $0x62] sm:$0xff]
  %v574 = vld [vmem:[#allocation2 + $0x6a] sm:$0xff]
  %v575 = vld [vmem:[#allocation2 + $0x7a] sm:$0xff]
  %v576 = vld [vmem:[#allocation2 + $0x82] sm:$0xff]
  %v577 = vld [vmem:[#allocation2 + $0x92] sm:$0xff]
  %v578 = vld [vmem:[#allocation2 + $0x9a] sm:$0xff]
  %v579 = vld [vmem:[#allocation2 + $0xaa] sm:$0xff]
  %v580 = vld [vmem:[#allocation2 + $0xb2] sm:$0xff]
  %v581 = vld [vmem:[#allocation2 + $0xc2] sm:$0xff]
  %v582 = vld [vmem:[#allocation2 + $0xca] sm:$0xff]
  %v583 = vld [vmem:[#allocation2 + $0xda] sm:$0xff]
  %v584 = vld [vmem:[#allocation2 + $0xe2] sm:$0xff]
  %v585 = vld [vmem:[#allocation2 + $0xf2] sm:$0xff]
  %v586 = vld [vmem:[#allocation2 + $0xfa] sm:$0xff]
  %v587 = vld [vmem:[#allocation2 + $0x10a] sm:$0xff]
  %v588 = vld [vmem:[#allocation2 + $0x112] sm:$0xff]
  %v589 = vld [vmem:[#allocation2 + $0x122] sm:$0xff]
  %v590 = vld [vmem:[#allocation2 + $0x12a] sm:$0xff]
  %v591 = vld [vmem:[#allocation2 + $0x13a] sm:$0xff]
  %v592 = vld [vmem:[#allocation2 + $0x142] sm:$0xff]
  %v593 = vld [vmem:[#allocation2 + $0x152] sm:$0xff]
  %v594 = vld [vmem:[#allocation2 + $0x15a] sm:$0xff]
  %v595 = vld [vmem:[#allocation2 + $0x16a] sm:$0xff]
  %v596 = vld [vmem:[#allocation2 + $0x172] sm:$0xff]
  %v597 = vld [vmem:[#allocation2 + $0x1b2] sm:$0xff]
  %v598 = vld [vmem:[#allocation2 + $0x1ba] sm:$0xff]
  %v599 = vld [vmem:[#allocation2 + $0x1ca] sm:$0xff]
  %v600 = vld [vmem:[#allocation2 + $0x1d2] sm:$0xff]
  %v601 = vld [vmem:[#allocation2 + $0x1e2] sm:$0xff]
  %v602 = vld [vmem:[#allocation2 + $0x1ea] sm:$0xff]
  %v603 = vld [vmem:[#allocation2 + $0x1fa] sm:$0xff]
  %v604 = vld [vmem:[#allocation2 + $0x202] sm:$0xff]
  %v605 = vld [vmem:[#allocation2 + $0x212] sm:$0xff]
  %v606 = vld [vmem:[#allocation2 + $0x21a] sm:$0xff]
  %v607 = vld [vmem:[#allocation2 + $0x22a] sm:$0xff]
  %v608 = vld [vmem:[#allocation2 + $0x232] sm:$0xff]
  %v609 = vld [vmem:[#allocation2 + $0x242] sm:$0xff]
  %v610 = vld [vmem:[#allocation2 + $0x24a] sm:$0xff]
  %v611 = vld [vmem:[#allocation2 + $0x25a] sm:$0xff]
  %v612 = vld [vmem:[#allocation2 + $0x262] sm:$0xff]
  %v613 = vld [vmem:[#allocation2 + $0x272] sm:$0xff]
  %v614 = vld [vmem:[#allocation2 + $0x27a] sm:$0xff]
  %v615 = vld [vmem:[#allocation2 + $0x28a] sm:$0xff]
  %v616 = vld [vmem:[#allocation2 + $0x292] sm:$0xff]
  %v617 = vld [vmem:[#allocation2 + $0x2a2] sm:$0xff]
  %v618 = vld [vmem:[#allocation2 + $0x2aa] sm:$0xff]
  %v619 = vld [vmem:[#allocation2 + $0x2ba] sm:$0xff]
  %v620 = vld [vmem:[#allocation2 + $0x2c2] sm:$0xff]
  %v621 = vld [vmem:[#allocation2 + $0x2d2] sm:$0xff]
  %v622 = vld [vmem:[#allocation2 + $0x2da] sm:$0xff]
  %v623 = vld [vmem:[#allocation2 + $0x2ea] sm:$0xff]
  %v624 = vld [vmem:[#allocation2 + $0x2f2] sm:$0xff]
  %v625 = vld [vmem:[#allocation2 + $0x302] sm:$0xff]
  %v626 = vld [vmem:[#allocation2 + $0x30a] sm:$0xff]
  %v627 = vld [vmem:[#allocation2 + $0x31a] sm:$0xff]
  %v628 = vld [vmem:[#allocation2 + $0x322] sm:$0xff]
  %v629 = vld [vmem:[%s372] sm:$0xff]
  %v630 = vld [vmem:[%s372 + $0x8] sm:$0xff]
  %v631 = vld [vmem:[%s372 + $0x18] sm:$0xff]
  %v632 = vld [vmem:[%s372 + $0x20] sm:$0xff]
  %v633 = vld [vmem:[%s372 + $0x30] sm:$0xff]
  %v634 = vld [vmem:[%s372 + $0x38] sm:$0xff]
  %v635 = vld [vmem:[%s372 + $0x48] sm:$0xff]
  %v636 = vld [vmem:[%s372 + $0x50] sm:$0xff]
  %v637 = vld [vmem:[%s372 + $0x60] sm:$0xff]
  %v638 = vld [vmem:[%s372 + $0x68] sm:$0xff]
  %v639 = vld [vmem:[%s372 + $0x78] sm:$0xff]
  %v640 = vld [vmem:[%s372 + $0x80] sm:$0xff]
  %v641 = vld [vmem:[%s372 + $0x90] sm:$0xff]
  %v642 = vld [vmem:[%s372 + $0x98] sm:$0xff]
  %v643 = vld [vmem:[%s372 + $0xa8] sm:$0xff]
  %v644 = vld [vmem:[%s372 + $0xb0] sm:$0xff]
  %v645 = vld [vmem:[%s372 + $0xc0] sm:$0xff]
  %v646 = vld [vmem:[%s372 + $0xc8] sm:$0xff]
  %v647 = vld [vmem:[%s372 + $0xd8] sm:$0xff]
  %v648 = vld [vmem:[%s372 + $0xe0] sm:$0xff]
  %v649 = vld [vmem:[%s372 + $0xf0] sm:$0xff]
  %v650 = vld [vmem:[%s372 + $0xf8] sm:$0xff]
  %v651 = vld [vmem:[%s372 + $0x108] sm:$0xff]
  %v652 = vld [vmem:[%s372 + $0x110] sm:$0xff]
  %v653 = vld [vmem:[%s372 + $0x120] sm:$0xff]
  %v654 = vld [vmem:[%s372 + $0x128] sm:$0xff]
  %v655 = vld [vmem:[%s372 + $0x138] sm:$0xff]
  %v656 = vld [vmem:[%s372 + $0x140] sm:$0xff]
  %v657 = vld [vmem:[%s372 + $0x150] sm:$0xff]
  %v658 = vld [vmem:[%s372 + $0x158] sm:$0xff]
  %v659 = vld [vmem:[%s372 + $0x168] sm:$0xff]
  %v660 = vld [vmem:[%s372 + $0x170] sm:$0xff]
  %v661 = vld [vmem:[%s372 + $0x1b0] sm:$0xff]
  %v662 = vld [vmem:[%s372 + $0x1b8] sm:$0xff]
  %v663 = vld [vmem:[%s372 + $0x1c8] sm:$0xff]
  %v664 = vld [vmem:[%s372 + $0x1d0] sm:$0xff]
  %v665 = vld [vmem:[%s372 + $0x1e0] sm:$0xff]
  %v666 = vld [vmem:[%s372 + $0x1e8] sm:$0xff]
  %v667 = vld [vmem:[%s372 + $0x1f8] sm:$0xff]
  %v668 = vld [vmem:[%s372 + $0x200] sm:$0xff]
  %v669 = vld [vmem:[%s372 + $0x210] sm:$0xff]
  %v670 = vld [vmem:[%s372 + $0x218] sm:$0xff]
  %v671 = vld [vmem:[%s372 + $0x228] sm:$0xff]
  %v672 = vld [vmem:[%s372 + $0x230] sm:$0xff]
  %v673 = vld [vmem:[%s372 + $0x240] sm:$0xff]
  %v674 = vld [vmem:[%s372 + $0x248] sm:$0xff]
  %v675 = vld [vmem:[%s372 + $0x258] sm:$0xff]
  %v676 = vld [vmem:[%s372 + $0x260] sm:$0xff]
  %v677 = vld [vmem:[%s372 + $0x270] sm:$0xff]
  %v678 = vld [vmem:[%s372 + $0x278] sm:$0xff]
  %v679 = vld [vmem:[%s372 + $0x288] sm:$0xff]
  %v680 = vld [vmem:[%s372 + $0x290] sm:$0xff]
  %v681 = vld [vmem:[%s372 + $0x2a0] sm:$0xff]
  %v682 = vld [vmem:[%s372 + $0x2a8] sm:$0xff]
  %v683 = vld [vmem:[%s372 + $0x2b8] sm:$0xff]
  %v684 = vld [vmem:[%s372 + $0x2c0] sm:$0xff]
  %v685 = vld [vmem:[%s372 + $0x2d0] sm:$0xff]
  %v686 = vld [vmem:[%s372 + $0x2d8] sm:$0xff]
  %v687 = vld [vmem:[%s372 + $0x2e8] sm:$0xff]
  %v688 = vld [vmem:[%s372 + $0x2f0] sm:$0xff]
  %v689 = vld [vmem:[%s372 + $0x300] sm:$0xff]
  %v690 = vld [vmem:[%s372 + $0x308] sm:$0xff]
  %v691 = vld [vmem:[%s372 + $0x318] sm:$0xff]
  %v692 = vld [vmem:[%s372 + $0x320] sm:$0xff]
  %v693 = vld [vmem:[%s372 + $0x1] sm:$0xff]
  %v694 = vld [vmem:[%s372 + $0x9] sm:$0xff]
  %v695 = vld [vmem:[%s372 + $0x19] sm:$0xff]
  %v696 = vld [vmem:[%s372 + $0x21] sm:$0xff]
  %v697 = vld [vmem:[%s372 + $0x31] sm:$0xff]
  %v698 = vld [vmem:[%s372 + $0x39] sm:$0xff]
  %v699 = vld [vmem:[%s372 + $0x49] sm:$0xff]
  %v700 = vld [vmem:[%s372 + $0x51] sm:$0xff]
  %v701 = vld [vmem:[%s372 + $0x61] sm:$0xff]
  %v702 = vld [vmem:[%s372 + $0x69] sm:$0xff]
  %v703 = vld [vmem:[%s372 + $0x79] sm:$0xff]
  %v704 = vld [vmem:[%s372 + $0x81] sm:$0xff]
  %v705 = vld [vmem:[%s372 + $0x91] sm:$0xff]
  %v706 = vld [vmem:[%s372 + $0x99] sm:$0xff]
  %v707 = vld [vmem:[%s372 + $0xa9] sm:$0xff]
  %v708 = vld [vmem:[%s372 + $0xb1] sm:$0xff]
  %v709 = vld [vmem:[%s372 + $0xc1] sm:$0xff]
  %v710 = vld [vmem:[%s372 + $0xc9] sm:$0xff]
  %v711 = vld [vmem:[%s372 + $0xd9] sm:$0xff]
  %v712 = vld [vmem:[%s372 + $0xe1] sm:$0xff]
  %v713 = vld [vmem:[%s372 + $0xf1] sm:$0xff]
  %v714 = vld [vmem:[%s372 + $0xf9] sm:$0xff]
  %v715 = vld [vmem:[%s372 + $0x109] sm:$0xff]
  %v716 = vld [vmem:[%s372 + $0x111] sm:$0xff]
  %v717 = vld [vmem:[%s372 + $0x121] sm:$0xff]
  %v718 = vld [vmem:[%s372 + $0x129] sm:$0xff]
  %v719 = vld [vmem:[%s372 + $0x139] sm:$0xff]
  %v720 = vld [vmem:[%s372 + $0x141] sm:$0xff]
  %v721 = vld [vmem:[%s372 + $0x151] sm:$0xff]
  %v722 = vld [vmem:[%s372 + $0x159] sm:$0xff]
  %v723 = vld [vmem:[%s372 + $0x169] sm:$0xff]
  %v724 = vld [vmem:[%s372 + $0x171] sm:$0xff]
  %v725 = vld [vmem:[%s372 + $0x1b1] sm:$0xff]
  %v726 = vld [vmem:[%s372 + $0x1b9] sm:$0xff]
  %v727 = vld [vmem:[%s372 + $0x1c9] sm:$0xff]
  %v728 = vld [vmem:[%s372 + $0x1d1] sm:$0xff]
  %v729 = vld [vmem:[%s372 + $0x1e1] sm:$0xff]
  %v730 = vld [vmem:[%s372 + $0x1e9] sm:$0xff]
  %v731 = vld [vmem:[%s372 + $0x1f9] sm:$0xff]
  %v732 = vld [vmem:[%s372 + $0x201] sm:$0xff]
  %v733 = vld [vmem:[%s372 + $0x211] sm:$0xff]
  %v734 = vld [vmem:[%s372 + $0x219] sm:$0xff]
  %v735 = vld [vmem:[%s372 + $0x229] sm:$0xff]
  %v736 = vld [vmem:[%s372 + $0x231] sm:$0xff]
  %v737 = vld [vmem:[%s372 + $0x241] sm:$0xff]
  %v738 = vld [vmem:[%s372 + $0x249] sm:$0xff]
  %v739 = vld [vmem:[%s372 + $0x259] sm:$0xff]
  %v740 = vld [vmem:[%s372 + $0x261] sm:$0xff]
  %v741 = vld [vmem:[%s372 + $0x271] sm:$0xff]
  %v742 = vld [vmem:[%s372 + $0x279] sm:$0xff]
  %v743 = vld [vmem:[%s372 + $0x289] sm:$0xff]
  %v744 = vld [vmem:[%s372 + $0x291] sm:$0xff]
  %v745 = vld [vmem:[%s372 + $0x2a1] sm:$0xff]
  %v746 = vld [vmem:[%s372 + $0x2a9] sm:$0xff]
  %v747 = vld [vmem:[%s372 + $0x2b9] sm:$0xff]
  %v748 = vld [vmem:[%s372 + $0x2c1] sm:$0xff]
  %v749 = vld [vmem:[%s372 + $0x2d1] sm:$0xff]
  %v750 = vld [vmem:[%s372 + $0x2d9] sm:$0xff]
  %v751 = vld [vmem:[%s372 + $0x2e9] sm:$0xff]
  %v752 = vld [vmem:[%s372 + $0x2f1] sm:$0xff]
  %v753 = vld [vmem:[%s372 + $0x301] sm:$0xff]
  %v754 = vld [vmem:[%s372 + $0x309] sm:$0xff]
  %v755 = vld [vmem:[%s372 + $0x319] sm:$0xff]
  %v756 = vld [vmem:[%s372 + $0x321] sm:$0xff]
  %v757 = vld [vmem:[%s372 + $0x2] sm:$0xff]
  %v758 = vld [vmem:[%s372 + $0xa] sm:$0xff]
  %v759 = vld [vmem:[%s372 + $0x1a] sm:$0xff]
  %v760 = vld [vmem:[%s372 + $0x22] sm:$0xff]
  %v761 = vld [vmem:[%s372 + $0x32] sm:$0xff]
  %v762 = vld [vmem:[%s372 + $0x3a] sm:$0xff]
  %v763 = vld [vmem:[%s372 + $0x4a] sm:$0xff]
  %v764 = vld [vmem:[%s372 + $0x52] sm:$0xff]
  %v765 = vld [vmem:[%s372 + $0x62] sm:$0xff]
  %v766 = vld [vmem:[%s372 + $0x6a] sm:$0xff]
  %v767 = vld [vmem:[%s372 + $0x7a] sm:$0xff]
  %v768 = vld [vmem:[%s372 + $0x82] sm:$0xff]
  %v769 = vld [vmem:[%s372 + $0x92] sm:$0xff]
  %v770 = vld [vmem:[%s372 + $0x9a] sm:$0xff]
  %v771 = vld [vmem:[%s372 + $0xaa] sm:$0xff]
  %v772 = vld [vmem:[%s372 + $0xb2] sm:$0xff]
  %v773 = vld [vmem:[%s372 + $0xc2] sm:$0xff]
  %v774 = vld [vmem:[%s372 + $0xca] sm:$0xff]
  %v775 = vld [vmem:[%s372 + $0xda] sm:$0xff]
  %v776 = vld [vmem:[%s372 + $0xe2] sm:$0xff]
  %v777 = vld [vmem:[%s372 + $0xf2] sm:$0xff]
  %v778 = vld [vmem:[%s372 + $0xfa] sm:$0xff]
  %v779 = vld [vmem:[%s372 + $0x10a] sm:$0xff]
  %v780 = vld [vmem:[%s372 + $0x112] sm:$0xff]
  %v781 = vld [vmem:[%s372 + $0x122] sm:$0xff]
  %v782 = vld [vmem:[%s372 + $0x12a] sm:$0xff]
  %v783 = vld [vmem:[%s372 + $0x13a] sm:$0xff]
  %v784 = vld [vmem:[%s372 + $0x142] sm:$0xff]
  %v785 = vld [vmem:[%s372 + $0x152] sm:$0xff]
  %v786 = vld [vmem:[%s372 + $0x15a] sm:$0xff]
  %v787 = vld [vmem:[%s372 + $0x16a] sm:$0xff]
  %v788 = vld [vmem:[%s372 + $0x172] sm:$0xff]
  %v789 = vld [vmem:[%s372 + $0x1b2] sm:$0xff]
  %v790 = vld [vmem:[%s372 + $0x1ba] sm:$0xff]
  %v791 = vld [vmem:[%s372 + $0x1ca] sm:$0xff]
  %v792 = vld [vmem:[%s372 + $0x1d2] sm:$0xff]
  %v793 = vld [vmem:[%s372 + $0x1e2] sm:$0xff]
  %v794 = vld [vmem:[%s372 + $0x1ea] sm:$0xff]
  %v795 = vld [vmem:[%s372 + $0x1fa] sm:$0xff]
  %v796 = vld [vmem:[%s372 + $0x202] sm:$0xff]
  %v797 = vld [vmem:[%s372 + $0x212] sm:$0xff]
  %v798 = vld [vmem:[%s372 + $0x21a] sm:$0xff]
  %v799 = vld [vmem:[%s372 + $0x22a] sm:$0xff]
  %v800 = vld [vmem:[%s372 + $0x232] sm:$0xff]
  %v801 = vld [vmem:[%s372 + $0x242] sm:$0xff]
  %v802 = vld [vmem:[%s372 + $0x24a] sm:$0xff]
  %v803 = vld [vmem:[%s372 + $0x25a] sm:$0xff]
  %v804 = vld [vmem:[%s372 + $0x262] sm:$0xff]
  %v805 = vld [vmem:[%s372 + $0x272] sm:$0xff]
  %v806 = vld [vmem:[%s372 + $0x27a] sm:$0xff]
  %v807 = vld [vmem:[%s372 + $0x28a] sm:$0xff]
  %v808 = vld [vmem:[%s372 + $0x292] sm:$0xff]
  %v809 = vld [vmem:[%s372 + $0x2a2] sm:$0xff]
  %v810 = vld [vmem:[%s372 + $0x2aa] sm:$0xff]
  %v811 = vld [vmem:[%s372 + $0x2ba] sm:$0xff]
  %v812 = vld [vmem:[%s372 + $0x2c2] sm:$0xff]
  %v813 = vld [vmem:[%s372 + $0x2d2] sm:$0xff]
  %v814 = vld [vmem:[%s372 + $0x2da] sm:$0xff]
  %v815 = vld [vmem:[%s372 + $0x2ea] sm:$0xff]
  %v816 = vld [vmem:[%s372 + $0x2f2] sm:$0xff]
  %v817 = vld [vmem:[%s372 + $0x302] sm:$0xff]
  %v818 = vld [vmem:[%s372 + $0x30a] sm:$0xff]
  %v819 = vld [vmem:[%s372 + $0x31a] sm:$0xff]
  %v820 = vld [vmem:[%s372 + $0x322] sm:$0xff]
  %s821 = scalar_lea.vmem [#allocation2], 48
  %v822 = vld [vmem:[%s821] sm:$0xff]
  %v823 = vld [vmem:[%s821 + $0x8] sm:$0xff]
  %v824 = vld [vmem:[%s821 + $0x18] sm:$0xff]
  %v825 = vld [vmem:[%s821 + $0x20] sm:$0xff]
  %v826 = vld [vmem:[%s821 + $0x30] sm:$0xff]
  %v827 = vld [vmem:[%s821 + $0x38] sm:$0xff]
  %v828 = vld [vmem:[%s821 + $0x48] sm:$0xff]
  %v829 = vld [vmem:[%s821 + $0x50] sm:$0xff]
  %v830 = vld [vmem:[%s821 + $0x60] sm:$0xff]
  %v831 = vld [vmem:[%s821 + $0x68] sm:$0xff]
  %v832 = vld [vmem:[%s821 + $0x78] sm:$0xff]
  %v833 = vld [vmem:[%s821 + $0x80] sm:$0xff]
  %v834 = vld [vmem:[%s821 + $0x90] sm:$0xff]
  %v835 = vld [vmem:[%s821 + $0x98] sm:$0xff]
  %v836 = vld [vmem:[%s821 + $0xa8] sm:$0xff]
  %v837 = vld [vmem:[%s821 + $0xb0] sm:$0xff]
  %v838 = vld [vmem:[%s821 + $0xc0] sm:$0xff]
  %v839 = vld [vmem:[%s821 + $0xc8] sm:$0xff]
  %v840 = vld [vmem:[%s821 + $0xd8] sm:$0xff]
  %v841 = vld [vmem:[%s821 + $0xe0] sm:$0xff]
  %v842 = vld [vmem:[%s821 + $0xf0] sm:$0xff]
  %v843 = vld [vmem:[%s821 + $0xf8] sm:$0xff]
  %v844 = vld [vmem:[%s821 + $0x108] sm:$0xff]
  %v845 = vld [vmem:[%s821 + $0x110] sm:$0xff]
  %v846 = vld [vmem:[%s821 + $0x120] sm:$0xff]
  %v847 = vld [vmem:[%s821 + $0x128] sm:$0xff]
  %v848 = vld [vmem:[%s821 + $0x138] sm:$0xff]
  %v849 = vld [vmem:[%s821 + $0x140] sm:$0xff]
  %v850 = vld [vmem:[%s821 + $0x150] sm:$0xff]
  %v851 = vld [vmem:[%s821 + $0x158] sm:$0xff]
  %v852 = vld [vmem:[%s821 + $0x168] sm:$0xff]
  %v853 = vld [vmem:[%s821 + $0x170] sm:$0xff]
  %v854 = vld [vmem:[%s821 + $0x1b0] sm:$0xff]
  %v855 = vld [vmem:[%s821 + $0x1b8] sm:$0xff]
  %v856 = vld [vmem:[%s821 + $0x1c8] sm:$0xff]
  %v857 = vld [vmem:[%s821 + $0x1d0] sm:$0xff]
  %v858 = vld [vmem:[%s821 + $0x1e0] sm:$0xff]
  %v859 = vld [vmem:[%s821 + $0x1e8] sm:$0xff]
  %v860 = vld [vmem:[%s821 + $0x1f8] sm:$0xff]
  %v861 = vld [vmem:[%s821 + $0x200] sm:$0xff]
  %v862 = vld [vmem:[%s821 + $0x210] sm:$0xff]
  %v863 = vld [vmem:[%s821 + $0x218] sm:$0xff]
  %v864 = vld [vmem:[%s821 + $0x228] sm:$0xff]
  %v865 = vld [vmem:[%s821 + $0x230] sm:$0xff]
  %v866 = vld [vmem:[%s821 + $0x240] sm:$0xff]
  %v867 = vld [vmem:[%s821 + $0x248] sm:$0xff]
  %v868 = vld [vmem:[%s821 + $0x258] sm:$0xff]
  %v869 = vld [vmem:[%s821 + $0x260] sm:$0xff]
  %v870 = vld [vmem:[%s821 + $0x270] sm:$0xff]
  %v871 = vld [vmem:[%s821 + $0x278] sm:$0xff]
  %v872 = vld [vmem:[%s821 + $0x288] sm:$0xff]
  %v873 = vld [vmem:[%s821 + $0x290] sm:$0xff]
  %v874 = vld [vmem:[%s821 + $0x2a0] sm:$0xff]
  %v875 = vld [vmem:[%s821 + $0x2a8] sm:$0xff]
  %v876 = vld [vmem:[%s821 + $0x2b8] sm:$0xff]
  %v877 = vld [vmem:[%s821 + $0x2c0] sm:$0xff]
  %v878 = vld [vmem:[%s821 + $0x2d0] sm:$0xff]
  %v879 = vld [vmem:[%s821 + $0x2d8] sm:$0xff]
  %v880 = vld [vmem:[%s821 + $0x2e8] sm:$0xff]
  %v881 = vld [vmem:[%s821 + $0x2f0] sm:$0xff]
  %v882 = vld [vmem:[%s821 + $0x300] sm:$0xff]
  %v883 = vld [vmem:[%s821 + $0x308] sm:$0xff]
  %v884 = vld [vmem:[%s821 + $0x318] sm:$0xff]
  %v885 = vld [vmem:[%s821 + $0x320] sm:$0xff]
  %v886 = vld [vmem:[%s821 + $0x1] sm:$0xff]
  %v887 = vld [vmem:[%s821 + $0x9] sm:$0xff]
  %v888 = vld [vmem:[%s821 + $0x19] sm:$0xff]
  %v889 = vld [vmem:[%s821 + $0x21] sm:$0xff]
  %v890 = vld [vmem:[%s821 + $0x31] sm:$0xff]
  %v891 = vld [vmem:[%s821 + $0x39] sm:$0xff]
  %v892 = vld [vmem:[%s821 + $0x49] sm:$0xff]
  %v893 = vld [vmem:[%s821 + $0x51] sm:$0xff]
  %v894 = vld [vmem:[%s821 + $0x61] sm:$0xff]
  %v895 = vld [vmem:[%s821 + $0x69] sm:$0xff]
  %v896 = vld [vmem:[%s821 + $0x79] sm:$0xff]
  %v897 = vld [vmem:[%s821 + $0x81] sm:$0xff]
  %v898 = vld [vmem:[%s821 + $0x91] sm:$0xff]
  %v899 = vld [vmem:[%s821 + $0x99] sm:$0xff]
  %v900 = vld [vmem:[%s821 + $0xa9] sm:$0xff]
  %v901 = vld [vmem:[%s821 + $0xb1] sm:$0xff]
  %v902 = vld [vmem:[%s821 + $0xc1] sm:$0xff]
  %v903 = vld [vmem:[%s821 + $0xc9] sm:$0xff]
  %v904 = vld [vmem:[%s821 + $0xd9] sm:$0xff]
  %v905 = vld [vmem:[%s821 + $0xe1] sm:$0xff]
  %v906 = vld [vmem:[%s821 + $0xf1] sm:$0xff]
  %v907 = vld [vmem:[%s821 + $0xf9] sm:$0xff]
  %v908 = vld [vmem:[%s821 + $0x109] sm:$0xff]
  %v909 = vld [vmem:[%s821 + $0x111] sm:$0xff]
  %v910 = vld [vmem:[%s821 + $0x121] sm:$0xff]
  %v911 = vld [vmem:[%s821 + $0x129] sm:$0xff]
  %v912 = vld [vmem:[%s821 + $0x139] sm:$0xff]
  %v913 = vld [vmem:[%s821 + $0x141] sm:$0xff]
  %v914 = vld [vmem:[%s821 + $0x151] sm:$0xff]
  %v915 = vld [vmem:[%s821 + $0x159] sm:$0xff]
  %v916 = vld [vmem:[%s821 + $0x169] sm:$0xff]
  %v917 = vld [vmem:[%s821 + $0x171] sm:$0xff]
  %v918 = vld [vmem:[%s821 + $0x1b1] sm:$0xff]
  %v919 = vld [vmem:[%s821 + $0x1b9] sm:$0xff]
  %v920 = vld [vmem:[%s821 + $0x1c9] sm:$0xff]
  %v921 = vld [vmem:[%s821 + $0x1d1] sm:$0xff]
  %v922 = vld [vmem:[%s821 + $0x1e1] sm:$0xff]
  %v923 = vld [vmem:[%s821 + $0x1e9] sm:$0xff]
  %v924 = vld [vmem:[%s821 + $0x1f9] sm:$0xff]
  %v925 = vld [vmem:[%s821 + $0x201] sm:$0xff]
  %v926 = vld [vmem:[%s821 + $0x211] sm:$0xff]
  %v927 = vld [vmem:[%s821 + $0x219] sm:$0xff]
  %v928 = vld [vmem:[%s821 + $0x229] sm:$0xff]
  %v929 = vld [vmem:[%s821 + $0x231] sm:$0xff]
  %v930 = vld [vmem:[%s821 + $0x241] sm:$0xff]
  %v931 = vld [vmem:[%s821 + $0x249] sm:$0xff]
  %v932 = vld [vmem:[%s821 + $0x259] sm:$0xff]
  %v933 = vld [vmem:[%s821 + $0x261] sm:$0xff]
  %v934 = vld [vmem:[%s821 + $0x271] sm:$0xff]
  %v935 = vld [vmem:[%s821 + $0x279] sm:$0xff]
  %v936 = vld [vmem:[%s821 + $0x289] sm:$0xff]
  %v937 = vld [vmem:[%s821 + $0x291] sm:$0xff]
  %v938 = vld [vmem:[%s821 + $0x2a1] sm:$0xff]
  %v939 = vld [vmem:[%s821 + $0x2a9] sm:$0xff]
  %v940 = vld [vmem:[%s821 + $0x2b9] sm:$0xff]
  %v941 = vld [vmem:[%s821 + $0x2c1] sm:$0xff]
  %v942 = vld [vmem:[%s821 + $0x2d1] sm:$0xff]
  %v943 = vld [vmem:[%s821 + $0x2d9] sm:$0xff]
  %v944 = vld [vmem:[%s821 + $0x2e9] sm:$0xff]
  %v945 = vld [vmem:[%s821 + $0x2f1] sm:$0xff]
  %v946 = vld [vmem:[%s821 + $0x301] sm:$0xff]
  %v947 = vld [vmem:[%s821 + $0x309] sm:$0xff]
  %v948 = vld [vmem:[%s821 + $0x319] sm:$0xff]
  %v949 = vld [vmem:[%s821 + $0x321] sm:$0xff]
  %v950 = vld [vmem:[%s821 + $0x2] sm:$0xff]
  %v951 = vld [vmem:[%s821 + $0xa] sm:$0xff]
  %v952 = vld [vmem:[%s821 + $0x1a] sm:$0xff]
  %v953 = vld [vmem:[%s821 + $0x22] sm:$0xff]
  %v954 = vld [vmem:[%s821 + $0x32] sm:$0xff]
  %v955 = vld [vmem:[%s821 + $0x3a] sm:$0xff]
  %v956 = vld [vmem:[%s821 + $0x4a] sm:$0xff]
  %v957 = vld [vmem:[%s821 + $0x52] sm:$0xff]
  %v958 = vld [vmem:[%s821 + $0x62] sm:$0xff]
  %v959 = vld [vmem:[%s821 + $0x6a] sm:$0xff]
  %v960 = vld [vmem:[%s821 + $0x7a] sm:$0xff]
  %v961 = vld [vmem:[%s821 + $0x82] sm:$0xff]
  %v962 = vld [vmem:[%s821 + $0x92] sm:$0xff]
  %v963 = vld [vmem:[%s821 + $0x9a] sm:$0xff]
  %v964 = vld [vmem:[%s821 + $0xaa] sm:$0xff]
  %v965 = vld [vmem:[%s821 + $0xb2] sm:$0xff]
  %v966 = vld [vmem:[%s821 + $0xc2] sm:$0xff]
  %v967 = vld [vmem:[%s821 + $0xca] sm:$0xff]
  %v968 = vld [vmem:[%s821 + $0xda] sm:$0xff]
  %v969 = vld [vmem:[%s821 + $0xe2] sm:$0xff]
  %v970 = vld [vmem:[%s821 + $0xf2] sm:$0xff]
  %v971 = vld [vmem:[%s821 + $0xfa] sm:$0xff]
  %v972 = vld [vmem:[%s821 + $0x10a] sm:$0xff]
  %v973 = vld [vmem:[%s821 + $0x112] sm:$0xff]
  %v974 = vld [vmem:[%s821 + $0x122] sm:$0xff]
  %v975 = vld [vmem:[%s821 + $0x12a] sm:$0xff]
  %v976 = vld [vmem:[%s821 + $0x13a] sm:$0xff]
  %v977 = vld [vmem:[%s821 + $0x142] sm:$0xff]
  %v978 = vld [vmem:[%s821 + $0x152] sm:$0xff]
  %v979 = vld [vmem:[%s821 + $0x15a] sm:$0xff]
  %v980 = vld [vmem:[%s821 + $0x16a] sm:$0xff]
  %v981 = vld [vmem:[%s821 + $0x172] sm:$0xff]
  %v982 = vld [vmem:[%s821 + $0x1b2] sm:$0xff]
  %v983 = vld [vmem:[%s821 + $0x1ba] sm:$0xff]
  %v984 = vld [vmem:[%s821 + $0x1ca] sm:$0xff]
  %v985 = vld [vmem:[%s821 + $0x1d2] sm:$0xff]
  %v986 = vld [vmem:[%s821 + $0x1e2] sm:$0xff]
  %v987 = vld [vmem:[%s821 + $0x1ea] sm:$0xff]
  %v988 = vld [vmem:[%s821 + $0x1fa] sm:$0xff]
  %v989 = vld [vmem:[%s821 + $0x202] sm:$0xff]
  %v990 = vld [vmem:[%s821 + $0x212] sm:$0xff]
  %v991 = vld [vmem:[%s821 + $0x21a] sm:$0xff]
  %v992 = vld [vmem:[%s821 + $0x22a] sm:$0xff]
  %v993 = vld [vmem:[%s821 + $0x232] sm:$0xff]
  %v994 = vld [vmem:[%s821 + $0x242] sm:$0xff]
  %v995 = vld [vmem:[%s821 + $0x24a] sm:$0xff]
  %v996 = vld [vmem:[%s821 + $0x25a] sm:$0xff]
  %v997 = vld [vmem:[%s821 + $0x262] sm:$0xff]
  %v998 = vld [vmem:[%s821 + $0x272] sm:$0xff]
  %v999 = vld [vmem:[%s821 + $0x27a] sm:$0xff]
  %v1000 = vld [vmem:[%s821 + $0x28a] sm:$0xff]
  %v1001 = vld [vmem:[%s821 + $0x292] sm:$0xff]
  %v1002 = vld [vmem:[%s821 + $0x2a2] sm:$0xff]
  %v1003 = vld [vmem:[%s821 + $0x2aa] sm:$0xff]
  %v1004 = vld [vmem:[%s821 + $0x2ba] sm:$0xff]
  %v1005 = vld [vmem:[%s821 + $0x2c2] sm:$0xff]
  %v1006 = vld [vmem:[%s821 + $0x2d2] sm:$0xff]
  %v1007 = vld [vmem:[%s821 + $0x2da] sm:$0xff]
  %v1008 = vld [vmem:[%s821 + $0x2ea] sm:$0xff]
  %v1009 = vld [vmem:[%s821 + $0x2f2] sm:$0xff]
  %v1010 = vld [vmem:[%s821 + $0x302] sm:$0xff]
  %v1011 = vld [vmem:[%s821 + $0x30a] sm:$0xff]
  %v1012 = vld [vmem:[%s821 + $0x31a] sm:$0xff]
  %v1013 = vld [vmem:[%s821 + $0x322] sm:$0xff]
  %1078 = vrot.lane.b32.xlu0 %v501, 8
  %v1079 = vpop.permute.xlu0 %1078
  %1080 = vrot.lane.b32.xlu0 %v502, 8
  %v1081 = vpop.permute.xlu0 %1080
  %1082 = vrot.lane.b32.xlu0 %v503, 8
  %v1083 = vpop.permute.xlu0 %1082
  %1084 = vrot.lane.b32.xlu0 %v504, 8
  %v1085 = vpop.permute.xlu0 %1084
  %1086 = vrot.lane.b32.xlu0 %v505, 8
  %v1087 = vpop.permute.xlu0 %1086
  %1088 = vrot.lane.b32.xlu0 %v506, 8
  %v1089 = vpop.permute.xlu0 %1088
  %1090 = vrot.lane.b32.xlu0 %v507, 8
  %v1091 = vpop.permute.xlu0 %1090
  %1092 = vrot.lane.b32.xlu0 %v508, 8
  %v1093 = vpop.permute.xlu0 %1092
  %1094 = vrot.lane.b32.xlu0 %v509, 8
  %v1095 = vpop.permute.xlu0 %1094
  %1096 = vrot.lane.b32.xlu0 %v510, 8
  %v1097 = vpop.permute.xlu0 %1096
  %1098 = vrot.lane.b32.xlu0 %v511, 8
  %v1099 = vpop.permute.xlu0 %1098
  %1100 = vrot.lane.b32.xlu0 %v512, 8
  %v1101 = vpop.permute.xlu0 %1100
  %1102 = vrot.lane.b32.xlu0 %v513, 8
  %v1103 = vpop.permute.xlu0 %1102
  %1104 = vrot.lane.b32.xlu0 %v514, 8
  %v1105 = vpop.permute.xlu0 %1104
  %1106 = vrot.lane.b32.xlu0 %v515, 8
  %v1107 = vpop.permute.xlu0 %1106
  %1108 = vrot.lane.b32.xlu0 %v516, 8
  %v1109 = vpop.permute.xlu0 %1108
  %1110 = vrot.lane.b32.xlu0 %v517, 8
  %v1111 = vpop.permute.xlu0 %1110
  %1112 = vrot.lane.b32.xlu0 %v518, 8
  %v1113 = vpop.permute.xlu0 %1112
  %1114 = vrot.lane.b32.xlu0 %v519, 8
  %v1115 = vpop.permute.xlu0 %1114
  %1116 = vrot.lane.b32.xlu0 %v520, 8
  %v1117 = vpop.permute.xlu0 %1116
  %1118 = vrot.lane.b32.xlu0 %v521, 8
  %v1119 = vpop.permute.xlu0 %1118
  %1120 = vrot.lane.b32.xlu0 %v522, 8
  %v1121 = vpop.permute.xlu0 %1120
  %1122 = vrot.lane.b32.xlu0 %v523, 8
  %v1123 = vpop.permute.xlu0 %1122
  %1124 = vrot.lane.b32.xlu0 %v524, 8
  %v1125 = vpop.permute.xlu0 %1124
  %1126 = vrot.lane.b32.xlu0 %v525, 8
  %v1127 = vpop.permute.xlu0 %1126
  %1128 = vrot.lane.b32.xlu0 %v526, 8
  %v1129 = vpop.permute.xlu0 %1128
  %1130 = vrot.lane.b32.xlu0 %v527, 8
  %v1131 = vpop.permute.xlu0 %1130
  %1132 = vrot.lane.b32.xlu0 %v528, 8
  %v1133 = vpop.permute.xlu0 %1132
  %1134 = vrot.lane.b32.xlu0 %v529, 8
  %v1135 = vpop.permute.xlu0 %1134
  %1136 = vrot.lane.b32.xlu0 %v530, 8
  %v1137 = vpop.permute.xlu0 %1136
  %1138 = vrot.lane.b32.xlu0 %v531, 8
  %v1139 = vpop.permute.xlu0 %1138
  %1140 = vrot.lane.b32.xlu0 %v532, 8
  %v1141 = vpop.permute.xlu0 %1140
  %1142 = vrot.lane.b32.xlu0 %v533, 8
  %v1143 = vpop.permute.xlu0 %1142
  %1144 = vrot.lane.b32.xlu0 %v534, 8
  %v1145 = vpop.permute.xlu0 %1144
  %1146 = vrot.lane.b32.xlu0 %v535, 8
  %v1147 = vpop.permute.xlu0 %1146
  %1148 = vrot.lane.b32.xlu0 %v536, 8
  %v1149 = vpop.permute.xlu0 %1148
  %1150 = vrot.lane.b32.xlu0 %v537, 8
  %v1151 = vpop.permute.xlu0 %1150
  %1152 = vrot.lane.b32.xlu0 %v538, 8
  %v1153 = vpop.permute.xlu0 %1152
  %1154 = vrot.lane.b32.xlu0 %v539, 8
  %v1155 = vpop.permute.xlu0 %1154
  %1156 = vrot.lane.b32.xlu0 %v540, 8
  %v1157 = vpop.permute.xlu0 %1156
  %1158 = vrot.lane.b32.xlu0 %v541, 8
  %v1159 = vpop.permute.xlu0 %1158
  %1160 = vrot.lane.b32.xlu0 %v542, 8
  %v1161 = vpop.permute.xlu0 %1160
  %1162 = vrot.lane.b32.xlu0 %v543, 8
  %v1163 = vpop.permute.xlu0 %1162
  %1164 = vrot.lane.b32.xlu0 %v544, 8
  %v1165 = vpop.permute.xlu0 %1164
  %1166 = vrot.lane.b32.xlu0 %v545, 8
  %v1167 = vpop.permute.xlu0 %1166
  %1168 = vrot.lane.b32.xlu0 %v546, 8
  %v1169 = vpop.permute.xlu0 %1168
  %1170 = vrot.lane.b32.xlu0 %v547, 8
  %v1171 = vpop.permute.xlu0 %1170
  %1172 = vrot.lane.b32.xlu0 %v548, 8
  %v1173 = vpop.permute.xlu0 %1172
  %1174 = vrot.lane.b32.xlu0 %v549, 8
  %v1175 = vpop.permute.xlu0 %1174
  %1176 = vrot.lane.b32.xlu0 %v550, 8
  %v1177 = vpop.permute.xlu0 %1176
  %1178 = vrot.lane.b32.xlu0 %v551, 8
  %v1179 = vpop.permute.xlu0 %1178
  %1180 = vrot.lane.b32.xlu0 %v552, 8
  %v1181 = vpop.permute.xlu0 %1180
  %1182 = vrot.lane.b32.xlu0 %v553, 8
  %v1183 = vpop.permute.xlu0 %1182
  %1184 = vrot.lane.b32.xlu0 %v554, 8
  %v1185 = vpop.permute.xlu0 %1184
  %1186 = vrot.lane.b32.xlu0 %v555, 8
  %v1187 = vpop.permute.xlu0 %1186
  %1188 = vrot.lane.b32.xlu0 %v556, 8
  %v1189 = vpop.permute.xlu0 %1188
  %1190 = vrot.lane.b32.xlu0 %v557, 8
  %v1191 = vpop.permute.xlu0 %1190
  %1192 = vrot.lane.b32.xlu0 %v558, 8
  %v1193 = vpop.permute.xlu0 %1192
  %1194 = vrot.lane.b32.xlu0 %v559, 8
  %v1195 = vpop.permute.xlu0 %1194
  %1196 = vrot.lane.b32.xlu0 %v560, 8
  %v1197 = vpop.permute.xlu0 %1196
  %1198 = vrot.lane.b32.xlu0 %v561, 8
  %v1199 = vpop.permute.xlu0 %1198
  %1200 = vrot.lane.b32.xlu0 %v562, 8
  %v1201 = vpop.permute.xlu0 %1200
  %1202 = vrot.lane.b32.xlu0 %v563, 8
  %v1203 = vpop.permute.xlu0 %1202
  %1204 = vrot.lane.b32.xlu0 %v564, 8
  %v1205 = vpop.permute.xlu0 %1204
  %1334 = vrot.lane.b32.xlu0 %v565, 16
  %v1335 = vpop.permute.xlu0 %1334
  %1336 = vrot.lane.b32.xlu0 %v566, 16
  %v1337 = vpop.permute.xlu0 %1336
  %1338 = vrot.lane.b32.xlu0 %v567, 16
  %v1339 = vpop.permute.xlu0 %1338
  %1340 = vrot.lane.b32.xlu0 %v568, 16
  %v1341 = vpop.permute.xlu0 %1340
  %1342 = vrot.lane.b32.xlu0 %v569, 16
  %v1343 = vpop.permute.xlu0 %1342
  %1344 = vrot.lane.b32.xlu0 %v570, 16
  %v1345 = vpop.permute.xlu0 %1344
  %1346 = vrot.lane.b32.xlu0 %v571, 16
  %v1347 = vpop.permute.xlu0 %1346
  %1348 = vrot.lane.b32.xlu0 %v572, 16
  %v1349 = vpop.permute.xlu0 %1348
  %1350 = vrot.lane.b32.xlu0 %v573, 16
  %v1351 = vpop.permute.xlu0 %1350
  %1352 = vrot.lane.b32.xlu0 %v574, 16
  %v1353 = vpop.permute.xlu0 %1352
  %1354 = vrot.lane.b32.xlu0 %v575, 16
  %v1355 = vpop.permute.xlu0 %1354
  %1356 = vrot.lane.b32.xlu0 %v576, 16
  %v1357 = vpop.permute.xlu0 %1356
  %1358 = vrot.lane.b32.xlu0 %v577, 16
  %v1359 = vpop.permute.xlu0 %1358
  %1360 = vrot.lane.b32.xlu0 %v578, 16
  %v1361 = vpop.permute.xlu0 %1360
  %1362 = vrot.lane.b32.xlu0 %v579, 16
  %v1363 = vpop.permute.xlu0 %1362
  %1364 = vrot.lane.b32.xlu0 %v580, 16
  %v1365 = vpop.permute.xlu0 %1364
  %1366 = vrot.lane.b32.xlu0 %v581, 16
  %v1367 = vpop.permute.xlu0 %1366
  %1368 = vrot.lane.b32.xlu0 %v582, 16
  %v1369 = vpop.permute.xlu0 %1368
  %1370 = vrot.lane.b32.xlu0 %v583, 16
  %v1371 = vpop.permute.xlu0 %1370
  %1372 = vrot.lane.b32.xlu0 %v584, 16
  %v1373 = vpop.permute.xlu0 %1372
  %1374 = vrot.lane.b32.xlu0 %v585, 16
  %v1375 = vpop.permute.xlu0 %1374
  %1376 = vrot.lane.b32.xlu0 %v586, 16
  %v1377 = vpop.permute.xlu0 %1376
  %1378 = vrot.lane.b32.xlu0 %v587, 16
  %v1379 = vpop.permute.xlu0 %1378
  %1380 = vrot.lane.b32.xlu0 %v588, 16
  %v1381 = vpop.permute.xlu0 %1380
  %1382 = vrot.lane.b32.xlu0 %v589, 16
  %v1383 = vpop.permute.xlu0 %1382
  %1384 = vrot.lane.b32.xlu0 %v590, 16
  %v1385 = vpop.permute.xlu0 %1384
  %1386 = vrot.lane.b32.xlu0 %v591, 16
  %v1387 = vpop.permute.xlu0 %1386
  %1388 = vrot.lane.b32.xlu0 %v592, 16
  %v1389 = vpop.permute.xlu0 %1388
  %1390 = vrot.lane.b32.xlu0 %v593, 16
  %v1391 = vpop.permute.xlu0 %1390
  %1392 = vrot.lane.b32.xlu0 %v594, 16
  %v1393 = vpop.permute.xlu0 %1392
  %1394 = vrot.lane.b32.xlu0 %v595, 16
  %v1395 = vpop.permute.xlu0 %1394
  %1396 = vrot.lane.b32.xlu0 %v596, 16
  %v1397 = vpop.permute.xlu0 %1396
  %1398 = vrot.lane.b32.xlu0 %v597, 16
  %v1399 = vpop.permute.xlu0 %1398
  %1400 = vrot.lane.b32.xlu0 %v598, 16
  %v1401 = vpop.permute.xlu0 %1400
  %1402 = vrot.lane.b32.xlu0 %v599, 16
  %v1403 = vpop.permute.xlu0 %1402
  %1404 = vrot.lane.b32.xlu0 %v600, 16
  %v1405 = vpop.permute.xlu0 %1404
  %1406 = vrot.lane.b32.xlu0 %v601, 16
  %v1407 = vpop.permute.xlu0 %1406
  %1408 = vrot.lane.b32.xlu0 %v602, 16
  %v1409 = vpop.permute.xlu0 %1408
  %1410 = vrot.lane.b32.xlu0 %v603, 16
  %v1411 = vpop.permute.xlu0 %1410
  %1412 = vrot.lane.b32.xlu0 %v604, 16
  %v1413 = vpop.permute.xlu0 %1412
  %1414 = vrot.lane.b32.xlu0 %v605, 16
  %v1415 = vpop.permute.xlu0 %1414
  %1416 = vrot.lane.b32.xlu0 %v606, 16
  %v1417 = vpop.permute.xlu0 %1416
  %1418 = vrot.lane.b32.xlu0 %v607, 16
  %v1419 = vpop.permute.xlu0 %1418
  %1420 = vrot.lane.b32.xlu0 %v608, 16
  %v1421 = vpop.permute.xlu0 %1420
  %1422 = vrot.lane.b32.xlu0 %v609, 16
  %v1423 = vpop.permute.xlu0 %1422
  %1424 = vrot.lane.b32.xlu0 %v610, 16
  %v1425 = vpop.permute.xlu0 %1424
  %1426 = vrot.lane.b32.xlu0 %v611, 16
  %v1427 = vpop.permute.xlu0 %1426
  %1428 = vrot.lane.b32.xlu0 %v612, 16
  %v1429 = vpop.permute.xlu0 %1428
  %1430 = vrot.lane.b32.xlu0 %v613, 16
  %v1431 = vpop.permute.xlu0 %1430
  %1432 = vrot.lane.b32.xlu0 %v614, 16
  %v1433 = vpop.permute.xlu0 %1432
  %1434 = vrot.lane.b32.xlu0 %v615, 16
  %v1435 = vpop.permute.xlu0 %1434
  %1436 = vrot.lane.b32.xlu0 %v616, 16
  %v1437 = vpop.permute.xlu0 %1436
  %1438 = vrot.lane.b32.xlu0 %v617, 16
  %v1439 = vpop.permute.xlu0 %1438
  %1440 = vrot.lane.b32.xlu0 %v618, 16
  %v1441 = vpop.permute.xlu0 %1440
  %1442 = vrot.lane.b32.xlu0 %v619, 16
  %v1443 = vpop.permute.xlu0 %1442
  %1444 = vrot.lane.b32.xlu0 %v620, 16
  %v1445 = vpop.permute.xlu0 %1444
  %1446 = vrot.lane.b32.xlu0 %v621, 16
  %v1447 = vpop.permute.xlu0 %1446
  %1448 = vrot.lane.b32.xlu0 %v622, 16
  %v1449 = vpop.permute.xlu0 %1448
  %1450 = vrot.lane.b32.xlu0 %v623, 16
  %v1451 = vpop.permute.xlu0 %1450
  %1452 = vrot.lane.b32.xlu0 %v624, 16
  %v1453 = vpop.permute.xlu0 %1452
  %1454 = vrot.lane.b32.xlu0 %v625, 16
  %v1455 = vpop.permute.xlu0 %1454
  %1456 = vrot.lane.b32.xlu0 %v626, 16
  %v1457 = vpop.permute.xlu0 %1456
  %1458 = vrot.lane.b32.xlu0 %v627, 16
  %v1459 = vpop.permute.xlu0 %1458
  %1460 = vrot.lane.b32.xlu0 %v628, 16
  %v1461 = vpop.permute.xlu0 %1460
  %1590 = vrot.lane.b32.xlu0 %v629, 24
  %v1591 = vpop.permute.xlu0 %1590
  %1592 = vrot.lane.b32.xlu0 %v630, 24
  %v1593 = vpop.permute.xlu0 %1592
  %1594 = vrot.lane.b32.xlu0 %v631, 24
  %v1595 = vpop.permute.xlu0 %1594
  %1596 = vrot.lane.b32.xlu0 %v632, 24
  %v1597 = vpop.permute.xlu0 %1596
  %1598 = vrot.lane.b32.xlu0 %v633, 24
  %v1599 = vpop.permute.xlu0 %1598
  %1600 = vrot.lane.b32.xlu0 %v634, 24
  %v1601 = vpop.permute.xlu0 %1600
  %1602 = vrot.lane.b32.xlu0 %v635, 24
  %v1603 = vpop.permute.xlu0 %1602
  %1604 = vrot.lane.b32.xlu0 %v636, 24
  %v1605 = vpop.permute.xlu0 %1604
  %1606 = vrot.lane.b32.xlu0 %v637, 24
  %v1607 = vpop.permute.xlu0 %1606
  %1608 = vrot.lane.b32.xlu0 %v638, 24
  %v1609 = vpop.permute.xlu0 %1608
  %1610 = vrot.lane.b32.xlu0 %v639, 24
  %v1611 = vpop.permute.xlu0 %1610
  %1612 = vrot.lane.b32.xlu0 %v640, 24
  %v1613 = vpop.permute.xlu0 %1612
  %1614 = vrot.lane.b32.xlu0 %v641, 24
  %v1615 = vpop.permute.xlu0 %1614
  %1616 = vrot.lane.b32.xlu0 %v642, 24
  %v1617 = vpop.permute.xlu0 %1616
  %1618 = vrot.lane.b32.xlu0 %v643, 24
  %v1619 = vpop.permute.xlu0 %1618
  %1620 = vrot.lane.b32.xlu0 %v644, 24
  %v1621 = vpop.permute.xlu0 %1620
  %1622 = vrot.lane.b32.xlu0 %v645, 24
  %v1623 = vpop.permute.xlu0 %1622
  %1624 = vrot.lane.b32.xlu0 %v646, 24
  %v1625 = vpop.permute.xlu0 %1624
  %1626 = vrot.lane.b32.xlu0 %v647, 24
  %v1627 = vpop.permute.xlu0 %1626
  %1628 = vrot.lane.b32.xlu0 %v648, 24
  %v1629 = vpop.permute.xlu0 %1628
  %1630 = vrot.lane.b32.xlu0 %v649, 24
  %v1631 = vpop.permute.xlu0 %1630
  %1632 = vrot.lane.b32.xlu0 %v650, 24
  %v1633 = vpop.permute.xlu0 %1632
  %1634 = vrot.lane.b32.xlu0 %v651, 24
  %v1635 = vpop.permute.xlu0 %1634
  %1636 = vrot.lane.b32.xlu0 %v652, 24
  %v1637 = vpop.permute.xlu0 %1636
  %1638 = vrot.lane.b32.xlu0 %v653, 24
  %v1639 = vpop.permute.xlu0 %1638
  %1640 = vrot.lane.b32.xlu0 %v654, 24
  %v1641 = vpop.permute.xlu0 %1640
  %1642 = vrot.lane.b32.xlu0 %v655, 24
  %v1643 = vpop.permute.xlu0 %1642
  %1644 = vrot.lane.b32.xlu0 %v656, 24
  %v1645 = vpop.permute.xlu0 %1644
  %1646 = vrot.lane.b32.xlu0 %v657, 24
  %v1647 = vpop.permute.xlu0 %1646
  %1648 = vrot.lane.b32.xlu0 %v658, 24
  %v1649 = vpop.permute.xlu0 %1648
  %1650 = vrot.lane.b32.xlu0 %v659, 24
  %v1651 = vpop.permute.xlu0 %1650
  %1652 = vrot.lane.b32.xlu0 %v660, 24
  %v1653 = vpop.permute.xlu0 %1652
  %1654 = vrot.lane.b32.xlu0 %v661, 24
  %v1655 = vpop.permute.xlu0 %1654
  %1656 = vrot.lane.b32.xlu0 %v662, 24
  %v1657 = vpop.permute.xlu0 %1656
  %1658 = vrot.lane.b32.xlu0 %v663, 24
  %v1659 = vpop.permute.xlu0 %1658
  %1660 = vrot.lane.b32.xlu0 %v664, 24
  %v1661 = vpop.permute.xlu0 %1660
  %1662 = vrot.lane.b32.xlu0 %v665, 24
  %v1663 = vpop.permute.xlu0 %1662
  %1664 = vrot.lane.b32.xlu0 %v666, 24
  %v1665 = vpop.permute.xlu0 %1664
  %1666 = vrot.lane.b32.xlu0 %v667, 24
  %v1667 = vpop.permute.xlu0 %1666
  %1668 = vrot.lane.b32.xlu0 %v668, 24
  %v1669 = vpop.permute.xlu0 %1668
  %1670 = vrot.lane.b32.xlu0 %v669, 24
  %v1671 = vpop.permute.xlu0 %1670
  %1672 = vrot.lane.b32.xlu0 %v670, 24
  %v1673 = vpop.permute.xlu0 %1672
  %1674 = vrot.lane.b32.xlu0 %v671, 24
  %v1675 = vpop.permute.xlu0 %1674
  %1676 = vrot.lane.b32.xlu0 %v672, 24
  %v1677 = vpop.permute.xlu0 %1676
  %1678 = vrot.lane.b32.xlu0 %v673, 24
  %v1679 = vpop.permute.xlu0 %1678
  %1680 = vrot.lane.b32.xlu0 %v674, 24
  %v1681 = vpop.permute.xlu0 %1680
  %1682 = vrot.lane.b32.xlu0 %v675, 24
  %v1683 = vpop.permute.xlu0 %1682
  %1684 = vrot.lane.b32.xlu0 %v676, 24
  %v1685 = vpop.permute.xlu0 %1684
  %1686 = vrot.lane.b32.xlu0 %v677, 24
  %v1687 = vpop.permute.xlu0 %1686
  %1688 = vrot.lane.b32.xlu0 %v678, 24
  %v1689 = vpop.permute.xlu0 %1688
  %1690 = vrot.lane.b32.xlu0 %v679, 24
  %v1691 = vpop.permute.xlu0 %1690
  %1692 = vrot.lane.b32.xlu0 %v680, 24
  %v1693 = vpop.permute.xlu0 %1692
  %1694 = vrot.lane.b32.xlu0 %v681, 24
  %v1695 = vpop.permute.xlu0 %1694
  %1696 = vrot.lane.b32.xlu0 %v682, 24
  %v1697 = vpop.permute.xlu0 %1696
  %1698 = vrot.lane.b32.xlu0 %v683, 24
  %v1699 = vpop.permute.xlu0 %1698
  %1700 = vrot.lane.b32.xlu0 %v684, 24
  %v1701 = vpop.permute.xlu0 %1700
  %1702 = vrot.lane.b32.xlu0 %v685, 24
  %v1703 = vpop.permute.xlu0 %1702
  %1704 = vrot.lane.b32.xlu0 %v686, 24
  %v1705 = vpop.permute.xlu0 %1704
  %1706 = vrot.lane.b32.xlu0 %v687, 24
  %v1707 = vpop.permute.xlu0 %1706
  %1708 = vrot.lane.b32.xlu0 %v688, 24
  %v1709 = vpop.permute.xlu0 %1708
  %1710 = vrot.lane.b32.xlu0 %v689, 24
  %v1711 = vpop.permute.xlu0 %1710
  %1712 = vrot.lane.b32.xlu0 %v690, 24
  %v1713 = vpop.permute.xlu0 %1712
  %1714 = vrot.lane.b32.xlu0 %v691, 24
  %v1715 = vpop.permute.xlu0 %1714
  %1716 = vrot.lane.b32.xlu0 %v692, 24
  %v1717 = vpop.permute.xlu0 %1716
  %1846 = vrot.lane.b32.xlu0 %v693, 32
  %v1847 = vpop.permute.xlu0 %1846
  %1848 = vrot.lane.b32.xlu0 %v694, 32
  %v1849 = vpop.permute.xlu0 %1848
  %1850 = vrot.lane.b32.xlu0 %v695, 32
  %v1851 = vpop.permute.xlu0 %1850
  %1852 = vrot.lane.b32.xlu0 %v696, 32
  %v1853 = vpop.permute.xlu0 %1852
  %1854 = vrot.lane.b32.xlu0 %v697, 32
  %v1855 = vpop.permute.xlu0 %1854
  %1856 = vrot.lane.b32.xlu0 %v698, 32
  %v1857 = vpop.permute.xlu0 %1856
  %1858 = vrot.lane.b32.xlu0 %v699, 32
  %v1859 = vpop.permute.xlu0 %1858
  %1860 = vrot.lane.b32.xlu0 %v700, 32
  %v1861 = vpop.permute.xlu0 %1860
  %1862 = vrot.lane.b32.xlu0 %v701, 32
  %v1863 = vpop.permute.xlu0 %1862
  %1864 = vrot.lane.b32.xlu0 %v702, 32
  %v1865 = vpop.permute.xlu0 %1864
  %1866 = vrot.lane.b32.xlu0 %v703, 32
  %v1867 = vpop.permute.xlu0 %1866
  %1868 = vrot.lane.b32.xlu0 %v704, 32
  %v1869 = vpop.permute.xlu0 %1868
  %1870 = vrot.lane.b32.xlu0 %v705, 32
  %v1871 = vpop.permute.xlu0 %1870
  %1872 = vrot.lane.b32.xlu0 %v706, 32
  %v1873 = vpop.permute.xlu0 %1872
  %1874 = vrot.lane.b32.xlu0 %v707, 32
  %v1875 = vpop.permute.xlu0 %1874
  %1876 = vrot.lane.b32.xlu0 %v708, 32
  %v1877 = vpop.permute.xlu0 %1876
  %1878 = vrot.lane.b32.xlu0 %v709, 32
  %v1879 = vpop.permute.xlu0 %1878
  %1880 = vrot.lane.b32.xlu0 %v710, 32
  %v1881 = vpop.permute.xlu0 %1880
  %1882 = vrot.lane.b32.xlu0 %v711, 32
  %v1883 = vpop.permute.xlu0 %1882
  %1884 = vrot.lane.b32.xlu0 %v712, 32
  %v1885 = vpop.permute.xlu0 %1884
  %1886 = vrot.lane.b32.xlu0 %v713, 32
  %v1887 = vpop.permute.xlu0 %1886
  %1888 = vrot.lane.b32.xlu0 %v714, 32
  %v1889 = vpop.permute.xlu0 %1888
  %1890 = vrot.lane.b32.xlu0 %v715, 32
  %v1891 = vpop.permute.xlu0 %1890
  %1892 = vrot.lane.b32.xlu0 %v716, 32
  %v1893 = vpop.permute.xlu0 %1892
  %1894 = vrot.lane.b32.xlu0 %v717, 32
  %v1895 = vpop.permute.xlu0 %1894
  %1896 = vrot.lane.b32.xlu0 %v718, 32
  %v1897 = vpop.permute.xlu0 %1896
  %1898 = vrot.lane.b32.xlu0 %v719, 32
  %v1899 = vpop.permute.xlu0 %1898
  %1900 = vrot.lane.b32.xlu0 %v720, 32
  %v1901 = vpop.permute.xlu0 %1900
  %1902 = vrot.lane.b32.xlu0 %v721, 32
  %v1903 = vpop.permute.xlu0 %1902
  %1904 = vrot.lane.b32.xlu0 %v722, 32
  %v1905 = vpop.permute.xlu0 %1904
  %1906 = vrot.lane.b32.xlu0 %v723, 32
  %v1907 = vpop.permute.xlu0 %1906
  %1908 = vrot.lane.b32.xlu0 %v724, 32
  %v1909 = vpop.permute.xlu0 %1908
  %1910 = vrot.lane.b32.xlu0 %v725, 32
  %v1911 = vpop.permute.xlu0 %1910
  %1912 = vrot.lane.b32.xlu0 %v726, 32
  %v1913 = vpop.permute.xlu0 %1912
  %1914 = vrot.lane.b32.xlu0 %v727, 32
  %v1915 = vpop.permute.xlu0 %1914
  %1916 = vrot.lane.b32.xlu0 %v728, 32
  %v1917 = vpop.permute.xlu0 %1916
  %1918 = vrot.lane.b32.xlu0 %v729, 32
  %v1919 = vpop.permute.xlu0 %1918
  %1920 = vrot.lane.b32.xlu0 %v730, 32
  %v1921 = vpop.permute.xlu0 %1920
  %1922 = vrot.lane.b32.xlu0 %v731, 32
  %v1923 = vpop.permute.xlu0 %1922
  %1924 = vrot.lane.b32.xlu0 %v732, 32
  %v1925 = vpop.permute.xlu0 %1924
  %1926 = vrot.lane.b32.xlu0 %v733, 32
  %v1927 = vpop.permute.xlu0 %1926
  %1928 = vrot.lane.b32.xlu0 %v734, 32
  %v1929 = vpop.permute.xlu0 %1928
  %1930 = vrot.lane.b32.xlu0 %v735, 32
  %v1931 = vpop.permute.xlu0 %1930
  %1932 = vrot.lane.b32.xlu0 %v736, 32
  %v1933 = vpop.permute.xlu0 %1932
  %1934 = vrot.lane.b32.xlu0 %v737, 32
  %v1935 = vpop.permute.xlu0 %1934
  %1936 = vrot.lane.b32.xlu0 %v738, 32
  %v1937 = vpop.permute.xlu0 %1936
  %1938 = vrot.lane.b32.xlu0 %v739, 32
  %v1939 = vpop.permute.xlu0 %1938
  %1940 = vrot.lane.b32.xlu0 %v740, 32
  %v1941 = vpop.permute.xlu0 %1940
  %1942 = vrot.lane.b32.xlu0 %v741, 32
  %v1943 = vpop.permute.xlu0 %1942
  %1944 = vrot.lane.b32.xlu0 %v742, 32
  %v1945 = vpop.permute.xlu0 %1944
  %1946 = vrot.lane.b32.xlu0 %v743, 32
  %v1947 = vpop.permute.xlu0 %1946
  %1948 = vrot.lane.b32.xlu0 %v744, 32
  %v1949 = vpop.permute.xlu0 %1948
  %1950 = vrot.lane.b32.xlu0 %v745, 32
  %v1951 = vpop.permute.xlu0 %1950
  %1952 = vrot.lane.b32.xlu0 %v746, 32
  %v1953 = vpop.permute.xlu0 %1952
  %1954 = vrot.lane.b32.xlu0 %v747, 32
  %v1955 = vpop.permute.xlu0 %1954
  %1956 = vrot.lane.b32.xlu0 %v748, 32
  %v1957 = vpop.permute.xlu0 %1956
  %1958 = vrot.lane.b32.xlu0 %v749, 32
  %v1959 = vpop.permute.xlu0 %1958
  %1960 = vrot.lane.b32.xlu0 %v750, 32
  %v1961 = vpop.permute.xlu0 %1960
  %1962 = vrot.lane.b32.xlu0 %v751, 32
  %v1963 = vpop.permute.xlu0 %1962
  %1964 = vrot.lane.b32.xlu0 %v752, 32
  %v1965 = vpop.permute.xlu0 %1964
  %1966 = vrot.lane.b32.xlu0 %v753, 32
  %v1967 = vpop.permute.xlu0 %1966
  %1968 = vrot.lane.b32.xlu0 %v754, 32
  %v1969 = vpop.permute.xlu0 %1968
  %1970 = vrot.lane.b32.xlu0 %v755, 32
  %v1971 = vpop.permute.xlu0 %1970
  %1972 = vrot.lane.b32.xlu0 %v756, 32
  %v1973 = vpop.permute.xlu0 %1972
  %2102 = vrot.lane.b32.xlu0 %v757, 40
  %v2103 = vpop.permute.xlu0 %2102
  %2104 = vrot.lane.b32.xlu0 %v758, 40
  %v2105 = vpop.permute.xlu0 %2104
  %2106 = vrot.lane.b32.xlu0 %v759, 40
  %v2107 = vpop.permute.xlu0 %2106
  %2108 = vrot.lane.b32.xlu0 %v760, 40
  %v2109 = vpop.permute.xlu0 %2108
  %2110 = vrot.lane.b32.xlu0 %v761, 40
  %v2111 = vpop.permute.xlu0 %2110
  %2112 = vrot.lane.b32.xlu0 %v762, 40
  %v2113 = vpop.permute.xlu0 %2112
  %2114 = vrot.lane.b32.xlu0 %v763, 40
  %v2115 = vpop.permute.xlu0 %2114
  %2116 = vrot.lane.b32.xlu0 %v764, 40
  %v2117 = vpop.permute.xlu0 %2116
  %2118 = vrot.lane.b32.xlu0 %v765, 40
  %v2119 = vpop.permute.xlu0 %2118
  %2120 = vrot.lane.b32.xlu0 %v766, 40
  %v2121 = vpop.permute.xlu0 %2120
  %2122 = vrot.lane.b32.xlu0 %v767, 40
  %v2123 = vpop.permute.xlu0 %2122
  %2124 = vrot.lane.b32.xlu0 %v768, 40
  %v2125 = vpop.permute.xlu0 %2124
  %2126 = vrot.lane.b32.xlu0 %v769, 40
  %v2127 = vpop.permute.xlu0 %2126
  %2128 = vrot.lane.b32.xlu0 %v770, 40
  %v2129 = vpop.permute.xlu0 %2128
  %2130 = vrot.lane.b32.xlu0 %v771, 40
  %v2131 = vpop.permute.xlu0 %2130
  %2132 = vrot.lane.b32.xlu0 %v772, 40
  %v2133 = vpop.permute.xlu0 %2132
  %2134 = vrot.lane.b32.xlu0 %v773, 40
  %v2135 = vpop.permute.xlu0 %2134
  %2136 = vrot.lane.b32.xlu0 %v774, 40
  %v2137 = vpop.permute.xlu0 %2136
  %2138 = vrot.lane.b32.xlu0 %v775, 40
  %v2139 = vpop.permute.xlu0 %2138
  %2140 = vrot.lane.b32.xlu0 %v776, 40
  %v2141 = vpop.permute.xlu0 %2140
  %2142 = vrot.lane.b32.xlu0 %v777, 40
  %v2143 = vpop.permute.xlu0 %2142
  %2144 = vrot.lane.b32.xlu0 %v778, 40
  %v2145 = vpop.permute.xlu0 %2144
  %2146 = vrot.lane.b32.xlu0 %v779, 40
  %v2147 = vpop.permute.xlu0 %2146
  %2148 = vrot.lane.b32.xlu0 %v780, 40
  %v2149 = vpop.permute.xlu0 %2148
  %2150 = vrot.lane.b32.xlu0 %v781, 40
  %v2151 = vpop.permute.xlu0 %2150
  %2152 = vrot.lane.b32.xlu0 %v782, 40
  %v2153 = vpop.permute.xlu0 %2152
  %2154 = vrot.lane.b32.xlu0 %v783, 40
  %v2155 = vpop.permute.xlu0 %2154
  %2156 = vrot.lane.b32.xlu0 %v784, 40
  %v2157 = vpop.permute.xlu0 %2156
  %2158 = vrot.lane.b32.xlu0 %v785, 40
  %v2159 = vpop.permute.xlu0 %2158
  %2160 = vrot.lane.b32.xlu0 %v786, 40
  %v2161 = vpop.permute.xlu0 %2160
  %2162 = vrot.lane.b32.xlu0 %v787, 40
  %v2163 = vpop.permute.xlu0 %2162
  %2164 = vrot.lane.b32.xlu0 %v788, 40
  %v2165 = vpop.permute.xlu0 %2164
  %2166 = vrot.lane.b32.xlu0 %v789, 40
  %v2167 = vpop.permute.xlu0 %2166
  %2168 = vrot.lane.b32.xlu0 %v790, 40
  %v2169 = vpop.permute.xlu0 %2168
  %2170 = vrot.lane.b32.xlu0 %v791, 40
  %v2171 = vpop.permute.xlu0 %2170
  %2172 = vrot.lane.b32.xlu0 %v792, 40
  %v2173 = vpop.permute.xlu0 %2172
  %2174 = vrot.lane.b32.xlu0 %v793, 40
  %v2175 = vpop.permute.xlu0 %2174
  %2176 = vrot.lane.b32.xlu0 %v794, 40
  %v2177 = vpop.permute.xlu0 %2176
  %2178 = vrot.lane.b32.xlu0 %v795, 40
  %v2179 = vpop.permute.xlu0 %2178
  %2180 = vrot.lane.b32.xlu0 %v796, 40
  %v2181 = vpop.permute.xlu0 %2180
  %2182 = vrot.lane.b32.xlu0 %v797, 40
  %v2183 = vpop.permute.xlu0 %2182
  %2184 = vrot.lane.b32.xlu0 %v798, 40
  %v2185 = vpop.permute.xlu0 %2184
  %2186 = vrot.lane.b32.xlu0 %v799, 40
  %v2187 = vpop.permute.xlu0 %2186
  %2188 = vrot.lane.b32.xlu0 %v800, 40
  %v2189 = vpop.permute.xlu0 %2188
  %2190 = vrot.lane.b32.xlu0 %v801, 40
  %v2191 = vpop.permute.xlu0 %2190
  %2192 = vrot.lane.b32.xlu0 %v802, 40
  %v2193 = vpop.permute.xlu0 %2192
  %2194 = vrot.lane.b32.xlu0 %v803, 40
  %v2195 = vpop.permute.xlu0 %2194
  %2196 = vrot.lane.b32.xlu0 %v804, 40
  %v2197 = vpop.permute.xlu0 %2196
  %2198 = vrot.lane.b32.xlu0 %v805, 40
  %v2199 = vpop.permute.xlu0 %2198
  %2200 = vrot.lane.b32.xlu0 %v806, 40
  %v2201 = vpop.permute.xlu0 %2200
  %2202 = vrot.lane.b32.xlu0 %v807, 40
  %v2203 = vpop.permute.xlu0 %2202
  %2204 = vrot.lane.b32.xlu0 %v808, 40
  %v2205 = vpop.permute.xlu0 %2204
  %2206 = vrot.lane.b32.xlu0 %v809, 40
  %v2207 = vpop.permute.xlu0 %2206
  %2208 = vrot.lane.b32.xlu0 %v810, 40
  %v2209 = vpop.permute.xlu0 %2208
  %2210 = vrot.lane.b32.xlu0 %v811, 40
  %v2211 = vpop.permute.xlu0 %2210
  %2212 = vrot.lane.b32.xlu0 %v812, 40
  %v2213 = vpop.permute.xlu0 %2212
  %2214 = vrot.lane.b32.xlu0 %v813, 40
  %v2215 = vpop.permute.xlu0 %2214
  %2216 = vrot.lane.b32.xlu0 %v814, 40
  %v2217 = vpop.permute.xlu0 %2216
  %2218 = vrot.lane.b32.xlu0 %v815, 40
  %v2219 = vpop.permute.xlu0 %2218
  %2220 = vrot.lane.b32.xlu0 %v816, 40
  %v2221 = vpop.permute.xlu0 %2220
  %2222 = vrot.lane.b32.xlu0 %v817, 40
  %v2223 = vpop.permute.xlu0 %2222
  %2224 = vrot.lane.b32.xlu0 %v818, 40
  %v2225 = vpop.permute.xlu0 %2224
  %2226 = vrot.lane.b32.xlu0 %v819, 40
  %v2227 = vpop.permute.xlu0 %2226
  %2228 = vrot.lane.b32.xlu0 %v820, 40
  %v2229 = vpop.permute.xlu0 %2228
  %2358 = vrot.lane.b32.xlu0 %v822, 48
  %v2359 = vpop.permute.xlu0 %2358
  %2360 = vrot.lane.b32.xlu0 %v823, 48
  %v2361 = vpop.permute.xlu0 %2360
  %2362 = vrot.lane.b32.xlu0 %v824, 48
  %v2363 = vpop.permute.xlu0 %2362
  %2364 = vrot.lane.b32.xlu0 %v825, 48
  %v2365 = vpop.permute.xlu0 %2364
  %2366 = vrot.lane.b32.xlu0 %v826, 48
  %v2367 = vpop.permute.xlu0 %2366
  %2368 = vrot.lane.b32.xlu0 %v827, 48
  %v2369 = vpop.permute.xlu0 %2368
  %2370 = vrot.lane.b32.xlu0 %v828, 48
  %v2371 = vpop.permute.xlu0 %2370
  %2372 = vrot.lane.b32.xlu0 %v829, 48
  %v2373 = vpop.permute.xlu0 %2372
  %2374 = vrot.lane.b32.xlu0 %v830, 48
  %v2375 = vpop.permute.xlu0 %2374
  %2376 = vrot.lane.b32.xlu0 %v831, 48
  %v2377 = vpop.permute.xlu0 %2376
  %2378 = vrot.lane.b32.xlu0 %v832, 48
  %v2379 = vpop.permute.xlu0 %2378
  %2380 = vrot.lane.b32.xlu0 %v833, 48
  %v2381 = vpop.permute.xlu0 %2380
  %2382 = vrot.lane.b32.xlu0 %v834, 48
  %v2383 = vpop.permute.xlu0 %2382
  %2384 = vrot.lane.b32.xlu0 %v835, 48
  %v2385 = vpop.permute.xlu0 %2384
  %2386 = vrot.lane.b32.xlu0 %v836, 48
  %v2387 = vpop.permute.xlu0 %2386
  %2388 = vrot.lane.b32.xlu0 %v837, 48
  %v2389 = vpop.permute.xlu0 %2388
  %2390 = vrot.lane.b32.xlu0 %v838, 48
  %v2391 = vpop.permute.xlu0 %2390
  %2392 = vrot.lane.b32.xlu0 %v839, 48
  %v2393 = vpop.permute.xlu0 %2392
  %2394 = vrot.lane.b32.xlu0 %v840, 48
  %v2395 = vpop.permute.xlu0 %2394
  %2396 = vrot.lane.b32.xlu0 %v841, 48
  %v2397 = vpop.permute.xlu0 %2396
  %2398 = vrot.lane.b32.xlu0 %v842, 48
  %v2399 = vpop.permute.xlu0 %2398
  %2400 = vrot.lane.b32.xlu0 %v843, 48
  %v2401 = vpop.permute.xlu0 %2400
  %2402 = vrot.lane.b32.xlu0 %v844, 48
  %v2403 = vpop.permute.xlu0 %2402
  %2404 = vrot.lane.b32.xlu0 %v845, 48
  %v2405 = vpop.permute.xlu0 %2404
  %2406 = vrot.lane.b32.xlu0 %v846, 48
  %v2407 = vpop.permute.xlu0 %2406
  %2408 = vrot.lane.b32.xlu0 %v847, 48
  %v2409 = vpop.permute.xlu0 %2408
  %2410 = vrot.lane.b32.xlu0 %v848, 48
  %v2411 = vpop.permute.xlu0 %2410
  %2412 = vrot.lane.b32.xlu0 %v849, 48
  %v2413 = vpop.permute.xlu0 %2412
  %2414 = vrot.lane.b32.xlu0 %v850, 48
  %v2415 = vpop.permute.xlu0 %2414
  %2416 = vrot.lane.b32.xlu0 %v851, 48
  %v2417 = vpop.permute.xlu0 %2416
  %2418 = vrot.lane.b32.xlu0 %v852, 48
  %v2419 = vpop.permute.xlu0 %2418
  %2420 = vrot.lane.b32.xlu0 %v853, 48
  %v2421 = vpop.permute.xlu0 %2420
  %2422 = vrot.lane.b32.xlu0 %v854, 48
  %v2423 = vpop.permute.xlu0 %2422
  %2424 = vrot.lane.b32.xlu0 %v855, 48
  %v2425 = vpop.permute.xlu0 %2424
  %2426 = vrot.lane.b32.xlu0 %v856, 48
  %v2427 = vpop.permute.xlu0 %2426
  %2428 = vrot.lane.b32.xlu0 %v857, 48
  %v2429 = vpop.permute.xlu0 %2428
  %2430 = vrot.lane.b32.xlu0 %v858, 48
  %v2431 = vpop.permute.xlu0 %2430
  %2432 = vrot.lane.b32.xlu0 %v859, 48
  %v2433 = vpop.permute.xlu0 %2432
  %2434 = vrot.lane.b32.xlu0 %v860, 48
  %v2435 = vpop.permute.xlu0 %2434
  %2436 = vrot.lane.b32.xlu0 %v861, 48
  %v2437 = vpop.permute.xlu0 %2436
  %2438 = vrot.lane.b32.xlu0 %v862, 48
  %v2439 = vpop.permute.xlu0 %2438
  %2440 = vrot.lane.b32.xlu0 %v863, 48
  %v2441 = vpop.permute.xlu0 %2440
  %2442 = vrot.lane.b32.xlu0 %v864, 48
  %v2443 = vpop.permute.xlu0 %2442
  %2444 = vrot.lane.b32.xlu0 %v865, 48
  %v2445 = vpop.permute.xlu0 %2444
  %2446 = vrot.lane.b32.xlu0 %v866, 48
  %v2447 = vpop.permute.xlu0 %2446
  %2448 = vrot.lane.b32.xlu0 %v867, 48
  %v2449 = vpop.permute.xlu0 %2448
  %2450 = vrot.lane.b32.xlu0 %v868, 48
  %v2451 = vpop.permute.xlu0 %2450
  %2452 = vrot.lane.b32.xlu0 %v869, 48
  %v2453 = vpop.permute.xlu0 %2452
  %2454 = vrot.lane.b32.xlu0 %v870, 48
  %v2455 = vpop.permute.xlu0 %2454
  %2456 = vrot.lane.b32.xlu0 %v871, 48
  %v2457 = vpop.permute.xlu0 %2456
  %2458 = vrot.lane.b32.xlu0 %v872, 48
  %v2459 = vpop.permute.xlu0 %2458
  %2460 = vrot.lane.b32.xlu0 %v873, 48
  %v2461 = vpop.permute.xlu0 %2460
  %2462 = vrot.lane.b32.xlu0 %v874, 48
  %v2463 = vpop.permute.xlu0 %2462
  %2464 = vrot.lane.b32.xlu0 %v875, 48
  %v2465 = vpop.permute.xlu0 %2464
  %2466 = vrot.lane.b32.xlu0 %v876, 48
  %v2467 = vpop.permute.xlu0 %2466
  %2468 = vrot.lane.b32.xlu0 %v877, 48
  %v2469 = vpop.permute.xlu0 %2468
  %2470 = vrot.lane.b32.xlu0 %v878, 48
  %v2471 = vpop.permute.xlu0 %2470
  %2472 = vrot.lane.b32.xlu0 %v879, 48
  %v2473 = vpop.permute.xlu0 %2472
  %2474 = vrot.lane.b32.xlu0 %v880, 48
  %v2475 = vpop.permute.xlu0 %2474
  %2476 = vrot.lane.b32.xlu0 %v881, 48
  %v2477 = vpop.permute.xlu0 %2476
  %2478 = vrot.lane.b32.xlu0 %v882, 48
  %v2479 = vpop.permute.xlu0 %2478
  %2480 = vrot.lane.b32.xlu0 %v883, 48
  %v2481 = vpop.permute.xlu0 %2480
  %2482 = vrot.lane.b32.xlu0 %v884, 48
  %v2483 = vpop.permute.xlu0 %2482
  %2484 = vrot.lane.b32.xlu0 %v885, 48
  %v2485 = vpop.permute.xlu0 %2484
  %2614 = vrot.lane.b32.xlu0 %v886, 56
  %v2615 = vpop.permute.xlu0 %2614
  %2616 = vrot.lane.b32.xlu0 %v887, 56
  %v2617 = vpop.permute.xlu0 %2616
  %2618 = vrot.lane.b32.xlu0 %v888, 56
  %v2619 = vpop.permute.xlu0 %2618
  %2620 = vrot.lane.b32.xlu0 %v889, 56
  %v2621 = vpop.permute.xlu0 %2620
  %2622 = vrot.lane.b32.xlu0 %v890, 56
  %v2623 = vpop.permute.xlu0 %2622
  %2624 = vrot.lane.b32.xlu0 %v891, 56
  %v2625 = vpop.permute.xlu0 %2624
  %2626 = vrot.lane.b32.xlu0 %v892, 56
  %v2627 = vpop.permute.xlu0 %2626
  %2628 = vrot.lane.b32.xlu0 %v893, 56
  %v2629 = vpop.permute.xlu0 %2628
  %2630 = vrot.lane.b32.xlu0 %v894, 56
  %v2631 = vpop.permute.xlu0 %2630
  %2632 = vrot.lane.b32.xlu0 %v895, 56
  %v2633 = vpop.permute.xlu0 %2632
  %2634 = vrot.lane.b32.xlu0 %v896, 56
  %v2635 = vpop.permute.xlu0 %2634
  %2636 = vrot.lane.b32.xlu0 %v897, 56
  %v2637 = vpop.permute.xlu0 %2636
  %2638 = vrot.lane.b32.xlu0 %v898, 56
  %v2639 = vpop.permute.xlu0 %2638
  %2640 = vrot.lane.b32.xlu0 %v899, 56
  %v2641 = vpop.permute.xlu0 %2640
  %2642 = vrot.lane.b32.xlu0 %v900, 56
  %v2643 = vpop.permute.xlu0 %2642
  %2644 = vrot.lane.b32.xlu0 %v901, 56
  %v2645 = vpop.permute.xlu0 %2644
  %2646 = vrot.lane.b32.xlu0 %v902, 56
  %v2647 = vpop.permute.xlu0 %2646
  %2648 = vrot.lane.b32.xlu0 %v903, 56
  %v2649 = vpop.permute.xlu0 %2648
  %2650 = vrot.lane.b32.xlu0 %v904, 56
  %v2651 = vpop.permute.xlu0 %2650
  %2652 = vrot.lane.b32.xlu0 %v905, 56
  %v2653 = vpop.permute.xlu0 %2652
  %2654 = vrot.lane.b32.xlu0 %v906, 56
  %v2655 = vpop.permute.xlu0 %2654
  %2656 = vrot.lane.b32.xlu0 %v907, 56
  %v2657 = vpop.permute.xlu0 %2656
  %2658 = vrot.lane.b32.xlu0 %v908, 56
  %v2659 = vpop.permute.xlu0 %2658
  %2660 = vrot.lane.b32.xlu0 %v909, 56
  %v2661 = vpop.permute.xlu0 %2660
  %2662 = vrot.lane.b32.xlu0 %v910, 56
  %v2663 = vpop.permute.xlu0 %2662
  %2664 = vrot.lane.b32.xlu0 %v911, 56
  %v2665 = vpop.permute.xlu0 %2664
  %2666 = vrot.lane.b32.xlu0 %v912, 56
  %v2667 = vpop.permute.xlu0 %2666
  %2668 = vrot.lane.b32.xlu0 %v913, 56
  %v2669 = vpop.permute.xlu0 %2668
  %2670 = vrot.lane.b32.xlu0 %v914, 56
  %v2671 = vpop.permute.xlu0 %2670
  %2672 = vrot.lane.b32.xlu0 %v915, 56
  %v2673 = vpop.permute.xlu0 %2672
  %2674 = vrot.lane.b32.xlu0 %v916, 56
  %v2675 = vpop.permute.xlu0 %2674
  %2676 = vrot.lane.b32.xlu0 %v917, 56
  %v2677 = vpop.permute.xlu0 %2676
  %2678 = vrot.lane.b32.xlu0 %v918, 56
  %v2679 = vpop.permute.xlu0 %2678
  %2680 = vrot.lane.b32.xlu0 %v919, 56
  %v2681 = vpop.permute.xlu0 %2680
  %2682 = vrot.lane.b32.xlu0 %v920, 56
  %v2683 = vpop.permute.xlu0 %2682
  %2684 = vrot.lane.b32.xlu0 %v921, 56
  %v2685 = vpop.permute.xlu0 %2684
  %2686 = vrot.lane.b32.xlu0 %v922, 56
  %v2687 = vpop.permute.xlu0 %2686
  %2688 = vrot.lane.b32.xlu0 %v923, 56
  %v2689 = vpop.permute.xlu0 %2688
  %2690 = vrot.lane.b32.xlu0 %v924, 56
  %v2691 = vpop.permute.xlu0 %2690
  %2692 = vrot.lane.b32.xlu0 %v925, 56
  %v2693 = vpop.permute.xlu0 %2692
  %2694 = vrot.lane.b32.xlu0 %v926, 56
  %v2695 = vpop.permute.xlu0 %2694
  %2696 = vrot.lane.b32.xlu0 %v927, 56
  %v2697 = vpop.permute.xlu0 %2696
  %2698 = vrot.lane.b32.xlu0 %v928, 56
  %v2699 = vpop.permute.xlu0 %2698
  %2700 = vrot.lane.b32.xlu0 %v929, 56
  %v2701 = vpop.permute.xlu0 %2700
  %2702 = vrot.lane.b32.xlu0 %v930, 56
  %v2703 = vpop.permute.xlu0 %2702
  %2704 = vrot.lane.b32.xlu0 %v931, 56
  %v2705 = vpop.permute.xlu0 %2704
  %2706 = vrot.lane.b32.xlu0 %v932, 56
  %v2707 = vpop.permute.xlu0 %2706
  %2708 = vrot.lane.b32.xlu0 %v933, 56
  %v2709 = vpop.permute.xlu0 %2708
  %2710 = vrot.lane.b32.xlu0 %v934, 56
  %v2711 = vpop.permute.xlu0 %2710
  %2712 = vrot.lane.b32.xlu0 %v935, 56
  %v2713 = vpop.permute.xlu0 %2712
  %2714 = vrot.lane.b32.xlu0 %v936, 56
  %v2715 = vpop.permute.xlu0 %2714
  %2716 = vrot.lane.b32.xlu0 %v937, 56
  %v2717 = vpop.permute.xlu0 %2716
  %2718 = vrot.lane.b32.xlu0 %v938, 56
  %v2719 = vpop.permute.xlu0 %2718
  %2720 = vrot.lane.b32.xlu0 %v939, 56
  %v2721 = vpop.permute.xlu0 %2720
  %2722 = vrot.lane.b32.xlu0 %v940, 56
  %v2723 = vpop.permute.xlu0 %2722
  %2724 = vrot.lane.b32.xlu0 %v941, 56
  %v2725 = vpop.permute.xlu0 %2724
  %2726 = vrot.lane.b32.xlu0 %v942, 56
  %v2727 = vpop.permute.xlu0 %2726
  %2728 = vrot.lane.b32.xlu0 %v943, 56
  %v2729 = vpop.permute.xlu0 %2728
  %2730 = vrot.lane.b32.xlu0 %v944, 56
  %v2731 = vpop.permute.xlu0 %2730
  %2732 = vrot.lane.b32.xlu0 %v945, 56
  %v2733 = vpop.permute.xlu0 %2732
  %2734 = vrot.lane.b32.xlu0 %v946, 56
  %v2735 = vpop.permute.xlu0 %2734
  %2736 = vrot.lane.b32.xlu0 %v947, 56
  %v2737 = vpop.permute.xlu0 %2736
  %2738 = vrot.lane.b32.xlu0 %v948, 56
  %v2739 = vpop.permute.xlu0 %2738
  %2740 = vrot.lane.b32.xlu0 %v949, 56
  %v2741 = vpop.permute.xlu0 %2740
  %2870 = vrot.lane.b32.xlu0 %v950, 64
  %v2871 = vpop.permute.xlu0 %2870
  %2872 = vrot.lane.b32.xlu0 %v951, 64
  %v2873 = vpop.permute.xlu0 %2872
  %2874 = vrot.lane.b32.xlu0 %v952, 64
  %v2875 = vpop.permute.xlu0 %2874
  %2876 = vrot.lane.b32.xlu0 %v953, 64
  %v2877 = vpop.permute.xlu0 %2876
  %2878 = vrot.lane.b32.xlu0 %v954, 64
  %v2879 = vpop.permute.xlu0 %2878
  %2880 = vrot.lane.b32.xlu0 %v955, 64
  %v2881 = vpop.permute.xlu0 %2880
  %2882 = vrot.lane.b32.xlu0 %v956, 64
  %v2883 = vpop.permute.xlu0 %2882
  %2884 = vrot.lane.b32.xlu0 %v957, 64
  %v2885 = vpop.permute.xlu0 %2884
  %2886 = vrot.lane.b32.xlu0 %v958, 64
  %v2887 = vpop.permute.xlu0 %2886
  %2888 = vrot.lane.b32.xlu0 %v959, 64
  %v2889 = vpop.permute.xlu0 %2888
  %2890 = vrot.lane.b32.xlu0 %v960, 64
  %v2891 = vpop.permute.xlu0 %2890
  %2892 = vrot.lane.b32.xlu0 %v961, 64
  %v2893 = vpop.permute.xlu0 %2892
  %2894 = vrot.lane.b32.xlu0 %v962, 64
  %v2895 = vpop.permute.xlu0 %2894
  %2896 = vrot.lane.b32.xlu0 %v963, 64
  %v2897 = vpop.permute.xlu0 %2896
  %2898 = vrot.lane.b32.xlu0 %v964, 64
  %v2899 = vpop.permute.xlu0 %2898
  %2900 = vrot.lane.b32.xlu0 %v965, 64
  %v2901 = vpop.permute.xlu0 %2900
  %2902 = vrot.lane.b32.xlu0 %v966, 64
  %v2903 = vpop.permute.xlu0 %2902
  %2904 = vrot.lane.b32.xlu0 %v967, 64
  %v2905 = vpop.permute.xlu0 %2904
  %2906 = vrot.lane.b32.xlu0 %v968, 64
  %v2907 = vpop.permute.xlu0 %2906
  %2908 = vrot.lane.b32.xlu0 %v969, 64
  %v2909 = vpop.permute.xlu0 %2908
  %2910 = vrot.lane.b32.xlu0 %v970, 64
  %v2911 = vpop.permute.xlu0 %2910
  %2912 = vrot.lane.b32.xlu0 %v971, 64
  %v2913 = vpop.permute.xlu0 %2912
  %2914 = vrot.lane.b32.xlu0 %v972, 64
  %v2915 = vpop.permute.xlu0 %2914
  %2916 = vrot.lane.b32.xlu0 %v973, 64
  %v2917 = vpop.permute.xlu0 %2916
  %2918 = vrot.lane.b32.xlu0 %v974, 64
  %v2919 = vpop.permute.xlu0 %2918
  %2920 = vrot.lane.b32.xlu0 %v975, 64
  %v2921 = vpop.permute.xlu0 %2920
  %2922 = vrot.lane.b32.xlu0 %v976, 64
  %v2923 = vpop.permute.xlu0 %2922
  %2924 = vrot.lane.b32.xlu0 %v977, 64
  %v2925 = vpop.permute.xlu0 %2924
  %2926 = vrot.lane.b32.xlu0 %v978, 64
  %v2927 = vpop.permute.xlu0 %2926
  %2928 = vrot.lane.b32.xlu0 %v979, 64
  %v2929 = vpop.permute.xlu0 %2928
  %2930 = vrot.lane.b32.xlu0 %v980, 64
  %v2931 = vpop.permute.xlu0 %2930
  %2932 = vrot.lane.b32.xlu0 %v981, 64
  %v2933 = vpop.permute.xlu0 %2932
  %2934 = vrot.lane.b32.xlu0 %v982, 64
  %v2935 = vpop.permute.xlu0 %2934
  %2936 = vrot.lane.b32.xlu0 %v983, 64
  %v2937 = vpop.permute.xlu0 %2936
  %2938 = vrot.lane.b32.xlu0 %v984, 64
  %v2939 = vpop.permute.xlu0 %2938
  %2940 = vrot.lane.b32.xlu0 %v985, 64
  %v2941 = vpop.permute.xlu0 %2940
  %2942 = vrot.lane.b32.xlu0 %v986, 64
  %v2943 = vpop.permute.xlu0 %2942
  %2944 = vrot.lane.b32.xlu0 %v987, 64
  %v2945 = vpop.permute.xlu0 %2944
  %2946 = vrot.lane.b32.xlu0 %v988, 64
  %v2947 = vpop.permute.xlu0 %2946
  %2948 = vrot.lane.b32.xlu0 %v989, 64
  %v2949 = vpop.permute.xlu0 %2948
  %2950 = vrot.lane.b32.xlu0 %v990, 64
  %v2951 = vpop.permute.xlu0 %2950
  %2952 = vrot.lane.b32.xlu0 %v991, 64
  %v2953 = vpop.permute.xlu0 %2952
  %2954 = vrot.lane.b32.xlu0 %v992, 64
  %v2955 = vpop.permute.xlu0 %2954
  %2956 = vrot.lane.b32.xlu0 %v993, 64
  %v2957 = vpop.permute.xlu0 %2956
  %2958 = vrot.lane.b32.xlu0 %v994, 64
  %v2959 = vpop.permute.xlu0 %2958
  %2960 = vrot.lane.b32.xlu0 %v995, 64
  %v2961 = vpop.permute.xlu0 %2960
  %2962 = vrot.lane.b32.xlu0 %v996, 64
  %v2963 = vpop.permute.xlu0 %2962
  %2964 = vrot.lane.b32.xlu0 %v997, 64
  %v2965 = vpop.permute.xlu0 %2964
  %2966 = vrot.lane.b32.xlu0 %v998, 64
  %v2967 = vpop.permute.xlu0 %2966
  %2968 = vrot.lane.b32.xlu0 %v999, 64
  %v2969 = vpop.permute.xlu0 %2968
  %2970 = vrot.lane.b32.xlu0 %v1000, 64
  %v2971 = vpop.permute.xlu0 %2970
  %2972 = vrot.lane.b32.xlu0 %v1001, 64
  %v2973 = vpop.permute.xlu0 %2972
  %2974 = vrot.lane.b32.xlu0 %v1002, 64
  %v2975 = vpop.permute.xlu0 %2974
  %2976 = vrot.lane.b32.xlu0 %v1003, 64
  %v2977 = vpop.permute.xlu0 %2976
  %2978 = vrot.lane.b32.xlu0 %v1004, 64
  %v2979 = vpop.permute.xlu0 %2978
  %2980 = vrot.lane.b32.xlu0 %v1005, 64
  %v2981 = vpop.permute.xlu0 %2980
  %2982 = vrot.lane.b32.xlu0 %v1006, 64
  %v2983 = vpop.permute.xlu0 %2982
  %2984 = vrot.lane.b32.xlu0 %v1007, 64
  %v2985 = vpop.permute.xlu0 %2984
  %2986 = vrot.lane.b32.xlu0 %v1008, 64
  %v2987 = vpop.permute.xlu0 %2986
  %2988 = vrot.lane.b32.xlu0 %v1009, 64
  %v2989 = vpop.permute.xlu0 %2988
  %2990 = vrot.lane.b32.xlu0 %v1010, 64
  %v2991 = vpop.permute.xlu0 %2990
  %2992 = vrot.lane.b32.xlu0 %v1011, 64
  %v2993 = vpop.permute.xlu0 %2992
  %2994 = vrot.lane.b32.xlu0 %v1012, 64
  %v2995 = vpop.permute.xlu0 %2994
  %2996 = vrot.lane.b32.xlu0 %v1013, 64
  %v2997 = vpop.permute.xlu0 %2996
  %v3062 = vsel %vm284, %v437, %v1079
  %v3063 = vsel %vm284, %v438, %v1081
  %v3064 = vsel %vm284, %v439, %v1083
  %v3065 = vsel %vm284, %v440, %v1085
  %v3066 = vsel %vm284, %v441, %v1087
  %v3067 = vsel %vm284, %v442, %v1089
  %v3068 = vsel %vm284, %v443, %v1091
  %v3069 = vsel %vm284, %v444, %v1093
  %v3070 = vsel %vm284, %v445, %v1095
  %v3071 = vsel %vm284, %v446, %v1097
  %v3072 = vsel %vm284, %v447, %v1099
  %v3073 = vsel %vm284, %v448, %v1101
  %v3074 = vsel %vm284, %v449, %v1103
  %v3075 = vsel %vm284, %v450, %v1105
  %v3076 = vsel %vm284, %v451, %v1107
  %v3077 = vsel %vm284, %v452, %v1109
  %v3078 = vsel %vm284, %v453, %v1111
  %v3079 = vsel %vm284, %v454, %v1113
  %v3080 = vsel %vm284, %v455, %v1115
  %v3081 = vsel %vm284, %v456, %v1117
  %v3082 = vsel %vm284, %v457, %v1119
  %v3083 = vsel %vm284, %v458, %v1121
  %v3084 = vsel %vm284, %v459, %v1123
  %v3085 = vsel %vm284, %v460, %v1125
  %v3086 = vsel %vm284, %v461, %v1127
  %v3087 = vsel %vm284, %v462, %v1129
  %v3088 = vsel %vm284, %v463, %v1131
  %v3089 = vsel %vm284, %v464, %v1133
  %v3090 = vsel %vm284, %v465, %v1135
  %v3091 = vsel %vm284, %v466, %v1137
  %v3092 = vsel %vm284, %v467, %v1139
  %v3093 = vsel %vm284, %v468, %v1141
  %v3094 = vsel %vm284, %v469, %v1143
  %v3095 = vsel %vm284, %v470, %v1145
  %v3096 = vsel %vm284, %v471, %v1147
  %v3097 = vsel %vm284, %v472, %v1149
  %v3098 = vsel %vm284, %v473, %v1151
  %v3099 = vsel %vm284, %v474, %v1153
  %v3100 = vsel %vm284, %v475, %v1155
  %v3101 = vsel %vm284, %v476, %v1157
  %v3102 = vsel %vm284, %v477, %v1159
  %v3103 = vsel %vm284, %v478, %v1161
  %v3104 = vsel %vm284, %v479, %v1163
  %v3105 = vsel %vm284, %v480, %v1165
  %v3106 = vsel %vm284, %v481, %v1167
  %v3107 = vsel %vm284, %v482, %v1169
  %v3108 = vsel %vm284, %v483, %v1171
  %v3109 = vsel %vm284, %v484, %v1173
  %v3110 = vsel %vm284, %v485, %v1175
  %v3111 = vsel %vm284, %v486, %v1177
  %v3112 = vsel %vm284, %v487, %v1179
  %v3113 = vsel %vm284, %v488, %v1181
  %v3114 = vsel %vm284, %v489, %v1183
  %v3115 = vsel %vm284, %v490, %v1185
  %v3116 = vsel %vm284, %v491, %v1187
  %v3117 = vsel %vm284, %v492, %v1189
  %v3118 = vsel %vm284, %v493, %v1191
  %v3119 = vsel %vm284, %v494, %v1193
  %v3120 = vsel %vm284, %v495, %v1195
  %v3121 = vsel %vm284, %v496, %v1197
  %v3122 = vsel %vm284, %v497, %v1199
  %v3123 = vsel %vm284, %v498, %v1201
  %v3124 = vsel %vm284, %v499, %v1203
  %v3125 = vsel %vm284, %v500, %v1205
  %vm3126 = vcmask 130048
  %v3127 = vsel %vm3126, %v3062, %v1335
  %v3128 = vsel %vm3126, %v3063, %v1337
  %v3129 = vsel %vm3126, %v3064, %v1339
  %v3130 = vsel %vm3126, %v3065, %v1341
  %v3131 = vsel %vm3126, %v3066, %v1343
  %v3132 = vsel %vm3126, %v3067, %v1345
  %v3133 = vsel %vm3126, %v3068, %v1347
  %v3134 = vsel %vm3126, %v3069, %v1349
  %v3135 = vsel %vm3126, %v3070, %v1351
  %v3136 = vsel %vm3126, %v3071, %v1353
  %v3137 = vsel %vm3126, %v3072, %v1355
  %v3138 = vsel %vm3126, %v3073, %v1357
  %v3139 = vsel %vm3126, %v3074, %v1359
  %v3140 = vsel %vm3126, %v3075, %v1361
  %v3141 = vsel %vm3126, %v3076, %v1363
  %v3142 = vsel %vm3126, %v3077, %v1365
  %v3143 = vsel %vm3126, %v3078, %v1367
  %v3144 = vsel %vm3126, %v3079, %v1369
  %v3145 = vsel %vm3126, %v3080, %v1371
  %v3146 = vsel %vm3126, %v3081, %v1373
  %v3147 = vsel %vm3126, %v3082, %v1375
  %v3148 = vsel %vm3126, %v3083, %v1377
  %v3149 = vsel %vm3126, %v3084, %v1379
  %v3150 = vsel %vm3126, %v3085, %v1381
  %v3151 = vsel %vm3126, %v3086, %v1383
  %v3152 = vsel %vm3126, %v3087, %v1385
  %v3153 = vsel %vm3126, %v3088, %v1387
  %v3154 = vsel %vm3126, %v3089, %v1389
  %v3155 = vsel %vm3126, %v3090, %v1391
  %v3156 = vsel %vm3126, %v3091, %v1393
  %v3157 = vsel %vm3126, %v3092, %v1395
  %v3158 = vsel %vm3126, %v3093, %v1397
  %v3159 = vsel %vm3126, %v3094, %v1399
  %v3160 = vsel %vm3126, %v3095, %v1401
  %v3161 = vsel %vm3126, %v3096, %v1403
  %v3162 = vsel %vm3126, %v3097, %v1405
  %v3163 = vsel %vm3126, %v3098, %v1407
  %v3164 = vsel %vm3126, %v3099, %v1409
  %v3165 = vsel %vm3126, %v3100, %v1411
  %v3166 = vsel %vm3126, %v3101, %v1413
  %v3167 = vsel %vm3126, %v3102, %v1415
  %v3168 = vsel %vm3126, %v3103, %v1417
  %v3169 = vsel %vm3126, %v3104, %v1419
  %v3170 = vsel %vm3126, %v3105, %v1421
  %v3171 = vsel %vm3126, %v3106, %v1423
  %v3172 = vsel %vm3126, %v3107, %v1425
  %v3173 = vsel %vm3126, %v3108, %v1427
  %v3174 = vsel %vm3126, %v3109, %v1429
  %v3175 = vsel %vm3126, %v3110, %v1431
  %v3176 = vsel %vm3126, %v3111, %v1433
  %v3177 = vsel %vm3126, %v3112, %v1435
  %v3178 = vsel %vm3126, %v3113, %v1437
  %v3179 = vsel %vm3126, %v3114, %v1439
  %v3180 = vsel %vm3126, %v3115, %v1441
  %v3181 = vsel %vm3126, %v3116, %v1443
  %v3182 = vsel %vm3126, %v3117, %v1445
  %v3183 = vsel %vm3126, %v3118, %v1447
  %v3184 = vsel %vm3126, %v3119, %v1449
  %v3185 = vsel %vm3126, %v3120, %v1451
  %v3186 = vsel %vm3126, %v3121, %v1453
  %v3187 = vsel %vm3126, %v3122, %v1455
  %v3188 = vsel %vm3126, %v3123, %v1457
  %v3189 = vsel %vm3126, %v3124, %v1459
  %v3190 = vsel %vm3126, %v3125, %v1461
  %vm3191 = vcmask 195584
  %v3192 = vsel %vm3191, %v3127, %v1591
  %v3193 = vsel %vm3191, %v3128, %v1593
  %v3194 = vsel %vm3191, %v3129, %v1595
  %v3195 = vsel %vm3191, %v3130, %v1597
  %v3196 = vsel %vm3191, %v3131, %v1599
  %v3197 = vsel %vm3191, %v3132, %v1601
  %v3198 = vsel %vm3191, %v3133, %v1603
  %v3199 = vsel %vm3191, %v3134, %v1605
  %v3200 = vsel %vm3191, %v3135, %v1607
  %v3201 = vsel %vm3191, %v3136, %v1609
  %v3202 = vsel %vm3191, %v3137, %v1611
  %v3203 = vsel %vm3191, %v3138, %v1613
  %v3204 = vsel %vm3191, %v3139, %v1615
  %v3205 = vsel %vm3191, %v3140, %v1617
  %v3206 = vsel %vm3191, %v3141, %v1619
  %v3207 = vsel %vm3191, %v3142, %v1621
  %v3208 = vsel %vm3191, %v3143, %v1623
  %v3209 = vsel %vm3191, %v3144, %v1625
  %v3210 = vsel %vm3191, %v3145, %v1627
  %v3211 = vsel %vm3191, %v3146, %v1629
  %v3212 = vsel %vm3191, %v3147, %v1631
  %v3213 = vsel %vm3191, %v3148, %v1633
  %v3214 = vsel %vm3191, %v3149, %v1635
  %v3215 = vsel %vm3191, %v3150, %v1637
  %v3216 = vsel %vm3191, %v3151, %v1639
  %v3217 = vsel %vm3191, %v3152, %v1641
  %v3218 = vsel %vm3191, %v3153, %v1643
  %v3219 = vsel %vm3191, %v3154, %v1645
  %v3220 = vsel %vm3191, %v3155, %v1647
  %v3221 = vsel %vm3191, %v3156, %v1649
  %v3222 = vsel %vm3191, %v3157, %v1651
  %v3223 = vsel %vm3191, %v3158, %v1653
  %v3224 = vsel %vm3191, %v3159, %v1655
  %v3225 = vsel %vm3191, %v3160, %v1657
  %v3226 = vsel %vm3191, %v3161, %v1659
  %v3227 = vsel %vm3191, %v3162, %v1661
  %v3228 = vsel %vm3191, %v3163, %v1663
  %v3229 = vsel %vm3191, %v3164, %v1665
  %v3230 = vsel %vm3191, %v3165, %v1667
  %v3231 = vsel %vm3191, %v3166, %v1669
  %v3232 = vsel %vm3191, %v3167, %v1671
  %v3233 = vsel %vm3191, %v3168, %v1673
  %v3234 = vsel %vm3191, %v3169, %v1675
  %v3235 = vsel %vm3191, %v3170, %v1677
  %v3236 = vsel %vm3191, %v3171, %v1679
  %v3237 = vsel %vm3191, %v3172, %v1681
  %v3238 = vsel %vm3191, %v3173, %v1683
  %v3239 = vsel %vm3191, %v3174, %v1685
  %v3240 = vsel %vm3191, %v3175, %v1687
  %v3241 = vsel %vm3191, %v3176, %v1689
  %v3242 = vsel %vm3191, %v3177, %v1691
  %v3243 = vsel %vm3191, %v3178, %v1693
  %v3244 = vsel %vm3191, %v3179, %v1695
  %v3245 = vsel %vm3191, %v3180, %v1697
  %v3246 = vsel %vm3191, %v3181, %v1699
  %v3247 = vsel %vm3191, %v3182, %v1701
  %v3248 = vsel %vm3191, %v3183, %v1703
  %v3249 = vsel %vm3191, %v3184, %v1705
  %v3250 = vsel %vm3191, %v3185, %v1707
  %v3251 = vsel %vm3191, %v3186, %v1709
  %v3252 = vsel %vm3191, %v3187, %v1711
  %v3253 = vsel %vm3191, %v3188, %v1713
  %v3254 = vsel %vm3191, %v3189, %v1715
  %v3255 = vsel %vm3191, %v3190, %v1717
  %vm3256 = vcmask 261120
  %v3257 = vsel %vm3256, %v3192, %v1847
  %v3258 = vsel %vm3256, %v3193, %v1849
  %v3259 = vsel %vm3256, %v3194, %v1851
  %v3260 = vsel %vm3256, %v3195, %v1853
  %v3261 = vsel %vm3256, %v3196, %v1855
  %v3262 = vsel %vm3256, %v3197, %v1857
  %v3263 = vsel %vm3256, %v3198, %v1859
  %v3264 = vsel %vm3256, %v3199, %v1861
  %v3265 = vsel %vm3256, %v3200, %v1863
  %v3266 = vsel %vm3256, %v3201, %v1865
  %v3267 = vsel %vm3256, %v3202, %v1867
  %v3268 = vsel %vm3256, %v3203, %v1869
  %v3269 = vsel %vm3256, %v3204, %v1871
  %v3270 = vsel %vm3256, %v3205, %v1873
  %v3271 = vsel %vm3256, %v3206, %v1875
  %v3272 = vsel %vm3256, %v3207, %v1877
  %v3273 = vsel %vm3256, %v3208, %v1879
  %v3274 = vsel %vm3256, %v3209, %v1881
  %v3275 = vsel %vm3256, %v3210, %v1883
  %v3276 = vsel %vm3256, %v3211, %v1885
  %v3277 = vsel %vm3256, %v3212, %v1887
  %v3278 = vsel %vm3256, %v3213, %v1889
  %v3279 = vsel %vm3256, %v3214, %v1891
  %v3280 = vsel %vm3256, %v3215, %v1893
  %v3281 = vsel %vm3256, %v3216, %v1895
  %v3282 = vsel %vm3256, %v3217, %v1897
  %v3283 = vsel %vm3256, %v3218, %v1899
  %v3284 = vsel %vm3256, %v3219, %v1901
  %v3285 = vsel %vm3256, %v3220, %v1903
  %v3286 = vsel %vm3256, %v3221, %v1905
  %v3287 = vsel %vm3256, %v3222, %v1907
  %v3288 = vsel %vm3256, %v3223, %v1909
  %v3289 = vsel %vm3256, %v3224, %v1911
  %v3290 = vsel %vm3256, %v3225, %v1913
  %v3291 = vsel %vm3256, %v3226, %v1915
  %v3292 = vsel %vm3256, %v3227, %v1917
  %v3293 = vsel %vm3256, %v3228, %v1919
  %v3294 = vsel %vm3256, %v3229, %v1921
  %v3295 = vsel %vm3256, %v3230, %v1923
  %v3296 = vsel %vm3256, %v3231, %v1925
  %v3297 = vsel %vm3256, %v3232, %v1927
  %v3298 = vsel %vm3256, %v3233, %v1929
  %v3299 = vsel %vm3256, %v3234, %v1931
  %v3300 = vsel %vm3256, %v3235, %v1933
  %v3301 = vsel %vm3256, %v3236, %v1935
  %v3302 = vsel %vm3256, %v3237, %v1937
  %v3303 = vsel %vm3256, %v3238, %v1939
  %v3304 = vsel %vm3256, %v3239, %v1941
  %v3305 = vsel %vm3256, %v3240, %v1943
  %v3306 = vsel %vm3256, %v3241, %v1945
  %v3307 = vsel %vm3256, %v3242, %v1947
  %v3308 = vsel %vm3256, %v3243, %v1949
  %v3309 = vsel %vm3256, %v3244, %v1951
  %v3310 = vsel %vm3256, %v3245, %v1953
  %v3311 = vsel %vm3256, %v3246, %v1955
  %v3312 = vsel %vm3256, %v3247, %v1957
  %v3313 = vsel %vm3256, %v3248, %v1959
  %v3314 = vsel %vm3256, %v3249, %v1961
  %v3315 = vsel %vm3256, %v3250, %v1963
  %v3316 = vsel %vm3256, %v3251, %v1965
  %v3317 = vsel %vm3256, %v3252, %v1967
  %v3318 = vsel %vm3256, %v3253, %v1969
  %v3319 = vsel %vm3256, %v3254, %v1971
  %v3320 = vsel %vm3256, %v3255, %v1973
  %vm3321 = vcmask 326656
  %v3322 = vsel %vm3321, %v3257, %v2103
  %v3323 = vsel %vm3321, %v3258, %v2105
  %v3324 = vsel %vm3321, %v3259, %v2107
  %v3325 = vsel %vm3321, %v3260, %v2109
  %v3326 = vsel %vm3321, %v3261, %v2111
  %v3327 = vsel %vm3321, %v3262, %v2113
  %v3328 = vsel %vm3321, %v3263, %v2115
  %v3329 = vsel %vm3321, %v3264, %v2117
  %v3330 = vsel %vm3321, %v3265, %v2119
  %v3331 = vsel %vm3321, %v3266, %v2121
  %v3332 = vsel %vm3321, %v3267, %v2123
  %v3333 = vsel %vm3321, %v3268, %v2125
  %v3334 = vsel %vm3321, %v3269, %v2127
  %v3335 = vsel %vm3321, %v3270, %v2129
  %v3336 = vsel %vm3321, %v3271, %v2131
  %v3337 = vsel %vm3321, %v3272, %v2133
  %v3338 = vsel %vm3321, %v3273, %v2135
  %v3339 = vsel %vm3321, %v3274, %v2137
  %v3340 = vsel %vm3321, %v3275, %v2139
  %v3341 = vsel %vm3321, %v3276, %v2141
  %v3342 = vsel %vm3321, %v3277, %v2143
  %v3343 = vsel %vm3321, %v3278, %v2145
  %v3344 = vsel %vm3321, %v3279, %v2147
  %v3345 = vsel %vm3321, %v3280, %v2149
  %v3346 = vsel %vm3321, %v3281, %v2151
  %v3347 = vsel %vm3321, %v3282, %v2153
  %v3348 = vsel %vm3321, %v3283, %v2155
  %v3349 = vsel %vm3321, %v3284, %v2157
  %v3350 = vsel %vm3321, %v3285, %v2159
  %v3351 = vsel %vm3321, %v3286, %v2161
  %v3352 = vsel %vm3321, %v3287, %v2163
  %v3353 = vsel %vm3321, %v3288, %v2165
  %v3354 = vsel %vm3321, %v3289, %v2167
  %v3355 = vsel %vm3321, %v3290, %v2169
  %v3356 = vsel %vm3321, %v3291, %v2171
  %v3357 = vsel %vm3321, %v3292, %v2173
  %v3358 = vsel %vm3321, %v3293, %v2175
  %v3359 = vsel %vm3321, %v3294, %v2177
  %v3360 = vsel %vm3321, %v3295, %v2179
  %v3361 = vsel %vm3321, %v3296, %v2181
  %v3362 = vsel %vm3321, %v3297, %v2183
  %v3363 = vsel %vm3321, %v3298, %v2185
  %v3364 = vsel %vm3321, %v3299, %v2187
  %v3365 = vsel %vm3321, %v3300, %v2189
  %v3366 = vsel %vm3321, %v3301, %v2191
  %v3367 = vsel %vm3321, %v3302, %v2193
  %v3368 = vsel %vm3321, %v3303, %v2195
  %v3369 = vsel %vm3321, %v3304, %v2197
  %v3370 = vsel %vm3321, %v3305, %v2199
  %v3371 = vsel %vm3321, %v3306, %v2201
  %v3372 = vsel %vm3321, %v3307, %v2203
  %v3373 = vsel %vm3321, %v3308, %v2205
  %v3374 = vsel %vm3321, %v3309, %v2207
  %v3375 = vsel %vm3321, %v3310, %v2209
  %v3376 = vsel %vm3321, %v3311, %v2211
  %v3377 = vsel %vm3321, %v3312, %v2213
  %v3378 = vsel %vm3321, %v3313, %v2215
  %v3379 = vsel %vm3321, %v3314, %v2217
  %v3380 = vsel %vm3321, %v3315, %v2219
  %v3381 = vsel %vm3321, %v3316, %v2221
  %v3382 = vsel %vm3321, %v3317, %v2223
  %v3383 = vsel %vm3321, %v3318, %v2225
  %v3384 = vsel %vm3321, %v3319, %v2227
  %v3385 = vsel %vm3321, %v3320, %v2229
  %vm3386 = vcmask 392192
  %v3387 = vsel %vm3386, %v3322, %v2359
  %v3388 = vsel %vm3386, %v3323, %v2361
  %v3389 = vsel %vm3386, %v3324, %v2363
  %v3390 = vsel %vm3386, %v3325, %v2365
  %v3391 = vsel %vm3386, %v3326, %v2367
  %v3392 = vsel %vm3386, %v3327, %v2369
  %v3393 = vsel %vm3386, %v3328, %v2371
  %v3394 = vsel %vm3386, %v3329, %v2373
  %v3395 = vsel %vm3386, %v3330, %v2375
  %v3396 = vsel %vm3386, %v3331, %v2377
  %v3397 = vsel %vm3386, %v3332, %v2379
  %v3398 = vsel %vm3386, %v3333, %v2381
  %v3399 = vsel %vm3386, %v3334, %v2383
  %v3400 = vsel %vm3386, %v3335, %v2385
  %v3401 = vsel %vm3386, %v3336, %v2387
  %v3402 = vsel %vm3386, %v3337, %v2389
  %v3403 = vsel %vm3386, %v3338, %v2391
  %v3404 = vsel %vm3386, %v3339, %v2393
  %v3405 = vsel %vm3386, %v3340, %v2395
  %v3406 = vsel %vm3386, %v3341, %v2397
  %v3407 = vsel %vm3386, %v3342, %v2399
  %v3408 = vsel %vm3386, %v3343, %v2401
  %v3409 = vsel %vm3386, %v3344, %v2403
  %v3410 = vsel %vm3386, %v3345, %v2405
  %v3411 = vsel %vm3386, %v3346, %v2407
  %v3412 = vsel %vm3386, %v3347, %v2409
  %v3413 = vsel %vm3386, %v3348, %v2411
  %v3414 = vsel %vm3386, %v3349, %v2413
  %v3415 = vsel %vm3386, %v3350, %v2415
  %v3416 = vsel %vm3386, %v3351, %v2417
  %v3417 = vsel %vm3386, %v3352, %v2419
  %v3418 = vsel %vm3386, %v3353, %v2421
  %v3419 = vsel %vm3386, %v3354, %v2423
  %v3420 = vsel %vm3386, %v3355, %v2425
  %v3421 = vsel %vm3386, %v3356, %v2427
  %v3422 = vsel %vm3386, %v3357, %v2429
  %v3423 = vsel %vm3386, %v3358, %v2431
  %v3424 = vsel %vm3386, %v3359, %v2433
  %v3425 = vsel %vm3386, %v3360, %v2435
  %v3426 = vsel %vm3386, %v3361, %v2437
  %v3427 = vsel %vm3386, %v3362, %v2439
  %v3428 = vsel %vm3386, %v3363, %v2441
  %v3429 = vsel %vm3386, %v3364, %v2443
  %v3430 = vsel %vm3386, %v3365, %v2445
  %v3431 = vsel %vm3386, %v3366, %v2447
  %v3432 = vsel %vm3386, %v3367, %v2449
  %v3433 = vsel %vm3386, %v3368, %v2451
  %v3434 = vsel %vm3386, %v3369, %v2453
  %v3435 = vsel %vm3386, %v3370, %v2455
  %v3436 = vsel %vm3386, %v3371, %v2457
  %v3437 = vsel %vm3386, %v3372, %v2459
  %v3438 = vsel %vm3386, %v3373, %v2461
  %v3439 = vsel %vm3386, %v3374, %v2463
  %v3440 = vsel %vm3386, %v3375, %v2465
  %v3441 = vsel %vm3386, %v3376, %v2467
  %v3442 = vsel %vm3386, %v3377, %v2469
  %v3443 = vsel %vm3386, %v3378, %v2471
  %v3444 = vsel %vm3386, %v3379, %v2473
  %v3445 = vsel %vm3386, %v3380, %v2475
  %v3446 = vsel %vm3386, %v3381, %v2477
  %v3447 = vsel %vm3386, %v3382, %v2479
  %v3448 = vsel %vm3386, %v3383, %v2481
  %v3449 = vsel %vm3386, %v3384, %v2483
  %v3450 = vsel %vm3386, %v3385, %v2485
  %vm3451 = vcmask 457728
  %v3452 = vsel %vm3451, %v3387, %v2615
  %v3453 = vsel %vm3451, %v3388, %v2617
  %v3454 = vsel %vm3451, %v3389, %v2619
  %v3455 = vsel %vm3451, %v3390, %v2621
  %v3456 = vsel %vm3451, %v3391, %v2623
  %v3457 = vsel %vm3451, %v3392, %v2625
  %v3458 = vsel %vm3451, %v3393, %v2627
  %v3459 = vsel %vm3451, %v3394, %v2629
  %v3460 = vsel %vm3451, %v3395, %v2631
  %v3461 = vsel %vm3451, %v3396, %v2633
  %v3462 = vsel %vm3451, %v3397, %v2635
  %v3463 = vsel %vm3451, %v3398, %v2637
  %v3464 = vsel %vm3451, %v3399, %v2639
  %v3465 = vsel %vm3451, %v3400, %v2641
  %v3466 = vsel %vm3451, %v3401, %v2643
  %v3467 = vsel %vm3451, %v3402, %v2645
  %v3468 = vsel %vm3451, %v3403, %v2647
  %v3469 = vsel %vm3451, %v3404, %v2649
  %v3470 = vsel %vm3451, %v3405, %v2651
  %v3471 = vsel %vm3451, %v3406, %v2653
  %v3472 = vsel %vm3451, %v3407, %v2655
  %v3473 = vsel %vm3451, %v3408, %v2657
  %v3474 = vsel %vm3451, %v3409, %v2659
  %v3475 = vsel %vm3451, %v3410, %v2661
  %v3476 = vsel %vm3451, %v3411, %v2663
  %v3477 = vsel %vm3451, %v3412, %v2665
  %v3478 = vsel %vm3451, %v3413, %v2667
  %v3479 = vsel %vm3451, %v3414, %v2669
  %v3480 = vsel %vm3451, %v3415, %v2671
  %v3481 = vsel %vm3451, %v3416, %v2673
  %v3482 = vsel %vm3451, %v3417, %v2675
  %v3483 = vsel %vm3451, %v3418, %v2677
  %v3484 = vsel %vm3451, %v3419, %v2679
  %v3485 = vsel %vm3451, %v3420, %v2681
  %v3486 = vsel %vm3451, %v3421, %v2683
  %v3487 = vsel %vm3451, %v3422, %v2685
  %v3488 = vsel %vm3451, %v3423, %v2687
  %v3489 = vsel %vm3451, %v3424, %v2689
  %v3490 = vsel %vm3451, %v3425, %v2691
  %v3491 = vsel %vm3451, %v3426, %v2693
  %v3492 = vsel %vm3451, %v3427, %v2695
  %v3493 = vsel %vm3451, %v3428, %v2697
  %v3494 = vsel %vm3451, %v3429, %v2699
  %v3495 = vsel %vm3451, %v3430, %v2701
  %v3496 = vsel %vm3451, %v3431, %v2703
  %v3497 = vsel %vm3451, %v3432, %v2705
  %v3498 = vsel %vm3451, %v3433, %v2707
  %v3499 = vsel %vm3451, %v3434, %v2709
  %v3500 = vsel %vm3451, %v3435, %v2711
  %v3501 = vsel %vm3451, %v3436, %v2713
  %v3502 = vsel %vm3451, %v3437, %v2715
  %v3503 = vsel %vm3451, %v3438, %v2717
  %v3504 = vsel %vm3451, %v3439, %v2719
  %v3505 = vsel %vm3451, %v3440, %v2721
  %v3506 = vsel %vm3451, %v3441, %v2723
  %v3507 = vsel %vm3451, %v3442, %v2725
  %v3508 = vsel %vm3451, %v3443, %v2727
  %v3509 = vsel %vm3451, %v3444, %v2729
  %v3510 = vsel %vm3451, %v3445, %v2731
  %v3511 = vsel %vm3451, %v3446, %v2733
  %v3512 = vsel %vm3451, %v3447, %v2735
  %v3513 = vsel %vm3451, %v3448, %v2737
  %v3514 = vsel %vm3451, %v3449, %v2739
  %v3515 = vsel %vm3451, %v3450, %v2741
  %vm3516 = vcmask 523264
  %v3517 = vsel %vm3516, %v3452, %v2871
  %v3518 = vsel %vm3516, %v3453, %v2873
  %v3519 = vsel %vm3516, %v3454, %v2875
  %v3520 = vsel %vm3516, %v3455, %v2877
  %v3521 = vsel %vm3516, %v3456, %v2879
  %v3522 = vsel %vm3516, %v3457, %v2881
  %v3523 = vsel %vm3516, %v3458, %v2883
  %v3524 = vsel %vm3516, %v3459, %v2885
  %v3525 = vsel %vm3516, %v3460, %v2887
  %v3526 = vsel %vm3516, %v3461, %v2889
  %v3527 = vsel %vm3516, %v3462, %v2891
  %v3528 = vsel %vm3516, %v3463, %v2893
  %v3529 = vsel %vm3516, %v3464, %v2895
  %v3530 = vsel %vm3516, %v3465, %v2897
  %v3531 = vsel %vm3516, %v3466, %v2899
  %v3532 = vsel %vm3516, %v3467, %v2901
  %v3533 = vsel %vm3516, %v3468, %v2903
  %v3534 = vsel %vm3516, %v3469, %v2905
  %v3535 = vsel %vm3516, %v3470, %v2907
  %v3536 = vsel %vm3516, %v3471, %v2909
  %v3537 = vsel %vm3516, %v3472, %v2911
  %v3538 = vsel %vm3516, %v3473, %v2913
  %v3539 = vsel %vm3516, %v3474, %v2915
  %v3540 = vsel %vm3516, %v3475, %v2917
  %v3541 = vsel %vm3516, %v3476, %v2919
  %v3542 = vsel %vm3516, %v3477, %v2921
  %v3543 = vsel %vm3516, %v3478, %v2923
  %v3544 = vsel %vm3516, %v3479, %v2925
  %v3545 = vsel %vm3516, %v3480, %v2927
  %v3546 = vsel %vm3516, %v3481, %v2929
  %v3547 = vsel %vm3516, %v3482, %v2931
  %v3548 = vsel %vm3516, %v3483, %v2933
  %v3549 = vsel %vm3516, %v3484, %v2935
  %v3550 = vsel %vm3516, %v3485, %v2937
  %v3551 = vsel %vm3516, %v3486, %v2939
  %v3552 = vsel %vm3516, %v3487, %v2941
  %v3553 = vsel %vm3516, %v3488, %v2943
  %v3554 = vsel %vm3516, %v3489, %v2945
  %v3555 = vsel %vm3516, %v3490, %v2947
  %v3556 = vsel %vm3516, %v3491, %v2949
  %v3557 = vsel %vm3516, %v3492, %v2951
  %v3558 = vsel %vm3516, %v3493, %v2953
  %v3559 = vsel %vm3516, %v3494, %v2955
  %v3560 = vsel %vm3516, %v3495, %v2957
  %v3561 = vsel %vm3516, %v3496, %v2959
  %v3562 = vsel %vm3516, %v3497, %v2961
  %v3563 = vsel %vm3516, %v3498, %v2963
  %v3564 = vsel %vm3516, %v3499, %v2965
  %v3565 = vsel %vm3516, %v3500, %v2967
  %v3566 = vsel %vm3516, %v3501, %v2969
  %v3567 = vsel %vm3516, %v3502, %v2971
  %v3568 = vsel %vm3516, %v3503, %v2973
  %v3569 = vsel %vm3516, %v3504, %v2975
  %v3570 = vsel %vm3516, %v3505, %v2977
  %v3571 = vsel %vm3516, %v3506, %v2979
  %v3572 = vsel %vm3516, %v3507, %v2981
  %v3573 = vsel %vm3516, %v3508, %v2983
  %v3574 = vsel %vm3516, %v3509, %v2985
  %v3575 = vsel %vm3516, %v3510, %v2987
  %v3576 = vsel %vm3516, %v3511, %v2989
  %v3577 = vsel %vm3516, %v3512, %v2991
  %v3578 = vsel %vm3516, %v3513, %v2993
  %v3579 = vsel %vm3516, %v3514, %v2995
  %v3580 = vsel %vm3516, %v3515, %v2997
  %v3581 = vld [vmem:[%s1] sm:$0xff]
  %v3582 = vld [vmem:[%s1 + $0x8] sm:$0xff]
  %v3583 = vld [vmem:[%s1 + $0x10] sm:$0xff]
  %v3584 = vld [vmem:[%s1 + $0x18] sm:$0xff]
  %v3585 = vld [vmem:[%s1 + $0x20] sm:$0xff]
  %v3586 = vld [vmem:[%s1 + $0x28] sm:$0xff]
  %v3587 = vld [vmem:[%s1 + $0x30] sm:$0xff]
  %v3588 = vld [vmem:[%s1 + $0x38] sm:$0xff]
  %v3589 = vld [vmem:[%s1 + $0x40] sm:$0xff]
  %vm3590 = vcmask 588800
  %v3592 = vsel %vm3590, %v3517, 0
  %v3595 = vsel %vm3590, %v3518, 0
  %v3598 = vsel %vm3590, %v3519, 0
  %v3601 = vsel %vm3590, %v3520, 0
  %v3604 = vsel %vm3590, %v3521, 0
  %v3607 = vsel %vm3590, %v3522, 0
  %v3610 = vsel %vm3590, %v3523, 0
  %v3613 = vsel %vm3590, %v3524, 0
  %v3616 = vsel %vm3590, %v3525, 0
  %v3619 = vsel %vm3590, %v3526, 0
  %v3622 = vsel %vm3590, %v3527, 0
  %v3625 = vsel %vm3590, %v3528, 0
  %v3628 = vsel %vm3590, %v3529, 0
  %v3631 = vsel %vm3590, %v3530, 0
  %v3634 = vsel %vm3590, %v3531, 0
  %v3637 = vsel %vm3590, %v3532, 0
  %v3640 = vsel %vm3590, %v3533, 0
  %v3643 = vsel %vm3590, %v3534, 0
  %v3646 = vsel %vm3590, %v3535, 0
  %v3649 = vsel %vm3590, %v3536, 0
  %v3652 = vsel %vm3590, %v3537, 0
  %v3655 = vsel %vm3590, %v3538, 0
  %v3658 = vsel %vm3590, %v3539, 0
  %v3661 = vsel %vm3590, %v3540, 0
  %v3664 = vsel %vm3590, %v3541, 0
  %v3667 = vsel %vm3590, %v3542, 0
  %v3670 = vsel %vm3590, %v3543, 0
  %v3673 = vsel %vm3590, %v3544, 0
  %v3676 = vsel %vm3590, %v3545, 0
  %v3679 = vsel %vm3590, %v3546, 0
  %v3682 = vsel %vm3590, %v3547, 0
  %v3685 = vsel %vm3590, %v3548, 0
  %v3688 = vsel %vm3590, %v3549, 0
  %v3691 = vsel %vm3590, %v3550, 0
  %v3694 = vsel %vm3590, %v3551, 0
  %v3697 = vsel %vm3590, %v3552, 0
  %v3700 = vsel %vm3590, %v3553, 0
  %v3703 = vsel %vm3590, %v3554, 0
  %v3706 = vsel %vm3590, %v3555, 0
  %v3709 = vsel %vm3590, %v3556, 0
  %v3712 = vsel %vm3590, %v3557, 0
  %v3715 = vsel %vm3590, %v3558, 0
  %v3718 = vsel %vm3590, %v3559, 0
  %v3721 = vsel %vm3590, %v3560, 0
  %v3724 = vsel %vm3590, %v3561, 0
  %v3727 = vsel %vm3590, %v3562, 0
  %v3730 = vsel %vm3590, %v3563, 0
  %v3733 = vsel %vm3590, %v3564, 0
  %v3736 = vsel %vm3590, %v3565, 0
  %v3739 = vsel %vm3590, %v3566, 0
  %v3742 = vsel %vm3590, %v3567, 0
  %v3745 = vsel %vm3590, %v3568, 0
  %v3748 = vsel %vm3590, %v3569, 0
  %v3751 = vsel %vm3590, %v3570, 0
  %v3754 = vsel %vm3590, %v3571, 0
  %v3757 = vsel %vm3590, %v3572, 0
  %v3760 = vsel %vm3590, %v3573, 0
  %v3763 = vsel %vm3590, %v3574, 0
  %v3766 = vsel %vm3590, %v3575, 0
  %v3769 = vsel %vm3590, %v3576, 0
  %v3772 = vsel %vm3590, %v3577, 0
  %v3775 = vsel %vm3590, %v3578, 0
  %v3778 = vsel %vm3590, %v3579, 0
  %v3781 = vsel %vm3590, %v3580, 0
  %3783 = vmatpush.msra.mxu0 0.0
  %3784 = vmatpush.msra.mxu0 0.0
  %3785 = vmatpush.msra.mxu0 0.0
  %3786 = vmatpush.msra.mxu0 0.0
  %3787 = vmatpush.msra.mxu0 0.0
  %3788 = vmatpush.msra.mxu0 0.0
  %3789 = vmatpush.msra.mxu0 0.0
  %3790 = vmatpush.msra.mxu0 %v3589
  %3791 = vmatpush.msra.mxu0 %v3588
  %3792 = vmatpush.msra.mxu0 %v3587
  %3793 = vmatpush.msra.mxu0 %v3586
  %3794 = vmatpush.msra.mxu0 %v3585
  %3795 = vmatpush.msra.mxu0 %v3584
  %3796 = vmatpush.msra.mxu0 %v3583
  %3797 = vmatpush.msra.mxu0 %v3582
  %3798 = vmatpush.msra.mxu0 %v3581
  %3799 = vmatmul.f32.gmra.mxu0 %v3592
  %v3800 = vpop.f32.mrf.mxu0
  %v3801 = vadd.f32 0.0, %v3800
  %3802 = vmatmul.f32.gmra.mxu0 %v3595
  %v3803 = vpop.f32.mrf.mxu0
  %v3804 = vadd.f32 0.0, %v3803
  %3805 = vmatmul.f32.gmra.mxu0 %v3598
  %v3806 = vpop.f32.mrf.mxu0
  %v3807 = vadd.f32 0.0, %v3806
  %3808 = vmatmul.f32.gmra.mxu0 %v3601
  %v3809 = vpop.f32.mrf.mxu0
  %v3810 = vadd.f32 0.0, %v3809
  %3811 = vmatmul.f32.gmra.mxu0 %v3604
  %v3812 = vpop.f32.mrf.mxu0
  %v3813 = vadd.f32 0.0, %v3812
  %3814 = vmatmul.f32.gmra.mxu0 %v3607
  %v3815 = vpop.f32.mrf.mxu0
  %v3816 = vadd.f32 0.0, %v3815
  %3817 = vmatmul.f32.gmra.mxu0 %v3610
  %v3818 = vpop.f32.mrf.mxu0
  %v3819 = vadd.f32 0.0, %v3818
  %3820 = vmatmul.f32.gmra.mxu0 %v3613
  %v3821 = vpop.f32.mrf.mxu0
  %v3822 = vadd.f32 0.0, %v3821
  %3823 = vmatmul.f32.gmra.mxu0 %v3616
  %v3824 = vpop.f32.mrf.mxu0
  %v3825 = vadd.f32 0.0, %v3824
  %3826 = vmatmul.f32.gmra.mxu0 %v3619
  %v3827 = vpop.f32.mrf.mxu0
  %v3828 = vadd.f32 0.0, %v3827
  %3829 = vmatmul.f32.gmra.mxu0 %v3622
  %v3830 = vpop.f32.mrf.mxu0
  %v3831 = vadd.f32 0.0, %v3830
  %3832 = vmatmul.f32.gmra.mxu0 %v3625
  %v3833 = vpop.f32.mrf.mxu0
  %v3834 = vadd.f32 0.0, %v3833
  %3835 = vmatmul.f32.gmra.mxu0 %v3628
  %v3836 = vpop.f32.mrf.mxu0
  %v3837 = vadd.f32 0.0, %v3836
  %3838 = vmatmul.f32.gmra.mxu0 %v3631
  %v3839 = vpop.f32.mrf.mxu0
  %v3840 = vadd.f32 0.0, %v3839
  %3841 = vmatmul.f32.gmra.mxu0 %v3634
  %v3842 = vpop.f32.mrf.mxu0
  %v3843 = vadd.f32 0.0, %v3842
  %3844 = vmatmul.f32.gmra.mxu0 %v3637
  %v3845 = vpop.f32.mrf.mxu0
  %v3846 = vadd.f32 0.0, %v3845
  %3847 = vmatmul.f32.gmra.mxu0 %v3640
  %v3848 = vpop.f32.mrf.mxu0
  %v3849 = vadd.f32 0.0, %v3848
  %3850 = vmatmul.f32.gmra.mxu0 %v3643
  %v3851 = vpop.f32.mrf.mxu0
  %v3852 = vadd.f32 0.0, %v3851
  %3853 = vmatmul.f32.gmra.mxu0 %v3646
  %v3854 = vpop.f32.mrf.mxu0
  %v3855 = vadd.f32 0.0, %v3854
  %3856 = vmatmul.f32.gmra.mxu0 %v3649
  %v3857 = vpop.f32.mrf.mxu0
  %v3858 = vadd.f32 0.0, %v3857
  %3859 = vmatmul.f32.gmra.mxu0 %v3652
  %v3860 = vpop.f32.mrf.mxu0
  %v3861 = vadd.f32 0.0, %v3860
  %3862 = vmatmul.f32.gmra.mxu0 %v3655
  %v3863 = vpop.f32.mrf.mxu0
  %v3864 = vadd.f32 0.0, %v3863
  %3865 = vmatmul.f32.gmra.mxu0 %v3658
  %v3866 = vpop.f32.mrf.mxu0
  %v3867 = vadd.f32 0.0, %v3866
  %3868 = vmatmul.f32.gmra.mxu0 %v3661
  %v3869 = vpop.f32.mrf.mxu0
  %v3870 = vadd.f32 0.0, %v3869
  %3871 = vmatmul.f32.gmra.mxu0 %v3664
  %v3872 = vpop.f32.mrf.mxu0
  %v3873 = vadd.f32 0.0, %v3872
  %3874 = vmatmul.f32.gmra.mxu0 %v3667
  %v3875 = vpop.f32.mrf.mxu0
  %v3876 = vadd.f32 0.0, %v3875
  %3877 = vmatmul.f32.gmra.mxu0 %v3670
  %v3878 = vpop.f32.mrf.mxu0
  %v3879 = vadd.f32 0.0, %v3878
  %3880 = vmatmul.f32.gmra.mxu0 %v3673
  %v3881 = vpop.f32.mrf.mxu0
  %v3882 = vadd.f32 0.0, %v3881
  %3883 = vmatmul.f32.gmra.mxu0 %v3676
  %v3884 = vpop.f32.mrf.mxu0
  %v3885 = vadd.f32 0.0, %v3884
  %3886 = vmatmul.f32.gmra.mxu0 %v3679
  %v3887 = vpop.f32.mrf.mxu0
  %v3888 = vadd.f32 0.0, %v3887
  %3889 = vmatmul.f32.gmra.mxu0 %v3682
  %v3890 = vpop.f32.mrf.mxu0
  %v3891 = vadd.f32 0.0, %v3890
  %3892 = vmatmul.f32.gmra.mxu0 %v3685
  %v3893 = vpop.f32.mrf.mxu0
  %v3894 = vadd.f32 0.0, %v3893
  %3895 = vmatmul.f32.gmra.mxu0 %v3688
  %v3896 = vpop.f32.mrf.mxu0
  %v3897 = vadd.f32 0.0, %v3896
  %3898 = vmatmul.f32.gmra.mxu0 %v3691
  %v3899 = vpop.f32.mrf.mxu0
  %v3900 = vadd.f32 0.0, %v3899
  %3901 = vmatmul.f32.gmra.mxu0 %v3694
  %v3902 = vpop.f32.mrf.mxu0
  %v3903 = vadd.f32 0.0, %v3902
  %3904 = vmatmul.f32.gmra.mxu0 %v3697
  %v3905 = vpop.f32.mrf.mxu0
  %v3906 = vadd.f32 0.0, %v3905
  %3907 = vmatmul.f32.gmra.mxu0 %v3700
  %v3908 = vpop.f32.mrf.mxu0
  %v3909 = vadd.f32 0.0, %v3908
  %3910 = vmatmul.f32.gmra.mxu0 %v3703
  %v3911 = vpop.f32.mrf.mxu0
  %v3912 = vadd.f32 0.0, %v3911
  %3913 = vmatmul.f32.gmra.mxu0 %v3706
  %v3914 = vpop.f32.mrf.mxu0
  %v3915 = vadd.f32 0.0, %v3914
  %3916 = vmatmul.f32.gmra.mxu0 %v3709
  %v3917 = vpop.f32.mrf.mxu0
  %v3918 = vadd.f32 0.0, %v3917
  %3919 = vmatmul.f32.gmra.mxu0 %v3712
  %v3920 = vpop.f32.mrf.mxu0
  %v3921 = vadd.f32 0.0, %v3920
  %3922 = vmatmul.f32.gmra.mxu0 %v3715
  %v3923 = vpop.f32.mrf.mxu0
  %v3924 = vadd.f32 0.0, %v3923
  %3925 = vmatmul.f32.gmra.mxu0 %v3718
  %v3926 = vpop.f32.mrf.mxu0
  %v3927 = vadd.f32 0.0, %v3926
  %3928 = vmatmul.f32.gmra.mxu0 %v3721
  %v3929 = vpop.f32.mrf.mxu0
  %v3930 = vadd.f32 0.0, %v3929
  %3931 = vmatmul.f32.gmra.mxu0 %v3724
  %v3932 = vpop.f32.mrf.mxu0
  %v3933 = vadd.f32 0.0, %v3932
  %3934 = vmatmul.f32.gmra.mxu0 %v3727
  %v3935 = vpop.f32.mrf.mxu0
  %v3936 = vadd.f32 0.0, %v3935
  %3937 = vmatmul.f32.gmra.mxu0 %v3730
  %v3938 = vpop.f32.mrf.mxu0
  %v3939 = vadd.f32 0.0, %v3938
  %3940 = vmatmul.f32.gmra.mxu0 %v3733
  %v3941 = vpop.f32.mrf.mxu0
  %v3942 = vadd.f32 0.0, %v3941
  %3943 = vmatmul.f32.gmra.mxu0 %v3736
  %v3944 = vpop.f32.mrf.mxu0
  %v3945 = vadd.f32 0.0, %v3944
  %3946 = vmatmul.f32.gmra.mxu0 %v3739
  %v3947 = vpop.f32.mrf.mxu0
  %v3948 = vadd.f32 0.0, %v3947
  %3949 = vmatmul.f32.gmra.mxu0 %v3742
  %v3950 = vpop.f32.mrf.mxu0
  %v3951 = vadd.f32 0.0, %v3950
  %3952 = vmatmul.f32.gmra.mxu0 %v3745
  %v3953 = vpop.f32.mrf.mxu0
  %v3954 = vadd.f32 0.0, %v3953
  %3955 = vmatmul.f32.gmra.mxu0 %v3748
  %v3956 = vpop.f32.mrf.mxu0
  %v3957 = vadd.f32 0.0, %v3956
  %3958 = vmatmul.f32.gmra.mxu0 %v3751
  %v3959 = vpop.f32.mrf.mxu0
  %v3960 = vadd.f32 0.0, %v3959
  %3961 = vmatmul.f32.gmra.mxu0 %v3754
  %v3962 = vpop.f32.mrf.mxu0
  %v3963 = vadd.f32 0.0, %v3962
  %3964 = vmatmul.f32.gmra.mxu0 %v3757
  %v3965 = vpop.f32.mrf.mxu0
  %v3966 = vadd.f32 0.0, %v3965
  %3967 = vmatmul.f32.gmra.mxu0 %v3760
  %v3968 = vpop.f32.mrf.mxu0
  %v3969 = vadd.f32 0.0, %v3968
  %3970 = vmatmul.f32.gmra.mxu0 %v3763
  %v3971 = vpop.f32.mrf.mxu0
  %v3972 = vadd.f32 0.0, %v3971
  %3973 = vmatmul.f32.gmra.mxu0 %v3766
  %v3974 = vpop.f32.mrf.mxu0
  %v3975 = vadd.f32 0.0, %v3974
  %3976 = vmatmul.f32.gmra.mxu0 %v3769
  %v3977 = vpop.f32.mrf.mxu0
  %v3978 = vadd.f32 0.0, %v3977
  %3979 = vmatmul.f32.gmra.mxu0 %v3772
  %v3980 = vpop.f32.mrf.mxu0
  %v3981 = vadd.f32 0.0, %v3980
  %3982 = vmatmul.f32.gmra.mxu0 %v3775
  %v3983 = vpop.f32.mrf.mxu0
  %v3984 = vadd.f32 0.0, %v3983
  %3985 = vmatmul.f32.gmra.mxu0 %v3778
  %v3986 = vpop.f32.mrf.mxu0
  %v3987 = vadd.f32 0.0, %v3986
  %3988 = vmatmul.f32.gmra.mxu0 %v3781
  %v3989 = vpop.f32.mrf.mxu0
  %v3990 = vadd.f32 0.0, %v3989
  %3991 = vdwg.mxu0
  %3992 = vst.msk [vmem:[%s4] sm:$0xff] %vm284, %v3801
  %3993 = vst.msk [vmem:[%s4 + $0x8] sm:$0xff] %vm284, %v3804
  %3994 = vst.msk [vmem:[%s4 + $0x10] sm:$0xff] %vm284, %v3807
  %3995 = vst.msk [vmem:[%s4 + $0x18] sm:$0xff] %vm284, %v3810
  %3996 = vst.msk [vmem:[%s4 + $0x20] sm:$0xff] %vm284, %v3813
  %3997 = vst.msk [vmem:[%s4 + $0x28] sm:$0xff] %vm284, %v3816
  %3998 = vst.msk [vmem:[%s4 + $0x30] sm:$0xff] %vm284, %v3819
  %3999 = vst.msk [vmem:[%s4 + $0x38] sm:$0xff] %vm284, %v3822
  %4000 = vst.msk [vmem:[%s4 + $0x40] sm:$0xff] %vm284, %v3825
  %4001 = vst.msk [vmem:[%s4 + $0x48] sm:$0xff] %vm284, %v3828
  %4002 = vst.msk [vmem:[%s4 + $0x50] sm:$0xff] %vm284, %v3831
  %4003 = vst.msk [vmem:[%s4 + $0x58] sm:$0xff] %vm284, %v3834
  %4004 = vst.msk [vmem:[%s4 + $0x60] sm:$0xff] %vm284, %v3837
  %4005 = vst.msk [vmem:[%s4 + $0x68] sm:$0xff] %vm284, %v3840
  %4006 = vst.msk [vmem:[%s4 + $0x70] sm:$0xff] %vm284, %v3843
  %4007 = vst.msk [vmem:[%s4 + $0x78] sm:$0xff] %vm284, %v3846
  %4008 = vst.msk [vmem:[%s4 + $0x80] sm:$0xff] %vm284, %v3849
  %4009 = vst.msk [vmem:[%s4 + $0x88] sm:$0xff] %vm284, %v3852
  %4010 = vst.msk [vmem:[%s4 + $0x90] sm:$0xff] %vm284, %v3855
  %4011 = vst.msk [vmem:[%s4 + $0x98] sm:$0xff] %vm284, %v3858
  %4012 = vst.msk [vmem:[%s4 + $0xa0] sm:$0xff] %vm284, %v3861
  %4013 = vst.msk [vmem:[%s4 + $0xa8] sm:$0xff] %vm284, %v3864
  %4014 = vst.msk [vmem:[%s4 + $0xb0] sm:$0xff] %vm284, %v3867
  %4015 = vst.msk [vmem:[%s4 + $0xb8] sm:$0xff] %vm284, %v3870
  %4016 = vst.msk [vmem:[%s4 + $0xc0] sm:$0xff] %vm284, %v3873
  %4017 = vst.msk [vmem:[%s4 + $0xc8] sm:$0xff] %vm284, %v3876
  %4018 = vst.msk [vmem:[%s4 + $0xd0] sm:$0xff] %vm284, %v3879
  %4019 = vst.msk [vmem:[%s4 + $0xd8] sm:$0xff] %vm284, %v3882
  %4020 = vst.msk [vmem:[%s4 + $0xe0] sm:$0xff] %vm284, %v3885
  %4021 = vst.msk [vmem:[%s4 + $0xe8] sm:$0xff] %vm284, %v3888
  %4022 = vst.msk [vmem:[%s4 + $0xf0] sm:$0xff] %vm284, %v3891
  %4023 = vst.msk [vmem:[%s4 + $0xf8] sm:$0xff] %vm284, %v3894
  %4024 = vst.msk [vmem:[%s4 + $0x100] sm:$0xff] %vm284, %v3897
  %4025 = vst.msk [vmem:[%s4 + $0x108] sm:$0xff] %vm284, %v3900
  %4026 = vst.msk [vmem:[%s4 + $0x110] sm:$0xff] %vm284, %v3903
  %4027 = vst.msk [vmem:[%s4 + $0x118] sm:$0xff] %vm284, %v3906
  %4028 = vst.msk [vmem:[%s4 + $0x120] sm:$0xff] %vm284, %v3909
  %4029 = vst.msk [vmem:[%s4 + $0x128] sm:$0xff] %vm284, %v3912
  %4030 = vst.msk [vmem:[%s4 + $0x130] sm:$0xff] %vm284, %v3915
  %4031 = vst.msk [vmem:[%s4 + $0x138] sm:$0xff] %vm284, %v3918
  %4032 = vst.msk [vmem:[%s4 + $0x140] sm:$0xff] %vm284, %v3921
  %4033 = vst.msk [vmem:[%s4 + $0x148] sm:$0xff] %vm284, %v3924
  %4034 = vst.msk [vmem:[%s4 + $0x150] sm:$0xff] %vm284, %v3927
  %4035 = vst.msk [vmem:[%s4 + $0x158] sm:$0xff] %vm284, %v3930
  %4036 = vst.msk [vmem:[%s4 + $0x160] sm:$0xff] %vm284, %v3933
  %4037 = vst.msk [vmem:[%s4 + $0x168] sm:$0xff] %vm284, %v3936
  %4038 = vst.msk [vmem:[%s4 + $0x170] sm:$0xff] %vm284, %v3939
  %4039 = vst.msk [vmem:[%s4 + $0x178] sm:$0xff] %vm284, %v3942
  %4040 = vst.msk [vmem:[%s4 + $0x180] sm:$0xff] %vm284, %v3945
  %4041 = vst.msk [vmem:[%s4 + $0x188] sm:$0xff] %vm284, %v3948
  %4042 = vst.msk [vmem:[%s4 + $0x190] sm:$0xff] %vm284, %v3951
  %4043 = vst.msk [vmem:[%s4 + $0x198] sm:$0xff] %vm284, %v3954
  %4044 = vst.msk [vmem:[%s4 + $0x1a0] sm:$0xff] %vm284, %v3957
  %4045 = vst.msk [vmem:[%s4 + $0x1a8] sm:$0xff] %vm284, %v3960
  %4046 = vst.msk [vmem:[%s4 + $0x1b0] sm:$0xff] %vm284, %v3963
  %4047 = vst.msk [vmem:[%s4 + $0x1b8] sm:$0xff] %vm284, %v3966
  %4048 = vst.msk [vmem:[%s4 + $0x1c0] sm:$0xff] %vm284, %v3969
  %4049 = vst.msk [vmem:[%s4 + $0x1c8] sm:$0xff] %vm284, %v3972
  %4050 = vst.msk [vmem:[%s4 + $0x1d0] sm:$0xff] %vm284, %v3975
  %4051 = vst.msk [vmem:[%s4 + $0x1d8] sm:$0xff] %vm284, %v3978
  %4052 = vst.msk [vmem:[%s4 + $0x1e0] sm:$0xff] %vm284, %v3981
  %4053 = vst.msk [vmem:[%s4 + $0x1e8] sm:$0xff] %vm284, %v3984
  %4054 = vst.msk [vmem:[%s4 + $0x1f0] sm:$0xff] %vm284, %v3987
  %4055 = vst.msk [vmem:[%s4 + $0x1f8] sm:$0xff] %vm284, %v3990
  %v4056 = vsel %vm284, %v3801, 0.0
  %v4057 = vsel %vm284, %v3804, 0.0
  %v4058 = vadd.f32 %v4056, %v4057
  %v4059 = vsel %vm284, %v3807, 0.0
  %v4060 = vadd.f32 %v4058, %v4059
  %v4061 = vsel %vm284, %v3810, 0.0
  %v4062 = vadd.f32 %v4060, %v4061
  %v4063 = vsel %vm284, %v3813, 0.0
  %v4064 = vadd.f32 %v4062, %v4063
  %v4065 = vsel %vm284, %v3816, 0.0
  %v4066 = vadd.f32 %v4064, %v4065
  %v4067 = vsel %vm284, %v3819, 0.0
  %v4068 = vadd.f32 %v4066, %v4067
  %v4069 = vsel %vm284, %v3822, 0.0
  %v4070 = vadd.f32 %v4068, %v4069
  %v4071 = vsel %vm284, %v3825, 0.0
  %v4072 = vadd.f32 %v4070, %v4071
  %v4073 = vsel %vm284, %v3828, 0.0
  %v4074 = vadd.f32 %v4072, %v4073
  %v4075 = vsel %vm284, %v3831, 0.0
  %v4076 = vadd.f32 %v4074, %v4075
  %v4077 = vsel %vm284, %v3834, 0.0
  %v4078 = vadd.f32 %v4076, %v4077
  %v4079 = vsel %vm284, %v3837, 0.0
  %v4080 = vadd.f32 %v4078, %v4079
  %v4081 = vsel %vm284, %v3840, 0.0
  %v4082 = vadd.f32 %v4080, %v4081
  %v4083 = vsel %vm284, %v3843, 0.0
  %v4084 = vadd.f32 %v4082, %v4083
  %v4085 = vsel %vm284, %v3846, 0.0
  %v4086 = vadd.f32 %v4084, %v4085
  %v4087 = vsel %vm284, %v3849, 0.0
  %v4088 = vadd.f32 %v4086, %v4087
  %v4089 = vsel %vm284, %v3852, 0.0
  %v4090 = vadd.f32 %v4088, %v4089
  %v4091 = vsel %vm284, %v3855, 0.0
  %v4092 = vadd.f32 %v4090, %v4091
  %v4093 = vsel %vm284, %v3858, 0.0
  %v4094 = vadd.f32 %v4092, %v4093
  %v4095 = vsel %vm284, %v3861, 0.0
  %v4096 = vadd.f32 %v4094, %v4095
  %v4097 = vsel %vm284, %v3864, 0.0
  %v4098 = vadd.f32 %v4096, %v4097
  %v4099 = vsel %vm284, %v3867, 0.0
  %v4100 = vadd.f32 %v4098, %v4099
  %v4101 = vsel %vm284, %v3870, 0.0
  %v4102 = vadd.f32 %v4100, %v4101
  %v4103 = vsel %vm284, %v3873, 0.0
  %v4104 = vadd.f32 %v4102, %v4103
  %v4105 = vsel %vm284, %v3876, 0.0
  %v4106 = vadd.f32 %v4104, %v4105
  %v4107 = vsel %vm284, %v3879, 0.0
  %v4108 = vadd.f32 %v4106, %v4107
  %v4109 = vsel %vm284, %v3882, 0.0
  %v4110 = vadd.f32 %v4108, %v4109
  %v4111 = vsel %vm284, %v3885, 0.0
  %v4112 = vadd.f32 %v4110, %v4111
  %v4113 = vsel %vm284, %v3888, 0.0
  %v4114 = vadd.f32 %v4112, %v4113
  %v4115 = vsel %vm284, %v3891, 0.0
  %v4116 = vadd.f32 %v4114, %v4115
  %v4117 = vsel %vm284, %v3894, 0.0
  %v4118 = vadd.f32 %v4116, %v4117
  %v4119 = vsel %vm284, %v3897, 0.0
  %v4120 = vadd.f32 %v4118, %v4119
  %v4121 = vsel %vm284, %v3900, 0.0
  %v4122 = vadd.f32 %v4120, %v4121
  %v4123 = vsel %vm284, %v3903, 0.0
  %v4124 = vadd.f32 %v4122, %v4123
  %v4125 = vsel %vm284, %v3906, 0.0
  %v4126 = vadd.f32 %v4124, %v4125
  %v4127 = vsel %vm284, %v3909, 0.0
  %v4128 = vadd.f32 %v4126, %v4127
  %v4129 = vsel %vm284, %v3912, 0.0
  %v4130 = vadd.f32 %v4128, %v4129
  %v4131 = vsel %vm284, %v3915, 0.0
  %v4132 = vadd.f32 %v4130, %v4131
  %v4133 = vsel %vm284, %v3918, 0.0
  %v4134 = vadd.f32 %v4132, %v4133
  %v4135 = vsel %vm284, %v3921, 0.0
  %v4136 = vadd.f32 %v4134, %v4135
  %v4137 = vsel %vm284, %v3924, 0.0
  %v4138 = vadd.f32 %v4136, %v4137
  %v4139 = vsel %vm284, %v3927, 0.0
  %v4140 = vadd.f32 %v4138, %v4139
  %v4141 = vsel %vm284, %v3930, 0.0
  %v4142 = vadd.f32 %v4140, %v4141
  %v4143 = vsel %vm284, %v3933, 0.0
  %v4144 = vadd.f32 %v4142, %v4143
  %v4145 = vsel %vm284, %v3936, 0.0
  %v4146 = vadd.f32 %v4144, %v4145
  %v4147 = vsel %vm284, %v3939, 0.0
  %v4148 = vadd.f32 %v4146, %v4147
  %v4149 = vsel %vm284, %v3942, 0.0
  %v4150 = vadd.f32 %v4148, %v4149
  %v4151 = vsel %vm284, %v3945, 0.0
  %v4152 = vadd.f32 %v4150, %v4151
  %v4153 = vsel %vm284, %v3948, 0.0
  %v4154 = vadd.f32 %v4152, %v4153
  %v4155 = vsel %vm284, %v3951, 0.0
  %v4156 = vadd.f32 %v4154, %v4155
  %v4157 = vsel %vm284, %v3954, 0.0
  %v4158 = vadd.f32 %v4156, %v4157
  %v4159 = vsel %vm284, %v3957, 0.0
  %v4160 = vadd.f32 %v4158, %v4159
  %v4161 = vsel %vm284, %v3960, 0.0
  %v4162 = vadd.f32 %v4160, %v4161
  %v4163 = vsel %vm284, %v3963, 0.0
  %v4164 = vadd.f32 %v4162, %v4163
  %v4165 = vsel %vm284, %v3966, 0.0
  %v4166 = vadd.f32 %v4164, %v4165
  %v4167 = vsel %vm284, %v3969, 0.0
  %v4168 = vadd.f32 %v4166, %v4167
  %v4169 = vsel %vm284, %v3972, 0.0
  %v4170 = vadd.f32 %v4168, %v4169
  %v4171 = vsel %vm284, %v3975, 0.0
  %v4172 = vadd.f32 %v4170, %v4171
  %v4173 = vsel %vm284, %v3978, 0.0
  %v4174 = vadd.f32 %v4172, %v4173
  %v4175 = vsel %vm284, %v3981, 0.0
  %v4176 = vadd.f32 %v4174, %v4175
  %v4177 = vsel %vm284, %v3984, 0.0
  %v4178 = vadd.f32 %v4176, %v4177
  %v4179 = vsel %vm284, %v3987, 0.0
  %v4180 = vadd.f32 %v4178, %v4179
  %v4181 = vsel %vm284, %v3990, 0.0
  %v4182 = vadd.f32 %v4180, %v4181
  %v4183 = vrot.slane %v4182, 4
  %v4184 = vadd.f32 %v4182, %v4183
  %v4185 = vrot.slane %v4184, 2
  %v4186 = vadd.f32 %v4184, %v4185
  %v4187 = vrot.slane %v4186, 1
  %v4188 = vadd.f32 %v4186, %v4187
  %4189 = vst.msk [vmem:[%s5] sm:$0x1] %vm299, %v4188
  %v4190 = vmul.f32 %v3801, %v3801
  %v4191 = vmul.f32 %v3804, %v3804
  %v4192 = vmul.f32 %v3807, %v3807
  %v4193 = vmul.f32 %v3810, %v3810
  %v4194 = vmul.f32 %v3813, %v3813
  %v4195 = vmul.f32 %v3816, %v3816
  %v4196 = vmul.f32 %v3819, %v3819
  %v4197 = vmul.f32 %v3822, %v3822
  %v4198 = vmul.f32 %v3825, %v3825
  %v4199 = vmul.f32 %v3828, %v3828
  %v4200 = vmul.f32 %v3831, %v3831
  %v4201 = vmul.f32 %v3834, %v3834
  %v4202 = vmul.f32 %v3837, %v3837
  %v4203 = vmul.f32 %v3840, %v3840
  %v4204 = vmul.f32 %v3843, %v3843
  %v4205 = vmul.f32 %v3846, %v3846
  %v4206 = vmul.f32 %v3849, %v3849
  %v4207 = vmul.f32 %v3852, %v3852
  %v4208 = vmul.f32 %v3855, %v3855
  %v4209 = vmul.f32 %v3858, %v3858
  %v4210 = vmul.f32 %v3861, %v3861
  %v4211 = vmul.f32 %v3864, %v3864
  %v4212 = vmul.f32 %v3867, %v3867
  %v4213 = vmul.f32 %v3870, %v3870
  %v4214 = vmul.f32 %v3873, %v3873
  %v4215 = vmul.f32 %v3876, %v3876
  %v4216 = vmul.f32 %v3879, %v3879
  %v4217 = vmul.f32 %v3882, %v3882
  %v4218 = vmul.f32 %v3885, %v3885
  %v4219 = vmul.f32 %v3888, %v3888
  %v4220 = vmul.f32 %v3891, %v3891
  %v4221 = vmul.f32 %v3894, %v3894
  %v4222 = vmul.f32 %v3897, %v3897
  %v4223 = vmul.f32 %v3900, %v3900
  %v4224 = vmul.f32 %v3903, %v3903
  %v4225 = vmul.f32 %v3906, %v3906
  %v4226 = vmul.f32 %v3909, %v3909
  %v4227 = vmul.f32 %v3912, %v3912
  %v4228 = vmul.f32 %v3915, %v3915
  %v4229 = vmul.f32 %v3918, %v3918
  %v4230 = vmul.f32 %v3921, %v3921
  %v4231 = vmul.f32 %v3924, %v3924
  %v4232 = vmul.f32 %v3927, %v3927
  %v4233 = vmul.f32 %v3930, %v3930
  %v4234 = vmul.f32 %v3933, %v3933
  %v4235 = vmul.f32 %v3936, %v3936
  %v4236 = vmul.f32 %v3939, %v3939
  %v4237 = vmul.f32 %v3942, %v3942
  %v4238 = vmul.f32 %v3945, %v3945
  %v4239 = vmul.f32 %v3948, %v3948
  %v4240 = vmul.f32 %v3951, %v3951
  %v4241 = vmul.f32 %v3954, %v3954
  %v4242 = vmul.f32 %v3957, %v3957
  %v4243 = vmul.f32 %v3960, %v3960
  %v4244 = vmul.f32 %v3963, %v3963
  %v4245 = vmul.f32 %v3966, %v3966
  %v4246 = vmul.f32 %v3969, %v3969
  %v4247 = vmul.f32 %v3972, %v3972
  %v4248 = vmul.f32 %v3975, %v3975
  %v4249 = vmul.f32 %v3978, %v3978
  %v4250 = vmul.f32 %v3981, %v3981
  %v4251 = vmul.f32 %v3984, %v3984
  %v4252 = vmul.f32 %v3987, %v3987
  %v4253 = vmul.f32 %v3990, %v3990
  %v4254 = vsel %vm284, %v4190, 0.0
  %v4255 = vsel %vm284, %v4191, 0.0
  %v4256 = vadd.f32 %v4254, %v4255
  %v4257 = vsel %vm284, %v4192, 0.0
  %v4258 = vadd.f32 %v4256, %v4257
  %v4259 = vsel %vm284, %v4193, 0.0
  %v4260 = vadd.f32 %v4258, %v4259
  %v4261 = vsel %vm284, %v4194, 0.0
  %v4262 = vadd.f32 %v4260, %v4261
  %v4263 = vsel %vm284, %v4195, 0.0
  %v4264 = vadd.f32 %v4262, %v4263
  %v4265 = vsel %vm284, %v4196, 0.0
  %v4266 = vadd.f32 %v4264, %v4265
  %v4267 = vsel %vm284, %v4197, 0.0
  %v4268 = vadd.f32 %v4266, %v4267
  %v4269 = vsel %vm284, %v4198, 0.0
  %v4270 = vadd.f32 %v4268, %v4269
  %v4271 = vsel %vm284, %v4199, 0.0
  %v4272 = vadd.f32 %v4270, %v4271
  %v4273 = vsel %vm284, %v4200, 0.0
  %v4274 = vadd.f32 %v4272, %v4273
  %v4275 = vsel %vm284, %v4201, 0.0
  %v4276 = vadd.f32 %v4274, %v4275
  %v4277 = vsel %vm284, %v4202, 0.0
  %v4278 = vadd.f32 %v4276, %v4277
  %v4279 = vsel %vm284, %v4203, 0.0
  %v4280 = vadd.f32 %v4278, %v4279
  %v4281 = vsel %vm284, %v4204, 0.0
  %v4282 = vadd.f32 %v4280, %v4281
  %v4283 = vsel %vm284, %v4205, 0.0
  %v4284 = vadd.f32 %v4282, %v4283
  %v4285 = vsel %vm284, %v4206, 0.0
  %v4286 = vadd.f32 %v4284, %v4285
  %v4287 = vsel %vm284, %v4207, 0.0
  %v4288 = vadd.f32 %v4286, %v4287
  %v4289 = vsel %vm284, %v4208, 0.0
  %v4290 = vadd.f32 %v4288, %v4289
  %v4291 = vsel %vm284, %v4209, 0.0
  %v4292 = vadd.f32 %v4290, %v4291
  %v4293 = vsel %vm284, %v4210, 0.0
  %v4294 = vadd.f32 %v4292, %v4293
  %v4295 = vsel %vm284, %v4211, 0.0
  %v4296 = vadd.f32 %v4294, %v4295
  %v4297 = vsel %vm284, %v4212, 0.0
  %v4298 = vadd.f32 %v4296, %v4297
  %v4299 = vsel %vm284, %v4213, 0.0
  %v4300 = vadd.f32 %v4298, %v4299
  %v4301 = vsel %vm284, %v4214, 0.0
  %v4302 = vadd.f32 %v4300, %v4301
  %v4303 = vsel %vm284, %v4215, 0.0
  %v4304 = vadd.f32 %v4302, %v4303
  %v4305 = vsel %vm284, %v4216, 0.0
  %v4306 = vadd.f32 %v4304, %v4305
  %v4307 = vsel %vm284, %v4217, 0.0
  %v4308 = vadd.f32 %v4306, %v4307
  %v4309 = vsel %vm284, %v4218, 0.0
  %v4310 = vadd.f32 %v4308, %v4309
  %v4311 = vsel %vm284, %v4219, 0.0
  %v4312 = vadd.f32 %v4310, %v4311
  %v4313 = vsel %vm284, %v4220, 0.0
  %v4314 = vadd.f32 %v4312, %v4313
  %v4315 = vsel %vm284, %v4221, 0.0
  %v4316 = vadd.f32 %v4314, %v4315
  %v4317 = vsel %vm284, %v4222, 0.0
  %v4318 = vadd.f32 %v4316, %v4317
  %v4319 = vsel %vm284, %v4223, 0.0
  %v4320 = vadd.f32 %v4318, %v4319
  %v4321 = vsel %vm284, %v4224, 0.0
  %v4322 = vadd.f32 %v4320, %v4321
  %v4323 = vsel %vm284, %v4225, 0.0
  %v4324 = vadd.f32 %v4322, %v4323
  %v4325 = vsel %vm284, %v4226, 0.0
  %v4326 = vadd.f32 %v4324, %v4325
  %v4327 = vsel %vm284, %v4227, 0.0
  %v4328 = vadd.f32 %v4326, %v4327
  %v4329 = vsel %vm284, %v4228, 0.0
  %v4330 = vadd.f32 %v4328, %v4329
  %v4331 = vsel %vm284, %v4229, 0.0
  %v4332 = vadd.f32 %v4330, %v4331
  %v4333 = vsel %vm284, %v4230, 0.0
  %v4334 = vadd.f32 %v4332, %v4333
  %v4335 = vsel %vm284, %v4231, 0.0
  %v4336 = vadd.f32 %v4334, %v4335
  %v4337 = vsel %vm284, %v4232, 0.0
  %v4338 = vadd.f32 %v4336, %v4337
  %v4339 = vsel %vm284, %v4233, 0.0
  %v4340 = vadd.f32 %v4338, %v4339
  %v4341 = vsel %vm284, %v4234, 0.0
  %v4342 = vadd.f32 %v4340, %v4341
  %v4343 = vsel %vm284, %v4235, 0.0
  %v4344 = vadd.f32 %v4342, %v4343
  %v4345 = vsel %vm284, %v4236, 0.0
  %v4346 = vadd.f32 %v4344, %v4345
  %v4347 = vsel %vm284, %v4237, 0.0
  %v4348 = vadd.f32 %v4346, %v4347
  %v4349 = vsel %vm284, %v4238, 0.0
  %v4350 = vadd.f32 %v4348, %v4349
  %v4351 = vsel %vm284, %v4239, 0.0
  %v4352 = vadd.f32 %v4350, %v4351
  %v4353 = vsel %vm284, %v4240, 0.0
  %v4354 = vadd.f32 %v4352, %v4353
  %v4355 = vsel %vm284, %v4241, 0.0
  %v4356 = vadd.f32 %v4354, %v4355
  %v4357 = vsel %vm284, %v4242, 0.0
  %v4358 = vadd.f32 %v4356, %v4357
  %v4359 = vsel %vm284, %v4243, 0.0
  %v4360 = vadd.f32 %v4358, %v4359
  %v4361 = vsel %vm284, %v4244, 0.0
  %v4362 = vadd.f32 %v4360, %v4361
  %v4363 = vsel %vm284, %v4245, 0.0
  %v4364 = vadd.f32 %v4362, %v4363
  %v4365 = vsel %vm284, %v4246, 0.0
  %v4366 = vadd.f32 %v4364, %v4365
  %v4367 = vsel %vm284, %v4247, 0.0
  %v4368 = vadd.f32 %v4366, %v4367
  %v4369 = vsel %vm284, %v4248, 0.0
  %v4370 = vadd.f32 %v4368, %v4369
  %v4371 = vsel %vm284, %v4249, 0.0
  %v4372 = vadd.f32 %v4370, %v4371
  %v4373 = vsel %vm284, %v4250, 0.0
  %v4374 = vadd.f32 %v4372, %v4373
  %v4375 = vsel %vm284, %v4251, 0.0
  %v4376 = vadd.f32 %v4374, %v4375
  %v4377 = vsel %vm284, %v4252, 0.0
  %v4378 = vadd.f32 %v4376, %v4377
  %v4379 = vsel %vm284, %v4253, 0.0
  %v4380 = vadd.f32 %v4378, %v4379
  %v4381 = vrot.slane %v4380, 4
  %v4382 = vadd.f32 %v4380, %v4381
  %v4383 = vrot.slane %v4382, 2
  %v4384 = vadd.f32 %v4382, %v4383
  %v4385 = vrot.slane %v4384, 1
  %v4386 = vadd.f32 %v4384, %v4385
  %4387 = vst.msk [vmem:[%s6] sm:$0x1] %vm299, %v4386
  // Predicated region
  $region18: #{conv_block_forward.4} parent=0 // pred_check
    _
  $region19: #{conv_block_forward.4} parent=0 // pred_check_branch
    %4389 = sbr.rel (0) target = $region21
  $region20: #{conv_block_forward.4} parent=0 // pred_region
    _
  $region21: #{conv_block_forward.4} parent=0 // pred_fallthru
    _
  // Predicated region
  $region22: #{conv_block_forward.4} parent=0 // pred_check
    _
  $region23: #{conv_block_forward.4} parent=0 // pred_check_branch
    %4391 = sbr.rel (0) target = $region25
  $region24: #{conv_block_forward.4} parent=0 // pred_region
    _
  $region25: #{conv_block_forward.4} parent=0 // pred_fallthru
    _
  // Predicated region
  $region26: #{conv_block_forward.4} parent=0 // pred_check
    _
  $region27: #{conv_block_forward.4} parent=0 // pred_check_branch
    %4393 = sbr.rel (0) target = $region29
  $region28: #{conv_block_forward.4} parent=0 // pred_region
    _
  $region29: #{conv_block_forward.4} parent=0 // pred_fallthru
    _
  // Predicated region
  $region30: #{conv_block_forward.4} parent=0 // pred_check
    _
  $region31: #{conv_block_forward.4} parent=0 // pred_check_branch
    %4395 = sbr.rel (0) target = $region33
  $region32: #{conv_block_forward.4} parent=0 // pred_region
    _
  $region33: #{conv_block_forward.4} parent=0 // pred_fallthru
    _
  // Predicated region
  $region34: #{conv_block_forward.4} parent=0 // pred_check
    _
  $region35: #{conv_block_forward.4} parent=0 // pred_check_branch
    %4397 = sbr.rel (0) target = $region37
  $region36: #{conv_block_forward.4} parent=0 // pred_region
    _
  $region37: #{conv_block_forward.4} parent=0 // pred_fallthru
    _
  // Predicated region
  $region38: #{conv_block_forward.4} parent=0 // pred_check
    _
  $region39: #{conv_block_forward.4} parent=0 // pred_check_branch
    %4399 = sbr.rel (0) target = $region41
  $region40: #{conv_block_forward.4} parent=0 // pred_region
    _
  $region41: #{conv_block_forward.4} parent=0 // pred_fallthru
    _

// kernel: conv_block_forward.3
$region0: #{conv_block_forward.3}
  #allocation0 [shape = 'u32[]', space=smem, size = 0x4, offset = 0x4, fixed_abs, tag = 'smem constant byte address 0x4 - core index']
  #allocation1 [shape = 'u32[72,128]{1,0:T(1,128)}', space=vmem, size = 0x9000, scoped, tag = 'internal scratch']
  #allocation2 [shape = 'f32[2,18,18,4]{3,2,1,0:T(8,128)}', space=vmem, size = 0x6c000, scoped, tag = 'scratch operand']
  %s0 = inlined_call_operand.vmem [shape: f32[2,16,16,4], index: 0, kind: input, shape index: {}]
  %s1 = inlined_call_operand.vmem [shape: f32[36,8], index: 1, kind: input, shape index: {}]
  %s2 = inlined_call_operand.vmem [shape: f32[2,16,16,8], index: 2, kind: output, shape index: {0}]
  %s3 = inlined_call_operand.vmem [shape: f32[1,8], index: 3, kind: output, shape index: {1}]
  %s4 = inlined_call_operand.vmem [shape: f32[1,8], index: 4, kind: output, shape index: {2}]
  %5 = xla_tuple %s2, %s3, %s4
  %s6 = sld [smem:[#allocation0]]
  $region34: #{conv_block_forward.3} parent=0
    _
  %s8 = ssub.s32 1, %s6
  %s9 = scalar_select 0, %s8, %s6
  // Predicated region
  $region2: #{conv_block_forward.3} parent=0 // pred_check
    _
  $region3: #{conv_block_forward.3} parent=0 // pred_check_branch
    %11 = sbr.rel (0) target = $region5
  $region4: #{conv_block_forward.3} parent=0 // pred_region
    _
  $region5: #{conv_block_forward.3} parent=0 // pred_fallthru
    _
  // Predicated region
  $region6: #{conv_block_forward.3} parent=0 // pred_check
    _
  $region7: #{conv_block_forward.3} parent=0 // pred_check_branch
    %13 = sbr.rel (0) target = $region9
  $region8: #{conv_block_forward.3} parent=0 // pred_region
    _
  $region9: #{conv_block_forward.3} parent=0 // pred_fallthru
    _
  %v14 = vld [vmem:[%s0] sm:$0xff]
  %v15 = vld [vmem:[%s0 + $0x8] sm:$0xff]
  %v16 = vld [vmem:[%s0 + $0x10] sm:$0xff]
  %v17 = vld [vmem:[%s0 + $0x18] sm:$0xff]
  %v18 = vld [vmem:[%s0 + $0x20] sm:$0xff]
  %v19 = vld [vmem:[%s0 + $0x28] sm:$0xff]
  %v20 = vld [vmem:[%s0 + $0x30] sm:$0xff]
  %v21 = vld [vmem:[%s0 + $0x38] sm:$0xff]
  %v22 = vld [vmem:[%s0 + $0x40] sm:$0xff]
  %v23 = vld [vmem:[%s0 + $0x48] sm:$0xff]
  %v24 = vld [vmem:[%s0 + $0x50] sm:$0xff]
  %v25 = vld [vmem:[%s0 + $0x58] sm:$0xff]
  %v26 = vld [vmem:[%s0 + $0x60] sm:$0xff]
  %v27 = vld [vmem:[%s0 + $0x68] sm:$0xff]
  %v28 = vld [vmem:[%s0 + $0x70] sm:$0xff]
  %v29 = vld [vmem:[%s0 + $0x78] sm:$0xff]
  %v30 = vld [vmem:[%s0 + $0x80] sm:$0xff]
  %v31 = vld [vmem:[%s0 + $0x88] sm:$0xff]
  %v32 = vld [vmem:[%s0 + $0x90] sm:$0xff]
  %v33 = vld [vmem:[%s0 + $0x98] sm:$0xff]
  %v34 = vld [vmem:[%s0 + $0xa0] sm:$0xff]
  %v35 = vld [vmem:[%s0 + $0xa8] sm:$0xff]
  %v36 = vld [vmem:[%s0 + $0xb0] sm:$0xff]
  %v37 = vld [vmem:[%s0 + $0xb8] sm:$0xff]
  %v38 = vld [vmem:[%s0 + $0xc0] sm:$0xff]
  %v39 = vld [vmem:[%s0 + $0xc8] sm:$0xff]
  %v40 = vld [vmem:[%s0 + $0xd0] sm:$0xff]
  %v41 = vld [vmem:[%s0 + $0xd8] sm:$0xff]
  %v42 = vld [vmem:[%s0 + $0xe0] sm:$0xff]
  %v43 = vld [vmem:[%s0 + $0xe8] sm:$0xff]
  %v44 = vld [vmem:[%s0 + $0xf0] sm:$0xff]
  %v45 = vld [vmem:[%s0 + $0xf8] sm:$0xff]
  %v46 = vld [vmem:[%s0 + $0x100] sm:$0xff]
  %v47 = vld [vmem:[%s0 + $0x108] sm:$0xff]
  %v48 = vld [vmem:[%s0 + $0x110] sm:$0xff]
  %v49 = vld [vmem:[%s0 + $0x118] sm:$0xff]
  %v50 = vld [vmem:[%s0 + $0x120] sm:$0xff]
  %v51 = vld [vmem:[%s0 + $0x128] sm:$0xff]
  %v52 = vld [vmem:[%s0 + $0x130] sm:$0xff]
  %v53 = vld [vmem:[%s0 + $0x138] sm:$0xff]
  %v54 = vld [vmem:[%s0 + $0x140] sm:$0xff]
  %v55 = vld [vmem:[%s0 + $0x148] sm:$0xff]
  %v56 = vld [vmem:[%s0 + $0x150] sm:$0xff]
  %v57 = vld [vmem:[%s0 + $0x158] sm:$0xff]
  %v58 = vld [vmem:[%s0 + $0x160] sm:$0xff]
  %v59 = vld [vmem:[%s0 + $0x168] sm:$0xff]
  %v60 = vld [vmem:[%s0 + $0x170] sm:$0xff]
  %v61 = vld [vmem:[%s0 + $0x178] sm:$0xff]
  %v62 = vld [vmem:[%s0 + $0x180] sm:$0xff]
  %v63 = vld [vmem:[%s0 + $0x188] sm:$0xff]
  %v64 = vld [vmem:[%s0 + $0x190] sm:$0xff]
  %v65 = vld [vmem:[%s0 + $0x198] sm:$0xff]
  %v66 = vld [vmem:[%s0 + $0x1a0] sm:$0xff]
  %v67 = vld [vmem:[%s0 + $0x1a8] sm:$0xff]
  %v68 = vld [vmem:[%s0 + $0x1b0] sm:$0xff]
  %v69 = vld [vmem:[%s0 + $0x1b8] sm:$0xff]
  %v70 = vld [vmem:[%s0 + $0x1c0] sm:$0xff]
  %v71 = vld [vmem:[%s0 + $0x1c8] sm:$0xff]
  %v72 = vld [vmem:[%s0 + $0x1d0] sm:$0xff]
  %v73 = vld [vmem:[%s0 + $0x1d8] sm:$0xff]
  %v74 = vld [vmem:[%s0 + $0x1e0] sm:$0xff]
  %v75 = vld [vmem:[%s0 + $0x1e8] sm:$0xff]
  %v76 = vld [vmem:[%s0 + $0x1f0] sm:$0xff]
  %v77 = vld [vmem:[%s0 + $0x1f8] sm:$0xff]
  %vm78 = vcmask 31744
  %79 = vst.msk [vmem:[#allocation2] sm:$0xff] %vm78, 0.0
  %80 = vst.msk [vmem:[#allocation2 + $0x8] sm:$0xff] %vm78, 0.0
  %vm81 = vcmask 25600
  %82 = vst.msk [vmem:[#allocation2 + $0x10] sm:$0x3] %vm81, 0.0
  %83 = vst.msk [vmem:[#allocation2 + $0x1b0] sm:$0xff] %vm78, 0.0
  %84 = vst.msk [vmem:[#allocation2 + $0x1b8] sm:$0xff] %vm78, 0.0
  %85 = vst.msk [vmem:[#allocation2 + $0x1c0] sm:$0x3] %vm81, 0.0
  %s86 = scalar_lea.vmem [#allocation2], 408
  %87 = vst.msk [vmem:[%s86] sm:$0xff] %vm78, 0.0
  %88 = vst.msk [vmem:[%s86 + $0x8] sm:$0xff] %vm78, 0.0
  %89 = vst.msk [vmem:[%s86 + $0x10] sm:$0x3] %vm81, 0.0
  %90 = vst.msk [vmem:[%s86 + $0x1b0] sm:$0xff] %vm78, 0.0
  %91 = vst.msk [vmem:[%s86 + $0x1b8] sm:$0xff] %vm78, 0.0
  %92 = vst.msk [vmem:[%s86 + $0x1c0] sm:$0x3] %vm81, 0.0
  %vm93 = vcmask 24576
  %94 = vst.msk [vmem:[#allocation2] sm:$0x1] %vm93, 0.0
  %95 = vst.msk [vmem:[#allocation2 + $0x18] sm:$0x1] %vm93, 0.0
  %96 = vst.msk [vmem:[#allocation2 + $0x30] sm:$0x1] %vm93, 0.0
  %97 = vst.msk [vmem:[#allocation2 + $0x48] sm:$0x1] %vm93, 0.0
  %98 = vst.msk [vmem:[#allocation2 + $0x60] sm:$0x1] %vm93, 0.0
  %99 = vst.msk [vmem:[#allocation2 + $0x78] sm:$0x1] %vm93, 0.0
  %100 = vst.msk [vmem:[#allocation2 + $0x90] sm:$0x1] %vm93, 0.0
  %101 = vst.msk [vmem:[#allocation2 + $0xa8] sm:$0x1] %vm93, 0.0
  %102 = vst.msk [vmem:[#allocation2 + $0xc0] sm:$0x1] %vm93, 0.0
  %103 = vst.msk [vmem:[#allocation2 + $0xd8] sm:$0x1] %vm93, 0.0
  %104 = vst.msk [vmem:[#allocation2 + $0xf0] sm:$0x1] %vm93, 0.0
  %105 = vst.msk [vmem:[#allocation2 + $0x108] sm:$0x1] %vm93, 0.0
  %106 = vst.msk [vmem:[#allocation2 + $0x120] sm:$0x1] %vm93, 0.0
  %107 = vst.msk [vmem:[#allocation2 + $0x138] sm:$0x1] %vm93, 0.0
  %108 = vst.msk [vmem:[#allocation2 + $0x150] sm:$0x1] %vm93, 0.0
  %109 = vst.msk [vmem:[#allocation2 + $0x168] sm:$0x1] %vm93, 0.0
  %110 = vst.msk [vmem:[#allocation2 + $0x180] sm:$0x1] %vm93, 0.0
  %111 = vst.msk [vmem:[#allocation2 + $0x198] sm:$0x1] %vm93, 0.0
  %112 = vst.msk [vmem:[#allocation2 + $0x1b0] sm:$0x1] %vm93, 0.0
  %113 = vst.msk [vmem:[#allocation2 + $0x1c8] sm:$0x1] %vm93, 0.0
  %114 = vst.msk [vmem:[#allocation2 + $0x1e0] sm:$0x1] %vm93, 0.0
  %115 = vst.msk [vmem:[#allocation2 + $0x1f8] sm:$0x1] %vm93, 0.0
  %116 = vst.msk [vmem:[#allocation2 + $0x210] sm:$0x1] %vm93, 0.0
  %117 = vst.msk [vmem:[#allocation2 + $0x228] sm:$0x1] %vm93, 0.0
  %118 = vst.msk [vmem:[#allocation2 + $0x240] sm:$0x1] %vm93, 0.0
  %119 = vst.msk [vmem:[#allocation2 + $0x258] sm:$0x1] %vm93, 0.0
  %120 = vst.msk [vmem:[#allocation2 + $0x270] sm:$0x1] %vm93, 0.0
  %121 = vst.msk [vmem:[#allocation2 + $0x288] sm:$0x1] %vm93, 0.0
  %122 = vst.msk [vmem:[#allocation2 + $0x2a0] sm:$0x1] %vm93, 0.0
  %123 = vst.msk [vmem:[#allocation2 + $0x2b8] sm:$0x1] %vm93, 0.0
  %124 = vst.msk [vmem:[#allocation2 + $0x2d0] sm:$0x1] %vm93, 0.0
  %125 = vst.msk [vmem:[#allocation2 + $0x2e8] sm:$0x1] %vm93, 0.0
  %126 = vst.msk [vmem:[#allocation2 + $0x300] sm:$0x1] %vm93, 0.0
  %127 = vst.msk [vmem:[#allocation2 + $0x318] sm:$0x1] %vm93, 0.0
  %128 = vst.msk [vmem:[#allocation2 + $0x330] sm:$0x1] %vm93, 0.0
  %129 = vst.msk [vmem:[#allocation2 + $0x348] sm:$0x1] %vm93, 0.0
  %130 = vst.msk [vmem:[#allocation2 + $0x11] sm:$0x1] %vm93, 0.0
  %131 = vst.msk [vmem:[#allocation2 + $0x29] sm:$0x1] %vm93, 0.0
  %132 = vst.msk [vmem:[#allocation2 + $0x41] sm:$0x1] %vm93, 0.0
  %133 = vst.msk [vmem:[#allocation2 + $0x59] sm:$0x1] %vm93, 0.0
  %134 = vst.msk [vmem:[#allocation2 + $0x71] sm:$0x1] %vm93, 0.0
  %135 = vst.msk [vmem:[#allocation2 + $0x89] sm:$0x1] %vm93, 0.0
  %136 = vst.msk [vmem:[#allocation2 + $0xa1] sm:$0x1] %vm93, 0.0
  %137 = vst.msk [vmem:[#allocation2 + $0xb9] sm:$0x1] %vm93, 0.0
  %138 = vst.msk [vmem:[#allocation2 + $0xd1] sm:$0x1] %vm93, 0.0
  %139 = vst.msk [vmem:[#allocation2 + $0xe9] sm:$0x1] %vm93, 0.0
  %140 = vst.msk [vmem:[#allocation2 + $0x101] sm:$0x1] %vm93, 0.0
  %141 = vst.msk [vmem:[#allocation2 + $0x119] sm:$0x1] %vm93, 0.0
  %142 = vst.msk [vmem:[#allocation2 + $0x131] sm:$0x1] %vm93, 0.0
  %143 = vst.msk [vmem:[#allocation2 + $0x149] sm:$0x1] %vm93, 0.0
  %144 = vst.msk [vmem:[#allocation2 + $0x161] sm:$0x1] %vm93, 0.0
  %145 = vst.msk [vmem:[#allocation2 + $0x179] sm:$0x1] %vm93, 0.0
  %146 = vst.msk [vmem:[#allocation2 + $0x191] sm:$0x1] %vm93, 0.0
  %147 = vst.msk [vmem:[#allocation2 + $0x1a9] sm:$0x1] %vm93, 0.0
  %148 = vst.msk [vmem:[#allocation2 + $0x1c1] sm:$0x1] %vm93, 0.0
  %149 = vst.msk [vmem:[#allocation2 + $0x1d9] sm:$0x1] %vm93, 0.0
  %150 = vst.msk [vmem:[#allocation2 + $0x1f1] sm:$0x1] %vm93, 0.0
  %151 = vst.msk [vmem:[#allocation2 + $0x209] sm:$0x1] %vm93, 0.0
  %152 = vst.msk [vmem:[#allocation2 + $0x221] sm:$0x1] %vm93, 0.0
  %153 = vst.msk [vmem:[#allocation2 + $0x239] sm:$0x1] %vm93, 0.0
  %154 = vst.msk [vmem:[#allocation2 + $0x251] sm:$0x1] %vm93, 0.0
  %155 = vst.msk [vmem:[#allocation2 + $0x269] sm:$0x1] %vm93, 0.0
  %156 = vst.msk [vmem:[#allocation2 + $0x281] sm:$0x1] %vm93, 0.0
  %157 = vst.msk [vmem:[#allocation2 + $0x299] sm:$0x1] %vm93, 0.0
  %158 = vst.msk [vmem:[#allocation2 + $0x2b1] sm:$0x1] %vm93, 0.0
  %159 = vst.msk [vmem:[#allocation2 + $0x2c9] sm:$0x1] %vm93, 0.0
  %160 = vst.msk [vmem:[#allocation2 + $0x2e1] sm:$0x1] %vm93, 0.0
  %161 = vst.msk [vmem:[#allocation2 + $0x2f9] sm:$0x1] %vm93, 0.0
  %162 = vst.msk [vmem:[#allocation2 + $0x311] sm:$0x1] %vm93, 0.0
  %163 = vst.msk [vmem:[#allocation2 + $0x329] sm:$0x1] %vm93, 0.0
  %164 = vst.msk [vmem:[#allocation2 + $0x341] sm:$0x1] %vm93, 0.0
  %165 = vst.msk [vmem:[#allocation2 + $0x359] sm:$0x1] %vm93, 0.0
  %s166 = scalar_lea.vmem [#allocation2], 24
  %167 = vst.msk [vmem:[%s166 + $0x1] sm:$0xff] %vm78, %v14
  %168 = vst.msk [vmem:[%s166 + $0x9] sm:$0xff] %vm78, %v15
  %169 = vst.msk [vmem:[%s166 + $0x19] sm:$0xff] %vm78, %v16
  %170 = vst.msk [vmem:[%s166 + $0x21] sm:$0xff] %vm78, %v17
  %171 = vst.msk [vmem:[%s166 + $0x31] sm:$0xff] %vm78, %v18
  %172 = vst.msk [vmem:[%s166 + $0x39] sm:$0xff] %vm78, %v19
  %173 = vst.msk [vmem:[%s166 + $0x49] sm:$0xff] %vm78, %v20
  %174 = vst.msk [vmem:[%s166 + $0x51] sm:$0xff] %vm78, %v21
  %175 = vst.msk [vmem:[%s166 + $0x61] sm:$0xff] %vm78, %v22
  %176 = vst.msk [vmem:[%s166 + $0x69] sm:$0xff] %vm78, %v23
  %177 = vst.msk [vmem:[%s166 + $0x79] sm:$0xff] %vm78, %v24
  %178 = vst.msk [vmem:[%s166 + $0x81] sm:$0xff] %vm78, %v25
  %179 = vst.msk [vmem:[%s166 + $0x91] sm:$0xff] %vm78, %v26
  %180 = vst.msk [vmem:[%s166 + $0x99] sm:$0xff] %vm78, %v27
  %181 = vst.msk [vmem:[%s166 + $0xa9] sm:$0xff] %vm78, %v28
  %182 = vst.msk [vmem:[%s166 + $0xb1] sm:$0xff] %vm78, %v29
  %183 = vst.msk [vmem:[%s166 + $0xc1] sm:$0xff] %vm78, %v30
  %184 = vst.msk [vmem:[%s166 + $0xc9] sm:$0xff] %vm78, %v31
  %185 = vst.msk [vmem:[%s166 + $0xd9] sm:$0xff] %vm78, %v32
  %186 = vst.msk [vmem:[%s166 + $0xe1] sm:$0xff] %vm78, %v33
  %187 = vst.msk [vmem:[%s166 + $0xf1] sm:$0xff] %vm78, %v34
  %188 = vst.msk [vmem:[%s166 + $0xf9] sm:$0xff] %vm78, %v35
  %189 = vst.msk [vmem:[%s166 + $0x109] sm:$0xff] %vm78, %v36
  %190 = vst.msk [vmem:[%s166 + $0x111] sm:$0xff] %vm78, %v37
  %191 = vst.msk [vmem:[%s166 + $0x121] sm:$0xff] %vm78, %v38
  %192 = vst.msk [vmem:[%s166 + $0x129] sm:$0xff] %vm78, %v39
  %193 = vst.msk [vmem:[%s166 + $0x139] sm:$0xff] %vm78, %v40
  %194 = vst.msk [vmem:[%s166 + $0x141] sm:$0xff] %vm78, %v41
  %195 = vst.msk [vmem:[%s166 + $0x151] sm:$0xff] %vm78, %v42
  %196 = vst.msk [vmem:[%s166 + $0x159] sm:$0xff] %vm78, %v43
  %197 = vst.msk [vmem:[%s166 + $0x169] sm:$0xff] %vm78, %v44
  %198 = vst.msk [vmem:[%s166 + $0x171] sm:$0xff] %vm78, %v45
  %199 = vst.msk [vmem:[%s166 + $0x1b1] sm:$0xff] %vm78, %v46
  %200 = vst.msk [vmem:[%s166 + $0x1b9] sm:$0xff] %vm78, %v47
  %201 = vst.msk [vmem:[%s166 + $0x1c9] sm:$0xff] %vm78, %v48
  %202 = vst.msk [vmem:[%s166 + $0x1d1] sm:$0xff] %vm78, %v49
  %203 = vst.msk [vmem:[%s166 + $0x1e1] sm:$0xff] %vm78, %v50
  %204 = vst.msk [vmem:[%s166 + $0x1e9] sm:$0xff] %vm78, %v51
  %205 = vst.msk [vmem:[%s166 + $0x1f9] sm:$0xff] %vm78, %v52
  %206 = vst.msk [vmem:[%s166 + $0x201] sm:$0xff] %vm78, %v53
  %207 = vst.msk [vmem:[%s166 + $0x211] sm:$0xff] %vm78, %v54
  %208 = vst.msk [vmem:[%s166 + $0x219] sm:$0xff] %vm78, %v55
  %209 = vst.msk [vmem:[%s166 + $0x229] sm:$0xff] %vm78, %v56
  %210 = vst.msk [vmem:[%s166 + $0x231] sm:$0xff] %vm78, %v57
  %211 = vst.msk [vmem:[%s166 + $0x241] sm:$0xff] %vm78, %v58
  %212 = vst.msk [vmem:[%s166 + $0x249] sm:$0xff] %vm78, %v59
  %213 = vst.msk [vmem:[%s166 + $0x259] sm:$0xff] %vm78, %v60
  %214 = vst.msk [vmem:[%s166 + $0x261] sm:$0xff] %vm78, %v61
  %215 = vst.msk [vmem:[%s166 + $0x271] sm:$0xff] %vm78, %v62
  %216 = vst.msk [vmem:[%s166 + $0x279] sm:$0xff] %vm78, %v63
  %217 = vst.msk [vmem:[%s166 + $0x289] sm:$0xff] %vm78, %v64
  %218 = vst.msk [vmem:[%s166 + $0x291] sm:$0xff] %vm78, %v65
  %219 = vst.msk [vmem:[%s166 + $0x2a1] sm:$0xff] %vm78, %v66
  %220 = vst.msk [vmem:[%s166 + $0x2a9] sm:$0xff] %vm78, %v67
  %221 = vst.msk [vmem:[%s166 + $0x2b9] sm:$0xff] %vm78, %v68
  %222 = vst.msk [vmem:[%s166 + $0x2c1] sm:$0xff] %vm78, %v69
  %223 = vst.msk [vmem:[%s166 + $0x2d1] sm:$0xff] %vm78, %v70
  %224 = vst.msk [vmem:[%s166 + $0x2d9] sm:$0xff] %vm78, %v71
  %225 = vst.msk [vmem:[%s166 + $0x2e9] sm:$0xff] %vm78, %v72
  %226 = vst.msk [vmem:[%s166 + $0x2f1] sm:$0xff] %vm78, %v73
  %227 = vst.msk [vmem:[%s166 + $0x301] sm:$0xff] %vm78, %v74
  %228 = vst.msk [vmem:[%s166 + $0x309] sm:$0xff] %vm78, %v75
  %229 = vst.msk [vmem:[%s166 + $0x319] sm:$0xff] %vm78, %v76
  %230 = vst.msk [vmem:[%s166 + $0x321] sm:$0xff] %vm78, %v77
  %v231 = vld [vmem:[#allocation2] sm:$0xff]
  %v232 = vld [vmem:[#allocation2 + $0x8] sm:$0xff]
  %v233 = vld [vmem:[#allocation2 + $0x18] sm:$0xff]
  %v234 = vld [vmem:[#allocation2 + $0x20] sm:$0xff]
  %v235 = vld [vmem:[#allocation2 + $0x30] sm:$0xff]
  %v236 = vld [vmem:[#allocation2 + $0x38] sm:$0xff]
  %v237 = vld [vmem:[#allocation2 + $0x48] sm:$0xff]
  %v238 = vld [vmem:[#allocation2 + $0x50] sm:$0xff]
  %v239 = vld [vmem:[#allocation2 + $0x60] sm:$0xff]
  %v240 = vld [vmem:[#allocation2 + $0x68] sm:$0xff]
  %v241 = vld [vmem:[#allocation2 + $0x78] sm:$0xff]
  %v242 = vld [vmem:[#allocation2 + $0x80] sm:$0xff]
  %v243 = vld [vmem:[#allocation2 + $0x90] sm:$0xff]
  %v244 = vld [vmem:[#allocation2 + $0x98] sm:$0xff]
  %v245 = vld [vmem:[#allocation2 + $0xa8] sm:$0xff]
  %v246 = vld [vmem:[#allocation2 + $0xb0] sm:$0xff]
  %v247 = vld [vmem:[#allocation2 + $0xc0] sm:$0xff]
  %v248 = vld [vmem:[#allocation2 + $0xc8] sm:$0xff]
  %v249 = vld [vmem:[#allocation2 + $0xd8] sm:$0xff]
  %v250 = vld [vmem:[#allocation2 + $0xe0] sm:$0xff]
  %v251 = vld [vmem:[#allocation2 + $0xf0] sm:$0xff]
  %v252 = vld [vmem:[#allocation2 + $0xf8] sm:$0xff]
  %v253 = vld [vmem:[#allocation2 + $0x108] sm:$0xff]
  %v254 = vld [vmem:[#allocation2 + $0x110] sm:$0xff]
  %v255 = vld [vmem:[#allocation2 + $0x120] sm:$0xff]
  %v256 = vld [vmem:[#allocation2 + $0x128] sm:$0xff]
  %v257 = vld [vmem:[#allocation2 + $0x138] sm:$0xff]
  %v258 = vld [vmem:[#allocation2 + $0x140] sm:$0xff]
  %v259 = vld [vmem:[#allocation2 + $0x150] sm:$0xff]
  %v260 = vld [vmem:[#allocation2 + $0x158] sm:$0xff]
  %v261 = vld [vmem:[#allocation2 + $0x168] sm:$0xff]
  %v262 = vld [vmem:[#allocation2 + $0x170] sm:$0xff]
  %v263 = vld [vmem:[#allocation2 + $0x1b0] sm:$0xff]
  %v264 = vld [vmem:[#allocation2 + $0x1b8] sm:$0xff]
  %v265 = vld [vmem:[#allocation2 + $0x1c8] sm:$0xff]
  %v266 = vld [vmem:[#allocation2 + $0x1d0] sm:$0xff]
  %v267 = vld [vmem:[#allocation2 + $0x1e0] sm:$0xff]
  %v268 = vld [vmem:[#allocation2 + $0x1e8] sm:$0xff]
  %v269 = vld [vmem:[#allocation2 + $0x1f8] sm:$0xff]
  %v270 = vld [vmem:[#allocation2 + $0x200] sm:$0xff]
  %v271 = vld [vmem:[#allocation2 + $0x210] sm:$0xff]
  %v272 = vld [vmem:[#allocation2 + $0x218] sm:$0xff]
  %v273 = vld [vmem:[#allocation2 + $0x228] sm:$0xff]
  %v274 = vld [vmem:[#allocation2 + $0x230] sm:$0xff]
  %v275 = vld [vmem:[#allocation2 + $0x240] sm:$0xff]
  %v276 = vld [vmem:[#allocation2 + $0x248] sm:$0xff]
  %v277 = vld [vmem:[#allocation2 + $0x258] sm:$0xff]
  %v278 = vld [vmem:[#allocation2 + $0x260] sm:$0xff]
  %v279 = vld [vmem:[#allocation2 + $0x270] sm:$0xff]
  %v280 = vld [vmem:[#allocation2 + $0x278] sm:$0xff]
  %v281 = vld [vmem:[#allocation2 + $0x288] sm:$0xff]
  %v282 = vld [vmem:[#allocation2 + $0x290] sm:$0xff]
  %v283 = vld [vmem:[#allocation2 + $0x2a0] sm:$0xff]
  %v284 = vld [vmem:[#allocation2 + $0x2a8] sm:$0xff]
  %v285 = vld [vmem:[#allocation2 + $0x2b8] sm:$0xff]
  %v286 = vld [vmem:[#allocation2 + $0x2c0] sm:$0xff]
  %v287 = vld [vmem:[#allocation2 + $0x2d0] sm:$0xff]
  %v288 = vld [vmem:[#allocation2 + $0x2d8] sm:$0xff]
  %v289 = vld [vmem:[#allocation2 + $0x2e8] sm:$0xff]
  %v290 = vld [vmem:[#allocation2 + $0x2f0] sm:$0xff]
  %v291 = vld [vmem:[#allocation2 + $0x300] sm:$0xff]
  %v292 = vld [vmem:[#allocation2 + $0x308] sm:$0xff]
  %v293 = vld [vmem:[#allocation2 + $0x318] sm:$0xff]
  %v294 = vld [vmem:[#allocation2 + $0x320] sm:$0xff]
  %v295 = vld [vmem:[#allocation2 + $0x1] sm:$0xff]
  %v296 = vld [vmem:[#allocation2 + $0x9] sm:$0xff]
  %v297 = vld [vmem:[#allocation2 + $0x19] sm:$0xff]
  %v298 = vld [vmem:[#allocation2 + $0x21] sm:$0xff]
  %v299 = vld [vmem:[#allocation2 + $0x31] sm:$0xff]
  %v300 = vld [vmem:[#allocation2 + $0x39] sm:$0xff]
  %v301 = vld [vmem:[#allocation2 + $0x49] sm:$0xff]
  %v302 = vld [vmem:[#allocation2 + $0x51] sm:$0xff]
  %v303 = vld [vmem:[#allocation2 + $0x61] sm:$0xff]
  %v304 = vld [vmem:[#allocation2 + $0x69] sm:$0xff]
  %v305 = vld [vmem:[#allocation2 + $0x79] sm:$0xff]
  %v306 = vld [vmem:[#allocation2 + $0x81] sm:$0xff]
  %v307 = vld [vmem:[#allocation2 + $0x91] sm:$0xff]
  %v308 = vld [vmem:[#allocation2 + $0x99] sm:$0xff]
  %v309 = vld [vmem:[#allocation2 + $0xa9] sm:$0xff]
  %v310 = vld [vmem:[#allocation2 + $0xb1] sm:$0xff]
  %v311 = vld [vmem:[#allocation2 + $0xc1] sm:$0xff]
  %v312 = vld [vmem:[#allocation2 + $0xc9] sm:$0xff]
  %v313 = vld [vmem:[#allocation2 + $0xd9] sm:$0xff]
  %v314 = vld [vmem:[#allocation2 + $0xe1] sm:$0xff]
  %v315 = vld [vmem:[#allocation2 + $0xf1] sm:$0xff]
  %v316 = vld [vmem:[#allocation2 + $0xf9] sm:$0xff]
  %v317 = vld [vmem:[#allocation2 + $0x109] sm:$0xff]
  %v318 = vld [vmem:[#allocation2 + $0x111] sm:$0xff]
  %v319 = vld [vmem:[#allocation2 + $0x121] sm:$0xff]
  %v320 = vld [vmem:[#allocation2 + $0x129] sm:$0xff]
  %v321 = vld [vmem:[#allocation2 + $0x139] sm:$0xff]
  %v322 = vld [vmem:[#allocation2 + $0x141] sm:$0xff]
  %v323 = vld [vmem:[#allocation2 + $0x151] sm:$0xff]
  %v324 = vld [vmem:[#allocation2 + $0x159] sm:$0xff]
  %v325 = vld [vmem:[#allocation2 + $0x169] sm:$0xff]
  %v326 = vld [vmem:[#allocation2 + $0x171] sm:$0xff]
  %v327 = vld [vmem:[#allocation2 + $0x1b1] sm:$0xff]
  %v328 = vld [vmem:[#allocation2 + $0x1b9] sm:$0xff]
  %v329 = vld [vmem:[#allocation2 + $0x1c9] sm:$0xff]
  %v330 = vld [vmem:[#allocation2 + $0x1d1] sm:$0xff]
  %v331 = vld [vmem:[#allocation2 + $0x1e1] sm:$0xff]
  %v332 = vld [vmem:[#allocation2 + $0x1e9] sm:$0xff]
  %v333 = vld [vmem:[#allocation2 + $0x1f9] sm:$0xff]
  %v334 = vld [vmem:[#allocation2 + $0x201] sm:$0xff]
  %v335 = vld [vmem:[#allocation2 + $0x211] sm:$0xff]
  %v336 = vld [vmem:[#allocation2 + $0x219] sm:$0xff]
  %v337 = vld [vmem:[#allocation2 + $0x229] sm:$0xff]
  %v338 = vld [vmem:[#allocation2 + $0x231] sm:$0xff]
  %v339 = vld [vmem:[#allocation2 + $0x241] sm:$0xff]
  %v340 = vld [vmem:[#allocation2 + $0x249] sm:$0xff]
  %v341 = vld [vmem:[#allocation2 + $0x259] sm:$0xff]
  %v342 = vld [vmem:[#allocation2 + $0x261] sm:$0xff]
  %v343 = vld [vmem:[#allocation2 + $0x271] sm:$0xff]
  %v344 = vld [vmem:[#allocation2 + $0x279] sm:$0xff]
  %v345 = vld [vmem:[#allocation2 + $0x289] sm:$0xff]
  %v346 = vld [vmem:[#allocation2 + $0x291] sm:$0xff]
  %v347 = vld [vmem:[#allocation2 + $0x2a1] sm:$0xff]
  %v348 = vld [vmem:[#allocation2 + $0x2a9] sm:$0xff]
  %v349 = vld [vmem:[#allocation2 + $0x2b9] sm:$0xff]
  %v350 = vld [vmem:[#allocation2 + $0x2c1] sm:$0xff]
  %v351 = vld [vmem:[#allocation2 + $0x2d1] sm:$0xff]
  %v352 = vld [vmem:[#allocation2 + $0x2d9] sm:$0xff]
  %v353 = vld [vmem:[#allocation2 + $0x2e9] sm:$0xff]
  %v354 = vld [vmem:[#allocation2 + $0x2f1] sm:$0xff]
  %v355 = vld [vmem:[#allocation2 + $0x301] sm:$0xff]
  %v356 = vld [vmem:[#allocation2 + $0x309] sm:$0xff]
  %v357 = vld [vmem:[#allocation2 + $0x319] sm:$0xff]
  %v358 = vld [vmem:[#allocation2 + $0x321] sm:$0xff]
  %v359 = vld [vmem:[#allocation2 + $0x2] sm:$0xff]
  %v360 = vld [vmem:[#allocation2 + $0xa] sm:$0xff]
  %v361 = vld [vmem:[#allocation2 + $0x1a] sm:$0xff]
  %v362 = vld [vmem:[#allocation2 + $0x22] sm:$0xff]
  %v363 = vld [vmem:[#allocation2 + $0x32] sm:$0xff]
  %v364 = vld [vmem:[#allocation2 + $0x3a] sm:$0xff]
  %v365 = vld [vmem:[#allocation2 + $0x4a] sm:$0xff]
  %v366 = vld [vmem:[#allocation2 + $0x52] sm:$0xff]
  %v367 = vld [vmem:[#allocation2 + $0x62] sm:$0xff]
  %v368 = vld [vmem:[#allocation2 + $0x6a] sm:$0xff]
  %v369 = vld [vmem:[#allocation2 + $0x7a] sm:$0xff]
  %v370 = vld [vmem:[#allocation2 + $0x82] sm:$0xff]
  %v371 = vld [vmem:[#allocation2 + $0x92] sm:$0xff]
  %v372 = vld [vmem:[#allocation2 + $0x9a] sm:$0xff]
  %v373 = vld [vmem:[#allocation2 + $0xaa] sm:$0xff]
  %v374 = vld [vmem:[#allocation2 + $0xb2] sm:$0xff]
  %v375 = vld [vmem:[#allocation2 + $0xc2] sm:$0xff]
  %v376 = vld [vmem:[#allocation2 + $0xca] sm:$0xff]
  %v377 = vld [vmem:[#allocation2 + $0xda] sm:$0xff]
  %v378 = vld [vmem:[#allocation2 + $0xe2] sm:$0xff]
  %v379 = vld [vmem:[#allocation2 + $0xf2] sm:$0xff]
  %v380 = vld [vmem:[#allocation2 + $0xfa] sm:$0xff]
  %v381 = vld [vmem:[#allocation2 + $0x10a] sm:$0xff]
  %v382 = vld [vmem:[#allocation2 + $0x112] sm:$0xff]
  %v383 = vld [vmem:[#allocation2 + $0x122] sm:$0xff]
  %v384 = vld [vmem:[#allocation2 + $0x12a] sm:$0xff]
  %v385 = vld [vmem:[#allocation2 + $0x13a] sm:$0xff]
  %v386 = vld [vmem:[#allocation2 + $0x142] sm:$0xff]
  %v387 = vld [vmem:[#allocation2 + $0x152] sm:$0xff]
  %v388 = vld [vmem:[#allocation2 + $0x15a] sm:$0xff]
  %v389 = vld [vmem:[#allocation2 + $0x16a] sm:$0xff]
  %v390 = vld [vmem:[#allocation2 + $0x172] sm:$0xff]
  %v391 = vld [vmem:[#allocation2 + $0x1b2] sm:$0xff]
  %v392 = vld [vmem:[#allocation2 + $0x1ba] sm:$0xff]
  %v393 = vld [vmem:[#allocation2 + $0x1ca] sm:$0xff]
  %v394 = vld [vmem:[#allocation2 + $0x1d2] sm:$0xff]
  %v395 = vld [vmem:[#allocation2 + $0x1e2] sm:$0xff]
  %v396 = vld [vmem:[#allocation2 + $0x1ea] sm:$0xff]
  %v397 = vld [vmem:[#allocation2 + $0x1fa] sm:$0xff]
  %v398 = vld [vmem:[#allocation2 + $0x202] sm:$0xff]
  %v399 = vld [vmem:[#allocation2 + $0x212] sm:$0xff]
  %v400 = vld [vmem:[#allocation2 + $0x21a] sm:$0xff]
  %v401 = vld [vmem:[#allocation2 + $0x22a] sm:$0xff]
  %v402 = vld [vmem:[#allocation2 + $0x232] sm:$0xff]
  %v403 = vld [vmem:[#allocation2 + $0x242] sm:$0xff]
  %v404 = vld [vmem:[#allocation2 + $0x24a] sm:$0xff]
  %v405 = vld [vmem:[#allocation2 + $0x25a] sm:$0xff]
  %v406 = vld [vmem:[#allocation2 + $0x262] sm:$0xff]
  %v407 = vld [vmem:[#allocation2 + $0x272] sm:$0xff]
  %v408 = vld [vmem:[#allocation2 + $0x27a] sm:$0xff]
  %v409 = vld [vmem:[#allocation2 + $0x28a] sm:$0xff]
  %v410 = vld [vmem:[#allocation2 + $0x292] sm:$0xff]
  %v411 = vld [vmem:[#allocation2 + $0x2a2] sm:$0xff]
  %v412 = vld [vmem:[#allocation2 + $0x2aa] sm:$0xff]
  %v413 = vld [vmem:[#allocation2 + $0x2ba] sm:$0xff]
  %v414 = vld [vmem:[#allocation2 + $0x2c2] sm:$0xff]
  %v415 = vld [vmem:[#allocation2 + $0x2d2] sm:$0xff]
  %v416 = vld [vmem:[#allocation2 + $0x2da] sm:$0xff]
  %v417 = vld [vmem:[#allocation2 + $0x2ea] sm:$0xff]
  %v418 = vld [vmem:[#allocation2 + $0x2f2] sm:$0xff]
  %v419 = vld [vmem:[#allocation2 + $0x302] sm:$0xff]
  %v420 = vld [vmem:[#allocation2 + $0x30a] sm:$0xff]
  %v421 = vld [vmem:[#allocation2 + $0x31a] sm:$0xff]
  %v422 = vld [vmem:[#allocation2 + $0x322] sm:$0xff]
  %v423 = vld [vmem:[%s166] sm:$0xff]
  %v424 = vld [vmem:[%s166 + $0x8] sm:$0xff]
  %v425 = vld [vmem:[%s166 + $0x18] sm:$0xff]
  %v426 = vld [vmem:[%s166 + $0x20] sm:$0xff]
  %v427 = vld [vmem:[%s166 + $0x30] sm:$0xff]
  %v428 = vld [vmem:[%s166 + $0x38] sm:$0xff]
  %v429 = vld [vmem:[%s166 + $0x48] sm:$0xff]
  %v430 = vld [vmem:[%s166 + $0x50] sm:$0xff]
  %v431 = vld [vmem:[%s166 + $0x60] sm:$0xff]
  %v432 = vld [vmem:[%s166 + $0x68] sm:$0xff]
  %v433 = vld [vmem:[%s166 + $0x78] sm:$0xff]
  %v434 = vld [vmem:[%s166 + $0x80] sm:$0xff]
  %v435 = vld [vmem:[%s166 + $0x90] sm:$0xff]
  %v436 = vld [vmem:[%s166 + $0x98] sm:$0xff]
  %v437 = vld [vmem:[%s166 + $0xa8] sm:$0xff]
  %v438 = vld [vmem:[%s166 + $0xb0] sm:$0xff]
  %v439 = vld [vmem:[%s166 + $0xc0] sm:$0xff]
  %v440 = vld [vmem:[%s166 + $0xc8] sm:$0xff]
  %v441 = vld [vmem:[%s166 + $0xd8] sm:$0xff]
  %v442 = vld [vmem:[%s166 + $0xe0] sm:$0xff]
  %v443 = vld [vmem:[%s166 + $0xf0] sm:$0xff]
  %v444 = vld [vmem:[%s166 + $0xf8] sm:$0xff]
  %v445 = vld [vmem:[%s166 + $0x108] sm:$0xff]
  %v446 = vld [vmem:[%s166 + $0x110] sm:$0xff]
  %v447 = vld [vmem:[%s166 + $0x120] sm:$0xff]
  %v448 = vld [vmem:[%s166 + $0x128] sm:$0xff]
  %v449 = vld [vmem:[%s166 + $0x138] sm:$0xff]
  %v450 = vld [vmem:[%s166 + $0x140] sm:$0xff]
  %v451 = vld [vmem:[%s166 + $0x150] sm:$0xff]
  %v452 = vld [vmem:[%s166 + $0x158] sm:$0xff]
  %v453 = vld [vmem:[%s166 + $0x168] sm:$0xff]
  %v454 = vld [vmem:[%s166 + $0x170] sm:$0xff]
  %v455 = vld [vmem:[%s166 + $0x1b0] sm:$0xff]
  %v456 = vld [vmem:[%s166 + $0x1b8] sm:$0xff]
  %v457 = vld [vmem:[%s166 + $0x1c8] sm:$0xff]
  %v458 = vld [vmem:[%s166 + $0x1d0] sm:$0xff]
  %v459 = vld [vmem:[%s166 + $0x1e0] sm:$0xff]
  %v460 = vld [vmem:[%s166 + $0x1e8] sm:$0xff]
  %v461 = vld [vmem:[%s166 + $0x1f8] sm:$0xff]
  %v462 = vld [vmem:[%s166 + $0x200] sm:$0xff]
  %v463 = vld [vmem:[%s166 + $0x210] sm:$0xff]
  %v464 = vld [vmem:[%s166 + $0x218] sm:$0xff]
  %v465 = vld [vmem:[%s166 + $0x228] sm:$0xff]
  %v466 = vld [vmem:[%s166 + $0x230] sm:$0xff]
  %v467 = vld [vmem:[%s166 + $0x240] sm:$0xff]
  %v468 = vld [vmem:[%s166 + $0x248] sm:$0xff]
  %v469 = vld [vmem:[%s166 + $0x258] sm:$0xff]
  %v470 = vld [vmem:[%s166 + $0x260] sm:$0xff]
  %v471 = vld [vmem:[%s166 + $0x270] sm:$0xff]
  %v472 = vld [vmem:[%s166 + $0x278] sm:$0xff]
  %v473 = vld [vmem:[%s166 + $0x288] sm:$0xff]
  %v474 = vld [vmem:[%s166 + $0x290] sm:$0xff]
  %v475 = vld [vmem:[%s166 + $0x2a0] sm:$0xff]
  %v476 = vld [vmem:[%s166 + $0x2a8] sm:$0xff]
  %v477 = vld [vmem:[%s166 + $0x2b8] sm:$0xff]
  %v478 = vld [vmem:[%s166 + $0x2c0] sm:$0xff]
  %v479 = vld [vmem:[%s166 + $0x2d0] sm:$0xff]
  %v480 = vld [vmem:[%s166 + $0x2d8] sm:$0xff]
  %v481 = vld [vmem:[%s166 + $0x2e8] sm:$0xff]
  %v482 = vld [vmem:[%s166 + $0x2f0] sm:$0xff]
  %v483 = vld [vmem:[%s166 + $0x300] sm:$0xff]
  %v484 = vld [vmem:[%s166 + $0x308] sm:$0xff]
  %v485 = vld [vmem:[%s166 + $0x318] sm:$0xff]
  %v486 = vld [vmem:[%s166 + $0x320] sm:$0xff]
  %v487 = vld [vmem:[%s166 + $0x1] sm:$0xff]
  %v488 = vld [vmem:[%s166 + $0x9] sm:$0xff]
  %v489 = vld [vmem:[%s166 + $0x19] sm:$0xff]
  %v490 = vld [vmem:[%s166 + $0x21] sm:$0xff]
  %v491 = vld [vmem:[%s166 + $0x31] sm:$0xff]
  %v492 = vld [vmem:[%s166 + $0x39] sm:$0xff]
  %v493 = vld [vmem:[%s166 + $0x49] sm:$0xff]
  %v494 = vld [vmem:[%s166 + $0x51] sm:$0xff]
  %v495 = vld [vmem:[%s166 + $0x61] sm:$0xff]
  %v496 = vld [vmem:[%s166 + $0x69] sm:$0xff]
  %v497 = vld [vmem:[%s166 + $0x79] sm:$0xff]
  %v498 = vld [vmem:[%s166 + $0x81] sm:$0xff]
  %v499 = vld [vmem:[%s166 + $0x91] sm:$0xff]
  %v500 = vld [vmem:[%s166 + $0x99] sm:$0xff]
  %v501 = vld [vmem:[%s166 + $0xa9] sm:$0xff]
  %v502 = vld [vmem:[%s166 + $0xb1] sm:$0xff]
  %v503 = vld [vmem:[%s166 + $0xc1] sm:$0xff]
  %v504 = vld [vmem:[%s166 + $0xc9] sm:$0xff]
  %v505 = vld [vmem:[%s166 + $0xd9] sm:$0xff]
  %v506 = vld [vmem:[%s166 + $0xe1] sm:$0xff]
  %v507 = vld [vmem:[%s166 + $0xf1] sm:$0xff]
  %v508 = vld [vmem:[%s166 + $0xf9] sm:$0xff]
  %v509 = vld [vmem:[%s166 + $0x109] sm:$0xff]
  %v510 = vld [vmem:[%s166 + $0x111] sm:$0xff]
  %v511 = vld [vmem:[%s166 + $0x121] sm:$0xff]
  %v512 = vld [vmem:[%s166 + $0x129] sm:$0xff]
  %v513 = vld [vmem:[%s166 + $0x139] sm:$0xff]
  %v514 = vld [vmem:[%s166 + $0x141] sm:$0xff]
  %v515 = vld [vmem:[%s166 + $0x151] sm:$0xff]
  %v516 = vld [vmem:[%s166 + $0x159] sm:$0xff]
  %v517 = vld [vmem:[%s166 + $0x169] sm:$0xff]
  %v518 = vld [vmem:[%s166 + $0x171] sm:$0xff]
  %v519 = vld [vmem:[%s166 + $0x1b1] sm:$0xff]
  %v520 = vld [vmem:[%s166 + $0x1b9] sm:$0xff]
  %v521 = vld [vmem:[%s166 + $0x1c9] sm:$0xff]
  %v522 = vld [vmem:[%s166 + $0x1d1] sm:$0xff]
  %v523 = vld [vmem:[%s166 + $0x1e1] sm:$0xff]
  %v524 = vld [vmem:[%s166 + $0x1e9] sm:$0xff]
  %v525 = vld [vmem:[%s166 + $0x1f9] sm:$0xff]
  %v526 = vld [vmem:[%s166 + $0x201] sm:$0xff]
  %v527 = vld [vmem:[%s166 + $0x211] sm:$0xff]
  %v528 = vld [vmem:[%s166 + $0x219] sm:$0xff]
  %v529 = vld [vmem:[%s166 + $0x229] sm:$0xff]
  %v530 = vld [vmem:[%s166 + $0x231] sm:$0xff]
  %v531 = vld [vmem:[%s166 + $0x241] sm:$0xff]
  %v532 = vld [vmem:[%s166 + $0x249] sm:$0xff]
  %v533 = vld [vmem:[%s166 + $0x259] sm:$0xff]
  %v534 = vld [vmem:[%s166 + $0x261] sm:$0xff]
  %v535 = vld [vmem:[%s166 + $0x271] sm:$0xff]
  %v536 = vld [vmem:[%s166 + $0x279] sm:$0xff]
  %v537 = vld [vmem:[%s166 + $0x289] sm:$0xff]
  %v538 = vld [vmem:[%s166 + $0x291] sm:$0xff]
  %v539 = vld [vmem:[%s166 + $0x2a1] sm:$0xff]
  %v540 = vld [vmem:[%s166 + $0x2a9] sm:$0xff]
  %v541 = vld [vmem:[%s166 + $0x2b9] sm:$0xff]
  %v542 = vld [vmem:[%s166 + $0x2c1] sm:$0xff]
  %v543 = vld [vmem:[%s166 + $0x2d1] sm:$0xff]
  %v544 = vld [vmem:[%s166 + $0x2d9] sm:$0xff]
  %v545 = vld [vmem:[%s166 + $0x2e9] sm:$0xff]
  %v546 = vld [vmem:[%s166 + $0x2f1] sm:$0xff]
  %v547 = vld [vmem:[%s166 + $0x301] sm:$0xff]
  %v548 = vld [vmem:[%s166 + $0x309] sm:$0xff]
  %v549 = vld [vmem:[%s166 + $0x319] sm:$0xff]
  %v550 = vld [vmem:[%s166 + $0x321] sm:$0xff]
  %v551 = vld [vmem:[%s166 + $0x2] sm:$0xff]
  %v552 = vld [vmem:[%s166 + $0xa] sm:$0xff]
  %v553 = vld [vmem:[%s166 + $0x1a] sm:$0xff]
  %v554 = vld [vmem:[%s166 + $0x22] sm:$0xff]
  %v555 = vld [vmem:[%s166 + $0x32] sm:$0xff]
  %v556 = vld [vmem:[%s166 + $0x3a] sm:$0xff]
  %v557 = vld [vmem:[%s166 + $0x4a] sm:$0xff]
  %v558 = vld [vmem:[%s166 + $0x52] sm:$0xff]
  %v559 = vld [vmem:[%s166 + $0x62] sm:$0xff]
  %v560 = vld [vmem:[%s166 + $0x6a] sm:$0xff]
  %v561 = vld [vmem:[%s166 + $0x7a] sm:$0xff]
  %v562 = vld [vmem:[%s166 + $0x82] sm:$0xff]
  %v563 = vld [vmem:[%s166 + $0x92] sm:$0xff]
  %v564 = vld [vmem:[%s166 + $0x9a] sm:$0xff]
  %v565 = vld [vmem:[%s166 + $0xaa] sm:$0xff]
  %v566 = vld [vmem:[%s166 + $0xb2] sm:$0xff]
  %v567 = vld [vmem:[%s166 + $0xc2] sm:$0xff]
  %v568 = vld [vmem:[%s166 + $0xca] sm:$0xff]
  %v569 = vld [vmem:[%s166 + $0xda] sm:$0xff]
  %v570 = vld [vmem:[%s166 + $0xe2] sm:$0xff]
  %v571 = vld [vmem:[%s166 + $0xf2] sm:$0xff]
  %v572 = vld [vmem:[%s166 + $0xfa] sm:$0xff]
  %v573 = vld [vmem:[%s166 + $0x10a] sm:$0xff]
  %v574 = vld [vmem:[%s166 + $0x112] sm:$0xff]
  %v575 = vld [vmem:[%s166 + $0x122] sm:$0xff]
  %v576 = vld [vmem:[%s166 + $0x12a] sm:$0xff]
  %v577 = vld [vmem:[%s166 + $0x13a] sm:$0xff]
  %v578 = vld [vmem:[%s166 + $0x142] sm:$0xff]
  %v579 = vld [vmem:[%s166 + $0x152] sm:$0xff]
  %v580 = vld [vmem:[%s166 + $0x15a] sm:$0xff]
  %v581 = vld [vmem:[%s166 + $0x16a] sm:$0xff]
  %v582 = vld [vmem:[%s166 + $0x172] sm:$0xff]
  %v583 = vld [vmem:[%s166 + $0x1b2] sm:$0xff]
  %v584 = vld [vmem:[%s166 + $0x1ba] sm:$0xff]
  %v585 = vld [vmem:[%s166 + $0x1ca] sm:$0xff]
  %v586 = vld [vmem:[%s166 + $0x1d2] sm:$0xff]
  %v587 = vld [vmem:[%s166 + $0x1e2] sm:$0xff]
  %v588 = vld [vmem:[%s166 + $0x1ea] sm:$0xff]
  %v589 = vld [vmem:[%s166 + $0x1fa] sm:$0xff]
  %v590 = vld [vmem:[%s166 + $0x202] sm:$0xff]
  %v591 = vld [vmem:[%s166 + $0x212] sm:$0xff]
  %v592 = vld [vmem:[%s166 + $0x21a] sm:$0xff]
  %v593 = vld [vmem:[%s166 + $0x22a] sm:$0xff]
  %v594 = vld [vmem:[%s166 + $0x232] sm:$0xff]
  %v595 = vld [vmem:[%s166 + $0x242] sm:$0xff]
  %v596 = vld [vmem:[%s166 + $0x24a] sm:$0xff]
  %v597 = vld [vmem:[%s166 + $0x25a] sm:$0xff]
  %v598 = vld [vmem:[%s166 + $0x262] sm:$0xff]
  %v599 = vld [vmem:[%s166 + $0x272] sm:$0xff]
  %v600 = vld [vmem:[%s166 + $0x27a] sm:$0xff]
  %v601 = vld [vmem:[%s166 + $0x28a] sm:$0xff]
  %v602 = vld [vmem:[%s166 + $0x292] sm:$0xff]
  %v603 = vld [vmem:[%s166 + $0x2a2] sm:$0xff]
  %v604 = vld [vmem:[%s166 + $0x2aa] sm:$0xff]
  %v605 = vld [vmem:[%s166 + $0x2ba] sm:$0xff]
  %v606 = vld [vmem:[%s166 + $0x2c2] sm:$0xff]
  %v607 = vld [vmem:[%s166 + $0x2d2] sm:$0xff]
  %v608 = vld [vmem:[%s166 + $0x2da] sm:$0xff]
  %v609 = vld [vmem:[%s166 + $0x2ea] sm:$0xff]
  %v610 = vld [vmem:[%s166 + $0x2f2] sm:$0xff]
  %v611 = vld [vmem:[%s166 + $0x302] sm:$0xff]
  %v612 = vld [vmem:[%s166 + $0x30a] sm:$0xff]
  %v613 = vld [vmem:[%s166 + $0x31a] sm:$0xff]
  %v614 = vld [vmem:[%s166 + $0x322] sm:$0xff]
  %s615 = scalar_lea.vmem [#allocation2], 48
  %v616 = vld [vmem:[%s615] sm:$0xff]
  %v617 = vld [vmem:[%s615 + $0x8] sm:$0xff]
  %v618 = vld [vmem:[%s615 + $0x18] sm:$0xff]
  %v619 = vld [vmem:[%s615 + $0x20] sm:$0xff]
  %v620 = vld [vmem:[%s615 + $0x30] sm:$0xff]
  %v621 = vld [vmem:[%s615 + $0x38] sm:$0xff]
  %v622 = vld [vmem:[%s615 + $0x48] sm:$0xff]
  %v623 = vld [vmem:[%s615 + $0x50] sm:$0xff]
  %v624 = vld [vmem:[%s615 + $0x60] sm:$0xff]
  %v625 = vld [vmem:[%s615 + $0x68] sm:$0xff]
  %v626 = vld [vmem:[%s615 + $0x78] sm:$0xff]
  %v627 = vld [vmem:[%s615 + $0x80] sm:$0xff]
  %v628 = vld [vmem:[%s615 + $0x90] sm:$0xff]
  %v629 = vld [vmem:[%s615 + $0x98] sm:$0xff]
  %v630 = vld [vmem:[%s615 + $0xa8] sm:$0xff]
  %v631 = vld [vmem:[%s615 + $0xb0] sm:$0xff]
  %v632 = vld [vmem:[%s615 + $0xc0] sm:$0xff]
  %v633 = vld [vmem:[%s615 + $0xc8] sm:$0xff]
  %v634 = vld [vmem:[%s615 + $0xd8] sm:$0xff]
  %v635 = vld [vmem:[%s615 + $0xe0] sm:$0xff]
  %v636 = vld [vmem:[%s615 + $0xf0] sm:$0xff]
  %v637 = vld [vmem:[%s615 + $0xf8] sm:$0xff]
  %v638 = vld [vmem:[%s615 + $0x108] sm:$0xff]
  %v639 = vld [vmem:[%s615 + $0x110] sm:$0xff]
  %v640 = vld [vmem:[%s615 + $0x120] sm:$0xff]
  %v641 = vld [vmem:[%s615 + $0x128] sm:$0xff]
  %v642 = vld [vmem:[%s615 + $0x138] sm:$0xff]
  %v643 = vld [vmem:[%s615 + $0x140] sm:$0xff]
  %v644 = vld [vmem:[%s615 + $0x150] sm:$0xff]
  %v645 = vld [vmem:[%s615 + $0x158] sm:$0xff]
  %v646 = vld [vmem:[%s615 + $0x168] sm:$0xff]
  %v647 = vld [vmem:[%s615 + $0x170] sm:$0xff]
  %v648 = vld [vmem:[%s615 + $0x1b0] sm:$0xff]
  %v649 = vld [vmem:[%s615 + $0x1b8] sm:$0xff]
  %v650 = vld [vmem:[%s615 + $0x1c8] sm:$0xff]
  %v651 = vld [vmem:[%s615 + $0x1d0] sm:$0xff]
  %v652 = vld [vmem:[%s615 + $0x1e0] sm:$0xff]
  %v653 = vld [vmem:[%s615 + $0x1e8] sm:$0xff]
  %v654 = vld [vmem:[%s615 + $0x1f8] sm:$0xff]
  %v655 = vld [vmem:[%s615 + $0x200] sm:$0xff]
  %v656 = vld [vmem:[%s615 + $0x210] sm:$0xff]
  %v657 = vld [vmem:[%s615 + $0x218] sm:$0xff]
  %v658 = vld [vmem:[%s615 + $0x228] sm:$0xff]
  %v659 = vld [vmem:[%s615 + $0x230] sm:$0xff]
  %v660 = vld [vmem:[%s615 + $0x240] sm:$0xff]
  %v661 = vld [vmem:[%s615 + $0x248] sm:$0xff]
  %v662 = vld [vmem:[%s615 + $0x258] sm:$0xff]
  %v663 = vld [vmem:[%s615 + $0x260] sm:$0xff]
  %v664 = vld [vmem:[%s615 + $0x270] sm:$0xff]
  %v665 = vld [vmem:[%s615 + $0x278] sm:$0xff]
  %v666 = vld [vmem:[%s615 + $0x288] sm:$0xff]
  %v667 = vld [vmem:[%s615 + $0x290] sm:$0xff]
  %v668 = vld [vmem:[%s615 + $0x2a0] sm:$0xff]
  %v669 = vld [vmem:[%s615 + $0x2a8] sm:$0xff]
  %v670 = vld [vmem:[%s615 + $0x2b8] sm:$0xff]
  %v671 = vld [vmem:[%s615 + $0x2c0] sm:$0xff]
  %v672 = vld [vmem:[%s615 + $0x2d0] sm:$0xff]
  %v673 = vld [vmem:[%s615 + $0x2d8] sm:$0xff]
  %v674 = vld [vmem:[%s615 + $0x2e8] sm:$0xff]
  %v675 = vld [vmem:[%s615 + $0x2f0] sm:$0xff]
  %v676 = vld [vmem:[%s615 + $0x300] sm:$0xff]
  %v677 = vld [vmem:[%s615 + $0x308] sm:$0xff]
  %v678 = vld [vmem:[%s615 + $0x318] sm:$0xff]
  %v679 = vld [vmem:[%s615 + $0x320] sm:$0xff]
  %v680 = vld [vmem:[%s615 + $0x1] sm:$0xff]
  %v681 = vld [vmem:[%s615 + $0x9] sm:$0xff]
  %v682 = vld [vmem:[%s615 + $0x19] sm:$0xff]
  %v683 = vld [vmem:[%s615 + $0x21] sm:$0xff]
  %v684 = vld [vmem:[%s615 + $0x31] sm:$0xff]
  %v685 = vld [vmem:[%s615 + $0x39] sm:$0xff]
  %v686 = vld [vmem:[%s615 + $0x49] sm:$0xff]
  %v687 = vld [vmem:[%s615 + $0x51] sm:$0xff]
  %v688 = vld [vmem:[%s615 + $0x61] sm:$0xff]
  %v689 = vld [vmem:[%s615 + $0x69] sm:$0xff]
  %v690 = vld [vmem:[%s615 + $0x79] sm:$0xff]
  %v691 = vld [vmem:[%s615 + $0x81] sm:$0xff]
  %v692 = vld [vmem:[%s615 + $0x91] sm:$0xff]
  %v693 = vld [vmem:[%s615 + $0x99] sm:$0xff]
  %v694 = vld [vmem:[%s615 + $0xa9] sm:$0xff]
  %v695 = vld [vmem:[%s615 + $0xb1] sm:$0xff]
  %v696 = vld [vmem:[%s615 + $0xc1] sm:$0xff]
  %v697 = vld [vmem:[%s615 + $0xc9] sm:$0xff]
  %v698 = vld [vmem:[%s615 + $0xd9] sm:$0xff]
  %v699 = vld [vmem:[%s615 + $0xe1] sm:$0xff]
  %v700 = vld [vmem:[%s615 + $0xf1] sm:$0xff]
  %v701 = vld [vmem:[%s615 + $0xf9] sm:$0xff]
  %v702 = vld [vmem:[%s615 + $0x109] sm:$0xff]
  %v703 = vld [vmem:[%s615 + $0x111] sm:$0xff]
  %v704 = vld [vmem:[%s615 + $0x121] sm:$0xff]
  %v705 = vld [vmem:[%s615 + $0x129] sm:$0xff]
  %v706 = vld [vmem:[%s615 + $0x139] sm:$0xff]
  %v707 = vld [vmem:[%s615 + $0x141] sm:$0xff]
  %v708 = vld [vmem:[%s615 + $0x151] sm:$0xff]
  %v709 = vld [vmem:[%s615 + $0x159] sm:$0xff]
  %v710 = vld [vmem:[%s615 + $0x169] sm:$0xff]
  %v711 = vld [vmem:[%s615 + $0x171] sm:$0xff]
  %v712 = vld [vmem:[%s615 + $0x1b1] sm:$0xff]
  %v713 = vld [vmem:[%s615 + $0x1b9] sm:$0xff]
  %v714 = vld [vmem:[%s615 + $0x1c9] sm:$0xff]
  %v715 = vld [vmem:[%s615 + $0x1d1] sm:$0xff]
  %v716 = vld [vmem:[%s615 + $0x1e1] sm:$0xff]
  %v717 = vld [vmem:[%s615 + $0x1e9] sm:$0xff]
  %v718 = vld [vmem:[%s615 + $0x1f9] sm:$0xff]
  %v719 = vld [vmem:[%s615 + $0x201] sm:$0xff]
  %v720 = vld [vmem:[%s615 + $0x211] sm:$0xff]
  %v721 = vld [vmem:[%s615 + $0x219] sm:$0xff]
  %v722 = vld [vmem:[%s615 + $0x229] sm:$0xff]
  %v723 = vld [vmem:[%s615 + $0x231] sm:$0xff]
  %v724 = vld [vmem:[%s615 + $0x241] sm:$0xff]
  %v725 = vld [vmem:[%s615 + $0x249] sm:$0xff]
  %v726 = vld [vmem:[%s615 + $0x259] sm:$0xff]
  %v727 = vld [vmem:[%s615 + $0x261] sm:$0xff]
  %v728 = vld [vmem:[%s615 + $0x271] sm:$0xff]
  %v729 = vld [vmem:[%s615 + $0x279] sm:$0xff]
  %v730 = vld [vmem:[%s615 + $0x289] sm:$0xff]
  %v731 = vld [vmem:[%s615 + $0x291] sm:$0xff]
  %v732 = vld [vmem:[%s615 + $0x2a1] sm:$0xff]
  %v733 = vld [vmem:[%s615 + $0x2a9] sm:$0xff]
  %v734 = vld [vmem:[%s615 + $0x2b9] sm:$0xff]
  %v735 = vld [vmem:[%s615 + $0x2c1] sm:$0xff]
  %v736 = vld [vmem:[%s615 + $0x2d1] sm:$0xff]
  %v737 = vld [vmem:[%s615 + $0x2d9] sm:$0xff]
  %v738 = vld [vmem:[%s615 + $0x2e9] sm:$0xff]
  %v739 = vld [vmem:[%s615 + $0x2f1] sm:$0xff]
  %v740 = vld [vmem:[%s615 + $0x301] sm:$0xff]
  %v741 = vld [vmem:[%s615 + $0x309] sm:$0xff]
  %v742 = vld [vmem:[%s615 + $0x319] sm:$0xff]
  %v743 = vld [vmem:[%s615 + $0x321] sm:$0xff]
  %v744 = vld [vmem:[%s615 + $0x2] sm:$0xff]
  %v745 = vld [vmem:[%s615 + $0xa] sm:$0xff]
  %v746 = vld [vmem:[%s615 + $0x1a] sm:$0xff]
  %v747 = vld [vmem:[%s615 + $0x22] sm:$0xff]
  %v748 = vld [vmem:[%s615 + $0x32] sm:$0xff]
  %v749 = vld [vmem:[%s615 + $0x3a] sm:$0xff]
  %v750 = vld [vmem:[%s615 + $0x4a] sm:$0xff]
  %v751 = vld [vmem:[%s615 + $0x52] sm:$0xff]
  %v752 = vld [vmem:[%s615 + $0x62] sm:$0xff]
  %v753 = vld [vmem:[%s615 + $0x6a] sm:$0xff]
  %v754 = vld [vmem:[%s615 + $0x7a] sm:$0xff]
  %v755 = vld [vmem:[%s615 + $0x82] sm:$0xff]
  %v756 = vld [vmem:[%s615 + $0x92] sm:$0xff]
  %v757 = vld [vmem:[%s615 + $0x9a] sm:$0xff]
  %v758 = vld [vmem:[%s615 + $0xaa] sm:$0xff]
  %v759 = vld [vmem:[%s615 + $0xb2] sm:$0xff]
  %v760 = vld [vmem:[%s615 + $0xc2] sm:$0xff]
  %v761 = vld [vmem:[%s615 + $0xca] sm:$0xff]
  %v762 = vld [vmem:[%s615 + $0xda] sm:$0xff]
  %v763 = vld [vmem:[%s615 + $0xe2] sm:$0xff]
  %v764 = vld [vmem:[%s615 + $0xf2] sm:$0xff]
  %v765 = vld [vmem:[%s615 + $0xfa] sm:$0xff]
  %v766 = vld [vmem:[%s615 + $0x10a] sm:$0xff]
  %v767 = vld [vmem:[%s615 + $0x112] sm:$0xff]
  %v768 = vld [vmem:[%s615 + $0x122] sm:$0xff]
  %v769 = vld [vmem:[%s615 + $0x12a] sm:$0xff]
  %v770 = vld [vmem:[%s615 + $0x13a] sm:$0xff]
  %v771 = vld [vmem:[%s615 + $0x142] sm:$0xff]
  %v772 = vld [vmem:[%s615 + $0x152] sm:$0xff]
  %v773 = vld [vmem:[%s615 + $0x15a] sm:$0xff]
  %v774 = vld [vmem:[%s615 + $0x16a] sm:$0xff]
  %v775 = vld [vmem:[%s615 + $0x172] sm:$0xff]
  %v776 = vld [vmem:[%s615 + $0x1b2] sm:$0xff]
  %v777 = vld [vmem:[%s615 + $0x1ba] sm:$0xff]
  %v778 = vld [vmem:[%s615 + $0x1ca] sm:$0xff]
  %v779 = vld [vmem:[%s615 + $0x1d2] sm:$0xff]
  %v780 = vld [vmem:[%s615 + $0x1e2] sm:$0xff]
  %v781 = vld [vmem:[%s615 + $0x1ea] sm:$0xff]
  %v782 = vld [vmem:[%s615 + $0x1fa] sm:$0xff]
  %v783 = vld [vmem:[%s615 + $0x202] sm:$0xff]
  %v784 = vld [vmem:[%s615 + $0x212] sm:$0xff]
  %v785 = vld [vmem:[%s615 + $0x21a] sm:$0xff]
  %v786 = vld [vmem:[%s615 + $0x22a] sm:$0xff]
  %v787 = vld [vmem:[%s615 + $0x232] sm:$0xff]
  %v788 = vld [vmem:[%s615 + $0x242] sm:$0xff]
  %v789 = vld [vmem:[%s615 + $0x24a] sm:$0xff]
  %v790 = vld [vmem:[%s615 + $0x25a] sm:$0xff]
  %v791 = vld [vmem:[%s615 + $0x262] sm:$0xff]
  %v792 = vld [vmem:[%s615 + $0x272] sm:$0xff]
  %v793 = vld [vmem:[%s615 + $0x27a] sm:$0xff]
  %v794 = vld [vmem:[%s615 + $0x28a] sm:$0xff]
  %v795 = vld [vmem:[%s615 + $0x292] sm:$0xff]
  %v796 = vld [vmem:[%s615 + $0x2a2] sm:$0xff]
  %v797 = vld [vmem:[%s615 + $0x2aa] sm:$0xff]
  %v798 = vld [vmem:[%s615 + $0x2ba] sm:$0xff]
  %v799 = vld [vmem:[%s615 + $0x2c2] sm:$0xff]
  %v800 = vld [vmem:[%s615 + $0x2d2] sm:$0xff]
  %v801 = vld [vmem:[%s615 + $0x2da] sm:$0xff]
  %v802 = vld [vmem:[%s615 + $0x2ea] sm:$0xff]
  %v803 = vld [vmem:[%s615 + $0x2f2] sm:$0xff]
  %v804 = vld [vmem:[%s615 + $0x302] sm:$0xff]
  %v805 = vld [vmem:[%s615 + $0x30a] sm:$0xff]
  %v806 = vld [vmem:[%s615 + $0x31a] sm:$0xff]
  %v807 = vld [vmem:[%s615 + $0x322] sm:$0xff]
  %872 = vrot.lane.b32.xlu0 %v295, 4
  %v873 = vpop.permute.xlu0 %872
  %874 = vrot.lane.b32.xlu0 %v296, 4
  %v875 = vpop.permute.xlu0 %874
  %876 = vrot.lane.b32.xlu0 %v297, 4
  %v877 = vpop.permute.xlu0 %876
  %878 = vrot.lane.b32.xlu0 %v298, 4
  %v879 = vpop.permute.xlu0 %878
  %880 = vrot.lane.b32.xlu0 %v299, 4
  %v881 = vpop.permute.xlu0 %880
  %882 = vrot.lane.b32.xlu0 %v300, 4
  %v883 = vpop.permute.xlu0 %882
  %884 = vrot.lane.b32.xlu0 %v301, 4
  %v885 = vpop.permute.xlu0 %884
  %886 = vrot.lane.b32.xlu0 %v302, 4
  %v887 = vpop.permute.xlu0 %886
  %888 = vrot.lane.b32.xlu0 %v303, 4
  %v889 = vpop.permute.xlu0 %888
  %890 = vrot.lane.b32.xlu0 %v304, 4
  %v891 = vpop.permute.xlu0 %890
  %892 = vrot.lane.b32.xlu0 %v305, 4
  %v893 = vpop.permute.xlu0 %892
  %894 = vrot.lane.b32.xlu0 %v306, 4
  %v895 = vpop.permute.xlu0 %894
  %896 = vrot.lane.b32.xlu0 %v307, 4
  %v897 = vpop.permute.xlu0 %896
  %898 = vrot.lane.b32.xlu0 %v308, 4
  %v899 = vpop.permute.xlu0 %898
  %900 = vrot.lane.b32.xlu0 %v309, 4
  %v901 = vpop.permute.xlu0 %900
  %902 = vrot.lane.b32.xlu0 %v310, 4
  %v903 = vpop.permute.xlu0 %902
  %904 = vrot.lane.b32.xlu0 %v311, 4
  %v905 = vpop.permute.xlu0 %904
  %906 = vrot.lane.b32.xlu0 %v312, 4
  %v907 = vpop.permute.xlu0 %906
  %908 = vrot.lane.b32.xlu0 %v313, 4
  %v909 = vpop.permute.xlu0 %908
  %910 = vrot.lane.b32.xlu0 %v314, 4
  %v911 = vpop.permute.xlu0 %910
  %912 = vrot.lane.b32.xlu0 %v315, 4
  %v913 = vpop.permute.xlu0 %912
  %914 = vrot.lane.b32.xlu0 %v316, 4
  %v915 = vpop.permute.xlu0 %914
  %916 = vrot.lane.b32.xlu0 %v317, 4
  %v917 = vpop.permute.xlu0 %916
  %918 = vrot.lane.b32.xlu0 %v318, 4
  %v919 = vpop.permute.xlu0 %918
  %920 = vrot.lane.b32.xlu0 %v319, 4
  %v921 = vpop.permute.xlu0 %920
  %922 = vrot.lane.b32.xlu0 %v320, 4
  %v923 = vpop.permute.xlu0 %922
  %924 = vrot.lane.b32.xlu0 %v321, 4
  %v925 = vpop.permute.xlu0 %924
  %926 = vrot.lane.b32.xlu0 %v322, 4
  %v927 = vpop.permute.xlu0 %926
  %928 = vrot.lane.b32.xlu0 %v323, 4
  %v929 = vpop.permute.xlu0 %928
  %930 = vrot.lane.b32.xlu0 %v324, 4
  %v931 = vpop.permute.xlu0 %930
  %932 = vrot.lane.b32.xlu0 %v325, 4
  %v933 = vpop.permute.xlu0 %932
  %934 = vrot.lane.b32.xlu0 %v326, 4
  %v935 = vpop.permute.xlu0 %934
  %936 = vrot.lane.b32.xlu0 %v327, 4
  %v937 = vpop.permute.xlu0 %936
  %938 = vrot.lane.b32.xlu0 %v328, 4
  %v939 = vpop.permute.xlu0 %938
  %940 = vrot.lane.b32.xlu0 %v329, 4
  %v941 = vpop.permute.xlu0 %940
  %942 = vrot.lane.b32.xlu0 %v330, 4
  %v943 = vpop.permute.xlu0 %942
  %944 = vrot.lane.b32.xlu0 %v331, 4
  %v945 = vpop.permute.xlu0 %944
  %946 = vrot.lane.b32.xlu0 %v332, 4
  %v947 = vpop.permute.xlu0 %946
  %948 = vrot.lane.b32.xlu0 %v333, 4
  %v949 = vpop.permute.xlu0 %948
  %950 = vrot.lane.b32.xlu0 %v334, 4
  %v951 = vpop.permute.xlu0 %950
  %952 = vrot.lane.b32.xlu0 %v335, 4
  %v953 = vpop.permute.xlu0 %952
  %954 = vrot.lane.b32.xlu0 %v336, 4
  %v955 = vpop.permute.xlu0 %954
  %956 = vrot.lane.b32.xlu0 %v337, 4
  %v957 = vpop.permute.xlu0 %956
  %958 = vrot.lane.b32.xlu0 %v338, 4
  %v959 = vpop.permute.xlu0 %958
  %960 = vrot.lane.b32.xlu0 %v339, 4
  %v961 = vpop.permute.xlu0 %960
  %962 = vrot.lane.b32.xlu0 %v340, 4
  %v963 = vpop.permute.xlu0 %962
  %964 = vrot.lane.b32.xlu0 %v341, 4
  %v965 = vpop.permute.xlu0 %964
  %966 = vrot.lane.b32.xlu0 %v342, 4
  %v967 = vpop.permute.xlu0 %966
  %968 = vrot.lane.b32.xlu0 %v343, 4
  %v969 = vpop.permute.xlu0 %968
  %970 = vrot.lane.b32.xlu0 %v344, 4
  %v971 = vpop.permute.xlu0 %970
  %972 = vrot.lane.b32.xlu0 %v345, 4
  %v973 = vpop.permute.xlu0 %972
  %974 = vrot.lane.b32.xlu0 %v346, 4
  %v975 = vpop.permute.xlu0 %974
  %976 = vrot.lane.b32.xlu0 %v347, 4
  %v977 = vpop.permute.xlu0 %976
  %978 = vrot.lane.b32.xlu0 %v348, 4
  %v979 = vpop.permute.xlu0 %978
  %980 = vrot.lane.b32.xlu0 %v349, 4
  %v981 = vpop.permute.xlu0 %980
  %982 = vrot.lane.b32.xlu0 %v350, 4
  %v983 = vpop.permute.xlu0 %982
  %984 = vrot.lane.b32.xlu0 %v351, 4
  %v985 = vpop.permute.xlu0 %984
  %986 = vrot.lane.b32.xlu0 %v352, 4
  %v987 = vpop.permute.xlu0 %986
  %988 = vrot.lane.b32.xlu0 %v353, 4
  %v989 = vpop.permute.xlu0 %988
  %990 = vrot.lane.b32.xlu0 %v354, 4
  %v991 = vpop.permute.xlu0 %990
  %992 = vrot.lane.b32.xlu0 %v355, 4
  %v993 = vpop.permute.xlu0 %992
  %994 = vrot.lane.b32.xlu0 %v356, 4
  %v995 = vpop.permute.xlu0 %994
  %996 = vrot.lane.b32.xlu0 %v357, 4
  %v997 = vpop.permute.xlu0 %996
  %998 = vrot.lane.b32.xlu0 %v358, 4
  %v999 = vpop.permute.xlu0 %998
  %1128 = vrot.lane.b32.xlu0 %v359, 8
  %v1129 = vpop.permute.xlu0 %1128
  %1130 = vrot.lane.b32.xlu0 %v360, 8
  %v1131 = vpop.permute.xlu0 %1130
  %1132 = vrot.lane.b32.xlu0 %v361, 8
  %v1133 = vpop.permute.xlu0 %1132
  %1134 = vrot.lane.b32.xlu0 %v362, 8
  %v1135 = vpop.permute.xlu0 %1134
  %1136 = vrot.lane.b32.xlu0 %v363, 8
  %v1137 = vpop.permute.xlu0 %1136
  %1138 = vrot.lane.b32.xlu0 %v364, 8
  %v1139 = vpop.permute.xlu0 %1138
  %1140 = vrot.lane.b32.xlu0 %v365, 8
  %v1141 = vpop.permute.xlu0 %1140
  %1142 = vrot.lane.b32.xlu0 %v366, 8
  %v1143 = vpop.permute.xlu0 %1142
  %1144 = vrot.lane.b32.xlu0 %v367, 8
  %v1145 = vpop.permute.xlu0 %1144
  %1146 = vrot.lane.b32.xlu0 %v368, 8
  %v1147 = vpop.permute.xlu0 %1146
  %1148 = vrot.lane.b32.xlu0 %v369, 8
  %v1149 = vpop.permute.xlu0 %1148
  %1150 = vrot.lane.b32.xlu0 %v370, 8
  %v1151 = vpop.permute.xlu0 %1150
  %1152 = vrot.lane.b32.xlu0 %v371, 8
  %v1153 = vpop.permute.xlu0 %1152
  %1154 = vrot.lane.b32.xlu0 %v372, 8
  %v1155 = vpop.permute.xlu0 %1154
  %1156 = vrot.lane.b32.xlu0 %v373, 8
  %v1157 = vpop.permute.xlu0 %1156
  %1158 = vrot.lane.b32.xlu0 %v374, 8
  %v1159 = vpop.permute.xlu0 %1158
  %1160 = vrot.lane.b32.xlu0 %v375, 8
  %v1161 = vpop.permute.xlu0 %1160
  %1162 = vrot.lane.b32.xlu0 %v376, 8
  %v1163 = vpop.permute.xlu0 %1162
  %1164 = vrot.lane.b32.xlu0 %v377, 8
  %v1165 = vpop.permute.xlu0 %1164
  %1166 = vrot.lane.b32.xlu0 %v378, 8
  %v1167 = vpop.permute.xlu0 %1166
  %1168 = vrot.lane.b32.xlu0 %v379, 8
  %v1169 = vpop.permute.xlu0 %1168
  %1170 = vrot.lane.b32.xlu0 %v380, 8
  %v1171 = vpop.permute.xlu0 %1170
  %1172 = vrot.lane.b32.xlu0 %v381, 8
  %v1173 = vpop.permute.xlu0 %1172
  %1174 = vrot.lane.b32.xlu0 %v382, 8
  %v1175 = vpop.permute.xlu0 %1174
  %1176 = vrot.lane.b32.xlu0 %v383, 8
  %v1177 = vpop.permute.xlu0 %1176
  %1178 = vrot.lane.b32.xlu0 %v384, 8
  %v1179 = vpop.permute.xlu0 %1178
  %1180 = vrot.lane.b32.xlu0 %v385, 8
  %v1181 = vpop.permute.xlu0 %1180
  %1182 = vrot.lane.b32.xlu0 %v386, 8
  %v1183 = vpop.permute.xlu0 %1182
  %1184 = vrot.lane.b32.xlu0 %v387, 8
  %v1185 = vpop.permute.xlu0 %1184
  %1186 = vrot.lane.b32.xlu0 %v388, 8
  %v1187 = vpop.permute.xlu0 %1186
  %1188 = vrot.lane.b32.xlu0 %v389, 8
  %v1189 = vpop.permute.xlu0 %1188
  %1190 = vrot.lane.b32.xlu0 %v390, 8
  %v1191 = vpop.permute.xlu0 %1190
  %1192 = vrot.lane.b32.xlu0 %v391, 8
  %v1193 = vpop.permute.xlu0 %1192
  %1194 = vrot.lane.b32.xlu0 %v392, 8
  %v1195 = vpop.permute.xlu0 %1194
  %1196 = vrot.lane.b32.xlu0 %v393, 8
  %v1197 = vpop.permute.xlu0 %1196
  %1198 = vrot.lane.b32.xlu0 %v394, 8
  %v1199 = vpop.permute.xlu0 %1198
  %1200 = vrot.lane.b32.xlu0 %v395, 8
  %v1201 = vpop.permute.xlu0 %1200
  %1202 = vrot.lane.b32.xlu0 %v396, 8
  %v1203 = vpop.permute.xlu0 %1202
  %1204 = vrot.lane.b32.xlu0 %v397, 8
  %v1205 = vpop.permute.xlu0 %1204
  %1206 = vrot.lane.b32.xlu0 %v398, 8
  %v1207 = vpop.permute.xlu0 %1206
  %1208 = vrot.lane.b32.xlu0 %v399, 8
  %v1209 = vpop.permute.xlu0 %1208
  %1210 = vrot.lane.b32.xlu0 %v400, 8
  %v1211 = vpop.permute.xlu0 %1210
  %1212 = vrot.lane.b32.xlu0 %v401, 8
  %v1213 = vpop.permute.xlu0 %1212
  %1214 = vrot.lane.b32.xlu0 %v402, 8
  %v1215 = vpop.permute.xlu0 %1214
  %1216 = vrot.lane.b32.xlu0 %v403, 8
  %v1217 = vpop.permute.xlu0 %1216
  %1218 = vrot.lane.b32.xlu0 %v404, 8
  %v1219 = vpop.permute.xlu0 %1218
  %1220 = vrot.lane.b32.xlu0 %v405, 8
  %v1221 = vpop.permute.xlu0 %1220
  %1222 = vrot.lane.b32.xlu0 %v406, 8
  %v1223 = vpop.permute.xlu0 %1222
  %1224 = vrot.lane.b32.xlu0 %v407, 8
  %v1225 = vpop.permute.xlu0 %1224
  %1226 = vrot.lane.b32.xlu0 %v408, 8
  %v1227 = vpop.permute.xlu0 %1226
  %1228 = vrot.lane.b32.xlu0 %v409, 8
  %v1229 = vpop.permute.xlu0 %1228
  %1230 = vrot.lane.b32.xlu0 %v410, 8
  %v1231 = vpop.permute.xlu0 %1230
  %1232 = vrot.lane.b32.xlu0 %v411, 8
  %v1233 = vpop.permute.xlu0 %1232
  %1234 = vrot.lane.b32.xlu0 %v412, 8
  %v1235 = vpop.permute.xlu0 %1234
  %1236 = vrot.lane.b32.xlu0 %v413, 8
  %v1237 = vpop.permute.xlu0 %1236
  %1238 = vrot.lane.b32.xlu0 %v414, 8
  %v1239 = vpop.permute.xlu0 %1238
  %1240 = vrot.lane.b32.xlu0 %v415, 8
  %v1241 = vpop.permute.xlu0 %1240
  %1242 = vrot.lane.b32.xlu0 %v416, 8
  %v1243 = vpop.permute.xlu0 %1242
  %1244 = vrot.lane.b32.xlu0 %v417, 8
  %v1245 = vpop.permute.xlu0 %1244
  %1246 = vrot.lane.b32.xlu0 %v418, 8
  %v1247 = vpop.permute.xlu0 %1246
  %1248 = vrot.lane.b32.xlu0 %v419, 8
  %v1249 = vpop.permute.xlu0 %1248
  %1250 = vrot.lane.b32.xlu0 %v420, 8
  %v1251 = vpop.permute.xlu0 %1250
  %1252 = vrot.lane.b32.xlu0 %v421, 8
  %v1253 = vpop.permute.xlu0 %1252
  %1254 = vrot.lane.b32.xlu0 %v422, 8
  %v1255 = vpop.permute.xlu0 %1254
  %1384 = vrot.lane.b32.xlu0 %v423, 12
  %v1385 = vpop.permute.xlu0 %1384
  %1386 = vrot.lane.b32.xlu0 %v424, 12
  %v1387 = vpop.permute.xlu0 %1386
  %1388 = vrot.lane.b32.xlu0 %v425, 12
  %v1389 = vpop.permute.xlu0 %1388
  %1390 = vrot.lane.b32.xlu0 %v426, 12
  %v1391 = vpop.permute.xlu0 %1390
  %1392 = vrot.lane.b32.xlu0 %v427, 12
  %v1393 = vpop.permute.xlu0 %1392
  %1394 = vrot.lane.b32.xlu0 %v428, 12
  %v1395 = vpop.permute.xlu0 %1394
  %1396 = vrot.lane.b32.xlu0 %v429, 12
  %v1397 = vpop.permute.xlu0 %1396
  %1398 = vrot.lane.b32.xlu0 %v430, 12
  %v1399 = vpop.permute.xlu0 %1398
  %1400 = vrot.lane.b32.xlu0 %v431, 12
  %v1401 = vpop.permute.xlu0 %1400
  %1402 = vrot.lane.b32.xlu0 %v432, 12
  %v1403 = vpop.permute.xlu0 %1402
  %1404 = vrot.lane.b32.xlu0 %v433, 12
  %v1405 = vpop.permute.xlu0 %1404
  %1406 = vrot.lane.b32.xlu0 %v434, 12
  %v1407 = vpop.permute.xlu0 %1406
  %1408 = vrot.lane.b32.xlu0 %v435, 12
  %v1409 = vpop.permute.xlu0 %1408
  %1410 = vrot.lane.b32.xlu0 %v436, 12
  %v1411 = vpop.permute.xlu0 %1410
  %1412 = vrot.lane.b32.xlu0 %v437, 12
  %v1413 = vpop.permute.xlu0 %1412
  %1414 = vrot.lane.b32.xlu0 %v438, 12
  %v1415 = vpop.permute.xlu0 %1414
  %1416 = vrot.lane.b32.xlu0 %v439, 12
  %v1417 = vpop.permute.xlu0 %1416
  %1418 = vrot.lane.b32.xlu0 %v440, 12
  %v1419 = vpop.permute.xlu0 %1418
  %1420 = vrot.lane.b32.xlu0 %v441, 12
  %v1421 = vpop.permute.xlu0 %1420
  %1422 = vrot.lane.b32.xlu0 %v442, 12
  %v1423 = vpop.permute.xlu0 %1422
  %1424 = vrot.lane.b32.xlu0 %v443, 12
  %v1425 = vpop.permute.xlu0 %1424
  %1426 = vrot.lane.b32.xlu0 %v444, 12
  %v1427 = vpop.permute.xlu0 %1426
  %1428 = vrot.lane.b32.xlu0 %v445, 12
  %v1429 = vpop.permute.xlu0 %1428
  %1430 = vrot.lane.b32.xlu0 %v446, 12
  %v1431 = vpop.permute.xlu0 %1430
  %1432 = vrot.lane.b32.xlu0 %v447, 12
  %v1433 = vpop.permute.xlu0 %1432
  %1434 = vrot.lane.b32.xlu0 %v448, 12
  %v1435 = vpop.permute.xlu0 %1434
  %1436 = vrot.lane.b32.xlu0 %v449, 12
  %v1437 = vpop.permute.xlu0 %1436
  %1438 = vrot.lane.b32.xlu0 %v450, 12
  %v1439 = vpop.permute.xlu0 %1438
  %1440 = vrot.lane.b32.xlu0 %v451, 12
  %v1441 = vpop.permute.xlu0 %1440
  %1442 = vrot.lane.b32.xlu0 %v452, 12
  %v1443 = vpop.permute.xlu0 %1442
  %1444 = vrot.lane.b32.xlu0 %v453, 12
  %v1445 = vpop.permute.xlu0 %1444
  %1446 = vrot.lane.b32.xlu0 %v454, 12
  %v1447 = vpop.permute.xlu0 %1446
  %1448 = vrot.lane.b32.xlu0 %v455, 12
  %v1449 = vpop.permute.xlu0 %1448
  %1450 = vrot.lane.b32.xlu0 %v456, 12
  %v1451 = vpop.permute.xlu0 %1450
  %1452 = vrot.lane.b32.xlu0 %v457, 12
  %v1453 = vpop.permute.xlu0 %1452
  %1454 = vrot.lane.b32.xlu0 %v458, 12
  %v1455 = vpop.permute.xlu0 %1454
  %1456 = vrot.lane.b32.xlu0 %v459, 12
  %v1457 = vpop.permute.xlu0 %1456
  %1458 = vrot.lane.b32.xlu0 %v460, 12
  %v1459 = vpop.permute.xlu0 %1458
  %1460 = vrot.lane.b32.xlu0 %v461, 12
  %v1461 = vpop.permute.xlu0 %1460
  %1462 = vrot.lane.b32.xlu0 %v462, 12
  %v1463 = vpop.permute.xlu0 %1462
  %1464 = vrot.lane.b32.xlu0 %v463, 12
  %v1465 = vpop.permute.xlu0 %1464
  %1466 = vrot.lane.b32.xlu0 %v464, 12
  %v1467 = vpop.permute.xlu0 %1466
  %1468 = vrot.lane.b32.xlu0 %v465, 12
  %v1469 = vpop.permute.xlu0 %1468
  %1470 = vrot.lane.b32.xlu0 %v466, 12
  %v1471 = vpop.permute.xlu0 %1470
  %1472 = vrot.lane.b32.xlu0 %v467, 12
  %v1473 = vpop.permute.xlu0 %1472
  %1474 = vrot.lane.b32.xlu0 %v468, 12
  %v1475 = vpop.permute.xlu0 %1474
  %1476 = vrot.lane.b32.xlu0 %v469, 12
  %v1477 = vpop.permute.xlu0 %1476
  %1478 = vrot.lane.b32.xlu0 %v470, 12
  %v1479 = vpop.permute.xlu0 %1478
  %1480 = vrot.lane.b32.xlu0 %v471, 12
  %v1481 = vpop.permute.xlu0 %1480
  %1482 = vrot.lane.b32.xlu0 %v472, 12
  %v1483 = vpop.permute.xlu0 %1482
  %1484 = vrot.lane.b32.xlu0 %v473, 12
  %v1485 = vpop.permute.xlu0 %1484
  %1486 = vrot.lane.b32.xlu0 %v474, 12
  %v1487 = vpop.permute.xlu0 %1486
  %1488 = vrot.lane.b32.xlu0 %v475, 12
  %v1489 = vpop.permute.xlu0 %1488
  %1490 = vrot.lane.b32.xlu0 %v476, 12
  %v1491 = vpop.permute.xlu0 %1490
  %1492 = vrot.lane.b32.xlu0 %v477, 12
  %v1493 = vpop.permute.xlu0 %1492
  %1494 = vrot.lane.b32.xlu0 %v478, 12
  %v1495 = vpop.permute.xlu0 %1494
  %1496 = vrot.lane.b32.xlu0 %v479, 12
  %v1497 = vpop.permute.xlu0 %1496
  %1498 = vrot.lane.b32.xlu0 %v480, 12
  %v1499 = vpop.permute.xlu0 %1498
  %1500 = vrot.lane.b32.xlu0 %v481, 12
  %v1501 = vpop.permute.xlu0 %1500
  %1502 = vrot.lane.b32.xlu0 %v482, 12
  %v1503 = vpop.permute.xlu0 %1502
  %1504 = vrot.lane.b32.xlu0 %v483, 12
  %v1505 = vpop.permute.xlu0 %1504
  %1506 = vrot.lane.b32.xlu0 %v484, 12
  %v1507 = vpop.permute.xlu0 %1506
  %1508 = vrot.lane.b32.xlu0 %v485, 12
  %v1509 = vpop.permute.xlu0 %1508
  %1510 = vrot.lane.b32.xlu0 %v486, 12
  %v1511 = vpop.permute.xlu0 %1510
  %1640 = vrot.lane.b32.xlu0 %v487, 16
  %v1641 = vpop.permute.xlu0 %1640
  %1642 = vrot.lane.b32.xlu0 %v488, 16
  %v1643 = vpop.permute.xlu0 %1642
  %1644 = vrot.lane.b32.xlu0 %v489, 16
  %v1645 = vpop.permute.xlu0 %1644
  %1646 = vrot.lane.b32.xlu0 %v490, 16
  %v1647 = vpop.permute.xlu0 %1646
  %1648 = vrot.lane.b32.xlu0 %v491, 16
  %v1649 = vpop.permute.xlu0 %1648
  %1650 = vrot.lane.b32.xlu0 %v492, 16
  %v1651 = vpop.permute.xlu0 %1650
  %1652 = vrot.lane.b32.xlu0 %v493, 16
  %v1653 = vpop.permute.xlu0 %1652
  %1654 = vrot.lane.b32.xlu0 %v494, 16
  %v1655 = vpop.permute.xlu0 %1654
  %1656 = vrot.lane.b32.xlu0 %v495, 16
  %v1657 = vpop.permute.xlu0 %1656
  %1658 = vrot.lane.b32.xlu0 %v496, 16
  %v1659 = vpop.permute.xlu0 %1658
  %1660 = vrot.lane.b32.xlu0 %v497, 16
  %v1661 = vpop.permute.xlu0 %1660
  %1662 = vrot.lane.b32.xlu0 %v498, 16
  %v1663 = vpop.permute.xlu0 %1662
  %1664 = vrot.lane.b32.xlu0 %v499, 16
  %v1665 = vpop.permute.xlu0 %1664
  %1666 = vrot.lane.b32.xlu0 %v500, 16
  %v1667 = vpop.permute.xlu0 %1666
  %1668 = vrot.lane.b32.xlu0 %v501, 16
  %v1669 = vpop.permute.xlu0 %1668
  %1670 = vrot.lane.b32.xlu0 %v502, 16
  %v1671 = vpop.permute.xlu0 %1670
  %1672 = vrot.lane.b32.xlu0 %v503, 16
  %v1673 = vpop.permute.xlu0 %1672
  %1674 = vrot.lane.b32.xlu0 %v504, 16
  %v1675 = vpop.permute.xlu0 %1674
  %1676 = vrot.lane.b32.xlu0 %v505, 16
  %v1677 = vpop.permute.xlu0 %1676
  %1678 = vrot.lane.b32.xlu0 %v506, 16
  %v1679 = vpop.permute.xlu0 %1678
  %1680 = vrot.lane.b32.xlu0 %v507, 16
  %v1681 = vpop.permute.xlu0 %1680
  %1682 = vrot.lane.b32.xlu0 %v508, 16
  %v1683 = vpop.permute.xlu0 %1682
  %1684 = vrot.lane.b32.xlu0 %v509, 16
  %v1685 = vpop.permute.xlu0 %1684
  %1686 = vrot.lane.b32.xlu0 %v510, 16
  %v1687 = vpop.permute.xlu0 %1686
  %1688 = vrot.lane.b32.xlu0 %v511, 16
  %v1689 = vpop.permute.xlu0 %1688
  %1690 = vrot.lane.b32.xlu0 %v512, 16
  %v1691 = vpop.permute.xlu0 %1690
  %1692 = vrot.lane.b32.xlu0 %v513, 16
  %v1693 = vpop.permute.xlu0 %1692
  %1694 = vrot.lane.b32.xlu0 %v514, 16
  %v1695 = vpop.permute.xlu0 %1694
  %1696 = vrot.lane.b32.xlu0 %v515, 16
  %v1697 = vpop.permute.xlu0 %1696
  %1698 = vrot.lane.b32.xlu0 %v516, 16
  %v1699 = vpop.permute.xlu0 %1698
  %1700 = vrot.lane.b32.xlu0 %v517, 16
  %v1701 = vpop.permute.xlu0 %1700
  %1702 = vrot.lane.b32.xlu0 %v518, 16
  %v1703 = vpop.permute.xlu0 %1702
  %1704 = vrot.lane.b32.xlu0 %v519, 16
  %v1705 = vpop.permute.xlu0 %1704
  %1706 = vrot.lane.b32.xlu0 %v520, 16
  %v1707 = vpop.permute.xlu0 %1706
  %1708 = vrot.lane.b32.xlu0 %v521, 16
  %v1709 = vpop.permute.xlu0 %1708
  %1710 = vrot.lane.b32.xlu0 %v522, 16
  %v1711 = vpop.permute.xlu0 %1710
  %1712 = vrot.lane.b32.xlu0 %v523, 16
  %v1713 = vpop.permute.xlu0 %1712
  %1714 = vrot.lane.b32.xlu0 %v524, 16
  %v1715 = vpop.permute.xlu0 %1714
  %1716 = vrot.lane.b32.xlu0 %v525, 16
  %v1717 = vpop.permute.xlu0 %1716
  %1718 = vrot.lane.b32.xlu0 %v526, 16
  %v1719 = vpop.permute.xlu0 %1718
  %1720 = vrot.lane.b32.xlu0 %v527, 16
  %v1721 = vpop.permute.xlu0 %1720
  %1722 = vrot.lane.b32.xlu0 %v528, 16
  %v1723 = vpop.permute.xlu0 %1722
  %1724 = vrot.lane.b32.xlu0 %v529, 16
  %v1725 = vpop.permute.xlu0 %1724
  %1726 = vrot.lane.b32.xlu0 %v530, 16
  %v1727 = vpop.permute.xlu0 %1726
  %1728 = vrot.lane.b32.xlu0 %v531, 16
  %v1729 = vpop.permute.xlu0 %1728
  %1730 = vrot.lane.b32.xlu0 %v532, 16
  %v1731 = vpop.permute.xlu0 %1730
  %1732 = vrot.lane.b32.xlu0 %v533, 16
  %v1733 = vpop.permute.xlu0 %1732
  %1734 = vrot.lane.b32.xlu0 %v534, 16
  %v1735 = vpop.permute.xlu0 %1734
  %1736 = vrot.lane.b32.xlu0 %v535, 16
  %v1737 = vpop.permute.xlu0 %1736
  %1738 = vrot.lane.b32.xlu0 %v536, 16
  %v1739 = vpop.permute.xlu0 %1738
  %1740 = vrot.lane.b32.xlu0 %v537, 16
  %v1741 = vpop.permute.xlu0 %1740
  %1742 = vrot.lane.b32.xlu0 %v538, 16
  %v1743 = vpop.permute.xlu0 %1742
  %1744 = vrot.lane.b32.xlu0 %v539, 16
  %v1745 = vpop.permute.xlu0 %1744
  %1746 = vrot.lane.b32.xlu0 %v540, 16
  %v1747 = vpop.permute.xlu0 %1746
  %1748 = vrot.lane.b32.xlu0 %v541, 16
  %v1749 = vpop.permute.xlu0 %1748
  %1750 = vrot.lane.b32.xlu0 %v542, 16
  %v1751 = vpop.permute.xlu0 %1750
  %1752 = vrot.lane.b32.xlu0 %v543, 16
  %v1753 = vpop.permute.xlu0 %1752
  %1754 = vrot.lane.b32.xlu0 %v544, 16
  %v1755 = vpop.permute.xlu0 %1754
  %1756 = vrot.lane.b32.xlu0 %v545, 16
  %v1757 = vpop.permute.xlu0 %1756
  %1758 = vrot.lane.b32.xlu0 %v546, 16
  %v1759 = vpop.permute.xlu0 %1758
  %1760 = vrot.lane.b32.xlu0 %v547, 16
  %v1761 = vpop.permute.xlu0 %1760
  %1762 = vrot.lane.b32.xlu0 %v548, 16
  %v1763 = vpop.permute.xlu0 %1762
  %1764 = vrot.lane.b32.xlu0 %v549, 16
  %v1765 = vpop.permute.xlu0 %1764
  %1766 = vrot.lane.b32.xlu0 %v550, 16
  %v1767 = vpop.permute.xlu0 %1766
  %1896 = vrot.lane.b32.xlu0 %v551, 20
  %v1897 = vpop.permute.xlu0 %1896
  %1898 = vrot.lane.b32.xlu0 %v552, 20
  %v1899 = vpop.permute.xlu0 %1898
  %1900 = vrot.lane.b32.xlu0 %v553, 20
  %v1901 = vpop.permute.xlu0 %1900
  %1902 = vrot.lane.b32.xlu0 %v554, 20
  %v1903 = vpop.permute.xlu0 %1902
  %1904 = vrot.lane.b32.xlu0 %v555, 20
  %v1905 = vpop.permute.xlu0 %1904
  %1906 = vrot.lane.b32.xlu0 %v556, 20
  %v1907 = vpop.permute.xlu0 %1906
  %1908 = vrot.lane.b32.xlu0 %v557, 20
  %v1909 = vpop.permute.xlu0 %1908
  %1910 = vrot.lane.b32.xlu0 %v558, 20
  %v1911 = vpop.permute.xlu0 %1910
  %1912 = vrot.lane.b32.xlu0 %v559, 20
  %v1913 = vpop.permute.xlu0 %1912
  %1914 = vrot.lane.b32.xlu0 %v560, 20
  %v1915 = vpop.permute.xlu0 %1914
  %1916 = vrot.lane.b32.xlu0 %v561, 20
  %v1917 = vpop.permute.xlu0 %1916
  %1918 = vrot.lane.b32.xlu0 %v562, 20
  %v1919 = vpop.permute.xlu0 %1918
  %1920 = vrot.lane.b32.xlu0 %v563, 20
  %v1921 = vpop.permute.xlu0 %1920
  %1922 = vrot.lane.b32.xlu0 %v564, 20
  %v1923 = vpop.permute.xlu0 %1922
  %1924 = vrot.lane.b32.xlu0 %v565, 20
  %v1925 = vpop.permute.xlu0 %1924
  %1926 = vrot.lane.b32.xlu0 %v566, 20
  %v1927 = vpop.permute.xlu0 %1926
  %1928 = vrot.lane.b32.xlu0 %v567, 20
  %v1929 = vpop.permute.xlu0 %1928
  %1930 = vrot.lane.b32.xlu0 %v568, 20
  %v1931 = vpop.permute.xlu0 %1930
  %1932 = vrot.lane.b32.xlu0 %v569, 20
  %v1933 = vpop.permute.xlu0 %1932
  %1934 = vrot.lane.b32.xlu0 %v570, 20
  %v1935 = vpop.permute.xlu0 %1934
  %1936 = vrot.lane.b32.xlu0 %v571, 20
  %v1937 = vpop.permute.xlu0 %1936
  %1938 = vrot.lane.b32.xlu0 %v572, 20
  %v1939 = vpop.permute.xlu0 %1938
  %1940 = vrot.lane.b32.xlu0 %v573, 20
  %v1941 = vpop.permute.xlu0 %1940
  %1942 = vrot.lane.b32.xlu0 %v574, 20
  %v1943 = vpop.permute.xlu0 %1942
  %1944 = vrot.lane.b32.xlu0 %v575, 20
  %v1945 = vpop.permute.xlu0 %1944
  %1946 = vrot.lane.b32.xlu0 %v576, 20
  %v1947 = vpop.permute.xlu0 %1946
  %1948 = vrot.lane.b32.xlu0 %v577, 20
  %v1949 = vpop.permute.xlu0 %1948
  %1950 = vrot.lane.b32.xlu0 %v578, 20
  %v1951 = vpop.permute.xlu0 %1950
  %1952 = vrot.lane.b32.xlu0 %v579, 20
  %v1953 = vpop.permute.xlu0 %1952
  %1954 = vrot.lane.b32.xlu0 %v580, 20
  %v1955 = vpop.permute.xlu0 %1954
  %1956 = vrot.lane.b32.xlu0 %v581, 20
  %v1957 = vpop.permute.xlu0 %1956
  %1958 = vrot.lane.b32.xlu0 %v582, 20
  %v1959 = vpop.permute.xlu0 %1958
  %1960 = vrot.lane.b32.xlu0 %v583, 20
  %v1961 = vpop.permute.xlu0 %1960
  %1962 = vrot.lane.b32.xlu0 %v584, 20
  %v1963 = vpop.permute.xlu0 %1962
  %1964 = vrot.lane.b32.xlu0 %v585, 20
  %v1965 = vpop.permute.xlu0 %1964
  %1966 = vrot.lane.b32.xlu0 %v586, 20
  %v1967 = vpop.permute.xlu0 %1966
  %1968 = vrot.lane.b32.xlu0 %v587, 20
  %v1969 = vpop.permute.xlu0 %1968
  %1970 = vrot.lane.b32.xlu0 %v588, 20
  %v1971 = vpop.permute.xlu0 %1970
  %1972 = vrot.lane.b32.xlu0 %v589, 20
  %v1973 = vpop.permute.xlu0 %1972
  %1974 = vrot.lane.b32.xlu0 %v590, 20
  %v1975 = vpop.permute.xlu0 %1974
  %1976 = vrot.lane.b32.xlu0 %v591, 20
  %v1977 = vpop.permute.xlu0 %1976
  %1978 = vrot.lane.b32.xlu0 %v592, 20
  %v1979 = vpop.permute.xlu0 %1978
  %1980 = vrot.lane.b32.xlu0 %v593, 20
  %v1981 = vpop.permute.xlu0 %1980
  %1982 = vrot.lane.b32.xlu0 %v594, 20
  %v1983 = vpop.permute.xlu0 %1982
  %1984 = vrot.lane.b32.xlu0 %v595, 20
  %v1985 = vpop.permute.xlu0 %1984
  %1986 = vrot.lane.b32.xlu0 %v596, 20
  %v1987 = vpop.permute.xlu0 %1986
  %1988 = vrot.lane.b32.xlu0 %v597, 20
  %v1989 = vpop.permute.xlu0 %1988
  %1990 = vrot.lane.b32.xlu0 %v598, 20
  %v1991 = vpop.permute.xlu0 %1990
  %1992 = vrot.lane.b32.xlu0 %v599, 20
  %v1993 = vpop.permute.xlu0 %1992
  %1994 = vrot.lane.b32.xlu0 %v600, 20
  %v1995 = vpop.permute.xlu0 %1994
  %1996 = vrot.lane.b32.xlu0 %v601, 20
  %v1997 = vpop.permute.xlu0 %1996
  %1998 = vrot.lane.b32.xlu0 %v602, 20
  %v1999 = vpop.permute.xlu0 %1998
  %2000 = vrot.lane.b32.xlu0 %v603, 20
  %v2001 = vpop.permute.xlu0 %2000
  %2002 = vrot.lane.b32.xlu0 %v604, 20
  %v2003 = vpop.permute.xlu0 %2002
  %2004 = vrot.lane.b32.xlu0 %v605, 20
  %v2005 = vpop.permute.xlu0 %2004
  %2006 = vrot.lane.b32.xlu0 %v606, 20
  %v2007 = vpop.permute.xlu0 %2006
  %2008 = vrot.lane.b32.xlu0 %v607, 20
  %v2009 = vpop.permute.xlu0 %2008
  %2010 = vrot.lane.b32.xlu0 %v608, 20
  %v2011 = vpop.permute.xlu0 %2010
  %2012 = vrot.lane.b32.xlu0 %v609, 20
  %v2013 = vpop.permute.xlu0 %2012
  %2014 = vrot.lane.b32.xlu0 %v610, 20
  %v2015 = vpop.permute.xlu0 %2014
  %2016 = vrot.lane.b32.xlu0 %v611, 20
  %v2017 = vpop.permute.xlu0 %2016
  %2018 = vrot.lane.b32.xlu0 %v612, 20
  %v2019 = vpop.permute.xlu0 %2018
  %2020 = vrot.lane.b32.xlu0 %v613, 20
  %v2021 = vpop.permute.xlu0 %2020
  %2022 = vrot.lane.b32.xlu0 %v614, 20
  %v2023 = vpop.permute.xlu0 %2022
  %2152 = vrot.lane.b32.xlu0 %v616, 24
  %v2153 = vpop.permute.xlu0 %2152
  %2154 = vrot.lane.b32.xlu0 %v617, 24
  %v2155 = vpop.permute.xlu0 %2154
  %2156 = vrot.lane.b32.xlu0 %v618, 24
  %v2157 = vpop.permute.xlu0 %2156
  %2158 = vrot.lane.b32.xlu0 %v619, 24
  %v2159 = vpop.permute.xlu0 %2158
  %2160 = vrot.lane.b32.xlu0 %v620, 24
  %v2161 = vpop.permute.xlu0 %2160
  %2162 = vrot.lane.b32.xlu0 %v621, 24
  %v2163 = vpop.permute.xlu0 %2162
  %2164 = vrot.lane.b32.xlu0 %v622, 24
  %v2165 = vpop.permute.xlu0 %2164
  %2166 = vrot.lane.b32.xlu0 %v623, 24
  %v2167 = vpop.permute.xlu0 %2166
  %2168 = vrot.lane.b32.xlu0 %v624, 24
  %v2169 = vpop.permute.xlu0 %2168
  %2170 = vrot.lane.b32.xlu0 %v625, 24
  %v2171 = vpop.permute.xlu0 %2170
  %2172 = vrot.lane.b32.xlu0 %v626, 24
  %v2173 = vpop.permute.xlu0 %2172
  %2174 = vrot.lane.b32.xlu0 %v627, 24
  %v2175 = vpop.permute.xlu0 %2174
  %2176 = vrot.lane.b32.xlu0 %v628, 24
  %v2177 = vpop.permute.xlu0 %2176
  %2178 = vrot.lane.b32.xlu0 %v629, 24
  %v2179 = vpop.permute.xlu0 %2178
  %2180 = vrot.lane.b32.xlu0 %v630, 24
  %v2181 = vpop.permute.xlu0 %2180
  %2182 = vrot.lane.b32.xlu0 %v631, 24
  %v2183 = vpop.permute.xlu0 %2182
  %2184 = vrot.lane.b32.xlu0 %v632, 24
  %v2185 = vpop.permute.xlu0 %2184
  %2186 = vrot.lane.b32.xlu0 %v633, 24
  %v2187 = vpop.permute.xlu0 %2186
  %2188 = vrot.lane.b32.xlu0 %v634, 24
  %v2189 = vpop.permute.xlu0 %2188
  %2190 = vrot.lane.b32.xlu0 %v635, 24
  %v2191 = vpop.permute.xlu0 %2190
  %2192 = vrot.lane.b32.xlu0 %v636, 24
  %v2193 = vpop.permute.xlu0 %2192
  %2194 = vrot.lane.b32.xlu0 %v637, 24
  %v2195 = vpop.permute.xlu0 %2194
  %2196 = vrot.lane.b32.xlu0 %v638, 24
  %v2197 = vpop.permute.xlu0 %2196
  %2198 = vrot.lane.b32.xlu0 %v639, 24
  %v2199 = vpop.permute.xlu0 %2198
  %2200 = vrot.lane.b32.xlu0 %v640, 24
  %v2201 = vpop.permute.xlu0 %2200
  %2202 = vrot.lane.b32.xlu0 %v641, 24
  %v2203 = vpop.permute.xlu0 %2202
  %2204 = vrot.lane.b32.xlu0 %v642, 24
  %v2205 = vpop.permute.xlu0 %2204
  %2206 = vrot.lane.b32.xlu0 %v643, 24
  %v2207 = vpop.permute.xlu0 %2206
  %2208 = vrot.lane.b32.xlu0 %v644, 24
  %v2209 = vpop.permute.xlu0 %2208
  %2210 = vrot.lane.b32.xlu0 %v645, 24
  %v2211 = vpop.permute.xlu0 %2210
  %2212 = vrot.lane.b32.xlu0 %v646, 24
  %v2213 = vpop.permute.xlu0 %2212
  %2214 = vrot.lane.b32.xlu0 %v647, 24
  %v2215 = vpop.permute.xlu0 %2214
  %2216 = vrot.lane.b32.xlu0 %v648, 24
  %v2217 = vpop.permute.xlu0 %2216
  %2218 = vrot.lane.b32.xlu0 %v649, 24
  %v2219 = vpop.permute.xlu0 %2218
  %2220 = vrot.lane.b32.xlu0 %v650, 24
  %v2221 = vpop.permute.xlu0 %2220
  %2222 = vrot.lane.b32.xlu0 %v651, 24
  %v2223 = vpop.permute.xlu0 %2222
  %2224 = vrot.lane.b32.xlu0 %v652, 24
  %v2225 = vpop.permute.xlu0 %2224
  %2226 = vrot.lane.b32.xlu0 %v653, 24
  %v2227 = vpop.permute.xlu0 %2226
  %2228 = vrot.lane.b32.xlu0 %v654, 24
  %v2229 = vpop.permute.xlu0 %2228
  %2230 = vrot.lane.b32.xlu0 %v655, 24
  %v2231 = vpop.permute.xlu0 %2230
  %2232 = vrot.lane.b32.xlu0 %v656, 24
  %v2233 = vpop.permute.xlu0 %2232
  %2234 = vrot.lane.b32.xlu0 %v657, 24
  %v2235 = vpop.permute.xlu0 %2234
  %2236 = vrot.lane.b32.xlu0 %v658, 24
  %v2237 = vpop.permute.xlu0 %2236
  %2238 = vrot.lane.b32.xlu0 %v659, 24
  %v2239 = vpop.permute.xlu0 %2238
  %2240 = vrot.lane.b32.xlu0 %v660, 24
  %v2241 = vpop.permute.xlu0 %2240
  %2242 = vrot.lane.b32.xlu0 %v661, 24
  %v2243 = vpop.permute.xlu0 %2242
  %2244 = vrot.lane.b32.xlu0 %v662, 24
  %v2245 = vpop.permute.xlu0 %2244
  %2246 = vrot.lane.b32.xlu0 %v663, 24
  %v2247 = vpop.permute.xlu0 %2246
  %2248 = vrot.lane.b32.xlu0 %v664, 24
  %v2249 = vpop.permute.xlu0 %2248
  %2250 = vrot.lane.b32.xlu0 %v665, 24
  %v2251 = vpop.permute.xlu0 %2250
  %2252 = vrot.lane.b32.xlu0 %v666, 24
  %v2253 = vpop.permute.xlu0 %2252
  %2254 = vrot.lane.b32.xlu0 %v667, 24
  %v2255 = vpop.permute.xlu0 %2254
  %2256 = vrot.lane.b32.xlu0 %v668, 24
  %v2257 = vpop.permute.xlu0 %2256
  %2258 = vrot.lane.b32.xlu0 %v669, 24
  %v2259 = vpop.permute.xlu0 %2258
  %2260 = vrot.lane.b32.xlu0 %v670, 24
  %v2261 = vpop.permute.xlu0 %2260
  %2262 = vrot.lane.b32.xlu0 %v671, 24
  %v2263 = vpop.permute.xlu0 %2262
  %2264 = vrot.lane.b32.xlu0 %v672, 24
  %v2265 = vpop.permute.xlu0 %2264
  %2266 = vrot.lane.b32.xlu0 %v673, 24
  %v2267 = vpop.permute.xlu0 %2266
  %2268 = vrot.lane.b32.xlu0 %v674, 24
  %v2269 = vpop.permute.xlu0 %2268
  %2270 = vrot.lane.b32.xlu0 %v675, 24
  %v2271 = vpop.permute.xlu0 %2270
  %2272 = vrot.lane.b32.xlu0 %v676, 24
  %v2273 = vpop.permute.xlu0 %2272
  %2274 = vrot.lane.b32.xlu0 %v677, 24
  %v2275 = vpop.permute.xlu0 %2274
  %2276 = vrot.lane.b32.xlu0 %v678, 24
  %v2277 = vpop.permute.xlu0 %2276
  %2278 = vrot.lane.b32.xlu0 %v679, 24
  %v2279 = vpop.permute.xlu0 %2278
  %2408 = vrot.lane.b32.xlu0 %v680, 28
  %v2409 = vpop.permute.xlu0 %2408
  %2410 = vrot.lane.b32.xlu0 %v681, 28
  %v2411 = vpop.permute.xlu0 %2410
  %2412 = vrot.lane.b32.xlu0 %v682, 28
  %v2413 = vpop.permute.xlu0 %2412
  %2414 = vrot.lane.b32.xlu0 %v683, 28
  %v2415 = vpop.permute.xlu0 %2414
  %2416 = vrot.lane.b32.xlu0 %v684, 28
  %v2417 = vpop.permute.xlu0 %2416
  %2418 = vrot.lane.b32.xlu0 %v685, 28
  %v2419 = vpop.permute.xlu0 %2418
  %2420 = vrot.lane.b32.xlu0 %v686, 28
  %v2421 = vpop.permute.xlu0 %2420
  %2422 = vrot.lane.b32.xlu0 %v687, 28
  %v2423 = vpop.permute.xlu0 %2422
  %2424 = vrot.lane.b32.xlu0 %v688, 28
  %v2425 = vpop.permute.xlu0 %2424
  %2426 = vrot.lane.b32.xlu0 %v689, 28
  %v2427 = vpop.permute.xlu0 %2426
  %2428 = vrot.lane.b32.xlu0 %v690, 28
  %v2429 = vpop.permute.xlu0 %2428
  %2430 = vrot.lane.b32.xlu0 %v691, 28
  %v2431 = vpop.permute.xlu0 %2430
  %2432 = vrot.lane.b32.xlu0 %v692, 28
  %v2433 = vpop.permute.xlu0 %2432
  %2434 = vrot.lane.b32.xlu0 %v693, 28
  %v2435 = vpop.permute.xlu0 %2434
  %2436 = vrot.lane.b32.xlu0 %v694, 28
  %v2437 = vpop.permute.xlu0 %2436
  %2438 = vrot.lane.b32.xlu0 %v695, 28
  %v2439 = vpop.permute.xlu0 %2438
  %2440 = vrot.lane.b32.xlu0 %v696, 28
  %v2441 = vpop.permute.xlu0 %2440
  %2442 = vrot.lane.b32.xlu0 %v697, 28
  %v2443 = vpop.permute.xlu0 %2442
  %2444 = vrot.lane.b32.xlu0 %v698, 28
  %v2445 = vpop.permute.xlu0 %2444
  %2446 = vrot.lane.b32.xlu0 %v699, 28
  %v2447 = vpop.permute.xlu0 %2446
  %2448 = vrot.lane.b32.xlu0 %v700, 28
  %v2449 = vpop.permute.xlu0 %2448
  %2450 = vrot.lane.b32.xlu0 %v701, 28
  %v2451 = vpop.permute.xlu0 %2450
  %2452 = vrot.lane.b32.xlu0 %v702, 28
  %v2453 = vpop.permute.xlu0 %2452
  %2454 = vrot.lane.b32.xlu0 %v703, 28
  %v2455 = vpop.permute.xlu0 %2454
  %2456 = vrot.lane.b32.xlu0 %v704, 28
  %v2457 = vpop.permute.xlu0 %2456
  %2458 = vrot.lane.b32.xlu0 %v705, 28
  %v2459 = vpop.permute.xlu0 %2458
  %2460 = vrot.lane.b32.xlu0 %v706, 28
  %v2461 = vpop.permute.xlu0 %2460
  %2462 = vrot.lane.b32.xlu0 %v707, 28
  %v2463 = vpop.permute.xlu0 %2462
  %2464 = vrot.lane.b32.xlu0 %v708, 28
  %v2465 = vpop.permute.xlu0 %2464
  %2466 = vrot.lane.b32.xlu0 %v709, 28
  %v2467 = vpop.permute.xlu0 %2466
  %2468 = vrot.lane.b32.xlu0 %v710, 28
  %v2469 = vpop.permute.xlu0 %2468
  %2470 = vrot.lane.b32.xlu0 %v711, 28
  %v2471 = vpop.permute.xlu0 %2470
  %2472 = vrot.lane.b32.xlu0 %v712, 28
  %v2473 = vpop.permute.xlu0 %2472
  %2474 = vrot.lane.b32.xlu0 %v713, 28
  %v2475 = vpop.permute.xlu0 %2474
  %2476 = vrot.lane.b32.xlu0 %v714, 28
  %v2477 = vpop.permute.xlu0 %2476
  %2478 = vrot.lane.b32.xlu0 %v715, 28
  %v2479 = vpop.permute.xlu0 %2478
  %2480 = vrot.lane.b32.xlu0 %v716, 28
  %v2481 = vpop.permute.xlu0 %2480
  %2482 = vrot.lane.b32.xlu0 %v717, 28
  %v2483 = vpop.permute.xlu0 %2482
  %2484 = vrot.lane.b32.xlu0 %v718, 28
  %v2485 = vpop.permute.xlu0 %2484
  %2486 = vrot.lane.b32.xlu0 %v719, 28
  %v2487 = vpop.permute.xlu0 %2486
  %2488 = vrot.lane.b32.xlu0 %v720, 28
  %v2489 = vpop.permute.xlu0 %2488
  %2490 = vrot.lane.b32.xlu0 %v721, 28
  %v2491 = vpop.permute.xlu0 %2490
  %2492 = vrot.lane.b32.xlu0 %v722, 28
  %v2493 = vpop.permute.xlu0 %2492
  %2494 = vrot.lane.b32.xlu0 %v723, 28
  %v2495 = vpop.permute.xlu0 %2494
  %2496 = vrot.lane.b32.xlu0 %v724, 28
  %v2497 = vpop.permute.xlu0 %2496
  %2498 = vrot.lane.b32.xlu0 %v725, 28
  %v2499 = vpop.permute.xlu0 %2498
  %2500 = vrot.lane.b32.xlu0 %v726, 28
  %v2501 = vpop.permute.xlu0 %2500
  %2502 = vrot.lane.b32.xlu0 %v727, 28
  %v2503 = vpop.permute.xlu0 %2502
  %2504 = vrot.lane.b32.xlu0 %v728, 28
  %v2505 = vpop.permute.xlu0 %2504
  %2506 = vrot.lane.b32.xlu0 %v729, 28
  %v2507 = vpop.permute.xlu0 %2506
  %2508 = vrot.lane.b32.xlu0 %v730, 28
  %v2509 = vpop.permute.xlu0 %2508
  %2510 = vrot.lane.b32.xlu0 %v731, 28
  %v2511 = vpop.permute.xlu0 %2510
  %2512 = vrot.lane.b32.xlu0 %v732, 28
  %v2513 = vpop.permute.xlu0 %2512
  %2514 = vrot.lane.b32.xlu0 %v733, 28
  %v2515 = vpop.permute.xlu0 %2514
  %2516 = vrot.lane.b32.xlu0 %v734, 28
  %v2517 = vpop.permute.xlu0 %2516
  %2518 = vrot.lane.b32.xlu0 %v735, 28
  %v2519 = vpop.permute.xlu0 %2518
  %2520 = vrot.lane.b32.xlu0 %v736, 28
  %v2521 = vpop.permute.xlu0 %2520
  %2522 = vrot.lane.b32.xlu0 %v737, 28
  %v2523 = vpop.permute.xlu0 %2522
  %2524 = vrot.lane.b32.xlu0 %v738, 28
  %v2525 = vpop.permute.xlu0 %2524
  %2526 = vrot.lane.b32.xlu0 %v739, 28
  %v2527 = vpop.permute.xlu0 %2526
  %2528 = vrot.lane.b32.xlu0 %v740, 28
  %v2529 = vpop.permute.xlu0 %2528
  %2530 = vrot.lane.b32.xlu0 %v741, 28
  %v2531 = vpop.permute.xlu0 %2530
  %2532 = vrot.lane.b32.xlu0 %v742, 28
  %v2533 = vpop.permute.xlu0 %2532
  %2534 = vrot.lane.b32.xlu0 %v743, 28
  %v2535 = vpop.permute.xlu0 %2534
  %2664 = vrot.lane.b32.xlu0 %v744, 32
  %v2665 = vpop.permute.xlu0 %2664
  %2666 = vrot.lane.b32.xlu0 %v745, 32
  %v2667 = vpop.permute.xlu0 %2666
  %2668 = vrot.lane.b32.xlu0 %v746, 32
  %v2669 = vpop.permute.xlu0 %2668
  %2670 = vrot.lane.b32.xlu0 %v747, 32
  %v2671 = vpop.permute.xlu0 %2670
  %2672 = vrot.lane.b32.xlu0 %v748, 32
  %v2673 = vpop.permute.xlu0 %2672
  %2674 = vrot.lane.b32.xlu0 %v749, 32
  %v2675 = vpop.permute.xlu0 %2674
  %2676 = vrot.lane.b32.xlu0 %v750, 32
  %v2677 = vpop.permute.xlu0 %2676
  %2678 = vrot.lane.b32.xlu0 %v751, 32
  %v2679 = vpop.permute.xlu0 %2678
  %2680 = vrot.lane.b32.xlu0 %v752, 32
  %v2681 = vpop.permute.xlu0 %2680
  %2682 = vrot.lane.b32.xlu0 %v753, 32
  %v2683 = vpop.permute.xlu0 %2682
  %2684 = vrot.lane.b32.xlu0 %v754, 32
  %v2685 = vpop.permute.xlu0 %2684
  %2686 = vrot.lane.b32.xlu0 %v755, 32
  %v2687 = vpop.permute.xlu0 %2686
  %2688 = vrot.lane.b32.xlu0 %v756, 32
  %v2689 = vpop.permute.xlu0 %2688
  %2690 = vrot.lane.b32.xlu0 %v757, 32
  %v2691 = vpop.permute.xlu0 %2690
  %2692 = vrot.lane.b32.xlu0 %v758, 32
  %v2693 = vpop.permute.xlu0 %2692
  %2694 = vrot.lane.b32.xlu0 %v759, 32
  %v2695 = vpop.permute.xlu0 %2694
  %2696 = vrot.lane.b32.xlu0 %v760, 32
  %v2697 = vpop.permute.xlu0 %2696
  %2698 = vrot.lane.b32.xlu0 %v761, 32
  %v2699 = vpop.permute.xlu0 %2698
  %2700 = vrot.lane.b32.xlu0 %v762, 32
  %v2701 = vpop.permute.xlu0 %2700
  %2702 = vrot.lane.b32.xlu0 %v763, 32
  %v2703 = vpop.permute.xlu0 %2702
  %2704 = vrot.lane.b32.xlu0 %v764, 32
  %v2705 = vpop.permute.xlu0 %2704
  %2706 = vrot.lane.b32.xlu0 %v765, 32
  %v2707 = vpop.permute.xlu0 %2706
  %2708 = vrot.lane.b32.xlu0 %v766, 32
  %v2709 = vpop.permute.xlu0 %2708
  %2710 = vrot.lane.b32.xlu0 %v767, 32
  %v2711 = vpop.permute.xlu0 %2710
  %2712 = vrot.lane.b32.xlu0 %v768, 32
  %v2713 = vpop.permute.xlu0 %2712
  %2714 = vrot.lane.b32.xlu0 %v769, 32
  %v2715 = vpop.permute.xlu0 %2714
  %2716 = vrot.lane.b32.xlu0 %v770, 32
  %v2717 = vpop.permute.xlu0 %2716
  %2718 = vrot.lane.b32.xlu0 %v771, 32
  %v2719 = vpop.permute.xlu0 %2718
  %2720 = vrot.lane.b32.xlu0 %v772, 32
  %v2721 = vpop.permute.xlu0 %2720
  %2722 = vrot.lane.b32.xlu0 %v773, 32
  %v2723 = vpop.permute.xlu0 %2722
  %2724 = vrot.lane.b32.xlu0 %v774, 32
  %v2725 = vpop.permute.xlu0 %2724
  %2726 = vrot.lane.b32.xlu0 %v775, 32
  %v2727 = vpop.permute.xlu0 %2726
  %2728 = vrot.lane.b32.xlu0 %v776, 32
  %v2729 = vpop.permute.xlu0 %2728
  %2730 = vrot.lane.b32.xlu0 %v777, 32
  %v2731 = vpop.permute.xlu0 %2730
  %2732 = vrot.lane.b32.xlu0 %v778, 32
  %v2733 = vpop.permute.xlu0 %2732
  %2734 = vrot.lane.b32.xlu0 %v779, 32
  %v2735 = vpop.permute.xlu0 %2734
  %2736 = vrot.lane.b32.xlu0 %v780, 32
  %v2737 = vpop.permute.xlu0 %2736
  %2738 = vrot.lane.b32.xlu0 %v781, 32
  %v2739 = vpop.permute.xlu0 %2738
  %2740 = vrot.lane.b32.xlu0 %v782, 32
  %v2741 = vpop.permute.xlu0 %2740
  %2742 = vrot.lane.b32.xlu0 %v783, 32
  %v2743 = vpop.permute.xlu0 %2742
  %2744 = vrot.lane.b32.xlu0 %v784, 32
  %v2745 = vpop.permute.xlu0 %2744
  %2746 = vrot.lane.b32.xlu0 %v785, 32
  %v2747 = vpop.permute.xlu0 %2746
  %2748 = vrot.lane.b32.xlu0 %v786, 32
  %v2749 = vpop.permute.xlu0 %2748
  %2750 = vrot.lane.b32.xlu0 %v787, 32
  %v2751 = vpop.permute.xlu0 %2750
  %2752 = vrot.lane.b32.xlu0 %v788, 32
  %v2753 = vpop.permute.xlu0 %2752
  %2754 = vrot.lane.b32.xlu0 %v789, 32
  %v2755 = vpop.permute.xlu0 %2754
  %2756 = vrot.lane.b32.xlu0 %v790, 32
  %v2757 = vpop.permute.xlu0 %2756
  %2758 = vrot.lane.b32.xlu0 %v791, 32
  %v2759 = vpop.permute.xlu0 %2758
  %2760 = vrot.lane.b32.xlu0 %v792, 32
  %v2761 = vpop.permute.xlu0 %2760
  %2762 = vrot.lane.b32.xlu0 %v793, 32
  %v2763 = vpop.permute.xlu0 %2762
  %2764 = vrot.lane.b32.xlu0 %v794, 32
  %v2765 = vpop.permute.xlu0 %2764
  %2766 = vrot.lane.b32.xlu0 %v795, 32
  %v2767 = vpop.permute.xlu0 %2766
  %2768 = vrot.lane.b32.xlu0 %v796, 32
  %v2769 = vpop.permute.xlu0 %2768
  %2770 = vrot.lane.b32.xlu0 %v797, 32
  %v2771 = vpop.permute.xlu0 %2770
  %2772 = vrot.lane.b32.xlu0 %v798, 32
  %v2773 = vpop.permute.xlu0 %2772
  %2774 = vrot.lane.b32.xlu0 %v799, 32
  %v2775 = vpop.permute.xlu0 %2774
  %2776 = vrot.lane.b32.xlu0 %v800, 32
  %v2777 = vpop.permute.xlu0 %2776
  %2778 = vrot.lane.b32.xlu0 %v801, 32
  %v2779 = vpop.permute.xlu0 %2778
  %2780 = vrot.lane.b32.xlu0 %v802, 32
  %v2781 = vpop.permute.xlu0 %2780
  %2782 = vrot.lane.b32.xlu0 %v803, 32
  %v2783 = vpop.permute.xlu0 %2782
  %2784 = vrot.lane.b32.xlu0 %v804, 32
  %v2785 = vpop.permute.xlu0 %2784
  %2786 = vrot.lane.b32.xlu0 %v805, 32
  %v2787 = vpop.permute.xlu0 %2786
  %2788 = vrot.lane.b32.xlu0 %v806, 32
  %v2789 = vpop.permute.xlu0 %2788
  %2790 = vrot.lane.b32.xlu0 %v807, 32
  %v2791 = vpop.permute.xlu0 %2790
  %v2856 = vsel %vm78, %v231, %v873
  %v2857 = vsel %vm78, %v232, %v875
  %v2858 = vsel %vm78, %v233, %v877
  %v2859 = vsel %vm78, %v234, %v879
  %v2860 = vsel %vm78, %v235, %v881
  %v2861 = vsel %vm78, %v236, %v883
  %v2862 = vsel %vm78, %v237, %v885
  %v2863 = vsel %vm78, %v238, %v887
  %v2864 = vsel %vm78, %v239, %v889
  %v2865 = vsel %vm78, %v240, %v891
  %v2866 = vsel %vm78, %v241, %v893
  %v2867 = vsel %vm78, %v242, %v895
  %v2868 = vsel %vm78, %v243, %v897
  %v2869 = vsel %vm78, %v244, %v899
  %v2870 = vsel %vm78, %v245, %v901
  %v2871 = vsel %vm78, %v246, %v903
  %v2872 = vsel %vm78, %v247, %v905
  %v2873 = vsel %vm78, %v248, %v907
  %v2874 = vsel %vm78, %v249, %v909
  %v2875 = vsel %vm78, %v250, %v911
  %v2876 = vsel %vm78, %v251, %v913
  %v2877 = vsel %vm78, %v252, %v915
  %v2878 = vsel %vm78, %v253, %v917
  %v2879 = vsel %vm78, %v254, %v919
  %v2880 = vsel %vm78, %v255, %v921
  %v2881 = vsel %vm78, %v256, %v923
  %v2882 = vsel %vm78, %v257, %v925
  %v2883 = vsel %vm78, %v258, %v927
  %v2884 = vsel %vm78, %v259, %v929
  %v2885 = vsel %vm78, %v260, %v931
  %v2886 = vsel %vm78, %v261, %v933
  %v2887 = vsel %vm78, %v262, %v935
  %v2888 = vsel %vm78, %v263, %v937
  %v2889 = vsel %vm78, %v264, %v939
  %v2890 = vsel %vm78, %v265, %v941
  %v2891 = vsel %vm78, %v266, %v943
  %v2892 = vsel %vm78, %v267, %v945
  %v2893 = vsel %vm78, %v268, %v947
  %v2894 = vsel %vm78, %v269, %v949
  %v2895 = vsel %vm78, %v270, %v951
  %v2896 = vsel %vm78, %v271, %v953
  %v2897 = vsel %vm78, %v272, %v955
  %v2898 = vsel %vm78, %v273, %v957
  %v2899 = vsel %vm78, %v274, %v959
  %v2900 = vsel %vm78, %v275, %v961
  %v2901 = vsel %vm78, %v276, %v963
  %v2902 = vsel %vm78, %v277, %v965
  %v2903 = vsel %vm78, %v278, %v967
  %v2904 = vsel %vm78, %v279, %v969
  %v2905 = vsel %vm78, %v280, %v971
  %v2906 = vsel %vm78, %v281, %v973
  %v2907 = vsel %vm78, %v282, %v975
  %v2908 = vsel %vm78, %v283, %v977
  %v2909 = vsel %vm78, %v284, %v979
  %v2910 = vsel %vm78, %v285, %v981
  %v2911 = vsel %vm78, %v286, %v983
  %v2912 = vsel %vm78, %v287, %v985
  %v2913 = vsel %vm78, %v288, %v987
  %v2914 = vsel %vm78, %v289, %v989
  %v2915 = vsel %vm78, %v290, %v991
  %v2916 = vsel %vm78, %v291, %v993
  %v2917 = vsel %vm78, %v292, %v995
  %v2918 = vsel %vm78, %v293, %v997
  %v2919 = vsel %vm78, %v294, %v999
  %vm2920 = vcmask 64512
  %v2921 = vsel %vm2920, %v2856, %v1129
  %v2922 = vsel %vm2920, %v2857, %v1131
  %v2923 = vsel %vm2920, %v2858, %v1133
  %v2924 = vsel %vm2920, %v2859, %v1135
  %v2925 = vsel %vm2920, %v2860, %v1137
  %v2926 = vsel %vm2920, %v2861, %v1139
  %v2927 = vsel %vm2920, %v2862, %v1141
  %v2928 = vsel %vm2920, %v2863, %v1143
  %v2929 = vsel %vm2920, %v2864, %v1145
  %v2930 = vsel %vm2920, %v2865, %v1147
  %v2931 = vsel %vm2920, %v2866, %v1149
  %v2932 = vsel %vm2920, %v2867, %v1151
  %v2933 = vsel %vm2920, %v2868, %v1153
  %v2934 = vsel %vm2920, %v2869, %v1155
  %v2935 = vsel %vm2920, %v2870, %v1157
  %v2936 = vsel %vm2920, %v2871, %v1159
  %v2937 = vsel %vm2920, %v2872, %v1161
  %v2938 = vsel %vm2920, %v2873, %v1163
  %v2939 = vsel %vm2920, %v2874, %v1165
  %v2940 = vsel %vm2920, %v2875, %v1167
  %v2941 = vsel %vm2920, %v2876, %v1169
  %v2942 = vsel %vm2920, %v2877, %v1171
  %v2943 = vsel %vm2920, %v2878, %v1173
  %v2944 = vsel %vm2920, %v2879, %v1175
  %v2945 = vsel %vm2920, %v2880, %v1177
  %v2946 = vsel %vm2920, %v2881, %v1179
  %v2947 = vsel %vm2920, %v2882, %v1181
  %v2948 = vsel %vm2920, %v2883, %v1183
  %v2949 = vsel %vm2920, %v2884, %v1185
  %v2950 = vsel %vm2920, %v2885, %v1187
  %v2951 = vsel %vm2920, %v2886, %v1189
  %v2952 = vsel %vm2920, %v2887, %v1191
  %v2953 = vsel %vm2920, %v2888, %v1193
  %v2954 = vsel %vm2920, %v2889, %v1195
  %v2955 = vsel %vm2920, %v2890, %v1197
  %v2956 = vsel %vm2920, %v2891, %v1199
  %v2957 = vsel %vm2920, %v2892, %v1201
  %v2958 = vsel %vm2920, %v2893, %v1203
  %v2959 = vsel %vm2920, %v2894, %v1205
  %v2960 = vsel %vm2920, %v2895, %v1207
  %v2961 = vsel %vm2920, %v2896, %v1209
  %v2962 = vsel %vm2920, %v2897, %v1211
  %v2963 = vsel %vm2920, %v2898, %v1213
  %v2964 = vsel %vm2920, %v2899, %v1215
  %v2965 = vsel %vm2920, %v2900, %v1217
  %v2966 = vsel %vm2920, %v2901, %v1219
  %v2967 = vsel %vm2920, %v2902, %v1221
  %v2968 = vsel %vm2920, %v2903, %v1223
  %v2969 = vsel %vm2920, %v2904, %v1225
  %v2970 = vsel %vm2920, %v2905, %v1227
  %v2971 = vsel %vm2920, %v2906, %v1229
  %v2972 = vsel %vm2920, %v2907, %v1231
  %v2973 = vsel %vm2920, %v2908, %v1233
  %v2974 = vsel %vm2920, %v2909, %v1235
  %v2975 = vsel %vm2920, %v2910, %v1237
  %v2976 = vsel %vm2920, %v2911, %v1239
  %v2977 = vsel %vm2920, %v2912, %v1241
  %v2978 = vsel %vm2920, %v2913, %v1243
  %v2979 = vsel %vm2920, %v2914, %v1245
  %v2980 = vsel %vm2920, %v2915, %v1247
  %v2981 = vsel %vm2920, %v2916, %v1249
  %v2982 = vsel %vm2920, %v2917, %v1251
  %v2983 = vsel %vm2920, %v2918, %v1253
  %v2984 = vsel %vm2920, %v2919, %v1255
  %vm2985 = vcmask 97280
  %v2986 = vsel %vm2985, %v2921, %v1385
  %v2987 = vsel %vm2985, %v2922, %v1387
  %v2988 = vsel %vm2985, %v2923, %v1389
  %v2989 = vsel %vm2985, %v2924, %v1391
  %v2990 = vsel %vm2985, %v2925, %v1393
  %v2991 = vsel %vm2985, %v2926, %v1395
  %v2992 = vsel %vm2985, %v2927, %v1397
  %v2993 = vsel %vm2985, %v2928, %v1399
  %v2994 = vsel %vm2985, %v2929, %v1401
  %v2995 = vsel %vm2985, %v2930, %v1403
  %v2996 = vsel %vm2985, %v2931, %v1405
  %v2997 = vsel %vm2985, %v2932, %v1407
  %v2998 = vsel %vm2985, %v2933, %v1409
  %v2999 = vsel %vm2985, %v2934, %v1411
  %v3000 = vsel %vm2985, %v2935, %v1413
  %v3001 = vsel %vm2985, %v2936, %v1415
  %v3002 = vsel %vm2985, %v2937, %v1417
  %v3003 = vsel %vm2985, %v2938, %v1419
  %v3004 = vsel %vm2985, %v2939, %v1421
  %v3005 = vsel %vm2985, %v2940, %v1423
  %v3006 = vsel %vm2985, %v2941, %v1425
  %v3007 = vsel %vm2985, %v2942, %v1427
  %v3008 = vsel %vm2985, %v2943, %v1429
  %v3009 = vsel %vm2985, %v2944, %v1431
  %v3010 = vsel %vm2985, %v2945, %v1433
  %v3011 = vsel %vm2985, %v2946, %v1435
  %v3012 = vsel %vm2985, %v2947, %v1437
  %v3013 = vsel %vm2985, %v2948, %v1439
  %v3014 = vsel %vm2985, %v2949, %v1441
  %v3015 = vsel %vm2985, %v2950, %v1443
  %v3016 = vsel %vm2985, %v2951, %v1445
  %v3017 = vsel %vm2985, %v2952, %v1447
  %v3018 = vsel %vm2985, %v2953, %v1449
  %v3019 = vsel %vm2985, %v2954, %v1451
  %v3020 = vsel %vm2985, %v2955, %v1453
  %v3021 = vsel %vm2985, %v2956, %v1455
  %v3022 = vsel %vm2985, %v2957, %v1457
  %v3023 = vsel %vm2985, %v2958, %v1459
  %v3024 = vsel %vm2985, %v2959, %v1461
  %v3025 = vsel %vm2985, %v2960, %v1463
  %v3026 = vsel %vm2985, %v2961, %v1465
  %v3027 = vsel %vm2985, %v2962, %v1467
  %v3028 = vsel %vm2985, %v2963, %v1469
  %v3029 = vsel %vm2985, %v2964, %v1471
  %v3030 = vsel %vm2985, %v2965, %v1473
  %v3031 = vsel %vm2985, %v2966, %v1475
  %v3032 = vsel %vm2985, %v2967, %v1477
  %v3033 = vsel %vm2985, %v2968, %v1479
  %v3034 = vsel %vm2985, %v2969, %v1481
  %v3035 = vsel %vm2985, %v2970, %v1483
  %v3036 = vsel %vm2985, %v2971, %v1485
  %v3037 = vsel %vm2985, %v2972, %v1487
  %v3038 = vsel %vm2985, %v2973, %v1489
  %v3039 = vsel %vm2985, %v2974, %v1491
  %v3040 = vsel %vm2985, %v2975, %v1493
  %v3041 = vsel %vm2985, %v2976, %v1495
  %v3042 = vsel %vm2985, %v2977, %v1497
  %v3043 = vsel %vm2985, %v2978, %v1499
  %v3044 = vsel %vm2985, %v2979, %v1501
  %v3045 = vsel %vm2985, %v2980, %v1503
  %v3046 = vsel %vm2985, %v2981, %v1505
  %v3047 = vsel %vm2985, %v2982, %v1507
  %v3048 = vsel %vm2985, %v2983, %v1509
  %v3049 = vsel %vm2985, %v2984, %v1511
  %vm3050 = vcmask 130048
  %v3051 = vsel %vm3050, %v2986, %v1641
  %v3052 = vsel %vm3050, %v2987, %v1643
  %v3053 = vsel %vm3050, %v2988, %v1645
  %v3054 = vsel %vm3050, %v2989, %v1647
  %v3055 = vsel %vm3050, %v2990, %v1649
  %v3056 = vsel %vm3050, %v2991, %v1651
  %v3057 = vsel %vm3050, %v2992, %v1653
  %v3058 = vsel %vm3050, %v2993, %v1655
  %v3059 = vsel %vm3050, %v2994, %v1657
  %v3060 = vsel %vm3050, %v2995, %v1659
  %v3061 = vsel %vm3050, %v2996, %v1661
  %v3062 = vsel %vm3050, %v2997, %v1663
  %v3063 = vsel %vm3050, %v2998, %v1665
  %v3064 = vsel %vm3050, %v2999, %v1667
  %v3065 = vsel %vm3050, %v3000, %v1669
  %v3066 = vsel %vm3050, %v3001, %v1671
  %v3067 = vsel %vm3050, %v3002, %v1673
  %v3068 = vsel %vm3050, %v3003, %v1675
  %v3069 = vsel %vm3050, %v3004, %v1677
  %v3070 = vsel %vm3050, %v3005, %v1679
  %v3071 = vsel %vm3050, %v3006, %v1681
  %v3072 = vsel %vm3050, %v3007, %v1683
  %v3073 = vsel %vm3050, %v3008, %v1685
  %v3074 = vsel %vm3050, %v3009, %v1687
  %v3075 = vsel %vm3050, %v3010, %v1689
  %v3076 = vsel %vm3050, %v3011, %v1691
  %v3077 = vsel %vm3050, %v3012, %v1693
  %v3078 = vsel %vm3050, %v3013, %v1695
  %v3079 = vsel %vm3050, %v3014, %v1697
  %v3080 = vsel %vm3050, %v3015, %v1699
  %v3081 = vsel %vm3050, %v3016, %v1701
  %v3082 = vsel %vm3050, %v3017, %v1703
  %v3083 = vsel %vm3050, %v3018, %v1705
  %v3084 = vsel %vm3050, %v3019, %v1707
  %v3085 = vsel %vm3050, %v3020, %v1709
  %v3086 = vsel %vm3050, %v3021, %v1711
  %v3087 = vsel %vm3050, %v3022, %v1713
  %v3088 = vsel %vm3050, %v3023, %v1715
  %v3089 = vsel %vm3050, %v3024, %v1717
  %v3090 = vsel %vm3050, %v3025, %v1719
  %v3091 = vsel %vm3050, %v3026, %v1721
  %v3092 = vsel %vm3050, %v3027, %v1723
  %v3093 = vsel %vm3050, %v3028, %v1725
  %v3094 = vsel %vm3050, %v3029, %v1727
  %v3095 = vsel %vm3050, %v3030, %v1729
  %v3096 = vsel %vm3050, %v3031, %v1731
  %v3097 = vsel %vm3050, %v3032, %v1733
  %v3098 = vsel %vm3050, %v3033, %v1735
  %v3099 = vsel %vm3050, %v3034, %v1737
  %v3100 = vsel %vm3050, %v3035, %v1739
  %v3101 = vsel %vm3050, %v3036, %v1741
  %v3102 = vsel %vm3050, %v3037, %v1743
  %v3103 = vsel %vm3050, %v3038, %v1745
  %v3104 = vsel %vm3050, %v3039, %v1747
  %v3105 = vsel %vm3050, %v3040, %v1749
  %v3106 = vsel %vm3050, %v3041, %v1751
  %v3107 = vsel %vm3050, %v3042, %v1753
  %v3108 = vsel %vm3050, %v3043, %v1755
  %v3109 = vsel %vm3050, %v3044, %v1757
  %v3110 = vsel %vm3050, %v3045, %v1759
  %v3111 = vsel %vm3050, %v3046, %v1761
  %v3112 = vsel %vm3050, %v3047, %v1763
  %v3113 = vsel %vm3050, %v3048, %v1765
  %v3114 = vsel %vm3050, %v3049, %v1767
  %vm3115 = vcmask 162816
  %v3116 = vsel %vm3115, %v3051, %v1897
  %v3117 = vsel %vm3115, %v3052, %v1899
  %v3118 = vsel %vm3115, %v3053, %v1901
  %v3119 = vsel %vm3115, %v3054, %v1903
  %v3120 = vsel %vm3115, %v3055, %v1905
  %v3121 = vsel %vm3115, %v3056, %v1907
  %v3122 = vsel %vm3115, %v3057, %v1909
  %v3123 = vsel %vm3115, %v3058, %v1911
  %v3124 = vsel %vm3115, %v3059, %v1913
  %v3125 = vsel %vm3115, %v3060, %v1915
  %v3126 = vsel %vm3115, %v3061, %v1917
  %v3127 = vsel %vm3115, %v3062, %v1919
  %v3128 = vsel %vm3115, %v3063, %v1921
  %v3129 = vsel %vm3115, %v3064, %v1923
  %v3130 = vsel %vm3115, %v3065, %v1925
  %v3131 = vsel %vm3115, %v3066, %v1927
  %v3132 = vsel %vm3115, %v3067, %v1929
  %v3133 = vsel %vm3115, %v3068, %v1931
  %v3134 = vsel %vm3115, %v3069, %v1933
  %v3135 = vsel %vm3115, %v3070, %v1935
  %v3136 = vsel %vm3115, %v3071, %v1937
  %v3137 = vsel %vm3115, %v3072, %v1939
  %v3138 = vsel %vm3115, %v3073, %v1941
  %v3139 = vsel %vm3115, %v3074, %v1943
  %v3140 = vsel %vm3115, %v3075, %v1945
  %v3141 = vsel %vm3115, %v3076, %v1947
  %v3142 = vsel %vm3115, %v3077, %v1949
  %v3143 = vsel %vm3115, %v3078, %v1951
  %v3144 = vsel %vm3115, %v3079, %v1953
  %v3145 = vsel %vm3115, %v3080, %v1955
  %v3146 = vsel %vm3115, %v3081, %v1957
  %v3147 = vsel %vm3115, %v3082, %v1959
  %v3148 = vsel %vm3115, %v3083, %v1961
  %v3149 = vsel %vm3115, %v3084, %v1963
  %v3150 = vsel %vm3115, %v3085, %v1965
  %v3151 = vsel %vm3115, %v3086, %v1967
  %v3152 = vsel %vm3115, %v3087, %v1969
  %v3153 = vsel %vm3115, %v3088, %v1971
  %v3154 = vsel %vm3115, %v3089, %v1973
  %v3155 = vsel %vm3115, %v3090, %v1975
  %v3156 = vsel %vm3115, %v3091, %v1977
  %v3157 = vsel %vm3115, %v3092, %v1979
  %v3158 = vsel %vm3115, %v3093, %v1981
  %v3159 = vsel %vm3115, %v3094, %v1983
  %v3160 = vsel %vm3115, %v3095, %v1985
  %v3161 = vsel %vm3115, %v3096, %v1987
  %v3162 = vsel %vm3115, %v3097, %v1989
  %v3163 = vsel %vm3115, %v3098, %v1991
  %v3164 = vsel %vm3115, %v3099, %v1993
  %v3165 = vsel %vm3115, %v3100, %v1995
  %v3166 = vsel %vm3115, %v3101, %v1997
  %v3167 = vsel %vm3115, %v3102, %v1999
  %v3168 = vsel %vm3115, %v3103, %v2001
  %v3169 = vsel %vm3115, %v3104, %v2003
  %v3170 = vsel %vm3115, %v3105, %v2005
  %v3171 = vsel %vm3115, %v3106, %v2007
  %v3172 = vsel %vm3115, %v3107, %v2009
  %v3173 = vsel %vm3115, %v3108, %v2011
  %v3174 = vsel %vm3115, %v3109, %v2013
  %v3175 = vsel %vm3115, %v3110, %v2015
  %v3176 = vsel %vm3115, %v3111, %v2017
  %v3177 = vsel %vm3115, %v3112, %v2019
  %v3178 = vsel %vm3115, %v3113, %v2021
  %v3179 = vsel %vm3115, %v3114, %v2023
  %vm3180 = vcmask 195584
  %v3181 = vsel %vm3180, %v3116, %v2153
  %v3182 = vsel %vm3180, %v3117, %v2155
  %v3183 = vsel %vm3180, %v3118, %v2157
  %v3184 = vsel %vm3180, %v3119, %v2159
  %v3185 = vsel %vm3180, %v3120, %v2161
  %v3186 = vsel %vm3180, %v3121, %v2163
  %v3187 = vsel %vm3180, %v3122, %v2165
  %v3188 = vsel %vm3180, %v3123, %v2167
  %v3189 = vsel %vm3180, %v3124, %v2169
  %v3190 = vsel %vm3180, %v3125, %v2171
  %v3191 = vsel %vm3180, %v3126, %v2173
  %v3192 = vsel %vm3180, %v3127, %v2175
  %v3193 = vsel %vm3180, %v3128, %v2177
  %v3194 = vsel %vm3180, %v3129, %v2179
  %v3195 = vsel %vm3180, %v3130, %v2181
  %v3196 = vsel %vm3180, %v3131, %v2183
  %v3197 = vsel %vm3180, %v3132, %v2185
  %v3198 = vsel %vm3180, %v3133, %v2187
  %v3199 = vsel %vm3180, %v3134, %v2189
  %v3200 = vsel %vm3180, %v3135, %v2191
  %v3201 = vsel %vm3180, %v3136, %v2193
  %v3202 = vsel %vm3180, %v3137, %v2195
  %v3203 = vsel %vm3180, %v3138, %v2197
  %v3204 = vsel %vm3180, %v3139, %v2199
  %v3205 = vsel %vm3180, %v3140, %v2201
  %v3206 = vsel %vm3180, %v3141, %v2203
  %v3207 = vsel %vm3180, %v3142, %v2205
  %v3208 = vsel %vm3180, %v3143, %v2207
  %v3209 = vsel %vm3180, %v3144, %v2209
  %v3210 = vsel %vm3180, %v3145, %v2211
  %v3211 = vsel %vm3180, %v3146, %v2213
  %v3212 = vsel %vm3180, %v3147, %v2215
  %v3213 = vsel %vm3180, %v3148, %v2217
  %v3214 = vsel %vm3180, %v3149, %v2219
  %v3215 = vsel %vm3180, %v3150, %v2221
  %v3216 = vsel %vm3180, %v3151, %v2223
  %v3217 = vsel %vm3180, %v3152, %v2225
  %v3218 = vsel %vm3180, %v3153, %v2227
  %v3219 = vsel %vm3180, %v3154, %v2229
  %v3220 = vsel %vm3180, %v3155, %v2231
  %v3221 = vsel %vm3180, %v3156, %v2233
  %v3222 = vsel %vm3180, %v3157, %v2235
  %v3223 = vsel %vm3180, %v3158, %v2237
  %v3224 = vsel %vm3180, %v3159, %v2239
  %v3225 = vsel %vm3180, %v3160, %v2241
  %v3226 = vsel %vm3180, %v3161, %v2243
  %v3227 = vsel %vm3180, %v3162, %v2245
  %v3228 = vsel %vm3180, %v3163, %v2247
  %v3229 = vsel %vm3180, %v3164, %v2249
  %v3230 = vsel %vm3180, %v3165, %v2251
  %v3231 = vsel %vm3180, %v3166, %v2253
  %v3232 = vsel %vm3180, %v3167, %v2255
  %v3233 = vsel %vm3180, %v3168, %v2257
  %v3234 = vsel %vm3180, %v3169, %v2259
  %v3235 = vsel %vm3180, %v3170, %v2261
  %v3236 = vsel %vm3180, %v3171, %v2263
  %v3237 = vsel %vm3180, %v3172, %v2265
  %v3238 = vsel %vm3180, %v3173, %v2267
  %v3239 = vsel %vm3180, %v3174, %v2269
  %v3240 = vsel %vm3180, %v3175, %v2271
  %v3241 = vsel %vm3180, %v3176, %v2273
  %v3242 = vsel %vm3180, %v3177, %v2275
  %v3243 = vsel %vm3180, %v3178, %v2277
  %v3244 = vsel %vm3180, %v3179, %v2279
  %vm3245 = vcmask 228352
  %v3246 = vsel %vm3245, %v3181, %v2409
  %v3247 = vsel %vm3245, %v3182, %v2411
  %v3248 = vsel %vm3245, %v3183, %v2413
  %v3249 = vsel %vm3245, %v3184, %v2415
  %v3250 = vsel %vm3245, %v3185, %v2417
  %v3251 = vsel %vm3245, %v3186, %v2419
  %v3252 = vsel %vm3245, %v3187, %v2421
  %v3253 = vsel %vm3245, %v3188, %v2423
  %v3254 = vsel %vm3245, %v3189, %v2425
  %v3255 = vsel %vm3245, %v3190, %v2427
  %v3256 = vsel %vm3245, %v3191, %v2429
  %v3257 = vsel %vm3245, %v3192, %v2431
  %v3258 = vsel %vm3245, %v3193, %v2433
  %v3259 = vsel %vm3245, %v3194, %v2435
  %v3260 = vsel %vm3245, %v3195, %v2437
  %v3261 = vsel %vm3245, %v3196, %v2439
  %v3262 = vsel %vm3245, %v3197, %v2441
  %v3263 = vsel %vm3245, %v3198, %v2443
  %v3264 = vsel %vm3245, %v3199, %v2445
  %v3265 = vsel %vm3245, %v3200, %v2447
  %v3266 = vsel %vm3245, %v3201, %v2449
  %v3267 = vsel %vm3245, %v3202, %v2451
  %v3268 = vsel %vm3245, %v3203, %v2453
  %v3269 = vsel %vm3245, %v3204, %v2455
  %v3270 = vsel %vm3245, %v3205, %v2457
  %v3271 = vsel %vm3245, %v3206, %v2459
  %v3272 = vsel %vm3245, %v3207, %v2461
  %v3273 = vsel %vm3245, %v3208, %v2463
  %v3274 = vsel %vm3245, %v3209, %v2465
  %v3275 = vsel %vm3245, %v3210, %v2467
  %v3276 = vsel %vm3245, %v3211, %v2469
  %v3277 = vsel %vm3245, %v3212, %v2471
  %v3278 = vsel %vm3245, %v3213, %v2473
  %v3279 = vsel %vm3245, %v3214, %v2475
  %v3280 = vsel %vm3245, %v3215, %v2477
  %v3281 = vsel %vm3245, %v3216, %v2479
  %v3282 = vsel %vm3245, %v3217, %v2481
  %v3283 = vsel %vm3245, %v3218, %v2483
  %v3284 = vsel %vm3245, %v3219, %v2485
  %v3285 = vsel %vm3245, %v3220, %v2487
  %v3286 = vsel %vm3245, %v3221, %v2489
  %v3287 = vsel %vm3245, %v3222, %v2491
  %v3288 = vsel %vm3245, %v3223, %v2493
  %v3289 = vsel %vm3245, %v3224, %v2495
  %v3290 = vsel %vm3245, %v3225, %v2497
  %v3291 = vsel %vm3245, %v3226, %v2499
  %v3292 = vsel %vm3245, %v3227, %v2501
  %v3293 = vsel %vm3245, %v3228, %v2503
  %v3294 = vsel %vm3245, %v3229, %v2505
  %v3295 = vsel %vm3245, %v3230, %v2507
  %v3296 = vsel %vm3245, %v3231, %v2509
  %v3297 = vsel %vm3245, %v3232, %v2511
  %v3298 = vsel %vm3245, %v3233, %v2513
  %v3299 = vsel %vm3245, %v3234, %v2515
  %v3300 = vsel %vm3245, %v3235, %v2517
  %v3301 = vsel %vm3245, %v3236, %v2519
  %v3302 = vsel %vm3245, %v3237, %v2521
  %v3303 = vsel %vm3245, %v3238, %v2523
  %v3304 = vsel %vm3245, %v3239, %v2525
  %v3305 = vsel %vm3245, %v3240, %v2527
  %v3306 = vsel %vm3245, %v3241, %v2529
  %v3307 = vsel %vm3245, %v3242, %v2531
  %v3308 = vsel %vm3245, %v3243, %v2533
  %v3309 = vsel %vm3245, %v3244, %v2535
  %vm3310 = vcmask 261120
  %v3311 = vsel %vm3310, %v3246, %v2665
  %v3312 = vsel %vm3310, %v3247, %v2667
  %v3313 = vsel %vm3310, %v3248, %v2669
  %v3314 = vsel %vm3310, %v3249, %v2671
  %v3315 = vsel %vm3310, %v3250, %v2673
  %v3316 = vsel %vm3310, %v3251, %v2675
  %v3317 = vsel %vm3310, %v3252, %v2677
  %v3318 = vsel %vm3310, %v3253, %v2679
  %v3319 = vsel %vm3310, %v3254, %v2681
  %v3320 = vsel %vm3310, %v3255, %v2683
  %v3321 = vsel %vm3310, %v3256, %v2685
  %v3322 = vsel %vm3310, %v3257, %v2687
  %v3323 = vsel %vm3310, %v3258, %v2689
  %v3324 = vsel %vm3310, %v3259, %v2691
  %v3325 = vsel %vm3310, %v3260, %v2693
  %v3326 = vsel %vm3310, %v3261, %v2695
  %v3327 = vsel %vm3310, %v3262, %v2697
  %v3328 = vsel %vm3310, %v3263, %v2699
  %v3329 = vsel %vm3310, %v3264, %v2701
  %v3330 = vsel %vm3310, %v3265, %v2703
  %v3331 = vsel %vm3310, %v3266, %v2705
  %v3332 = vsel %vm3310, %v3267, %v2707
  %v3333 = vsel %vm3310, %v3268, %v2709
  %v3334 = vsel %vm3310, %v3269, %v2711
  %v3335 = vsel %vm3310, %v3270, %v2713
  %v3336 = vsel %vm3310, %v3271, %v2715
  %v3337 = vsel %vm3310, %v3272, %v2717
  %v3338 = vsel %vm3310, %v3273, %v2719
  %v3339 = vsel %vm3310, %v3274, %v2721
  %v3340 = vsel %vm3310, %v3275, %v2723
  %v3341 = vsel %vm3310, %v3276, %v2725
  %v3342 = vsel %vm3310, %v3277, %v2727
  %v3343 = vsel %vm3310, %v3278, %v2729
  %v3344 = vsel %vm3310, %v3279, %v2731
  %v3345 = vsel %vm3310, %v3280, %v2733
  %v3346 = vsel %vm3310, %v3281, %v2735
  %v3347 = vsel %vm3310, %v3282, %v2737
  %v3348 = vsel %vm3310, %v3283, %v2739
  %v3349 = vsel %vm3310, %v3284, %v2741
  %v3350 = vsel %vm3310, %v3285, %v2743
  %v3351 = vsel %vm3310, %v3286, %v2745
  %v3352 = vsel %vm3310, %v3287, %v2747
  %v3353 = vsel %vm3310, %v3288, %v2749
  %v3354 = vsel %vm3310, %v3289, %v2751
  %v3355 = vsel %vm3310, %v3290, %v2753
  %v3356 = vsel %vm3310, %v3291, %v2755
  %v3357 = vsel %vm3310, %v3292, %v2757
  %v3358 = vsel %vm3310, %v3293, %v2759
  %v3359 = vsel %vm3310, %v3294, %v2761
  %v3360 = vsel %vm3310, %v3295, %v2763
  %v3361 = vsel %vm3310, %v3296, %v2765
  %v3362 = vsel %vm3310, %v3297, %v2767
  %v3363 = vsel %vm3310, %v3298, %v2769
  %v3364 = vsel %vm3310, %v3299, %v2771
  %v3365 = vsel %vm3310, %v3300, %v2773
  %v3366 = vsel %vm3310, %v3301, %v2775
  %v3367 = vsel %vm3310, %v3302, %v2777
  %v3368 = vsel %vm3310, %v3303, %v2779
  %v3369 = vsel %vm3310, %v3304, %v2781
  %v3370 = vsel %vm3310, %v3305, %v2783
  %v3371 = vsel %vm3310, %v3306, %v2785
  %v3372 = vsel %vm3310, %v3307, %v2787
  %v3373 = vsel %vm3310, %v3308, %v2789
  %v3374 = vsel %vm3310, %v3309, %v2791
  %v3375 = vld [vmem:[%s1] sm:$0xff]
  %v3376 = vld [vmem:[%s1 + $0x8] sm:$0xff]
  %v3377 = vld [vmem:[%s1 + $0x10] sm:$0xff]
  %v3378 = vld [vmem:[%s1 + $0x18] sm:$0xff]
  %v3379 = vld [vmem:[%s1 + $0x20] sm:$0xf]
  %vm3380 = vcmask 293888
  %v3382 = vsel %vm3380, %v3311, 0
  %v3385 = vsel %vm3380, %v3312, 0
  %v3388 = vsel %vm3380, %v3313, 0
  %v3391 = vsel %vm3380, %v3314, 0
  %v3394 = vsel %vm3380, %v3315, 0
  %v3397 = vsel %vm3380, %v3316, 0
  %v3400 = vsel %vm3380, %v3317, 0
  %v3403 = vsel %vm3380, %v3318, 0
  %v3406 = vsel %vm3380, %v3319, 0
  %v3409 = vsel %vm3380, %v3320, 0
  %v3412 = vsel %vm3380, %v3321, 0
  %v3415 = vsel %vm3380, %v3322, 0
  %v3418 = vsel %vm3380, %v3323, 0
  %v3421 = vsel %vm3380, %v3324, 0
  %v3424 = vsel %vm3380, %v3325, 0
  %v3427 = vsel %vm3380, %v3326, 0
  %v3430 = vsel %vm3380, %v3327, 0
  %v3433 = vsel %vm3380, %v3328, 0
  %v3436 = vsel %vm3380, %v3329, 0
  %v3439 = vsel %vm3380, %v3330, 0
  %v3442 = vsel %vm3380, %v3331, 0
  %v3445 = vsel %vm3380, %v3332, 0
  %v3448 = vsel %vm3380, %v3333, 0
  %v3451 = vsel %vm3380, %v3334, 0
  %v3454 = vsel %vm3380, %v3335, 0
  %v3457 = vsel %vm3380, %v3336, 0
  %v3460 = vsel %vm3380, %v3337, 0
  %v3463 = vsel %vm3380, %v3338, 0
  %v3466 = vsel %vm3380, %v3339, 0
  %v3469 = vsel %vm3380, %v3340, 0
  %v3472 = vsel %vm3380, %v3341, 0
  %v3475 = vsel %vm3380, %v3342, 0
  %v3478 = vsel %vm3380, %v3343, 0
  %v3481 = vsel %vm3380, %v3344, 0
  %v3484 = vsel %vm3380, %v3345, 0
  %v3487 = vsel %vm3380, %v3346, 0
  %v3490 = vsel %vm3380, %v3347, 0
  %v3493 = vsel %vm3380, %v3348, 0
  %v3496 = vsel %vm3380, %v3349, 0
  %v3499 = vsel %vm3380, %v3350, 0
  %v3502 = vsel %vm3380, %v3351, 0
  %v3505 = vsel %vm3380, %v3352, 0
  %v3508 = vsel %vm3380, %v3353, 0
  %v3511 = vsel %vm3380, %v3354, 0
  %v3514 = vsel %vm3380, %v3355, 0
  %v3517 = vsel %vm3380, %v3356, 0
  %v3520 = vsel %vm3380, %v3357, 0
  %v3523 = vsel %vm3380, %v3358, 0
  %v3526 = vsel %vm3380, %v3359, 0
  %v3529 = vsel %vm3380, %v3360, 0
  %v3532 = vsel %vm3380, %v3361, 0
  %v3535 = vsel %vm3380, %v3362, 0
  %v3538 = vsel %vm3380, %v3363, 0
  %v3541 = vsel %vm3380, %v3364, 0
  %v3544 = vsel %vm3380, %v3365, 0
  %v3547 = vsel %vm3380, %v3366, 0
  %v3550 = vsel %vm3380, %v3367, 0
  %v3553 = vsel %vm3380, %v3368, 0
  %v3556 = vsel %vm3380, %v3369, 0
  %v3559 = vsel %vm3380, %v3370, 0
  %v3562 = vsel %vm3380, %v3371, 0
  %v3565 = vsel %vm3380, %v3372, 0
  %v3568 = vsel %vm3380, %v3373, 0
  %v3571 = vsel %vm3380, %v3374, 0
  %vm3573 = vcmask 1043456
  %v3575 = vsel %vm3573, %v3379, 0
  %3577 = vmatpush.msra.mxu0 0.0
  %3578 = vmatpush.msra.mxu0 0.0
  %3579 = vmatpush.msra.mxu0 0.0
  %3580 = vmatpush.msra.mxu0 0.0
  %3581 = vmatpush.msra.mxu0 0.0
  %3582 = vmatpush.msra.mxu0 0.0
  %3583 = vmatpush.msra.mxu0 0.0
  %3584 = vmatpush.msra.mxu0 0.0
  %3585 = vmatpush.msra.mxu0 0.0
  %3586 = vmatpush.msra.mxu0 0.0
  %3587 = vmatpush.msra.mxu0 0.0
  %3588 = vmatpush.msra.mxu0 %v3575
  %3589 = vmatpush.msra.mxu0 %v3378
  %3590 = vmatpush.msra.mxu0 %v3377
  %3591 = vmatpush.msra.mxu0 %v3376
  %3592 = vmatpush.msra.mxu0 %v3375
  %3593 = vmatmul.f32.gmra.mxu0 %v3382
  %v3594 = vpop.f32.mrf.mxu0
  %v3595 = vadd.f32 0.0, %v3594
  %3596 = vmatmul.f32.gmra.mxu0 %v3385
  %v3597 = vpop.f32.mrf.mxu0
  %v3598 = vadd.f32 0.0, %v3597
  %3599 = vmatmul.f32.gmra.mxu0 %v3388
  %v3600 = vpop.f32.mrf.mxu0
  %v3601 = vadd.f32 0.0, %v3600
  %3602 = vmatmul.f32.gmra.mxu0 %v3391
  %v3603 = vpop.f32.mrf.mxu0
  %v3604 = vadd.f32 0.0, %v3603
  %3605 = vmatmul.f32.gmra.mxu0 %v3394
  %v3606 = vpop.f32.mrf.mxu0
  %v3607 = vadd.f32 0.0, %v3606
  %3608 = vmatmul.f32.gmra.mxu0 %v3397
  %v3609 = vpop.f32.mrf.mxu0
  %v3610 = vadd.f32 0.0, %v3609
  %3611 = vmatmul.f32.gmra.mxu0 %v3400
  %v3612 = vpop.f32.mrf.mxu0
  %v3613 = vadd.f32 0.0, %v3612
  %3614 = vmatmul.f32.gmra.mxu0 %v3403
  %v3615 = vpop.f32.mrf.mxu0
  %v3616 = vadd.f32 0.0, %v3615
  %3617 = vmatmul.f32.gmra.mxu0 %v3406
  %v3618 = vpop.f32.mrf.mxu0
  %v3619 = vadd.f32 0.0, %v3618
  %3620 = vmatmul.f32.gmra.mxu0 %v3409
  %v3621 = vpop.f32.mrf.mxu0
  %v3622 = vadd.f32 0.0, %v3621
  %3623 = vmatmul.f32.gmra.mxu0 %v3412
  %v3624 = vpop.f32.mrf.mxu0
  %v3625 = vadd.f32 0.0, %v3624
  %3626 = vmatmul.f32.gmra.mxu0 %v3415
  %v3627 = vpop.f32.mrf.mxu0
  %v3628 = vadd.f32 0.0, %v3627
  %3629 = vmatmul.f32.gmra.mxu0 %v3418
  %v3630 = vpop.f32.mrf.mxu0
  %v3631 = vadd.f32 0.0, %v3630
  %3632 = vmatmul.f32.gmra.mxu0 %v3421
  %v3633 = vpop.f32.mrf.mxu0
  %v3634 = vadd.f32 0.0, %v3633
  %3635 = vmatmul.f32.gmra.mxu0 %v3424
  %v3636 = vpop.f32.mrf.mxu0
  %v3637 = vadd.f32 0.0, %v3636
  %3638 = vmatmul.f32.gmra.mxu0 %v3427
  %v3639 = vpop.f32.mrf.mxu0
  %v3640 = vadd.f32 0.0, %v3639
  %3641 = vmatmul.f32.gmra.mxu0 %v3430
  %v3642 = vpop.f32.mrf.mxu0
  %v3643 = vadd.f32 0.0, %v3642
  %3644 = vmatmul.f32.gmra.mxu0 %v3433
  %v3645 = vpop.f32.mrf.mxu0
  %v3646 = vadd.f32 0.0, %v3645
  %3647 = vmatmul.f32.gmra.mxu0 %v3436
  %v3648 = vpop.f32.mrf.mxu0
  %v3649 = vadd.f32 0.0, %v3648
  %3650 = vmatmul.f32.gmra.mxu0 %v3439
  %v3651 = vpop.f32.mrf.mxu0
  %v3652 = vadd.f32 0.0, %v3651
  %3653 = vmatmul.f32.gmra.mxu0 %v3442
  %v3654 = vpop.f32.mrf.mxu0
  %v3655 = vadd.f32 0.0, %v3654
  %3656 = vmatmul.f32.gmra.mxu0 %v3445
  %v3657 = vpop.f32.mrf.mxu0
  %v3658 = vadd.f32 0.0, %v3657
  %3659 = vmatmul.f32.gmra.mxu0 %v3448
  %v3660 = vpop.f32.mrf.mxu0
  %v3661 = vadd.f32 0.0, %v3660
  %3662 = vmatmul.f32.gmra.mxu0 %v3451
  %v3663 = vpop.f32.mrf.mxu0
  %v3664 = vadd.f32 0.0, %v3663
  %3665 = vmatmul.f32.gmra.mxu0 %v3454
  %v3666 = vpop.f32.mrf.mxu0
  %v3667 = vadd.f32 0.0, %v3666
  %3668 = vmatmul.f32.gmra.mxu0 %v3457
  %v3669 = vpop.f32.mrf.mxu0
  %v3670 = vadd.f32 0.0, %v3669
  %3671 = vmatmul.f32.gmra.mxu0 %v3460
  %v3672 = vpop.f32.mrf.mxu0
  %v3673 = vadd.f32 0.0, %v3672
  %3674 = vmatmul.f32.gmra.mxu0 %v3463
  %v3675 = vpop.f32.mrf.mxu0
  %v3676 = vadd.f32 0.0, %v3675
  %3677 = vmatmul.f32.gmra.mxu0 %v3466
  %v3678 = vpop.f32.mrf.mxu0
  %v3679 = vadd.f32 0.0, %v3678
  %3680 = vmatmul.f32.gmra.mxu0 %v3469
  %v3681 = vpop.f32.mrf.mxu0
  %v3682 = vadd.f32 0.0, %v3681
  %3683 = vmatmul.f32.gmra.mxu0 %v3472
  %v3684 = vpop.f32.mrf.mxu0
  %v3685 = vadd.f32 0.0, %v3684
  %3686 = vmatmul.f32.gmra.mxu0 %v3475
  %v3687 = vpop.f32.mrf.mxu0
  %v3688 = vadd.f32 0.0, %v3687
  %3689 = vmatmul.f32.gmra.mxu0 %v3478
  %v3690 = vpop.f32.mrf.mxu0
  %v3691 = vadd.f32 0.0, %v3690
  %3692 = vmatmul.f32.gmra.mxu0 %v3481
  %v3693 = vpop.f32.mrf.mxu0
  %v3694 = vadd.f32 0.0, %v3693
  %3695 = vmatmul.f32.gmra.mxu0 %v3484
  %v3696 = vpop.f32.mrf.mxu0
  %v3697 = vadd.f32 0.0, %v3696
  %3698 = vmatmul.f32.gmra.mxu0 %v3487
  %v3699 = vpop.f32.mrf.mxu0
  %v3700 = vadd.f32 0.0, %v3699
  %3701 = vmatmul.f32.gmra.mxu0 %v3490
  %v3702 = vpop.f32.mrf.mxu0
  %v3703 = vadd.f32 0.0, %v3702
  %3704 = vmatmul.f32.gmra.mxu0 %v3493
  %v3705 = vpop.f32.mrf.mxu0
  %v3706 = vadd.f32 0.0, %v3705
  %3707 = vmatmul.f32.gmra.mxu0 %v3496
  %v3708 = vpop.f32.mrf.mxu0
  %v3709 = vadd.f32 0.0, %v3708
  %3710 = vmatmul.f32.gmra.mxu0 %v3499
  %v3711 = vpop.f32.mrf.mxu0
  %v3712 = vadd.f32 0.0, %v3711
  %3713 = vmatmul.f32.gmra.mxu0 %v3502
  %v3714 = vpop.f32.mrf.mxu0
  %v3715 = vadd.f32 0.0, %v3714
  %3716 = vmatmul.f32.gmra.mxu0 %v3505
  %v3717 = vpop.f32.mrf.mxu0
  %v3718 = vadd.f32 0.0, %v3717
  %3719 = vmatmul.f32.gmra.mxu0 %v3508
  %v3720 = vpop.f32.mrf.mxu0
  %v3721 = vadd.f32 0.0, %v3720
  %3722 = vmatmul.f32.gmra.mxu0 %v3511
  %v3723 = vpop.f32.mrf.mxu0
  %v3724 = vadd.f32 0.0, %v3723
  %3725 = vmatmul.f32.gmra.mxu0 %v3514
  %v3726 = vpop.f32.mrf.mxu0
  %v3727 = vadd.f32 0.0, %v3726
  %3728 = vmatmul.f32.gmra.mxu0 %v3517
  %v3729 = vpop.f32.mrf.mxu0
  %v3730 = vadd.f32 0.0, %v3729
  %3731 = vmatmul.f32.gmra.mxu0 %v3520
  %v3732 = vpop.f32.mrf.mxu0
  %v3733 = vadd.f32 0.0, %v3732
  %3734 = vmatmul.f32.gmra.mxu0 %v3523
  %v3735 = vpop.f32.mrf.mxu0
  %v3736 = vadd.f32 0.0, %v3735
  %3737 = vmatmul.f32.gmra.mxu0 %v3526
  %v3738 = vpop.f32.mrf.mxu0
  %v3739 = vadd.f32 0.0, %v3738
  %3740 = vmatmul.f32.gmra.mxu0 %v3529
  %v3741 = vpop.f32.mrf.mxu0
  %v3742 = vadd.f32 0.0, %v3741
  %3743 = vmatmul.f32.gmra.mxu0 %v3532
  %v3744 = vpop.f32.mrf.mxu0
  %v3745 = vadd.f32 0.0, %v3744
  %3746 = vmatmul.f32.gmra.mxu0 %v3535
  %v3747 = vpop.f32.mrf.mxu0
  %v3748 = vadd.f32 0.0, %v3747
  %3749 = vmatmul.f32.gmra.mxu0 %v3538
  %v3750 = vpop.f32.mrf.mxu0
  %v3751 = vadd.f32 0.0, %v3750
  %3752 = vmatmul.f32.gmra.mxu0 %v3541
  %v3753 = vpop.f32.mrf.mxu0
  %v3754 = vadd.f32 0.0, %v3753
  %3755 = vmatmul.f32.gmra.mxu0 %v3544
  %v3756 = vpop.f32.mrf.mxu0
  %v3757 = vadd.f32 0.0, %v3756
  %3758 = vmatmul.f32.gmra.mxu0 %v3547
  %v3759 = vpop.f32.mrf.mxu0
  %v3760 = vadd.f32 0.0, %v3759
  %3761 = vmatmul.f32.gmra.mxu0 %v3550
  %v3762 = vpop.f32.mrf.mxu0
  %v3763 = vadd.f32 0.0, %v3762
  %3764 = vmatmul.f32.gmra.mxu0 %v3553
  %v3765 = vpop.f32.mrf.mxu0
  %v3766 = vadd.f32 0.0, %v3765
  %3767 = vmatmul.f32.gmra.mxu0 %v3556
  %v3768 = vpop.f32.mrf.mxu0
  %v3769 = vadd.f32 0.0, %v3768
  %3770 = vmatmul.f32.gmra.mxu0 %v3559
  %v3771 = vpop.f32.mrf.mxu0
  %v3772 = vadd.f32 0.0, %v3771
  %3773 = vmatmul.f32.gmra.mxu0 %v3562
  %v3774 = vpop.f32.mrf.mxu0
  %v3775 = vadd.f32 0.0, %v3774
  %3776 = vmatmul.f32.gmra.mxu0 %v3565
  %v3777 = vpop.f32.mrf.mxu0
  %v3778 = vadd.f32 0.0, %v3777
  %3779 = vmatmul.f32.gmra.mxu0 %v3568
  %v3780 = vpop.f32.mrf.mxu0
  %v3781 = vadd.f32 0.0, %v3780
  %3782 = vmatmul.f32.gmra.mxu0 %v3571
  %v3783 = vpop.f32.mrf.mxu0
  %v3784 = vadd.f32 0.0, %v3783
  %3785 = vdwg.mxu0
  %3786 = vst.msk [vmem:[%s2] sm:$0xff] %vm2920, %v3595
  %3787 = vst.msk [vmem:[%s2 + $0x8] sm:$0xff] %vm2920, %v3598
  %3788 = vst.msk [vmem:[%s2 + $0x10] sm:$0xff] %vm2920, %v3601
  %3789 = vst.msk [vmem:[%s2 + $0x18] sm:$0xff] %vm2920, %v3604
  %3790 = vst.msk [vmem:[%s2 + $0x20] sm:$0xff] %vm2920, %v3607
  %3791 = vst.msk [vmem:[%s2 + $0x28] sm:$0xff] %vm2920, %v3610
  %3792 = vst.msk [vmem:[%s2 + $0x30] sm:$0xff] %vm2920, %v3613
  %3793 = vst.msk [vmem:[%s2 + $0x38] sm:$0xff] %vm2920, %v3616
  %3794 = vst.msk [vmem:[%s2 + $0x40] sm:$0xff] %vm2920, %v3619
  %3795 = vst.msk [vmem:[%s2 + $0x48] sm:$0xff] %vm2920, %v3622
  %3796 = vst.msk [vmem:[%s2 + $0x50] sm:$0xff] %vm2920, %v3625
  %3797 = vst.msk [vmem:[%s2 + $0x58] sm:$0xff] %vm2920, %v3628
  %3798 = vst.msk [vmem:[%s2 + $0x60] sm:$0xff] %vm2920, %v3631
  %3799 = vst.msk [vmem:[%s2 + $0x68] sm:$0xff] %vm2920, %v3634
  %3800 = vst.msk [vmem:[%s2 + $0x70] sm:$0xff] %vm2920, %v3637
  %3801 = vst.msk [vmem:[%s2 + $0x78] sm:$0xff] %vm2920, %v3640
  %3802 = vst.msk [vmem:[%s2 + $0x80] sm:$0xff] %vm2920, %v3643
  %3803 = vst.msk [vmem:[%s2 + $0x88] sm:$0xff] %vm2920, %v3646
  %3804 = vst.msk [vmem:[%s2 + $0x90] sm:$0xff] %vm2920, %v3649
  %3805 = vst.msk [vmem:[%s2 + $0x98] sm:$0xff] %vm2920, %v3652
  %3806 = vst.msk [vmem:[%s2 + $0xa0] sm:$0xff] %vm2920, %v3655
  %3807 = vst.msk [vmem:[%s2 + $0xa8] sm:$0xff] %vm2920, %v3658
  %3808 = vst.msk [vmem:[%s2 + $0xb0] sm:$0xff] %vm2920, %v3661
  %3809 = vst.msk [vmem:[%s2 + $0xb8] sm:$0xff] %vm2920, %v3664
  %3810 = vst.msk [vmem:[%s2 + $0xc0] sm:$0xff] %vm2920, %v3667
  %3811 = vst.msk [vmem:[%s2 + $0xc8] sm:$0xff] %vm2920, %v3670
  %3812 = vst.msk [vmem:[%s2 + $0xd0] sm:$0xff] %vm2920, %v3673
  %3813 = vst.msk [vmem:[%s2 + $0xd8] sm:$0xff] %vm2920, %v3676
  %3814 = vst.msk [vmem:[%s2 + $0xe0] sm:$0xff] %vm2920, %v3679
  %3815 = vst.msk [vmem:[%s2 + $0xe8] sm:$0xff] %vm2920, %v3682
  %3816 = vst.msk [vmem:[%s2 + $0xf0] sm:$0xff] %vm2920, %v3685
  %3817 = vst.msk [vmem:[%s2 + $0xf8] sm:$0xff] %vm2920, %v3688
  %3818 = vst.msk [vmem:[%s2 + $0x100] sm:$0xff] %vm2920, %v3691
  %3819 = vst.msk [vmem:[%s2 + $0x108] sm:$0xff] %vm2920, %v3694
  %3820 = vst.msk [vmem:[%s2 + $0x110] sm:$0xff] %vm2920, %v3697
  %3821 = vst.msk [vmem:[%s2 + $0x118] sm:$0xff] %vm2920, %v3700
  %3822 = vst.msk [vmem:[%s2 + $0x120] sm:$0xff] %vm2920, %v3703
  %3823 = vst.msk [vmem:[%s2 + $0x128] sm:$0xff] %vm2920, %v3706
  %3824 = vst.msk [vmem:[%s2 + $0x130] sm:$0xff] %vm2920, %v3709
  %3825 = vst.msk [vmem:[%s2 + $0x138] sm:$0xff] %vm2920, %v3712
  %3826 = vst.msk [vmem:[%s2 + $0x140] sm:$0xff] %vm2920, %v3715
  %3827 = vst.msk [vmem:[%s2 + $0x148] sm:$0xff] %vm2920, %v3718
  %3828 = vst.msk [vmem:[%s2 + $0x150] sm:$0xff] %vm2920, %v3721
  %3829 = vst.msk [vmem:[%s2 + $0x158] sm:$0xff] %vm2920, %v3724
  %3830 = vst.msk [vmem:[%s2 + $0x160] sm:$0xff] %vm2920, %v3727
  %3831 = vst.msk [vmem:[%s2 + $0x168] sm:$0xff] %vm2920, %v3730
  %3832 = vst.msk [vmem:[%s2 + $0x170] sm:$0xff] %vm2920, %v3733
  %3833 = vst.msk [vmem:[%s2 + $0x178] sm:$0xff] %vm2920, %v3736
  %3834 = vst.msk [vmem:[%s2 + $0x180] sm:$0xff] %vm2920, %v3739
  %3835 = vst.msk [vmem:[%s2 + $0x188] sm:$0xff] %vm2920, %v3742
  %3836 = vst.msk [vmem:[%s2 + $0x190] sm:$0xff] %vm2920, %v3745
  %3837 = vst.msk [vmem:[%s2 + $0x198] sm:$0xff] %vm2920, %v3748
  %3838 = vst.msk [vmem:[%s2 + $0x1a0] sm:$0xff] %vm2920, %v3751
  %3839 = vst.msk [vmem:[%s2 + $0x1a8] sm:$0xff] %vm2920, %v3754
  %3840 = vst.msk [vmem:[%s2 + $0x1b0] sm:$0xff] %vm2920, %v3757
  %3841 = vst.msk [vmem:[%s2 + $0x1b8] sm:$0xff] %vm2920, %v3760
  %3842 = vst.msk [vmem:[%s2 + $0x1c0] sm:$0xff] %vm2920, %v3763
  %3843 = vst.msk [vmem:[%s2 + $0x1c8] sm:$0xff] %vm2920, %v3766
  %3844 = vst.msk [vmem:[%s2 + $0x1d0] sm:$0xff] %vm2920, %v3769
  %3845 = vst.msk [vmem:[%s2 + $0x1d8] sm:$0xff] %vm2920, %v3772
  %3846 = vst.msk [vmem:[%s2 + $0x1e0] sm:$0xff] %vm2920, %v3775
  %3847 = vst.msk [vmem:[%s2 + $0x1e8] sm:$0xff] %vm2920, %v3778
  %3848 = vst.msk [vmem:[%s2 + $0x1f0] sm:$0xff] %vm2920, %v3781
  %3849 = vst.msk [vmem:[%s2 + $0x1f8] sm:$0xff] %vm2920, %v3784
  %v3850 = vsel %vm2920, %v3595, 0.0
  %v3851 = vsel %vm2920, %v3598, 0.0
  %v3852 = vadd.f32 %v3850, %v3851
  %v3853 = vsel %vm2920, %v3601, 0.0
  %v3854 = vadd.f32 %v3852, %v3853
  %v3855 = vsel %vm2920, %v3604, 0.0
  %v3856 = vadd.f32 %v3854, %v3855
  %v3857 = vsel %vm2920, %v3607, 0.0
  %v3858 = vadd.f32 %v3856, %v3857
  %v3859 = vsel %vm2920, %v3610, 0.0
  %v3860 = vadd.f32 %v3858, %v3859
  %v3861 = vsel %vm2920, %v3613, 0.0
  %v3862 = vadd.f32 %v3860, %v3861
  %v3863 = vsel %vm2920, %v3616, 0.0
  %v3864 = vadd.f32 %v3862, %v3863
  %v3865 = vsel %vm2920, %v3619, 0.0
  %v3866 = vadd.f32 %v3864, %v3865
  %v3867 = vsel %vm2920, %v3622, 0.0
  %v3868 = vadd.f32 %v3866, %v3867
  %v3869 = vsel %vm2920, %v3625, 0.0
  %v3870 = vadd.f32 %v3868, %v3869
  %v3871 = vsel %vm2920, %v3628, 0.0
  %v3872 = vadd.f32 %v3870, %v3871
  %v3873 = vsel %vm2920, %v3631, 0.0
  %v3874 = vadd.f32 %v3872, %v3873
  %v3875 = vsel %vm2920, %v3634, 0.0
  %v3876 = vadd.f32 %v3874, %v3875
  %v3877 = vsel %vm2920, %v3637, 0.0
  %v3878 = vadd.f32 %v3876, %v3877
  %v3879 = vsel %vm2920, %v3640, 0.0
  %v3880 = vadd.f32 %v3878, %v3879
  %v3881 = vsel %vm2920, %v3643, 0.0
  %v3882 = vadd.f32 %v3880, %v3881
  %v3883 = vsel %vm2920, %v3646, 0.0
  %v3884 = vadd.f32 %v3882, %v3883
  %v3885 = vsel %vm2920, %v3649, 0.0
  %v3886 = vadd.f32 %v3884, %v3885
  %v3887 = vsel %vm2920, %v3652, 0.0
  %v3888 = vadd.f32 %v3886, %v3887
  %v3889 = vsel %vm2920, %v3655, 0.0
  %v3890 = vadd.f32 %v3888, %v3889
  %v3891 = vsel %vm2920, %v3658, 0.0
  %v3892 = vadd.f32 %v3890, %v3891
  %v3893 = vsel %vm2920, %v3661, 0.0
  %v3894 = vadd.f32 %v3892, %v3893
  %v3895 = vsel %vm2920, %v3664, 0.0
  %v3896 = vadd.f32 %v3894, %v3895
  %v3897 = vsel %vm2920, %v3667, 0.0
  %v3898 = vadd.f32 %v3896, %v3897
  %v3899 = vsel %vm2920, %v3670, 0.0
  %v3900 = vadd.f32 %v3898, %v3899
  %v3901 = vsel %vm2920, %v3673, 0.0
  %v3902 = vadd.f32 %v3900, %v3901
  %v3903 = vsel %vm2920, %v3676, 0.0
  %v3904 = vadd.f32 %v3902, %v3903
  %v3905 = vsel %vm2920, %v3679, 0.0
  %v3906 = vadd.f32 %v3904, %v3905
  %v3907 = vsel %vm2920, %v3682, 0.0
  %v3908 = vadd.f32 %v3906, %v3907
  %v3909 = vsel %vm2920, %v3685, 0.0
  %v3910 = vadd.f32 %v3908, %v3909
  %v3911 = vsel %vm2920, %v3688, 0.0
  %v3912 = vadd.f32 %v3910, %v3911
  %v3913 = vsel %vm2920, %v3691, 0.0
  %v3914 = vadd.f32 %v3912, %v3913
  %v3915 = vsel %vm2920, %v3694, 0.0
  %v3916 = vadd.f32 %v3914, %v3915
  %v3917 = vsel %vm2920, %v3697, 0.0
  %v3918 = vadd.f32 %v3916, %v3917
  %v3919 = vsel %vm2920, %v3700, 0.0
  %v3920 = vadd.f32 %v3918, %v3919
  %v3921 = vsel %vm2920, %v3703, 0.0
  %v3922 = vadd.f32 %v3920, %v3921
  %v3923 = vsel %vm2920, %v3706, 0.0
  %v3924 = vadd.f32 %v3922, %v3923
  %v3925 = vsel %vm2920, %v3709, 0.0
  %v3926 = vadd.f32 %v3924, %v3925
  %v3927 = vsel %vm2920, %v3712, 0.0
  %v3928 = vadd.f32 %v3926, %v3927
  %v3929 = vsel %vm2920, %v3715, 0.0
  %v3930 = vadd.f32 %v3928, %v3929
  %v3931 = vsel %vm2920, %v3718, 0.0
  %v3932 = vadd.f32 %v3930, %v3931
  %v3933 = vsel %vm2920, %v3721, 0.0
  %v3934 = vadd.f32 %v3932, %v3933
  %v3935 = vsel %vm2920, %v3724, 0.0
  %v3936 = vadd.f32 %v3934, %v3935
  %v3937 = vsel %vm2920, %v3727, 0.0
  %v3938 = vadd.f32 %v3936, %v3937
  %v3939 = vsel %vm2920, %v3730, 0.0
  %v3940 = vadd.f32 %v3938, %v3939
  %v3941 = vsel %vm2920, %v3733, 0.0
  %v3942 = vadd.f32 %v3940, %v3941
  %v3943 = vsel %vm2920, %v3736, 0.0
  %v3944 = vadd.f32 %v3942, %v3943
  %v3945 = vsel %vm2920, %v3739, 0.0
  %v3946 = vadd.f32 %v3944, %v3945
  %v3947 = vsel %vm2920, %v3742, 0.0
  %v3948 = vadd.f32 %v3946, %v3947
  %v3949 = vsel %vm2920, %v3745, 0.0
  %v3950 = vadd.f32 %v3948, %v3949
  %v3951 = vsel %vm2920, %v3748, 0.0
  %v3952 = vadd.f32 %v3950, %v3951
  %v3953 = vsel %vm2920, %v3751, 0.0
  %v3954 = vadd.f32 %v3952, %v3953
  %v3955 = vsel %vm2920, %v3754, 0.0
  %v3956 = vadd.f32 %v3954, %v3955
  %v3957 = vsel %vm2920, %v3757, 0.0
  %v3958 = vadd.f32 %v3956, %v3957
  %v3959 = vsel %vm2920, %v3760, 0.0
  %v3960 = vadd.f32 %v3958, %v3959
  %v3961 = vsel %vm2920, %v3763, 0.0
  %v3962 = vadd.f32 %v3960, %v3961
  %v3963 = vsel %vm2920, %v3766, 0.0
  %v3964 = vadd.f32 %v3962, %v3963
  %v3965 = vsel %vm2920, %v3769, 0.0
  %v3966 = vadd.f32 %v3964, %v3965
  %v3967 = vsel %vm2920, %v3772, 0.0
  %v3968 = vadd.f32 %v3966, %v3967
  %v3969 = vsel %vm2920, %v3775, 0.0
  %v3970 = vadd.f32 %v3968, %v3969
  %v3971 = vsel %vm2920, %v3778, 0.0
  %v3972 = vadd.f32 %v3970, %v3971
  %v3973 = vsel %vm2920, %v3781, 0.0
  %v3974 = vadd.f32 %v3972, %v3973
  %v3975 = vsel %vm2920, %v3784, 0.0
  %v3976 = vadd.f32 %v3974, %v3975
  %v3977 = vrot.slane %v3976, 4
  %v3978 = vadd.f32 %v3976, %v3977
  %v3979 = vrot.slane %v3978, 2
  %v3980 = vadd.f32 %v3978, %v3979
  %v3981 = vrot.slane %v3980, 1
  %v3982 = vadd.f32 %v3980, %v3981
  %vm3983 = vcmask 57344
  %3984 = vst.msk [vmem:[%s3] sm:$0x1] %vm3983, %v3982
  %v3985 = vmul.f32 %v3595, %v3595
  %v3986 = vmul.f32 %v3598, %v3598
  %v3987 = vmul.f32 %v3601, %v3601
  %v3988 = vmul.f32 %v3604, %v3604
  %v3989 = vmul.f32 %v3607, %v3607
  %v3990 = vmul.f32 %v3610, %v3610
  %v3991 = vmul.f32 %v3613, %v3613
  %v3992 = vmul.f32 %v3616, %v3616
  %v3993 = vmul.f32 %v3619, %v3619
  %v3994 = vmul.f32 %v3622, %v3622
  %v3995 = vmul.f32 %v3625, %v3625
  %v3996 = vmul.f32 %v3628, %v3628
  %v3997 = vmul.f32 %v3631, %v3631
  %v3998 = vmul.f32 %v3634, %v3634
  %v3999 = vmul.f32 %v3637, %v3637
  %v4000 = vmul.f32 %v3640, %v3640
  %v4001 = vmul.f32 %v3643, %v3643
  %v4002 = vmul.f32 %v3646, %v3646
  %v4003 = vmul.f32 %v3649, %v3649
  %v4004 = vmul.f32 %v3652, %v3652
  %v4005 = vmul.f32 %v3655, %v3655
  %v4006 = vmul.f32 %v3658, %v3658
  %v4007 = vmul.f32 %v3661, %v3661
  %v4008 = vmul.f32 %v3664, %v3664
  %v4009 = vmul.f32 %v3667, %v3667
  %v4010 = vmul.f32 %v3670, %v3670
  %v4011 = vmul.f32 %v3673, %v3673
  %v4012 = vmul.f32 %v3676, %v3676
  %v4013 = vmul.f32 %v3679, %v3679
  %v4014 = vmul.f32 %v3682, %v3682
  %v4015 = vmul.f32 %v3685, %v3685
  %v4016 = vmul.f32 %v3688, %v3688
  %v4017 = vmul.f32 %v3691, %v3691
  %v4018 = vmul.f32 %v3694, %v3694
  %v4019 = vmul.f32 %v3697, %v3697
  %v4020 = vmul.f32 %v3700, %v3700
  %v4021 = vmul.f32 %v3703, %v3703
  %v4022 = vmul.f32 %v3706, %v3706
  %v4023 = vmul.f32 %v3709, %v3709
  %v4024 = vmul.f32 %v3712, %v3712
  %v4025 = vmul.f32 %v3715, %v3715
  %v4026 = vmul.f32 %v3718, %v3718
  %v4027 = vmul.f32 %v3721, %v3721
  %v4028 = vmul.f32 %v3724, %v3724
  %v4029 = vmul.f32 %v3727, %v3727
  %v4030 = vmul.f32 %v3730, %v3730
  %v4031 = vmul.f32 %v3733, %v3733
  %v4032 = vmul.f32 %v3736, %v3736
  %v4033 = vmul.f32 %v3739, %v3739
  %v4034 = vmul.f32 %v3742, %v3742
  %v4035 = vmul.f32 %v3745, %v3745
  %v4036 = vmul.f32 %v3748, %v3748
  %v4037 = vmul.f32 %v3751, %v3751
  %v4038 = vmul.f32 %v3754, %v3754
  %v4039 = vmul.f32 %v3757, %v3757
  %v4040 = vmul.f32 %v3760, %v3760
  %v4041 = vmul.f32 %v3763, %v3763
  %v4042 = vmul.f32 %v3766, %v3766
  %v4043 = vmul.f32 %v3769, %v3769
  %v4044 = vmul.f32 %v3772, %v3772
  %v4045 = vmul.f32 %v3775, %v3775
  %v4046 = vmul.f32 %v3778, %v3778
  %v4047 = vmul.f32 %v3781, %v3781
  %v4048 = vmul.f32 %v3784, %v3784
  %v4049 = vsel %vm2920, %v3985, 0.0
  %v4050 = vsel %vm2920, %v3986, 0.0
  %v4051 = vadd.f32 %v4049, %v4050
  %v4052 = vsel %vm2920, %v3987, 0.0
  %v4053 = vadd.f32 %v4051, %v4052
  %v4054 = vsel %vm2920, %v3988, 0.0
  %v4055 = vadd.f32 %v4053, %v4054
  %v4056 = vsel %vm2920, %v3989, 0.0
  %v4057 = vadd.f32 %v4055, %v4056
  %v4058 = vsel %vm2920, %v3990, 0.0
  %v4059 = vadd.f32 %v4057, %v4058
  %v4060 = vsel %vm2920, %v3991, 0.0
  %v4061 = vadd.f32 %v4059, %v4060
  %v4062 = vsel %vm2920, %v3992, 0.0
  %v4063 = vadd.f32 %v4061, %v4062
  %v4064 = vsel %vm2920, %v3993, 0.0
  %v4065 = vadd.f32 %v4063, %v4064
  %v4066 = vsel %vm2920, %v3994, 0.0
  %v4067 = vadd.f32 %v4065, %v4066
  %v4068 = vsel %vm2920, %v3995, 0.0
  %v4069 = vadd.f32 %v4067, %v4068
  %v4070 = vsel %vm2920, %v3996, 0.0
  %v4071 = vadd.f32 %v4069, %v4070
  %v4072 = vsel %vm2920, %v3997, 0.0
  %v4073 = vadd.f32 %v4071, %v4072
  %v4074 = vsel %vm2920, %v3998, 0.0
  %v4075 = vadd.f32 %v4073, %v4074
  %v4076 = vsel %vm2920, %v3999, 0.0
  %v4077 = vadd.f32 %v4075, %v4076
  %v4078 = vsel %vm2920, %v4000, 0.0
  %v4079 = vadd.f32 %v4077, %v4078
  %v4080 = vsel %vm2920, %v4001, 0.0
  %v4081 = vadd.f32 %v4079, %v4080
  %v4082 = vsel %vm2920, %v4002, 0.0
  %v4083 = vadd.f32 %v4081, %v4082
  %v4084 = vsel %vm2920, %v4003, 0.0
  %v4085 = vadd.f32 %v4083, %v4084
  %v4086 = vsel %vm2920, %v4004, 0.0
  %v4087 = vadd.f32 %v4085, %v4086
  %v4088 = vsel %vm2920, %v4005, 0.0
  %v4089 = vadd.f32 %v4087, %v4088
  %v4090 = vsel %vm2920, %v4006, 0.0
  %v4091 = vadd.f32 %v4089, %v4090
  %v4092 = vsel %vm2920, %v4007, 0.0
  %v4093 = vadd.f32 %v4091, %v4092
  %v4094 = vsel %vm2920, %v4008, 0.0
  %v4095 = vadd.f32 %v4093, %v4094
  %v4096 = vsel %vm2920, %v4009, 0.0
  %v4097 = vadd.f32 %v4095, %v4096
  %v4098 = vsel %vm2920, %v4010, 0.0
  %v4099 = vadd.f32 %v4097, %v4098
  %v4100 = vsel %vm2920, %v4011, 0.0
  %v4101 = vadd.f32 %v4099, %v4100
  %v4102 = vsel %vm2920, %v4012, 0.0
  %v4103 = vadd.f32 %v4101, %v4102
  %v4104 = vsel %vm2920, %v4013, 0.0
  %v4105 = vadd.f32 %v4103, %v4104
  %v4106 = vsel %vm2920, %v4014, 0.0
  %v4107 = vadd.f32 %v4105, %v4106
  %v4108 = vsel %vm2920, %v4015, 0.0
  %v4109 = vadd.f32 %v4107, %v4108
  %v4110 = vsel %vm2920, %v4016, 0.0
  %v4111 = vadd.f32 %v4109, %v4110
  %v4112 = vsel %vm2920, %v4017, 0.0
  %v4113 = vadd.f32 %v4111, %v4112
  %v4114 = vsel %vm2920, %v4018, 0.0
  %v4115 = vadd.f32 %v4113, %v4114
  %v4116 = vsel %vm2920, %v4019, 0.0
  %v4117 = vadd.f32 %v4115, %v4116
  %v4118 = vsel %vm2920, %v4020, 0.0
  %v4119 = vadd.f32 %v4117, %v4118
  %v4120 = vsel %vm2920, %v4021, 0.0
  %v4121 = vadd.f32 %v4119, %v4120
  %v4122 = vsel %vm2920, %v4022, 0.0
  %v4123 = vadd.f32 %v4121, %v4122
  %v4124 = vsel %vm2920, %v4023, 0.0
  %v4125 = vadd.f32 %v4123, %v4124
  %v4126 = vsel %vm2920, %v4024, 0.0
  %v4127 = vadd.f32 %v4125, %v4126
  %v4128 = vsel %vm2920, %v4025, 0.0
  %v4129 = vadd.f32 %v4127, %v4128
  %v4130 = vsel %vm2920, %v4026, 0.0
  %v4131 = vadd.f32 %v4129, %v4130
  %v4132 = vsel %vm2920, %v4027, 0.0
  %v4133 = vadd.f32 %v4131, %v4132
  %v4134 = vsel %vm2920, %v4028, 0.0
  %v4135 = vadd.f32 %v4133, %v4134
  %v4136 = vsel %vm2920, %v4029, 0.0
  %v4137 = vadd.f32 %v4135, %v4136
  %v4138 = vsel %vm2920, %v4030, 0.0
  %v4139 = vadd.f32 %v4137, %v4138
  %v4140 = vsel %vm2920, %v4031, 0.0
  %v4141 = vadd.f32 %v4139, %v4140
  %v4142 = vsel %vm2920, %v4032, 0.0
  %v4143 = vadd.f32 %v4141, %v4142
  %v4144 = vsel %vm2920, %v4033, 0.0
  %v4145 = vadd.f32 %v4143, %v4144
  %v4146 = vsel %vm2920, %v4034, 0.0
  %v4147 = vadd.f32 %v4145, %v4146
  %v4148 = vsel %vm2920, %v4035, 0.0
  %v4149 = vadd.f32 %v4147, %v4148
  %v4150 = vsel %vm2920, %v4036, 0.0
  %v4151 = vadd.f32 %v4149, %v4150
  %v4152 = vsel %vm2920, %v4037, 0.0
  %v4153 = vadd.f32 %v4151, %v4152
  %v4154 = vsel %vm2920, %v4038, 0.0
  %v4155 = vadd.f32 %v4153, %v4154
  %v4156 = vsel %vm2920, %v4039, 0.0
  %v4157 = vadd.f32 %v4155, %v4156
  %v4158 = vsel %vm2920, %v4040, 0.0
  %v4159 = vadd.f32 %v4157, %v4158
  %v4160 = vsel %vm2920, %v4041, 0.0
  %v4161 = vadd.f32 %v4159, %v4160
  %v4162 = vsel %vm2920, %v4042, 0.0
  %v4163 = vadd.f32 %v4161, %v4162
  %v4164 = vsel %vm2920, %v4043, 0.0
  %v4165 = vadd.f32 %v4163, %v4164
  %v4166 = vsel %vm2920, %v4044, 0.0
  %v4167 = vadd.f32 %v4165, %v4166
  %v4168 = vsel %vm2920, %v4045, 0.0
  %v4169 = vadd.f32 %v4167, %v4168
  %v4170 = vsel %vm2920, %v4046, 0.0
  %v4171 = vadd.f32 %v4169, %v4170
  %v4172 = vsel %vm2920, %v4047, 0.0
  %v4173 = vadd.f32 %v4171, %v4172
  %v4174 = vsel %vm2920, %v4048, 0.0
  %v4175 = vadd.f32 %v4173, %v4174
  %v4176 = vrot.slane %v4175, 4
  %v4177 = vadd.f32 %v4175, %v4176
  %v4178 = vrot.slane %v4177, 2
  %v4179 = vadd.f32 %v4177, %v4178
  %v4180 = vrot.slane %v4179, 1
  %v4181 = vadd.f32 %v4179, %v4180
  %4182 = vst.msk [vmem:[%s4] sm:$0x1] %vm3983, %v4181
  // Predicated region
  $region10: #{conv_block_forward.3} parent=0 // pred_check
    _
  $region11: #{conv_block_forward.3} parent=0 // pred_check_branch
    %4184 = sbr.rel (0) target = $region13
  $region12: #{conv_block_forward.3} parent=0 // pred_region
    _
  $region13: #{conv_block_forward.3} parent=0 // pred_fallthru
    _
  // Predicated region
  $region14: #{conv_block_forward.3} parent=0 // pred_check
    _
  $region15: #{conv_block_forward.3} parent=0 // pred_check_branch
    %4186 = sbr.rel (0) target = $region17
  $region16: #{conv_block_forward.3} parent=0 // pred_region
    _
  $region17: #{conv_block_forward.3} parent=0 // pred_fallthru
    _
  // Predicated region
  $region18: #{conv_block_forward.3} parent=0 // pred_check
    _
  $region19: #{conv_block_forward.3} parent=0 // pred_check_branch
    %4188 = sbr.rel (0) target = $region21
  $region20: #{conv_block_forward.3} parent=0 // pred_region
    _
  $region21: #{conv_block_forward.3} parent=0 // pred_fallthru
    _
  // Predicated region
  $region22: #{conv_block_forward.3} parent=0 // pred_check
    _
  $region23: #{conv_block_forward.3} parent=0 // pred_check_branch
    %4190 = sbr.rel (0) target = $region25
  $region24: #{conv_block_forward.3} parent=0 // pred_region
    _
  $region25: #{conv_block_forward.3} parent=0 // pred_fallthru
    _
  // Predicated region
  $region26: #{conv_block_forward.3} parent=0 // pred_check
    _
  $region27: #{conv_block_forward.3} parent=0 // pred_check_branch
    %4192 = sbr.rel (0) target = $region29
  $region28: #{conv_block_forward.3} parent=0 // pred_region
    _
  $region29: #{conv_block_forward.3} parent=0 // pred_fallthru
    _
  // Predicated region
  $region30: #{conv_block_forward.3} parent=0 // pred_check
    _
  $region31: #{conv_block_forward.3} parent=0 // pred_check_branch
    %4194 = sbr.rel (0) target = $region33
  $region32: #{conv_block_forward.3} parent=0 // pred_region
    _
  $region33: #{conv_block_forward.3} parent=0 // pred_fallthru
    _

</llo_original>
